<compile_context>
chip_gen: v7x
topology: tpu7x:2x2x1
jax: 0.10.0
libtpu: 0.0.40
codegen_flags: <defaults>
</compile_context>

<pallas_src>
import jax
import jax.numpy as jnp
from jax.experimental import pallas as pl
from jax.experimental.pallas import tpu as pltpu

HIDDEN = 32            # base.config.hidden_size (small synthetic value)
FF1 = 2048             # nn.Linear(hidden, 2048)
FF2 = 1024             # nn.Linear(2048, 1024)
N_LABELS = 2
LABEL_PAD = 128        # lane-dense padding of the class dim
LOSS_LANE = N_LABELS   # unused padded logit lane that carries the per-token loss
LABEL_SMOOTHING = 0.1
IGNORE_INDEX = -100


def _round_up(x, m):
    return (x + m - 1) // m * m


# ------------------------------- kernel bodies --------------------------------

def _mlp_logits(x_ref, w1_ref, b1_ref, w2_ref, b2_ref, w3_ref, b3_ref):
    """bf16 matmuls with f32 accumulation; returns (tm, LABEL_PAD) f32 logits
    (columns >= N_LABELS are exactly the zero-padded W3/b3 columns, i.e. 0.0)."""
    x = x_ref[...].astype(jnp.bfloat16)      # no-op if the input is already bf16
    h1 = jnp.dot(x, w1_ref[...], preferred_element_type=jnp.float32) + b1_ref[...]
    h1 = jnp.maximum(h1, 0.0).astype(jnp.bfloat16)
    h2 = jnp.dot(h1, w2_ref[...], preferred_element_type=jnp.float32) + b2_ref[...]
    h2 = jnp.maximum(h2, 0.0).astype(jnp.bfloat16)
    logits = jnp.dot(h2, w3_ref[...], preferred_element_type=jnp.float32) + b3_ref[...]
    return logits


def _classifier_kernel(x_ref, w1_ref, b1_ref, w2_ref, b2_ref, w3_ref, b3_ref, out_ref):
    out_ref[...] = _mlp_logits(x_ref, w1_ref, b1_ref, w2_ref, b2_ref, w3_ref, b3_ref
                               ).astype(out_ref.dtype)


def _classifier_loss_kernel(x_ref, lab_ref, w1_ref, b1_ref, w2_ref, b2_ref, w3_ref, b3_ref,
                            out_ref):
    """Computes logits and fuses the label-smoothed CE epilogue.

    Single (tm, LABEL_PAD) f32 output:
      lanes [0, N_LABELS)  -> logits
      lane  LOSS_LANE      -> per-token loss (0 for ignore_index / padded tokens)
      remaining lanes      -> 0
    """
    logits = _mlp_logits(x_ref, w1_ref, b1_ref, w2_ref, b2_ref, w3_ref, b3_ref)

    labels = lab_ref[...]                                        # (tm, 1) int32
    tm, cpad = logits.shape
    cls = jax.lax.broadcasted_iota(jnp.int32, (tm, cpad), 1)
    class_mask = cls < N_LABELS
    masked_logits = jnp.where(class_mask, logits, jnp.float32(-1e30))
    m = jnp.max(masked_logits, axis=-1, keepdims=True)
    lse = m + jnp.log(jnp.sum(jnp.exp(masked_logits - m), axis=-1, keepdims=True))
    logp = logits - lse
    onehot = (cls == labels).astype(jnp.float32)                 # all-zero for ignore_index
    nll = -jnp.sum(onehot * logp, axis=-1, keepdims=True)        # (tm, 1)
    smooth = -jnp.sum(jnp.where(class_mask, logp, 0.0), axis=-1, keepdims=True) / float(N_LABELS)
    per_tok = (1.0 - LABEL_SMOOTHING) * nll + LABEL_SMOOTHING * smooth
    valid = (labels != IGNORE_INDEX).astype(jnp.float32)
    tok_loss = per_tok * valid                                   # (tm, 1)

    # Pack the per-token loss into the (otherwise zero) padded lane LOSS_LANE.
    out = jnp.where(cls == LOSS_LANE, tok_loss, logits)
    out_ref[...] = out.astype(out_ref.dtype)


# ------------------------------- pallas wrappers -------------------------------

def _const_spec(shape):
    # Grid-invariant operand: constant index_map => Pallas' revisit optimization fetches
    # the block once and keeps it resident (no per-step re-DMA).  Default buffering is
    # used on purpose (see header note re: Buffered(1) residency risk).
    return pl.BlockSpec(shape, lambda i: (0, 0))


def _weight_specs():
    return [
        _const_spec((HIDDEN, FF1)), _const_spec((1, FF1)),
        _const_spec((FF1, FF2)),    _const_spec((1, FF2)),
        _const_spec((FF2, LABEL_PAD)), _const_spec((1, LABEL_PAD)),
    ]


def classifier_head(x_tok, kparams, labels=None, tm=512):
    """x_tok: (n_pad, HIDDEN) f32 or bf16 with n_pad % tm == 0.
    Returns padded (n_pad, LABEL_PAD) f32 output; in the loss path lane LOSS_LANE holds
    the per-token loss and lanes [0, N_LABELS) hold the logits."""
    n_pad, h = x_tok.shape
    assert n_pad % tm == 0 and h == HIDDEN
    grid = (n_pad // tm,)
    x_spec = pl.BlockSpec((tm, HIDDEN), lambda i: (i, 0))
    out_spec = pl.BlockSpec((tm, LABEL_PAD), lambda i: (i, 0))
    cparams = pltpu.CompilerParams(
        dimension_semantics=("parallel",),   # token axis is fully independent
        vmem_limit_bytes=48 << 20,           # ~15 MiB actual footprint at tm=512
    )
    if labels is None:
        return pl.pallas_call(
            _classifier_kernel,
            out_shape=jax.ShapeDtypeStruct((n_pad, LABEL_PAD), jnp.float32),
            grid_spec=pltpu.PrefetchScalarGridSpec(
                num_scalar_prefetch=0,
                grid=grid,
                in_specs=[x_spec] + _weight_specs(),
                out_specs=out_spec,
            ),
            compiler_params=cparams,
        )(x_tok, *kparams)

    assert labels.shape == (n_pad, 1)
    lab_spec = pl.BlockSpec((tm, 1), lambda i: (i, 0))
    return pl.pallas_call(
        _classifier_loss_kernel,
        out_shape=jax.ShapeDtypeStruct((n_pad, LABEL_PAD), jnp.float32),
        grid_spec=pltpu.PrefetchScalarGridSpec(
            num_scalar_prefetch=0,
            grid=grid,
            in_specs=[x_spec, lab_spec] + _weight_specs(),
            out_specs=out_spec,
        ),
        compiler_params=cparams,
    )(x_tok, labels, *kparams)


def token_classifier_forward(sequence_output, kparams, attention_mask=None, labels=None, tm=512):
    """Mirrors TokenClassifier.forward (return_dict=False): (logits,) or (loss, logits).

    `sequence_output` may be f32 or bf16 (no wrapper-side cast is performed)."""
    b, s, h = sequence_output.shape
    n_tok = b * s
    tm = min(tm, _round_up(n_tok, 8))            # avoid over-padding tiny inputs
    n_pad = _round_up(n_tok, tm)
    x_tok = sequence_output.reshape(n_tok, h)
    if n_pad != n_tok:
        x_tok = jnp.pad(x_tok, ((0, n_pad - n_tok), (0, 0)))

    if labels is None:
        out_pad = classifier_head(x_tok, kparams, tm=tm)
        logits = out_pad[:n_tok, :N_LABELS].reshape(b, s, N_LABELS)
        return (logits,)

    flat_labels = labels.reshape(-1).astype(jnp.int32)
    if attention_mask is not None:
        active = attention_mask.reshape(-1) == 1
        flat_labels = jnp.where(active, flat_labels, IGNORE_INDEX)
    lab_pad = jnp.pad(flat_labels, (0, n_pad - n_tok), constant_values=IGNORE_INDEX)
    lab_pad = lab_pad.reshape(n_pad, 1)

    out_pad = classifier_head(x_tok, kparams, labels=lab_pad, tm=tm)
    logits = out_pad[:n_tok, :N_LABELS].reshape(b, s, N_LABELS)
    tok_loss = out_pad[:n_tok, LOSS_LANE]
    n_valid = jnp.sum((flat_labels != IGNORE_INDEX).astype(jnp.float32))
    # NOTE: matches torch.nn.CrossEntropyLoss -- NaN if every token is ignored.
    loss = jnp.sum(tok_loss) / n_valid
    return (loss, logits)


# ----------------------------- parameters / reference --------------------------

def init_params(key):
    """PyTorch nn.Linear default init U(-1/sqrt(fan_in), 1/sqrt(fan_in)); weights stored (in, out)."""
    def linear(k, fan_in, fan_out):
        kw, kb = jax.random.split(k)
        bound = 1.0 / jnp.sqrt(fan_in)
        w = jax.random.uniform(kw, (fan_in, fan_out), jnp.float32, -bound, bound)
        b = jax.random.uniform(kb, (fan_out,), jnp.float32, -bound, bound)
        return w, b
    k1, k2, k3 = jax.random.split(key, 3)
    w1, b1 = linear(k1, HIDDEN, FF1)
    w2, b2 = linear(k2, FF1, FF2)
    w3, b3 = linear(k3, FF2, N_LABELS)
    return (w1, b1, w2, b2, w3, b3)


def prepare_params(params):
    """One-time host-side prep: cast weights to bf16 (native MXU dtype, halves weight
    DMA), keep biases f32 as (1, out) rows, pad the final layer to LABEL_PAD lanes."""
    w1, b1, w2, b2, w3, b3 = params
    w3p = jnp.zeros((FF2, LABEL_PAD), jnp.float32).at[:, :N_LABELS].set(w3)
    b3p = jnp.zeros((LABEL_PAD,), jnp.float32).at[:N_LABELS].set(b3)
    return (w1.astype(jnp.bfloat16), b1.reshape(1, FF1),
            w2.astype(jnp.bfloat16), b2.reshape(1, FF2),
            w3p.astype(jnp.bfloat16), b3p.reshape(1, LABEL_PAD))


def _reference(sequence_output, params, attention_mask, labels):
    """Pure-JAX reference emulating the kernel's bf16-weight / f32-accumulate precision.
    NOTE: parity with a true f32 PyTorch module is only ~1e-2/1e-3 because of the bf16
    weight cast; the kernel matches this reference to 1e-4."""
    w1, b1, w2, b2, w3, b3 = params

    def mm(a, w):
        return jnp.dot(a.astype(jnp.bfloat16), w.astype(jnp.bfloat16),
                       preferred_element_type=jnp.float32)

    b, s, h = sequence_output.shape
    x = sequence_output.reshape(b * s, h)
    h1 = jnp.maximum(mm(x, w1) + b1, 0.0)
    h2 = jnp.maximum(mm(h1, w2) + b2, 0.0)
    logits = mm(h2, w3) + b3

    flat_labels = labels.reshape(-1)
    flat_labels = jnp.where(attention_mask.reshape(-1) == 1, flat_labels, IGNORE_INDEX)
    logp = jax.nn.log_softmax(logits, axis=-1)
    valid = flat_labels != IGNORE_INDEX
    safe = jnp.where(valid, flat_labels, 0)
    nll = -jnp.take_along_axis(logp, safe[:, None], axis=-1)[:, 0]
    smooth = -jnp.mean(logp, axis=-1)
    per_tok = (1.0 - LABEL_SMOOTHING) * nll + LABEL_SMOOTHING * smooth
    loss = jnp.sum(per_tok * valid) / jnp.sum(valid)
    return loss, logits.reshape(b, s, N_LABELS)


if __name__ == "__main__":
    B, S = 2, 8
    key = jax.random.PRNGKey(0)
    k_params, k_x, k_lab, k_mask = jax.random.split(key, 4)

    raw_params = init_params(k_params)
    kparams = prepare_params(raw_params)
    sequence_output = jax.random.normal(k_x, (B, S, HIDDEN), jnp.float32)
    labels = jax.random.randint(k_lab, (B, S), 0, N_LABELS, jnp.int32)
    attention_mask = (jax.random.uniform(k_mask, (B, S)) > 0.25).astype(jnp.int32)
    attention_mask = attention_mask.at[:, 0].set(1)   # ensure at least one active token

    # with labels -> (loss, logits); without labels -> (logits,)
    loss, logits = token_classifier_forward(
        sequence_output, kparams, attention_mask=attention_mask, labels=labels)
    (logits_only,) = token_classifier_forward(sequence_output, kparams)
    jax.block_until_ready((loss, logits, logits_only))

    ref_loss, ref_logits = _reference(sequence_output, raw_params, attention_mask, labels)
    assert jnp.allclose(logits, ref_logits, rtol=1e-4, atol=1e-4)
    assert jnp.allclose(logits_only, ref_logits, rtol=1e-4, atol=1e-4)
    assert jnp.allclose(loss, ref_loss, rtol=1e-4, atol=1e-4)

    print("KERNEL_OK")
</pallas_src>

<mosaic_0001>
module attributes {stable_mosaic.version = 11 : i64} {
  func.func @_classifier_loss_kernel(%arg0: i32, %arg1: memref<16x32xf32, #tpu.memory_space<vmem>>, %arg2: memref<16x1xi32, #tpu.memory_space<vmem>>, %arg3: memref<32x2048xbf16, #tpu.memory_space<vmem>>, %arg4: memref<1x2048xf32, #tpu.memory_space<vmem>>, %arg5: memref<2048x1024xbf16, #tpu.memory_space<vmem>>, %arg6: memref<1x1024xf32, #tpu.memory_space<vmem>>, %arg7: memref<1024x128xbf16, #tpu.memory_space<vmem>>, %arg8: memref<1x128xf32, #tpu.memory_space<vmem>>, %arg9: memref<16x128xf32, #tpu.memory_space<vmem>>) attributes {dimension_semantics = [#tpu.dimension_semantics<parallel>], iteration_bounds = array<i64: 1>, scalar_prefetch = 0 : i64, scratch_operands = 0 : i64, tpu.core_type = #tpu.core_type<tc>, window_params = [{transform_indices = @transform_0, window_bounds = array<i64: 16, 32>}, {transform_indices = @transform_1, window_bounds = array<i64: 16, 1>}, {pipeline_mode = #tpu.pipeline_mode<synchronous>, transform_indices = @transform_2, window_bounds = array<i64: 32, 2048>}, {pipeline_mode = #tpu.pipeline_mode<synchronous>, transform_indices = @transform_3, window_bounds = array<i64: 1, 2048>}, {pipeline_mode = #tpu.pipeline_mode<synchronous>, transform_indices = @transform_4, window_bounds = array<i64: 2048, 1024>}, {pipeline_mode = #tpu.pipeline_mode<synchronous>, transform_indices = @transform_5, window_bounds = array<i64: 1, 1024>}, {pipeline_mode = #tpu.pipeline_mode<synchronous>, transform_indices = @transform_6, window_bounds = array<i64: 1024, 128>}, {pipeline_mode = #tpu.pipeline_mode<synchronous>, transform_indices = @transform_7, window_bounds = array<i64: 1, 128>}, {transform_indices = @transform_8, window_bounds = array<i64: 16, 128>}]} {
    %c0 = arith.constant 0 : index
    %c0_0 = arith.constant 0 : index
    %0 = vector.load %arg1[%c0, %c0_0] : memref<16x32xf32, #tpu.memory_space<vmem>>, vector<16x32xf32>
    %1 = arith.truncf %0 : vector<16x32xf32> to vector<16x32xbf16>
    %c0_1 = arith.constant 0 : index
    %c0_2 = arith.constant 0 : index
    %2 = vector.load %arg3[%c0_1, %c0_2] : memref<32x2048xbf16, #tpu.memory_space<vmem>>, vector<32x2048xbf16>
    %cst = arith.constant dense<0.000000e+00> : vector<16x2048xf32>
    %3 = tpu.matmul %1, %2, %cst {dimension_numbers = #tpu.dot_dimension_numbers<[1], [0], [0], [1], [0, 0, 1, 1], [], []>} : vector<16x32xbf16>, vector<32x2048xbf16>, vector<16x2048xf32> -> vector<16x2048xf32>
    %c0_3 = arith.constant 0 : index
    %c0_4 = arith.constant 0 : index
    %4 = vector.load %arg4[%c0_3, %c0_4] : memref<1x2048xf32, #tpu.memory_space<vmem>>, vector<1x2048xf32>
    %5 = vector.broadcast %4 : vector<1x2048xf32> to vector<16x2048xf32>
    %6 = arith.addf %3, %5 : vector<16x2048xf32>
    %cst_5 = arith.constant 0.000000e+00 : f32
    %7 = vector.broadcast %cst_5 : f32 to vector<16x2048xf32>
    %8 = arith.maximumf %6, %7 : vector<16x2048xf32>
    %9 = arith.truncf %8 : vector<16x2048xf32> to vector<16x2048xbf16>
    %c0_6 = arith.constant 0 : index
    %c0_7 = arith.constant 0 : index
    %10 = vector.load %arg5[%c0_6, %c0_7] : memref<2048x1024xbf16, #tpu.memory_space<vmem>>, vector<2048x1024xbf16>
    %cst_8 = arith.constant dense<0.000000e+00> : vector<16x1024xf32>
    %11 = tpu.matmul %9, %10, %cst_8 {dimension_numbers = #tpu.dot_dimension_numbers<[1], [0], [0], [1], [0, 0, 1, 1], [], []>} : vector<16x2048xbf16>, vector<2048x1024xbf16>, vector<16x1024xf32> -> vector<16x1024xf32>
    %c0_9 = arith.constant 0 : index
    %c0_10 = arith.constant 0 : index
    %12 = vector.load %arg6[%c0_9, %c0_10] : memref<1x1024xf32, #tpu.memory_space<vmem>>, vector<1x1024xf32>
    %13 = vector.broadcast %12 : vector<1x1024xf32> to vector<16x1024xf32>
    %14 = arith.addf %11, %13 : vector<16x1024xf32>
    %cst_11 = arith.constant 0.000000e+00 : f32
    %15 = vector.broadcast %cst_11 : f32 to vector<16x1024xf32>
    %16 = arith.maximumf %14, %15 : vector<16x1024xf32>
    %17 = arith.truncf %16 : vector<16x1024xf32> to vector<16x1024xbf16>
    %c0_12 = arith.constant 0 : index
    %c0_13 = arith.constant 0 : index
    %18 = vector.load %arg7[%c0_12, %c0_13] : memref<1024x128xbf16, #tpu.memory_space<vmem>>, vector<1024x128xbf16>
    %cst_14 = arith.constant dense<0.000000e+00> : vector<16x128xf32>
    %19 = tpu.matmul %17, %18, %cst_14 {dimension_numbers = #tpu.dot_dimension_numbers<[1], [0], [0], [1], [0, 0, 1, 1], [], []>} : vector<16x1024xbf16>, vector<1024x128xbf16>, vector<16x128xf32> -> vector<16x128xf32>
    %c0_15 = arith.constant 0 : index
    %c0_16 = arith.constant 0 : index
    %20 = vector.load %arg8[%c0_15, %c0_16] : memref<1x128xf32, #tpu.memory_space<vmem>>, vector<1x128xf32>
    %21 = vector.broadcast %20 : vector<1x128xf32> to vector<16x128xf32>
    %22 = arith.addf %19, %21 : vector<16x128xf32>
    %c0_17 = arith.constant 0 : index
    %c0_18 = arith.constant 0 : index
    %23 = vector.load %arg2[%c0_17, %c0_18] : memref<16x1xi32, #tpu.memory_space<vmem>>, vector<16x1xi32>
    %24 = tpu.iota {dimensions = array<i32: 1>} : vector<16x128xi32>
    %c2_i32 = arith.constant 2 : i32
    %25 = vector.broadcast %c2_i32 : i32 to vector<16x128xi32>
    %26 = arith.cmpi slt, %24, %25 : vector<16x128xi32>
    %cst_19 = arith.constant -1.000000e+30 : f32
    %27 = vector.broadcast %cst_19 : f32 to vector<16x128xf32>
    %28 = arith.select %26, %22, %27 : vector<16x128xi1>, vector<16x128xf32>
    %cst_20 = arith.constant dense<0xFF800000> : vector<16xf32>
    %29 = vector.multi_reduction <maximumf>, %28, %cst_20 [1] : vector<16x128xf32> to vector<16xf32>
    %30 = vector.shape_cast %29 : vector<16xf32> to vector<16x1xf32>
    %31 = vector.broadcast %30 : vector<16x1xf32> to vector<16x128xf32>
    %32 = arith.subf %28, %31 : vector<16x128xf32>
    %33 = math.exp %32 : vector<16x128xf32>
    %cst_21 = arith.constant dense<0.000000e+00> : vector<16xf32>
    %34 = vector.multi_reduction <add>, %33, %cst_21 [1] : vector<16x128xf32> to vector<16xf32>
    %35 = vector.shape_cast %34 : vector<16xf32> to vector<16x1xf32>
    %36 = math.log %35 : vector<16x1xf32>
    %37 = arith.addf %30, %36 : vector<16x1xf32>
    %38 = vector.broadcast %37 : vector<16x1xf32> to vector<16x128xf32>
    %39 = arith.subf %22, %38 : vector<16x128xf32>
    %40 = vector.broadcast %23 : vector<16x1xi32> to vector<16x128xi32>
    %41 = arith.cmpi eq, %24, %40 : vector<16x128xi32>
    %42 = arith.extui %41 : vector<16x128xi1> to vector<16x128xi32>
    %43 = arith.sitofp %42 : vector<16x128xi32> to vector<16x128xf32>
    %44 = arith.mulf %43, %39 : vector<16x128xf32>
    %cst_22 = arith.constant dense<0.000000e+00> : vector<16xf32>
    %45 = vector.multi_reduction <add>, %44, %cst_22 [1] : vector<16x128xf32> to vector<16xf32>
    %46 = vector.shape_cast %45 : vector<16xf32> to vector<16x1xf32>
    %cst_23 = arith.constant 0.000000e+00 : f32
    %47 = vector.broadcast %cst_23 : f32 to vector<16x1xf32>
    %48 = arith.subf %47, %46 : vector<16x1xf32>
    %cst_24 = arith.constant 0.000000e+00 : f32
    %49 = vector.broadcast %cst_24 : f32 to vector<16x128xf32>
    %50 = arith.select %26, %39, %49 : vector<16x128xi1>, vector<16x128xf32>
    %cst_25 = arith.constant dense<0.000000e+00> : vector<16xf32>
    %51 = vector.multi_reduction <add>, %50, %cst_25 [1] : vector<16x128xf32> to vector<16xf32>
    %52 = vector.shape_cast %51 : vector<16xf32> to vector<16x1xf32>
    %cst_26 = arith.constant 0.000000e+00 : f32
    %53 = vector.broadcast %cst_26 : f32 to vector<16x1xf32>
    %54 = arith.subf %53, %52 : vector<16x1xf32>
    %cst_27 = arith.constant 2.000000e+00 : f32
    %55 = vector.broadcast %cst_27 : f32 to vector<16x1xf32>
    %56 = arith.divf %54, %55 : vector<16x1xf32>
    %cst_28 = arith.constant 0.899999976 : f32
    %57 = vector.broadcast %cst_28 : f32 to vector<16x1xf32>
    %58 = arith.mulf %57, %48 : vector<16x1xf32>
    %cst_29 = arith.constant 1.000000e-01 : f32
    %59 = vector.broadcast %cst_29 : f32 to vector<16x1xf32>
    %60 = arith.mulf %59, %56 : vector<16x1xf32>
    %61 = arith.addf %58, %60 : vector<16x1xf32>
    %c-100_i32 = arith.constant -100 : i32
    %62 = vector.broadcast %c-100_i32 : i32 to vector<16x1xi32>
    %63 = arith.cmpi ne, %23, %62 : vector<16x1xi32>
    %64 = arith.extui %63 : vector<16x1xi1> to vector<16x1xi32>
    %65 = arith.sitofp %64 : vector<16x1xi32> to vector<16x1xf32>
    %66 = arith.mulf %61, %65 : vector<16x1xf32>
    %c2_i32_30 = arith.constant 2 : i32
    %67 = vector.broadcast %c2_i32_30 : i32 to vector<16x128xi32>
    %68 = arith.cmpi eq, %24, %67 : vector<16x128xi32>
    %69 = vector.shape_cast %66 : vector<16x1xf32> to vector<16x1xf32>
    %70 = vector.broadcast %69 : vector<16x1xf32> to vector<16x128xf32>
    %71 = arith.select %68, %70, %22 : vector<16x128xi1>, vector<16x128xf32>
    %c0_31 = arith.constant 0 : index
    %c0_32 = arith.constant 0 : index
    %72 = vector.load %arg9[%c0_31, %c0_32] : memref<16x128xf32, #tpu.memory_space<vmem>>, vector<16x128xf32>
    tpu.vector_store %arg9[%c0_31, %c0_32], %71 {strides = array<i32>} : memref<16x128xf32, #tpu.memory_space<vmem>>, vector<16x128xf32>,
    return
  }
  func.func @transform_0(%arg0: i32) -> (i32, i32) {
    %c0_i32 = arith.constant 0 : i32
    %c0_i32_0 = arith.constant 0 : i32
    return %arg0, %c0_i32 : i32, i32
  }
  func.func @transform_1(%arg0: i32) -> (i32, i32) {
    %c0_i32 = arith.constant 0 : i32
    %c0_i32_0 = arith.constant 0 : i32
    return %arg0, %c0_i32 : i32, i32
  }
  func.func @transform_2(%arg0: i32) -> (i32, i32) {
    %c0_i32 = arith.constant 0 : i32
    %c0_i32_0 = arith.constant 0 : i32
    %c0_i32_1 = arith.constant 0 : i32
    return %c0_i32, %c0_i32_0 : i32, i32
  }
  func.func @transform_3(%arg0: i32) -> (i32, i32) {
    %c0_i32 = arith.constant 0 : i32
    %c0_i32_0 = arith.constant 0 : i32
    %c0_i32_1 = arith.constant 0 : i32
    return %c0_i32, %c0_i32_0 : i32, i32
  }
  func.func @transform_4(%arg0: i32) -> (i32, i32) {
    %c0_i32 = arith.constant 0 : i32
    %c0_i32_0 = arith.constant 0 : i32
    %c0_i32_1 = arith.constant 0 : i32
    return %c0_i32, %c0_i32_0 : i32, i32
  }
  func.func @transform_5(%arg0: i32) -> (i32, i32) {
    %c0_i32 = arith.constant 0 : i32
    %c0_i32_0 = arith.constant 0 : i32
    %c0_i32_1 = arith.constant 0 : i32
    return %c0_i32, %c0_i32_0 : i32, i32
  }
  func.func @transform_6(%arg0: i32) -> (i32, i32) {
    %c0_i32 = arith.constant 0 : i32
    %c0_i32_0 = arith.constant 0 : i32
    %c0_i32_1 = arith.constant 0 : i32
    return %c0_i32, %c0_i32_0 : i32, i32
  }
  func.func @transform_7(%arg0: i32) -> (i32, i32) {
    %c0_i32 = arith.constant 0 : i32
    %c0_i32_0 = arith.constant 0 : i32
    %c0_i32_1 = arith.constant 0 : i32
    return %c0_i32, %c0_i32_0 : i32, i32
  }
  func.func @transform_8(%arg0: i32) -> (i32, i32) {
    %c0_i32 = arith.constant 0 : i32
    %c0_i32_0 = arith.constant 0 : i32
    return %arg0, %c0_i32 : i32, i32
  }
}

</mosaic_0001>

<llo_original>
// kernel: tpu_custom_call.1
$region0: #{tpu_custom_call.1}
  #allocation0 [shape = 'u32[]', space=smem, size = 0x4, offset = 0x4, fixed_abs, tag = 'smem constant byte address 0x4 - core index']
  #allocation1 [shape = 'u32[144,128]{1,0:T(1,128)}', space=vmem, size = 0x12000, scoped, tag = 'internal scratch']
  %s0 = inlined_call_operand.hbm [shape: f32[16,32], index: 0, kind: input, shape index: {}]
  %s1 = inlined_call_operand.vmem [shape: s32[16,1], index: 1, kind: input, shape index: {}]
  %s2 = inlined_call_operand.hbm [shape: bf16[32,2048], index: 2, kind: input, shape index: {}]
  %s3 = inlined_call_operand.hbm [shape: f32[1,2048], index: 3, kind: input, shape index: {}]
  %s4 = inlined_call_operand.hbm [shape: bf16[2048,1024], index: 4, kind: input, shape index: {}]
  %s5 = inlined_call_operand.hbm [shape: f32[1,1024], index: 5, kind: input, shape index: {}]
  %s6 = inlined_call_operand.hbm [shape: bf16[1024,128], index: 6, kind: input, shape index: {}]
  %s7 = inlined_call_operand.hbm [shape: f32[1,128], index: 7, kind: input, shape index: {}]
  %s8 = inlined_call_operand.hbm [shape: f32[16,128], index: 8, kind: output, shape index: {}]
  %s9 = sld [smem:[#allocation0]]
  $region70: #{tpu_custom_call.1} parent=0
    _
  %s11 = ssub.s32 1, %s9
  %s12 = scalar_select 0, %s11, %s9
  $region1: #{tpu_custom_call.1} parent=0
    #allocation2 [shape = 'u8[8192]{0}', space=vmem, size = 0x2000, scoped, tag = 'input window, operand 0, single buffered']
    #allocation3 [shape = 's32[1]{0}', space=sflag, size = 0x4, scoped, tag = 'scoped memory for tpu_custom_call.1']
    #allocation4 [shape = 's32[1]{0}', space=sflag, size = 0x4, scoped, tag = 'scoped memory for tpu_custom_call.1']
    #allocation5 [shape = 'u8[131072]{0}', space=vmem, size = 0x20000, scoped, tag = 'input window, operand 2, single buffered']
    #allocation6 [shape = 's32[1]{0}', space=sflag, size = 0x4, scoped, tag = 'scoped memory for tpu_custom_call.1']
    #allocation7 [shape = 'u8[8192]{0}', space=vmem, size = 0x2000, scoped, tag = 'input window, operand 3, single buffered']
    #allocation8 [shape = 'u8[4194304]{0}', space=vmem, size = 0x400000, scoped, tag = 'input window, operand 4, single buffered']
    #allocation9 [shape = 's32[1]{0}', space=sflag, size = 0x4, scoped, tag = 'scoped memory for tpu_custom_call.1']
    #allocation10 [shape = 'u8[4096]{0}', space=vmem, size = 0x1000, scoped, tag = 'input window, operand 5, single buffered']
    #allocation11 [shape = 'u8[262144]{0}', space=vmem, size = 0x40000, scoped, tag = 'input window, operand 6, single buffered']
    #allocation12 [shape = 's32[1]{0}', space=sflag, size = 0x4, scoped, tag = 'scoped memory for tpu_custom_call.1']
    #allocation13 [shape = 'u8[512]{0}', space=vmem, size = 0x400, scoped, tag = 'input window, operand 7, single buffered']
    #allocation14 [shape = 'u8[8192]{0}', space=vmem, size = 0x2000, scoped, tag = 'output window, operand 0, single buffered']
    %13 = vsyncpa [#allocation3], 0
    %14 = vsyncpa [#allocation6], 0
    %15 = vsyncpa [#allocation9], 0
    %16 = vsyncpa [#allocation12], 0
    %17 = vsyncpa [#allocation4], 0
    // Predicated region
    $region2: #{tpu_custom_call.1} parent=1 // pred_check
      _
    $region3: #{tpu_custom_call.1} parent=1 // pred_check_branch
      %19 = sbr.rel (0) target = $region5
    $region4: #{tpu_custom_call.1} parent=1 // pred_region
      %s21 = ssub.s32 256, 256
      %22 = vsyncadd [#allocation3], %s21
      %s23 = sshll.u32 [#allocation2], 4
      %s24 = int_to_ptr.vmem [resolvable:$true] %s23
      %29 = dma.hbm_to_vmem [thread:$0]  %s0, 256, %s24, [#allocation3], 128, 128, 8
    $region5: #{tpu_custom_call.1} parent=1 // pred_fallthru
      _
    // Predicated region
    $region6: #{tpu_custom_call.1} parent=1 // pred_check
      _
    $region7: #{tpu_custom_call.1} parent=1 // pred_check_branch
      %31 = sbr.rel (0) target = $region9
    $region8: #{tpu_custom_call.1} parent=1 // pred_region
      _
    $region9: #{tpu_custom_call.1} parent=1 // pred_fallthru
      _
    // Predicated region
    $region10: #{tpu_custom_call.1} parent=1 // pred_check
      _
    $region11: #{tpu_custom_call.1} parent=1 // pred_check_branch
      %33 = sbr.rel (0) target = $region13
    $region12: #{tpu_custom_call.1} parent=1 // pred_region
      %s35 = ssub.s32 4096, 4096
      %36 = vsyncadd [#allocation6], %s35
      %s37 = sshll.u32 [#allocation5], 4
      %s38 = int_to_ptr.vmem [resolvable:$true] %s37
      %43 = dma.hbm_to_vmem [thread:$0]  %s2, 4096, %s38, [#allocation6], 1024, 1024, 64
    $region13: #{tpu_custom_call.1} parent=1 // pred_fallthru
      _
    // Predicated region
    $region14: #{tpu_custom_call.1} parent=1 // pred_check
      _
    $region15: #{tpu_custom_call.1} parent=1 // pred_check_branch
      %45 = sbr.rel (0) target = $region17
    $region16: #{tpu_custom_call.1} parent=1 // pred_region
      %s47 = ssub.s32 256, 256
      %48 = vsyncadd [#allocation6], %s47
      %s50 = sshll.u32 [#allocation7], 4
      %s51 = int_to_ptr.vmem [resolvable:$true] %s50
      %53 = dma.hbm_to_vmem [thread:$0]  %s3, 256, %s51, [#allocation6]
    $region17: #{tpu_custom_call.1} parent=1 // pred_fallthru
      _
    // Predicated region
    $region18: #{tpu_custom_call.1} parent=1 // pred_check
      _
    $region19: #{tpu_custom_call.1} parent=1 // pred_check_branch
      %55 = sbr.rel (0) target = $region21
    $region20: #{tpu_custom_call.1} parent=1 // pred_region
      %s57 = ssub.s32 131072, 131072
      %58 = vsyncadd [#allocation9], %s57
      %s59 = sshll.u32 [#allocation8], 4
      %s60 = int_to_ptr.vmem [resolvable:$true] %s59
      %65 = dma.hbm_to_vmem [thread:$0]  %s4, 131072, %s60, [#allocation9], 512, 512, 32
    $region21: #{tpu_custom_call.1} parent=1 // pred_fallthru
      _
    // Predicated region
    $region22: #{tpu_custom_call.1} parent=1 // pred_check
      _
    $region23: #{tpu_custom_call.1} parent=1 // pred_check_branch
      %67 = sbr.rel (0) target = $region25
    $region24: #{tpu_custom_call.1} parent=1 // pred_region
      %s69 = ssub.s32 128, 128
      %70 = vsyncadd [#allocation9], %s69
      %s72 = sshll.u32 [#allocation10], 4
      %s73 = int_to_ptr.vmem [resolvable:$true] %s72
      %75 = dma.hbm_to_vmem [thread:$0]  %s5, 128, %s73, [#allocation9]
    $region25: #{tpu_custom_call.1} parent=1 // pred_fallthru
      _
    // Predicated region
    $region26: #{tpu_custom_call.1} parent=1 // pred_check
      _
    $region27: #{tpu_custom_call.1} parent=1 // pred_check_branch
      %77 = sbr.rel (0) target = $region29
    $region28: #{tpu_custom_call.1} parent=1 // pred_region
      %s79 = ssub.s32 8192, 8192
      %80 = vsyncadd [#allocation12], %s79
      %s81 = sshll.u32 [#allocation11], 4
      %s82 = int_to_ptr.vmem [resolvable:$true] %s81
      %87 = dma.hbm_to_vmem [thread:$0]  %s6, 8192, %s82, [#allocation12], 64, 64, 4
    $region29: #{tpu_custom_call.1} parent=1 // pred_fallthru
      _
    // Predicated region
    $region30: #{tpu_custom_call.1} parent=1 // pred_check
      _
    $region31: #{tpu_custom_call.1} parent=1 // pred_check_branch
      %89 = sbr.rel (0) target = $region33
    $region32: #{tpu_custom_call.1} parent=1 // pred_region
      %s91 = ssub.s32 16, 16
      %92 = vsyncadd [#allocation12], %s91
      %s94 = sshll.u32 [#allocation13], 4
      %s95 = int_to_ptr.vmem [resolvable:$true] %s94
      %97 = dma.hbm_to_vmem [thread:$0]  %s7, 16, %s95, [#allocation12]
    $region33: #{tpu_custom_call.1} parent=1 // pred_fallthru
      _
    // Predicated region
    $region34: #{tpu_custom_call.1} parent=1 // pred_check
      _
    $region35: #{tpu_custom_call.1} parent=1 // pred_check_branch
      %99 = sbr.rel (0) target = $region37
    $region36: #{tpu_custom_call.1} parent=1 // pred_region
      %100 = dma.done [#allocation3], 256
    $region37: #{tpu_custom_call.1} parent=1 // pred_fallthru
      _
    // Predicated region
    $region38: #{tpu_custom_call.1} parent=1 // pred_check
      _
    $region39: #{tpu_custom_call.1} parent=1 // pred_check_branch
      %102 = sbr.rel (0) target = $region41
    $region40: #{tpu_custom_call.1} parent=1 // pred_region
      %103 = dma.done [#allocation6], 4096
    $region41: #{tpu_custom_call.1} parent=1 // pred_fallthru
      _
    // Predicated region
    $region42: #{tpu_custom_call.1} parent=1 // pred_check
      _
    $region43: #{tpu_custom_call.1} parent=1 // pred_check_branch
      %105 = sbr.rel (0) target = $region45
    $region44: #{tpu_custom_call.1} parent=1 // pred_region
      %106 = dma.done [#allocation6], 256
    $region45: #{tpu_custom_call.1} parent=1 // pred_fallthru
      _
    // Predicated region
    $region46: #{tpu_custom_call.1} parent=1 // pred_check
      _
    $region47: #{tpu_custom_call.1} parent=1 // pred_check_branch
      %108 = sbr.rel (0) target = $region49
    $region48: #{tpu_custom_call.1} parent=1 // pred_region
      %109 = dma.done [#allocation9], 131072
    $region49: #{tpu_custom_call.1} parent=1 // pred_fallthru
      _
    // Predicated region
    $region50: #{tpu_custom_call.1} parent=1 // pred_check
      _
    $region51: #{tpu_custom_call.1} parent=1 // pred_check_branch
      %111 = sbr.rel (0) target = $region53
    $region52: #{tpu_custom_call.1} parent=1 // pred_region
      %112 = dma.done [#allocation9], 128
    $region53: #{tpu_custom_call.1} parent=1 // pred_fallthru
      _
    // Predicated region
    $region54: #{tpu_custom_call.1} parent=1 // pred_check
      _
    $region55: #{tpu_custom_call.1} parent=1 // pred_check_branch
      %114 = sbr.rel (0) target = $region57
    $region56: #{tpu_custom_call.1} parent=1 // pred_region
      %115 = dma.done [#allocation12], 8192
    $region57: #{tpu_custom_call.1} parent=1 // pred_fallthru
      _
    // Predicated region
    $region58: #{tpu_custom_call.1} parent=1 // pred_check
      _
    $region59: #{tpu_custom_call.1} parent=1 // pred_check_branch
      %117 = sbr.rel (0) target = $region61
    $region60: #{tpu_custom_call.1} parent=1 // pred_region
      %118 = dma.done [#allocation12], 16
    $region61: #{tpu_custom_call.1} parent=1 // pred_fallthru
      _
    %v120 = vld [vmem:[#allocation2] sm:$0xff]
    %v121 = vld [vmem:[#allocation2 + $0x8] sm:$0xff]
    %v122 = vpack.c.bf16 %v121, %v120
    %v123 = vld [vmem:[#allocation5] sm:$0xff]
    %v124 = vld [vmem:[#allocation5 + $0x8] sm:$0xff]
    %v125 = vld [vmem:[#allocation5 + $0x10] sm:$0xff]
    %v126 = vld [vmem:[#allocation5 + $0x18] sm:$0xff]
    %v127 = vld [vmem:[#allocation5 + $0x20] sm:$0xff]
    %v128 = vld [vmem:[#allocation5 + $0x28] sm:$0xff]
    %v129 = vld [vmem:[#allocation5 + $0x30] sm:$0xff]
    %v130 = vld [vmem:[#allocation5 + $0x38] sm:$0xff]
    %v131 = vld [vmem:[#allocation5 + $0x40] sm:$0xff]
    %v132 = vld [vmem:[#allocation5 + $0x48] sm:$0xff]
    %v133 = vld [vmem:[#allocation5 + $0x50] sm:$0xff]
    %v134 = vld [vmem:[#allocation5 + $0x58] sm:$0xff]
    %v135 = vld [vmem:[#allocation5 + $0x60] sm:$0xff]
    %v136 = vld [vmem:[#allocation5 + $0x68] sm:$0xff]
    %v137 = vld [vmem:[#allocation5 + $0x70] sm:$0xff]
    %v138 = vld [vmem:[#allocation5 + $0x78] sm:$0xff]
    %v139 = vld [vmem:[#allocation5 + $0x80] sm:$0xff]
    %v140 = vld [vmem:[#allocation5 + $0x88] sm:$0xff]
    %v141 = vld [vmem:[#allocation5 + $0x90] sm:$0xff]
    %v142 = vld [vmem:[#allocation5 + $0x98] sm:$0xff]
    %v143 = vld [vmem:[#allocation5 + $0xa0] sm:$0xff]
    %v144 = vld [vmem:[#allocation5 + $0xa8] sm:$0xff]
    %v145 = vld [vmem:[#allocation5 + $0xb0] sm:$0xff]
    %v146 = vld [vmem:[#allocation5 + $0xb8] sm:$0xff]
    %v147 = vld [vmem:[#allocation5 + $0xc0] sm:$0xff]
    %v148 = vld [vmem:[#allocation5 + $0xc8] sm:$0xff]
    %v149 = vld [vmem:[#allocation5 + $0xd0] sm:$0xff]
    %v150 = vld [vmem:[#allocation5 + $0xd8] sm:$0xff]
    %v151 = vld [vmem:[#allocation5 + $0xe0] sm:$0xff]
    %v152 = vld [vmem:[#allocation5 + $0xe8] sm:$0xff]
    %v153 = vld [vmem:[#allocation5 + $0xf0] sm:$0xff]
    %v154 = vld [vmem:[#allocation5 + $0xf8] sm:$0xff]
    %v155 = vld [vmem:[#allocation7] sm:$0xff]
    %v156 = vld [vmem:[#allocation7 + $0x8] sm:$0xff]
    %v159 = vlaneseq
    %v160 = vshrl.u32 %v159, 7
    %v161 = vsub.s32 0, %v160
    %v162 = vrot.slane %v155, %v161
    %v163 = vlaneseq
    %v164 = vshrl.u32 %v163, 7
    %v165 = vsub.s32 1, %v164
    %v166 = vrot.slane %v155, %v165
    %v167 = vlaneseq
    %v168 = vshrl.u32 %v167, 7
    %v169 = vsub.s32 2, %v168
    %v170 = vrot.slane %v155, %v169
    %v171 = vlaneseq
    %v172 = vshrl.u32 %v171, 7
    %v173 = vsub.s32 3, %v172
    %v174 = vrot.slane %v155, %v173
    %v175 = vlaneseq
    %v176 = vshrl.u32 %v175, 7
    %v177 = vsub.s32 4, %v176
    %v178 = vrot.slane %v155, %v177
    %v179 = vlaneseq
    %v180 = vshrl.u32 %v179, 7
    %v181 = vsub.s32 5, %v180
    %v182 = vrot.slane %v155, %v181
    %v183 = vlaneseq
    %v184 = vshrl.u32 %v183, 7
    %v185 = vsub.s32 6, %v184
    %v186 = vrot.slane %v155, %v185
    %v187 = vlaneseq
    %v188 = vshrl.u32 %v187, 7
    %v189 = vsub.s32 7, %v188
    %v190 = vrot.slane %v155, %v189
    %v191 = vlaneseq
    %v192 = vshrl.u32 %v191, 7
    %v193 = vsub.s32 0, %v192
    %v194 = vrot.slane %v156, %v193
    %v195 = vlaneseq
    %v196 = vshrl.u32 %v195, 7
    %v197 = vsub.s32 1, %v196
    %v198 = vrot.slane %v156, %v197
    %v199 = vlaneseq
    %v200 = vshrl.u32 %v199, 7
    %v201 = vsub.s32 2, %v200
    %v202 = vrot.slane %v156, %v201
    %v203 = vlaneseq
    %v204 = vshrl.u32 %v203, 7
    %v205 = vsub.s32 3, %v204
    %v206 = vrot.slane %v156, %v205
    %v207 = vlaneseq
    %v208 = vshrl.u32 %v207, 7
    %v209 = vsub.s32 4, %v208
    %v210 = vrot.slane %v156, %v209
    %v211 = vlaneseq
    %v212 = vshrl.u32 %v211, 7
    %v213 = vsub.s32 5, %v212
    %v214 = vrot.slane %v156, %v213
    %v215 = vlaneseq
    %v216 = vshrl.u32 %v215, 7
    %v217 = vsub.s32 6, %v216
    %v218 = vrot.slane %v156, %v217
    %v219 = vlaneseq
    %v220 = vshrl.u32 %v219, 7
    %v221 = vsub.s32 7, %v220
    %v222 = vrot.slane %v156, %v221
    %v271 = vunpack.c.l.b16 %v123
    %v272 = vunpack.c.h.b16 %v123
    %v273 = vunpack.c.l.b16 %v124
    %v274 = vunpack.c.h.b16 %v124
    %v275 = vunpack.c.l.b16 %v125
    %v276 = vunpack.c.h.b16 %v125
    %v277 = vunpack.c.l.b16 %v126
    %v278 = vunpack.c.h.b16 %v126
    %v279 = vunpack.c.l.b16 %v127
    %v280 = vunpack.c.h.b16 %v127
    %v281 = vunpack.c.l.b16 %v128
    %v282 = vunpack.c.h.b16 %v128
    %v283 = vunpack.c.l.b16 %v129
    %v284 = vunpack.c.h.b16 %v129
    %v285 = vunpack.c.l.b16 %v130
    %v286 = vunpack.c.h.b16 %v130
    %v287 = vunpack.c.l.b16 %v131
    %v288 = vunpack.c.h.b16 %v131
    %v289 = vunpack.c.l.b16 %v132
    %v290 = vunpack.c.h.b16 %v132
    %v291 = vunpack.c.l.b16 %v133
    %v292 = vunpack.c.h.b16 %v133
    %v293 = vunpack.c.l.b16 %v134
    %v294 = vunpack.c.h.b16 %v134
    %v295 = vunpack.c.l.b16 %v135
    %v296 = vunpack.c.h.b16 %v135
    %v297 = vunpack.c.l.b16 %v136
    %v298 = vunpack.c.h.b16 %v136
    %v299 = vunpack.c.l.b16 %v137
    %v300 = vunpack.c.h.b16 %v137
    %v301 = vunpack.c.l.b16 %v138
    %v302 = vunpack.c.h.b16 %v138
    %v303 = vunpack.c.l.b16 %v139
    %v304 = vunpack.c.h.b16 %v139
    %v305 = vunpack.c.l.b16 %v140
    %v306 = vunpack.c.h.b16 %v140
    %v307 = vunpack.c.l.b16 %v141
    %v308 = vunpack.c.h.b16 %v141
    %v309 = vunpack.c.l.b16 %v142
    %v310 = vunpack.c.h.b16 %v142
    %v311 = vunpack.c.l.b16 %v143
    %v312 = vunpack.c.h.b16 %v143
    %v313 = vunpack.c.l.b16 %v144
    %v314 = vunpack.c.h.b16 %v144
    %v315 = vunpack.c.l.b16 %v145
    %v316 = vunpack.c.h.b16 %v145
    %v317 = vunpack.c.l.b16 %v146
    %v318 = vunpack.c.h.b16 %v146
    %v319 = vunpack.c.l.b16 %v147
    %v320 = vunpack.c.h.b16 %v147
    %v321 = vunpack.c.l.b16 %v148
    %v322 = vunpack.c.h.b16 %v148
    %v323 = vunpack.c.l.b16 %v149
    %v324 = vunpack.c.h.b16 %v149
    %v325 = vunpack.c.l.b16 %v150
    %v326 = vunpack.c.h.b16 %v150
    %v327 = vunpack.c.l.b16 %v151
    %v328 = vunpack.c.h.b16 %v151
    %v329 = vunpack.c.l.b16 %v152
    %v330 = vunpack.c.h.b16 %v152
    %v331 = vunpack.c.l.b16 %v153
    %v332 = vunpack.c.h.b16 %v153
    %v333 = vunpack.c.l.b16 %v154
    %v334 = vunpack.c.h.b16 %v154
    %v335 = vpack.c.b16 %v287, %v271
    %v336 = vpack.c.b16 %v288, %v272
    %v337 = vpack.c.b16 %v289, %v273
    %v338 = vpack.c.b16 %v290, %v274
    %v339 = vpack.c.b16 %v291, %v275
    %v340 = vpack.c.b16 %v292, %v276
    %v341 = vpack.c.b16 %v293, %v277
    %v342 = vpack.c.b16 %v294, %v278
    %v343 = vpack.c.b16 %v295, %v279
    %v344 = vpack.c.b16 %v296, %v280
    %v345 = vpack.c.b16 %v297, %v281
    %v346 = vpack.c.b16 %v298, %v282
    %v347 = vpack.c.b16 %v299, %v283
    %v348 = vpack.c.b16 %v300, %v284
    %v349 = vpack.c.b16 %v301, %v285
    %v350 = vpack.c.b16 %v302, %v286
    %v351 = vpack.c.b16 %v319, %v303
    %v352 = vpack.c.b16 %v320, %v304
    %v353 = vpack.c.b16 %v321, %v305
    %v354 = vpack.c.b16 %v322, %v306
    %v355 = vpack.c.b16 %v323, %v307
    %v356 = vpack.c.b16 %v324, %v308
    %v357 = vpack.c.b16 %v325, %v309
    %v358 = vpack.c.b16 %v326, %v310
    %v359 = vpack.c.b16 %v327, %v311
    %v360 = vpack.c.b16 %v328, %v312
    %v361 = vpack.c.b16 %v329, %v313
    %v362 = vpack.c.b16 %v330, %v314
    %v363 = vpack.c.b16 %v331, %v315
    %v364 = vpack.c.b16 %v332, %v316
    %v365 = vpack.c.b16 %v333, %v317
    %v366 = vpack.c.b16 %v334, %v318
    %vm399 = vcmask 261120
    %v401 = vsel %vm399, %v122, 0
    %403 = vmatprep.subr.bf16.mxu0 %v336
    %404 = vmatpush1.bf16.msra.mxu0 %v335
    %405 = vmatprep.subr.bf16.mxu0 %v352
    %406 = vmatpush1.bf16.msra.mxu0 %v351
    %407 = vmatprep.subr.bf16.mxu0 0
    %408 = vmatpush1.bf16.msra.mxu0 0
    %409 = vmatprep.subr.bf16.mxu0 0
    %410 = vmatpush1.bf16.msra.mxu0 0
    %411 = vmatprep.subr.bf16.mxu0 0
    %412 = vmatpush1.bf16.msra.mxu0 0
    %413 = vmatprep.subr.bf16.mxu0 0
    %414 = vmatpush1.bf16.msra.mxu0 0
    %415 = vmatprep.subr.bf16.mxu0 0
    %416 = vmatpush1.bf16.msra.mxu0 0
    %417 = vmatprep.subr.bf16.mxu0 0
    %418 = vmatpush1.bf16.msra.mxu0 0
    %419 = vmatprep.subr.bf16.mxu0 0
    %420 = vmatpush1.bf16.msra.mxu0 0
    %421 = vmatprep.subr.bf16.mxu0 0
    %422 = vmatpush1.bf16.msra.mxu0 0
    %423 = vmatprep.subr.bf16.mxu0 0
    %424 = vmatpush1.bf16.msra.mxu0 0
    %425 = vmatprep.subr.bf16.mxu0 0
    %426 = vmatpush1.bf16.msra.mxu0 0
    %427 = vmatprep.subr.bf16.mxu0 0
    %428 = vmatpush1.bf16.msra.mxu0 0
    %429 = vmatprep.subr.bf16.mxu0 0
    %430 = vmatpush1.bf16.msra.mxu0 0
    %431 = vmatprep.subr.bf16.mxu0 0
    %432 = vmatpush1.bf16.msra.mxu0 0
    %433 = vmatprep.subr.bf16.mxu0 0
    %434 = vmatpush1.bf16.msra.mxu0 0
    %435 = vmatprep.mubr.bf16.mxu0 0
    %436 = vmatmul.mubr.bf16.gmra.mrb[0].mxu0 %v401
    %v437 = vpop.f32.mrb[0].mxu0
    %v438 = vadd.f32 %v162, %v437
    %v439 = vpop.f32.mrb[0].mxu0
    %v440 = vadd.f32 %v166, %v439
    %v441 = vpop.f32.mrb[0].mxu0
    %v442 = vadd.f32 %v162, %v441
    %v443 = vpop.f32.mrb[0].mxu0
    %v444 = vadd.f32 %v166, %v443
    %445 = vdwg.mxu0
    %446 = vmatprep.subr.bf16.mxu0 %v338
    %447 = vmatpush1.bf16.msra.mxu0 %v337
    %448 = vmatprep.subr.bf16.mxu0 %v354
    %449 = vmatpush1.bf16.msra.mxu0 %v353
    %450 = vmatprep.subr.bf16.mxu0 0
    %451 = vmatpush1.bf16.msra.mxu0 0
    %452 = vmatprep.subr.bf16.mxu0 0
    %453 = vmatpush1.bf16.msra.mxu0 0
    %454 = vmatprep.subr.bf16.mxu0 0
    %455 = vmatpush1.bf16.msra.mxu0 0
    %456 = vmatprep.subr.bf16.mxu0 0
    %457 = vmatpush1.bf16.msra.mxu0 0
    %458 = vmatprep.subr.bf16.mxu0 0
    %459 = vmatpush1.bf16.msra.mxu0 0
    %460 = vmatprep.subr.bf16.mxu0 0
    %461 = vmatpush1.bf16.msra.mxu0 0
    %462 = vmatprep.subr.bf16.mxu0 0
    %463 = vmatpush1.bf16.msra.mxu0 0
    %464 = vmatprep.subr.bf16.mxu0 0
    %465 = vmatpush1.bf16.msra.mxu0 0
    %466 = vmatprep.subr.bf16.mxu0 0
    %467 = vmatpush1.bf16.msra.mxu0 0
    %468 = vmatprep.subr.bf16.mxu0 0
    %469 = vmatpush1.bf16.msra.mxu0 0
    %470 = vmatprep.subr.bf16.mxu0 0
    %471 = vmatpush1.bf16.msra.mxu0 0
    %472 = vmatprep.subr.bf16.mxu0 0
    %473 = vmatpush1.bf16.msra.mxu0 0
    %474 = vmatprep.subr.bf16.mxu0 0
    %475 = vmatpush1.bf16.msra.mxu0 0
    %476 = vmatprep.subr.bf16.mxu0 0
    %477 = vmatpush1.bf16.msra.mxu0 0
    %478 = vmatprep.mubr.bf16.mxu0 0
    %479 = vmatmul.mubr.bf16.gmra.mrb[0].mxu0 %v401
    %v480 = vpop.f32.mrb[0].mxu0
    %v481 = vadd.f32 %v170, %v480
    %v482 = vpop.f32.mrb[0].mxu0
    %v483 = vadd.f32 %v174, %v482
    %v484 = vpop.f32.mrb[0].mxu0
    %v485 = vadd.f32 %v170, %v484
    %v486 = vpop.f32.mrb[0].mxu0
    %v487 = vadd.f32 %v174, %v486
    %488 = vdwg.mxu0
    %489 = vmatprep.subr.bf16.mxu0 %v340
    %490 = vmatpush1.bf16.msra.mxu0 %v339
    %491 = vmatprep.subr.bf16.mxu0 %v356
    %492 = vmatpush1.bf16.msra.mxu0 %v355
    %493 = vmatprep.subr.bf16.mxu0 0
    %494 = vmatpush1.bf16.msra.mxu0 0
    %495 = vmatprep.subr.bf16.mxu0 0
    %496 = vmatpush1.bf16.msra.mxu0 0
    %497 = vmatprep.subr.bf16.mxu0 0
    %498 = vmatpush1.bf16.msra.mxu0 0
    %499 = vmatprep.subr.bf16.mxu0 0
    %500 = vmatpush1.bf16.msra.mxu0 0
    %501 = vmatprep.subr.bf16.mxu0 0
    %502 = vmatpush1.bf16.msra.mxu0 0
    %503 = vmatprep.subr.bf16.mxu0 0
    %504 = vmatpush1.bf16.msra.mxu0 0
    %505 = vmatprep.subr.bf16.mxu0 0
    %506 = vmatpush1.bf16.msra.mxu0 0
    %507 = vmatprep.subr.bf16.mxu0 0
    %508 = vmatpush1.bf16.msra.mxu0 0
    %509 = vmatprep.subr.bf16.mxu0 0
    %510 = vmatpush1.bf16.msra.mxu0 0
    %511 = vmatprep.subr.bf16.mxu0 0
    %512 = vmatpush1.bf16.msra.mxu0 0
    %513 = vmatprep.subr.bf16.mxu0 0
    %514 = vmatpush1.bf16.msra.mxu0 0
    %515 = vmatprep.subr.bf16.mxu0 0
    %516 = vmatpush1.bf16.msra.mxu0 0
    %517 = vmatprep.subr.bf16.mxu0 0
    %518 = vmatpush1.bf16.msra.mxu0 0
    %519 = vmatprep.subr.bf16.mxu0 0
    %520 = vmatpush1.bf16.msra.mxu0 0
    %521 = vmatprep.mubr.bf16.mxu0 0
    %522 = vmatmul.mubr.bf16.gmra.mrb[0].mxu0 %v401
    %v523 = vpop.f32.mrb[0].mxu0
    %v524 = vadd.f32 %v178, %v523
    %v525 = vpop.f32.mrb[0].mxu0
    %v526 = vadd.f32 %v182, %v525
    %v527 = vpop.f32.mrb[0].mxu0
    %v528 = vadd.f32 %v178, %v527
    %v529 = vpop.f32.mrb[0].mxu0
    %v530 = vadd.f32 %v182, %v529
    %531 = vdwg.mxu0
    %532 = vmatprep.subr.bf16.mxu0 %v342
    %533 = vmatpush1.bf16.msra.mxu0 %v341
    %534 = vmatprep.subr.bf16.mxu0 %v358
    %535 = vmatpush1.bf16.msra.mxu0 %v357
    %536 = vmatprep.subr.bf16.mxu0 0
    %537 = vmatpush1.bf16.msra.mxu0 0
    %538 = vmatprep.subr.bf16.mxu0 0
    %539 = vmatpush1.bf16.msra.mxu0 0
    %540 = vmatprep.subr.bf16.mxu0 0
    %541 = vmatpush1.bf16.msra.mxu0 0
    %542 = vmatprep.subr.bf16.mxu0 0
    %543 = vmatpush1.bf16.msra.mxu0 0
    %544 = vmatprep.subr.bf16.mxu0 0
    %545 = vmatpush1.bf16.msra.mxu0 0
    %546 = vmatprep.subr.bf16.mxu0 0
    %547 = vmatpush1.bf16.msra.mxu0 0
    %548 = vmatprep.subr.bf16.mxu0 0
    %549 = vmatpush1.bf16.msra.mxu0 0
    %550 = vmatprep.subr.bf16.mxu0 0
    %551 = vmatpush1.bf16.msra.mxu0 0
    %552 = vmatprep.subr.bf16.mxu0 0
    %553 = vmatpush1.bf16.msra.mxu0 0
    %554 = vmatprep.subr.bf16.mxu0 0
    %555 = vmatpush1.bf16.msra.mxu0 0
    %556 = vmatprep.subr.bf16.mxu0 0
    %557 = vmatpush1.bf16.msra.mxu0 0
    %558 = vmatprep.subr.bf16.mxu0 0
    %559 = vmatpush1.bf16.msra.mxu0 0
    %560 = vmatprep.subr.bf16.mxu0 0
    %561 = vmatpush1.bf16.msra.mxu0 0
    %562 = vmatprep.subr.bf16.mxu0 0
    %563 = vmatpush1.bf16.msra.mxu0 0
    %564 = vmatprep.mubr.bf16.mxu0 0
    %565 = vmatmul.mubr.bf16.gmra.mrb[0].mxu0 %v401
    %v566 = vpop.f32.mrb[0].mxu0
    %v567 = vadd.f32 %v186, %v566
    %v568 = vpop.f32.mrb[0].mxu0
    %v569 = vadd.f32 %v190, %v568
    %v570 = vpop.f32.mrb[0].mxu0
    %v571 = vadd.f32 %v186, %v570
    %v572 = vpop.f32.mrb[0].mxu0
    %v573 = vadd.f32 %v190, %v572
    %574 = vdwg.mxu0
    %575 = vmatprep.subr.bf16.mxu0 %v344
    %576 = vmatpush1.bf16.msra.mxu0 %v343
    %577 = vmatprep.subr.bf16.mxu0 %v360
    %578 = vmatpush1.bf16.msra.mxu0 %v359
    %579 = vmatprep.subr.bf16.mxu0 0
    %580 = vmatpush1.bf16.msra.mxu0 0
    %581 = vmatprep.subr.bf16.mxu0 0
    %582 = vmatpush1.bf16.msra.mxu0 0
    %583 = vmatprep.subr.bf16.mxu0 0
    %584 = vmatpush1.bf16.msra.mxu0 0
    %585 = vmatprep.subr.bf16.mxu0 0
    %586 = vmatpush1.bf16.msra.mxu0 0
    %587 = vmatprep.subr.bf16.mxu0 0
    %588 = vmatpush1.bf16.msra.mxu0 0
    %589 = vmatprep.subr.bf16.mxu0 0
    %590 = vmatpush1.bf16.msra.mxu0 0
    %591 = vmatprep.subr.bf16.mxu0 0
    %592 = vmatpush1.bf16.msra.mxu0 0
    %593 = vmatprep.subr.bf16.mxu0 0
    %594 = vmatpush1.bf16.msra.mxu0 0
    %595 = vmatprep.subr.bf16.mxu0 0
    %596 = vmatpush1.bf16.msra.mxu0 0
    %597 = vmatprep.subr.bf16.mxu0 0
    %598 = vmatpush1.bf16.msra.mxu0 0
    %599 = vmatprep.subr.bf16.mxu0 0
    %600 = vmatpush1.bf16.msra.mxu0 0
    %601 = vmatprep.subr.bf16.mxu0 0
    %602 = vmatpush1.bf16.msra.mxu0 0
    %603 = vmatprep.subr.bf16.mxu0 0
    %604 = vmatpush1.bf16.msra.mxu0 0
    %605 = vmatprep.subr.bf16.mxu0 0
    %606 = vmatpush1.bf16.msra.mxu0 0
    %607 = vmatprep.mubr.bf16.mxu0 0
    %608 = vmatmul.mubr.bf16.gmra.mrb[0].mxu0 %v401
    %v609 = vpop.f32.mrb[0].mxu0
    %v610 = vadd.f32 %v194, %v609
    %v611 = vpop.f32.mrb[0].mxu0
    %v612 = vadd.f32 %v198, %v611
    %v613 = vpop.f32.mrb[0].mxu0
    %v614 = vadd.f32 %v194, %v613
    %v615 = vpop.f32.mrb[0].mxu0
    %v616 = vadd.f32 %v198, %v615
    %617 = vdwg.mxu0
    %618 = vmatprep.subr.bf16.mxu0 %v346
    %619 = vmatpush1.bf16.msra.mxu0 %v345
    %620 = vmatprep.subr.bf16.mxu0 %v362
    %621 = vmatpush1.bf16.msra.mxu0 %v361
    %622 = vmatprep.subr.bf16.mxu0 0
    %623 = vmatpush1.bf16.msra.mxu0 0
    %624 = vmatprep.subr.bf16.mxu0 0
    %625 = vmatpush1.bf16.msra.mxu0 0
    %626 = vmatprep.subr.bf16.mxu0 0
    %627 = vmatpush1.bf16.msra.mxu0 0
    %628 = vmatprep.subr.bf16.mxu0 0
    %629 = vmatpush1.bf16.msra.mxu0 0
    %630 = vmatprep.subr.bf16.mxu0 0
    %631 = vmatpush1.bf16.msra.mxu0 0
    %632 = vmatprep.subr.bf16.mxu0 0
    %633 = vmatpush1.bf16.msra.mxu0 0
    %634 = vmatprep.subr.bf16.mxu0 0
    %635 = vmatpush1.bf16.msra.mxu0 0
    %636 = vmatprep.subr.bf16.mxu0 0
    %637 = vmatpush1.bf16.msra.mxu0 0
    %638 = vmatprep.subr.bf16.mxu0 0
    %639 = vmatpush1.bf16.msra.mxu0 0
    %640 = vmatprep.subr.bf16.mxu0 0
    %641 = vmatpush1.bf16.msra.mxu0 0
    %642 = vmatprep.subr.bf16.mxu0 0
    %643 = vmatpush1.bf16.msra.mxu0 0
    %644 = vmatprep.subr.bf16.mxu0 0
    %645 = vmatpush1.bf16.msra.mxu0 0
    %646 = vmatprep.subr.bf16.mxu0 0
    %647 = vmatpush1.bf16.msra.mxu0 0
    %648 = vmatprep.subr.bf16.mxu0 0
    %649 = vmatpush1.bf16.msra.mxu0 0
    %650 = vmatprep.mubr.bf16.mxu0 0
    %651 = vmatmul.mubr.bf16.gmra.mrb[0].mxu0 %v401
    %v652 = vpop.f32.mrb[0].mxu0
    %v653 = vadd.f32 %v202, %v652
    %v654 = vpop.f32.mrb[0].mxu0
    %v655 = vadd.f32 %v206, %v654
    %v656 = vpop.f32.mrb[0].mxu0
    %v657 = vadd.f32 %v202, %v656
    %v658 = vpop.f32.mrb[0].mxu0
    %v659 = vadd.f32 %v206, %v658
    %660 = vdwg.mxu0
    %661 = vmatprep.subr.bf16.mxu0 %v348
    %662 = vmatpush1.bf16.msra.mxu0 %v347
    %663 = vmatprep.subr.bf16.mxu0 %v364
    %664 = vmatpush1.bf16.msra.mxu0 %v363
    %665 = vmatprep.subr.bf16.mxu0 0
    %666 = vmatpush1.bf16.msra.mxu0 0
    %667 = vmatprep.subr.bf16.mxu0 0
    %668 = vmatpush1.bf16.msra.mxu0 0
    %669 = vmatprep.subr.bf16.mxu0 0
    %670 = vmatpush1.bf16.msra.mxu0 0
    %671 = vmatprep.subr.bf16.mxu0 0
    %672 = vmatpush1.bf16.msra.mxu0 0
    %673 = vmatprep.subr.bf16.mxu0 0
    %674 = vmatpush1.bf16.msra.mxu0 0
    %675 = vmatprep.subr.bf16.mxu0 0
    %676 = vmatpush1.bf16.msra.mxu0 0
    %677 = vmatprep.subr.bf16.mxu0 0
    %678 = vmatpush1.bf16.msra.mxu0 0
    %679 = vmatprep.subr.bf16.mxu0 0
    %680 = vmatpush1.bf16.msra.mxu0 0
    %681 = vmatprep.subr.bf16.mxu0 0
    %682 = vmatpush1.bf16.msra.mxu0 0
    %683 = vmatprep.subr.bf16.mxu0 0
    %684 = vmatpush1.bf16.msra.mxu0 0
    %685 = vmatprep.subr.bf16.mxu0 0
    %686 = vmatpush1.bf16.msra.mxu0 0
    %687 = vmatprep.subr.bf16.mxu0 0
    %688 = vmatpush1.bf16.msra.mxu0 0
    %689 = vmatprep.subr.bf16.mxu0 0
    %690 = vmatpush1.bf16.msra.mxu0 0
    %691 = vmatprep.subr.bf16.mxu0 0
    %692 = vmatpush1.bf16.msra.mxu0 0
    %693 = vmatprep.mubr.bf16.mxu0 0
    %694 = vmatmul.mubr.bf16.gmra.mrb[0].mxu0 %v401
    %v695 = vpop.f32.mrb[0].mxu0
    %v696 = vadd.f32 %v210, %v695
    %v697 = vpop.f32.mrb[0].mxu0
    %v698 = vadd.f32 %v214, %v697
    %v699 = vpop.f32.mrb[0].mxu0
    %v700 = vadd.f32 %v210, %v699
    %v701 = vpop.f32.mrb[0].mxu0
    %v702 = vadd.f32 %v214, %v701
    %703 = vdwg.mxu0
    %704 = vmatprep.subr.bf16.mxu0 %v350
    %705 = vmatpush1.bf16.msra.mxu0 %v349
    %706 = vmatprep.subr.bf16.mxu0 %v366
    %707 = vmatpush1.bf16.msra.mxu0 %v365
    %708 = vmatprep.subr.bf16.mxu0 0
    %709 = vmatpush1.bf16.msra.mxu0 0
    %710 = vmatprep.subr.bf16.mxu0 0
    %711 = vmatpush1.bf16.msra.mxu0 0
    %712 = vmatprep.subr.bf16.mxu0 0
    %713 = vmatpush1.bf16.msra.mxu0 0
    %714 = vmatprep.subr.bf16.mxu0 0
    %715 = vmatpush1.bf16.msra.mxu0 0
    %716 = vmatprep.subr.bf16.mxu0 0
    %717 = vmatpush1.bf16.msra.mxu0 0
    %718 = vmatprep.subr.bf16.mxu0 0
    %719 = vmatpush1.bf16.msra.mxu0 0
    %720 = vmatprep.subr.bf16.mxu0 0
    %721 = vmatpush1.bf16.msra.mxu0 0
    %722 = vmatprep.subr.bf16.mxu0 0
    %723 = vmatpush1.bf16.msra.mxu0 0
    %724 = vmatprep.subr.bf16.mxu0 0
    %725 = vmatpush1.bf16.msra.mxu0 0
    %726 = vmatprep.subr.bf16.mxu0 0
    %727 = vmatpush1.bf16.msra.mxu0 0
    %728 = vmatprep.subr.bf16.mxu0 0
    %729 = vmatpush1.bf16.msra.mxu0 0
    %730 = vmatprep.subr.bf16.mxu0 0
    %731 = vmatpush1.bf16.msra.mxu0 0
    %732 = vmatprep.subr.bf16.mxu0 0
    %733 = vmatpush1.bf16.msra.mxu0 0
    %734 = vmatprep.subr.bf16.mxu0 0
    %735 = vmatpush1.bf16.msra.mxu0 0
    %736 = vmatprep.mubr.bf16.mxu0 0
    %737 = vmatmul.mubr.bf16.gmra.mrb[0].mxu0 %v401
    %v738 = vpop.f32.mrb[0].mxu0
    %v739 = vadd.f32 %v218, %v738
    %v740 = vpop.f32.mrb[0].mxu0
    %v741 = vadd.f32 %v222, %v740
    %v742 = vpop.f32.mrb[0].mxu0
    %v743 = vadd.f32 %v218, %v742
    %v744 = vpop.f32.mrb[0].mxu0
    %v745 = vadd.f32 %v222, %v744
    %746 = vdwg.mxu0
    %v747 = vmax.f32 %v438, 0.0
    %v748 = vmax.f32 %v440, 0.0
    %v749 = vmax.f32 %v481, 0.0
    %v750 = vmax.f32 %v483, 0.0
    %v751 = vmax.f32 %v524, 0.0
    %v752 = vmax.f32 %v526, 0.0
    %v753 = vmax.f32 %v567, 0.0
    %v754 = vmax.f32 %v569, 0.0
    %v755 = vmax.f32 %v610, 0.0
    %v756 = vmax.f32 %v612, 0.0
    %v757 = vmax.f32 %v653, 0.0
    %v758 = vmax.f32 %v655, 0.0
    %v759 = vmax.f32 %v696, 0.0
    %v760 = vmax.f32 %v698, 0.0
    %v761 = vmax.f32 %v739, 0.0
    %v762 = vmax.f32 %v741, 0.0
    %v763 = vmax.f32 %v442, 0.0
    %v764 = vmax.f32 %v444, 0.0
    %v765 = vmax.f32 %v485, 0.0
    %v766 = vmax.f32 %v487, 0.0
    %v767 = vmax.f32 %v528, 0.0
    %v768 = vmax.f32 %v530, 0.0
    %v769 = vmax.f32 %v571, 0.0
    %v770 = vmax.f32 %v573, 0.0
    %v771 = vmax.f32 %v614, 0.0
    %v772 = vmax.f32 %v616, 0.0
    %v773 = vmax.f32 %v657, 0.0
    %v774 = vmax.f32 %v659, 0.0
    %v775 = vmax.f32 %v700, 0.0
    %v776 = vmax.f32 %v702, 0.0
    %v777 = vmax.f32 %v743, 0.0
    %v778 = vmax.f32 %v745, 0.0
    %v779 = vpack.c.bf16 %v763, %v747
    %v780 = vpack.c.bf16 %v764, %v748
    %v781 = vpack.c.bf16 %v765, %v749
    %v782 = vpack.c.bf16 %v766, %v750
    %v783 = vpack.c.bf16 %v767, %v751
    %v784 = vpack.c.bf16 %v768, %v752
    %v785 = vpack.c.bf16 %v769, %v753
    %v786 = vpack.c.bf16 %v770, %v754
    %v787 = vpack.c.bf16 %v771, %v755
    %v788 = vpack.c.bf16 %v772, %v756
    %v789 = vpack.c.bf16 %v773, %v757
    %v790 = vpack.c.bf16 %v774, %v758
    %v791 = vpack.c.bf16 %v775, %v759
    %v792 = vpack.c.bf16 %v776, %v760
    %v793 = vpack.c.bf16 %v777, %v761
    %v794 = vpack.c.bf16 %v778, %v762
    %v795 = vld [vmem:[#allocation8] sm:$0xff]
    %v796 = vld [vmem:[#allocation8 + $0x8] sm:$0xff]
    %v797 = vld [vmem:[#allocation8 + $0x10] sm:$0xff]
    %v798 = vld [vmem:[#allocation8 + $0x18] sm:$0xff]
    %v799 = vld [vmem:[#allocation8 + $0x20] sm:$0xff]
    %v800 = vld [vmem:[#allocation8 + $0x28] sm:$0xff]
    %v801 = vld [vmem:[#allocation8 + $0x30] sm:$0xff]
    %v802 = vld [vmem:[#allocation8 + $0x38] sm:$0xff]
    %v803 = vld [vmem:[#allocation8 + $0x40] sm:$0xff]
    %v804 = vld [vmem:[#allocation8 + $0x48] sm:$0xff]
    %v805 = vld [vmem:[#allocation8 + $0x50] sm:$0xff]
    %v806 = vld [vmem:[#allocation8 + $0x58] sm:$0xff]
    %v807 = vld [vmem:[#allocation8 + $0x60] sm:$0xff]
    %v808 = vld [vmem:[#allocation8 + $0x68] sm:$0xff]
    %v809 = vld [vmem:[#allocation8 + $0x70] sm:$0xff]
    %v810 = vld [vmem:[#allocation8 + $0x78] sm:$0xff]
    %v811 = vld [vmem:[#allocation8 + $0x80] sm:$0xff]
    %v812 = vld [vmem:[#allocation8 + $0x88] sm:$0xff]
    %v813 = vld [vmem:[#allocation8 + $0x90] sm:$0xff]
    %v814 = vld [vmem:[#allocation8 + $0x98] sm:$0xff]
    %v815 = vld [vmem:[#allocation8 + $0xa0] sm:$0xff]
    %v816 = vld [vmem:[#allocation8 + $0xa8] sm:$0xff]
    %v817 = vld [vmem:[#allocation8 + $0xb0] sm:$0xff]
    %v818 = vld [vmem:[#allocation8 + $0xb8] sm:$0xff]
    %v819 = vld [vmem:[#allocation8 + $0xc0] sm:$0xff]
    %v820 = vld [vmem:[#allocation8 + $0xc8] sm:$0xff]
    %v821 = vld [vmem:[#allocation8 + $0xd0] sm:$0xff]
    %v822 = vld [vmem:[#allocation8 + $0xd8] sm:$0xff]
    %v823 = vld [vmem:[#allocation8 + $0xe0] sm:$0xff]
    %v824 = vld [vmem:[#allocation8 + $0xe8] sm:$0xff]
    %v825 = vld [vmem:[#allocation8 + $0xf0] sm:$0xff]
    %v826 = vld [vmem:[#allocation8 + $0xf8] sm:$0xff]
    %v827 = vld [vmem:[#allocation8 + $0x100] sm:$0xff]
    %v828 = vld [vmem:[#allocation8 + $0x108] sm:$0xff]
    %v829 = vld [vmem:[#allocation8 + $0x110] sm:$0xff]
    %v830 = vld [vmem:[#allocation8 + $0x118] sm:$0xff]
    %v831 = vld [vmem:[#allocation8 + $0x120] sm:$0xff]
    %v832 = vld [vmem:[#allocation8 + $0x128] sm:$0xff]
    %v833 = vld [vmem:[#allocation8 + $0x130] sm:$0xff]
    %v834 = vld [vmem:[#allocation8 + $0x138] sm:$0xff]
    %v835 = vld [vmem:[#allocation8 + $0x140] sm:$0xff]
    %v836 = vld [vmem:[#allocation8 + $0x148] sm:$0xff]
    %v837 = vld [vmem:[#allocation8 + $0x150] sm:$0xff]
    %v838 = vld [vmem:[#allocation8 + $0x158] sm:$0xff]
    %v839 = vld [vmem:[#allocation8 + $0x160] sm:$0xff]
    %v840 = vld [vmem:[#allocation8 + $0x168] sm:$0xff]
    %v841 = vld [vmem:[#allocation8 + $0x170] sm:$0xff]
    %v842 = vld [vmem:[#allocation8 + $0x178] sm:$0xff]
    %v843 = vld [vmem:[#allocation8 + $0x180] sm:$0xff]
    %v844 = vld [vmem:[#allocation8 + $0x188] sm:$0xff]
    %v845 = vld [vmem:[#allocation8 + $0x190] sm:$0xff]
    %v846 = vld [vmem:[#allocation8 + $0x198] sm:$0xff]
    %v847 = vld [vmem:[#allocation8 + $0x1a0] sm:$0xff]
    %v848 = vld [vmem:[#allocation8 + $0x1a8] sm:$0xff]
    %v849 = vld [vmem:[#allocation8 + $0x1b0] sm:$0xff]
    %v850 = vld [vmem:[#allocation8 + $0x1b8] sm:$0xff]
    %v851 = vld [vmem:[#allocation8 + $0x1c0] sm:$0xff]
    %v852 = vld [vmem:[#allocation8 + $0x1c8] sm:$0xff]
    %v853 = vld [vmem:[#allocation8 + $0x1d0] sm:$0xff]
    %v854 = vld [vmem:[#allocation8 + $0x1d8] sm:$0xff]
    %v855 = vld [vmem:[#allocation8 + $0x1e0] sm:$0xff]
    %v856 = vld [vmem:[#allocation8 + $0x1e8] sm:$0xff]
    %v857 = vld [vmem:[#allocation8 + $0x1f0] sm:$0xff]
    %v858 = vld [vmem:[#allocation8 + $0x1f8] sm:$0xff]
    %v859 = vld [vmem:[#allocation8 + $0x200] sm:$0xff]
    %v860 = vld [vmem:[#allocation8 + $0x208] sm:$0xff]
    %v861 = vld [vmem:[#allocation8 + $0x210] sm:$0xff]
    %v862 = vld [vmem:[#allocation8 + $0x218] sm:$0xff]
    %v863 = vld [vmem:[#allocation8 + $0x220] sm:$0xff]
    %v864 = vld [vmem:[#allocation8 + $0x228] sm:$0xff]
    %v865 = vld [vmem:[#allocation8 + $0x230] sm:$0xff]
    %v866 = vld [vmem:[#allocation8 + $0x238] sm:$0xff]
    %v867 = vld [vmem:[#allocation8 + $0x240] sm:$0xff]
    %v868 = vld [vmem:[#allocation8 + $0x248] sm:$0xff]
    %v869 = vld [vmem:[#allocation8 + $0x250] sm:$0xff]
    %v870 = vld [vmem:[#allocation8 + $0x258] sm:$0xff]
    %v871 = vld [vmem:[#allocation8 + $0x260] sm:$0xff]
    %v872 = vld [vmem:[#allocation8 + $0x268] sm:$0xff]
    %v873 = vld [vmem:[#allocation8 + $0x270] sm:$0xff]
    %v874 = vld [vmem:[#allocation8 + $0x278] sm:$0xff]
    %v875 = vld [vmem:[#allocation8 + $0x280] sm:$0xff]
    %v876 = vld [vmem:[#allocation8 + $0x288] sm:$0xff]
    %v877 = vld [vmem:[#allocation8 + $0x290] sm:$0xff]
    %v878 = vld [vmem:[#allocation8 + $0x298] sm:$0xff]
    %v879 = vld [vmem:[#allocation8 + $0x2a0] sm:$0xff]
    %v880 = vld [vmem:[#allocation8 + $0x2a8] sm:$0xff]
    %v881 = vld [vmem:[#allocation8 + $0x2b0] sm:$0xff]
    %v882 = vld [vmem:[#allocation8 + $0x2b8] sm:$0xff]
    %v883 = vld [vmem:[#allocation8 + $0x2c0] sm:$0xff]
    %v884 = vld [vmem:[#allocation8 + $0x2c8] sm:$0xff]
    %v885 = vld [vmem:[#allocation8 + $0x2d0] sm:$0xff]
    %v886 = vld [vmem:[#allocation8 + $0x2d8] sm:$0xff]
    %v887 = vld [vmem:[#allocation8 + $0x2e0] sm:$0xff]
    %v888 = vld [vmem:[#allocation8 + $0x2e8] sm:$0xff]
    %v889 = vld [vmem:[#allocation8 + $0x2f0] sm:$0xff]
    %v890 = vld [vmem:[#allocation8 + $0x2f8] sm:$0xff]
    %v891 = vld [vmem:[#allocation8 + $0x300] sm:$0xff]
    %v892 = vld [vmem:[#allocation8 + $0x308] sm:$0xff]
    %v893 = vld [vmem:[#allocation8 + $0x310] sm:$0xff]
    %v894 = vld [vmem:[#allocation8 + $0x318] sm:$0xff]
    %v895 = vld [vmem:[#allocation8 + $0x320] sm:$0xff]
    %v896 = vld [vmem:[#allocation8 + $0x328] sm:$0xff]
    %v897 = vld [vmem:[#allocation8 + $0x330] sm:$0xff]
    %v898 = vld [vmem:[#allocation8 + $0x338] sm:$0xff]
    %v899 = vld [vmem:[#allocation8 + $0x340] sm:$0xff]
    %v900 = vld [vmem:[#allocation8 + $0x348] sm:$0xff]
    %v901 = vld [vmem:[#allocation8 + $0x350] sm:$0xff]
    %v902 = vld [vmem:[#allocation8 + $0x358] sm:$0xff]
    %v903 = vld [vmem:[#allocation8 + $0x360] sm:$0xff]
    %v904 = vld [vmem:[#allocation8 + $0x368] sm:$0xff]
    %v905 = vld [vmem:[#allocation8 + $0x370] sm:$0xff]
    %v906 = vld [vmem:[#allocation8 + $0x378] sm:$0xff]
    %v907 = vld [vmem:[#allocation8 + $0x380] sm:$0xff]
    %v908 = vld [vmem:[#allocation8 + $0x388] sm:$0xff]
    %v909 = vld [vmem:[#allocation8 + $0x390] sm:$0xff]
    %v910 = vld [vmem:[#allocation8 + $0x398] sm:$0xff]
    %v911 = vld [vmem:[#allocation8 + $0x3a0] sm:$0xff]
    %v912 = vld [vmem:[#allocation8 + $0x3a8] sm:$0xff]
    %v913 = vld [vmem:[#allocation8 + $0x3b0] sm:$0xff]
    %v914 = vld [vmem:[#allocation8 + $0x3b8] sm:$0xff]
    %v915 = vld [vmem:[#allocation8 + $0x3c0] sm:$0xff]
    %v916 = vld [vmem:[#allocation8 + $0x3c8] sm:$0xff]
    %v917 = vld [vmem:[#allocation8 + $0x3d0] sm:$0xff]
    %v918 = vld [vmem:[#allocation8 + $0x3d8] sm:$0xff]
    %v919 = vld [vmem:[#allocation8 + $0x3e0] sm:$0xff]
    %v920 = vld [vmem:[#allocation8 + $0x3e8] sm:$0xff]
    %v921 = vld [vmem:[#allocation8 + $0x3f0] sm:$0xff]
    %v922 = vld [vmem:[#allocation8 + $0x3f8] sm:$0xff]
    %v923 = vld [vmem:[#allocation8 + $0x400] sm:$0xff]
    %v924 = vld [vmem:[#allocation8 + $0x408] sm:$0xff]
    %v925 = vld [vmem:[#allocation8 + $0x410] sm:$0xff]
    %v926 = vld [vmem:[#allocation8 + $0x418] sm:$0xff]
    %v927 = vld [vmem:[#allocation8 + $0x420] sm:$0xff]
    %v928 = vld [vmem:[#allocation8 + $0x428] sm:$0xff]
    %v929 = vld [vmem:[#allocation8 + $0x430] sm:$0xff]
    %v930 = vld [vmem:[#allocation8 + $0x438] sm:$0xff]
    %v931 = vld [vmem:[#allocation8 + $0x440] sm:$0xff]
    %v932 = vld [vmem:[#allocation8 + $0x448] sm:$0xff]
    %v933 = vld [vmem:[#allocation8 + $0x450] sm:$0xff]
    %v934 = vld [vmem:[#allocation8 + $0x458] sm:$0xff]
    %v935 = vld [vmem:[#allocation8 + $0x460] sm:$0xff]
    %v936 = vld [vmem:[#allocation8 + $0x468] sm:$0xff]
    %v937 = vld [vmem:[#allocation8 + $0x470] sm:$0xff]
    %v938 = vld [vmem:[#allocation8 + $0x478] sm:$0xff]
    %v939 = vld [vmem:[#allocation8 + $0x480] sm:$0xff]
    %v940 = vld [vmem:[#allocation8 + $0x488] sm:$0xff]
    %v941 = vld [vmem:[#allocation8 + $0x490] sm:$0xff]
    %v942 = vld [vmem:[#allocation8 + $0x498] sm:$0xff]
    %v943 = vld [vmem:[#allocation8 + $0x4a0] sm:$0xff]
    %v944 = vld [vmem:[#allocation8 + $0x4a8] sm:$0xff]
    %v945 = vld [vmem:[#allocation8 + $0x4b0] sm:$0xff]
    %v946 = vld [vmem:[#allocation8 + $0x4b8] sm:$0xff]
    %v947 = vld [vmem:[#allocation8 + $0x4c0] sm:$0xff]
    %v948 = vld [vmem:[#allocation8 + $0x4c8] sm:$0xff]
    %v949 = vld [vmem:[#allocation8 + $0x4d0] sm:$0xff]
    %v950 = vld [vmem:[#allocation8 + $0x4d8] sm:$0xff]
    %v951 = vld [vmem:[#allocation8 + $0x4e0] sm:$0xff]
    %v952 = vld [vmem:[#allocation8 + $0x4e8] sm:$0xff]
    %v953 = vld [vmem:[#allocation8 + $0x4f0] sm:$0xff]
    %v954 = vld [vmem:[#allocation8 + $0x4f8] sm:$0xff]
    %v955 = vld [vmem:[#allocation8 + $0x500] sm:$0xff]
    %v956 = vld [vmem:[#allocation8 + $0x508] sm:$0xff]
    %v957 = vld [vmem:[#allocation8 + $0x510] sm:$0xff]
    %v958 = vld [vmem:[#allocation8 + $0x518] sm:$0xff]
    %v959 = vld [vmem:[#allocation8 + $0x520] sm:$0xff]
    %v960 = vld [vmem:[#allocation8 + $0x528] sm:$0xff]
    %v961 = vld [vmem:[#allocation8 + $0x530] sm:$0xff]
    %v962 = vld [vmem:[#allocation8 + $0x538] sm:$0xff]
    %v963 = vld [vmem:[#allocation8 + $0x540] sm:$0xff]
    %v964 = vld [vmem:[#allocation8 + $0x548] sm:$0xff]
    %v965 = vld [vmem:[#allocation8 + $0x550] sm:$0xff]
    %v966 = vld [vmem:[#allocation8 + $0x558] sm:$0xff]
    %v967 = vld [vmem:[#allocation8 + $0x560] sm:$0xff]
    %v968 = vld [vmem:[#allocation8 + $0x568] sm:$0xff]
    %v969 = vld [vmem:[#allocation8 + $0x570] sm:$0xff]
    %v970 = vld [vmem:[#allocation8 + $0x578] sm:$0xff]
    %v971 = vld [vmem:[#allocation8 + $0x580] sm:$0xff]
    %v972 = vld [vmem:[#allocation8 + $0x588] sm:$0xff]
    %v973 = vld [vmem:[#allocation8 + $0x590] sm:$0xff]
    %v974 = vld [vmem:[#allocation8 + $0x598] sm:$0xff]
    %v975 = vld [vmem:[#allocation8 + $0x5a0] sm:$0xff]
    %v976 = vld [vmem:[#allocation8 + $0x5a8] sm:$0xff]
    %v977 = vld [vmem:[#allocation8 + $0x5b0] sm:$0xff]
    %v978 = vld [vmem:[#allocation8 + $0x5b8] sm:$0xff]
    %v979 = vld [vmem:[#allocation8 + $0x5c0] sm:$0xff]
    %v980 = vld [vmem:[#allocation8 + $0x5c8] sm:$0xff]
    %v981 = vld [vmem:[#allocation8 + $0x5d0] sm:$0xff]
    %v982 = vld [vmem:[#allocation8 + $0x5d8] sm:$0xff]
    %v983 = vld [vmem:[#allocation8 + $0x5e0] sm:$0xff]
    %v984 = vld [vmem:[#allocation8 + $0x5e8] sm:$0xff]
    %v985 = vld [vmem:[#allocation8 + $0x5f0] sm:$0xff]
    %v986 = vld [vmem:[#allocation8 + $0x5f8] sm:$0xff]
    %v987 = vld [vmem:[#allocation8 + $0x600] sm:$0xff]
    %v988 = vld [vmem:[#allocation8 + $0x608] sm:$0xff]
    %v989 = vld [vmem:[#allocation8 + $0x610] sm:$0xff]
    %v990 = vld [vmem:[#allocation8 + $0x618] sm:$0xff]
    %v991 = vld [vmem:[#allocation8 + $0x620] sm:$0xff]
    %v992 = vld [vmem:[#allocation8 + $0x628] sm:$0xff]
    %v993 = vld [vmem:[#allocation8 + $0x630] sm:$0xff]
    %v994 = vld [vmem:[#allocation8 + $0x638] sm:$0xff]
    %v995 = vld [vmem:[#allocation8 + $0x640] sm:$0xff]
    %v996 = vld [vmem:[#allocation8 + $0x648] sm:$0xff]
    %v997 = vld [vmem:[#allocation8 + $0x650] sm:$0xff]
    %v998 = vld [vmem:[#allocation8 + $0x658] sm:$0xff]
    %v999 = vld [vmem:[#allocation8 + $0x660] sm:$0xff]
    %v1000 = vld [vmem:[#allocation8 + $0x668] sm:$0xff]
    %v1001 = vld [vmem:[#allocation8 + $0x670] sm:$0xff]
    %v1002 = vld [vmem:[#allocation8 + $0x678] sm:$0xff]
    %v1003 = vld [vmem:[#allocation8 + $0x680] sm:$0xff]
    %v1004 = vld [vmem:[#allocation8 + $0x688] sm:$0xff]
    %v1005 = vld [vmem:[#allocation8 + $0x690] sm:$0xff]
    %v1006 = vld [vmem:[#allocation8 + $0x698] sm:$0xff]
    %v1007 = vld [vmem:[#allocation8 + $0x6a0] sm:$0xff]
    %v1008 = vld [vmem:[#allocation8 + $0x6a8] sm:$0xff]
    %v1009 = vld [vmem:[#allocation8 + $0x6b0] sm:$0xff]
    %v1010 = vld [vmem:[#allocation8 + $0x6b8] sm:$0xff]
    %v1011 = vld [vmem:[#allocation8 + $0x6c0] sm:$0xff]
    %v1012 = vld [vmem:[#allocation8 + $0x6c8] sm:$0xff]
    %v1013 = vld [vmem:[#allocation8 + $0x6d0] sm:$0xff]
    %v1014 = vld [vmem:[#allocation8 + $0x6d8] sm:$0xff]
    %v1015 = vld [vmem:[#allocation8 + $0x6e0] sm:$0xff]
    %v1016 = vld [vmem:[#allocation8 + $0x6e8] sm:$0xff]
    %v1017 = vld [vmem:[#allocation8 + $0x6f0] sm:$0xff]
    %v1018 = vld [vmem:[#allocation8 + $0x6f8] sm:$0xff]
    %v1019 = vld [vmem:[#allocation8 + $0x700] sm:$0xff]
    %v1020 = vld [vmem:[#allocation8 + $0x708] sm:$0xff]
    %v1021 = vld [vmem:[#allocation8 + $0x710] sm:$0xff]
    %v1022 = vld [vmem:[#allocation8 + $0x718] sm:$0xff]
    %v1023 = vld [vmem:[#allocation8 + $0x720] sm:$0xff]
    %v1024 = vld [vmem:[#allocation8 + $0x728] sm:$0xff]
    %v1025 = vld [vmem:[#allocation8 + $0x730] sm:$0xff]
    %v1026 = vld [vmem:[#allocation8 + $0x738] sm:$0xff]
    %v1027 = vld [vmem:[#allocation8 + $0x740] sm:$0xff]
    %v1028 = vld [vmem:[#allocation8 + $0x748] sm:$0xff]
    %v1029 = vld [vmem:[#allocation8 + $0x750] sm:$0xff]
    %v1030 = vld [vmem:[#allocation8 + $0x758] sm:$0xff]
    %v1031 = vld [vmem:[#allocation8 + $0x760] sm:$0xff]
    %v1032 = vld [vmem:[#allocation8 + $0x768] sm:$0xff]
    %v1033 = vld [vmem:[#allocation8 + $0x770] sm:$0xff]
    %v1034 = vld [vmem:[#allocation8 + $0x778] sm:$0xff]
    %v1035 = vld [vmem:[#allocation8 + $0x780] sm:$0xff]
    %v1036 = vld [vmem:[#allocation8 + $0x788] sm:$0xff]
    %v1037 = vld [vmem:[#allocation8 + $0x790] sm:$0xff]
    %v1038 = vld [vmem:[#allocation8 + $0x798] sm:$0xff]
    %v1039 = vld [vmem:[#allocation8 + $0x7a0] sm:$0xff]
    %v1040 = vld [vmem:[#allocation8 + $0x7a8] sm:$0xff]
    %v1041 = vld [vmem:[#allocation8 + $0x7b0] sm:$0xff]
    %v1042 = vld [vmem:[#allocation8 + $0x7b8] sm:$0xff]
    %v1043 = vld [vmem:[#allocation8 + $0x7c0] sm:$0xff]
    %v1044 = vld [vmem:[#allocation8 + $0x7c8] sm:$0xff]
    %v1045 = vld [vmem:[#allocation8 + $0x7d0] sm:$0xff]
    %v1046 = vld [vmem:[#allocation8 + $0x7d8] sm:$0xff]
    %v1047 = vld [vmem:[#allocation8 + $0x7e0] sm:$0xff]
    %v1048 = vld [vmem:[#allocation8 + $0x7e8] sm:$0xff]
    %v1049 = vld [vmem:[#allocation8 + $0x7f0] sm:$0xff]
    %v1050 = vld [vmem:[#allocation8 + $0x7f8] sm:$0xff]
    %v1051 = vld [vmem:[#allocation8 + $0x800] sm:$0xff]
    %v1052 = vld [vmem:[#allocation8 + $0x808] sm:$0xff]
    %v1053 = vld [vmem:[#allocation8 + $0x810] sm:$0xff]
    %v1054 = vld [vmem:[#allocation8 + $0x818] sm:$0xff]
    %v1055 = vld [vmem:[#allocation8 + $0x820] sm:$0xff]
    %v1056 = vld [vmem:[#allocation8 + $0x828] sm:$0xff]
    %v1057 = vld [vmem:[#allocation8 + $0x830] sm:$0xff]
    %v1058 = vld [vmem:[#allocation8 + $0x838] sm:$0xff]
    %v1059 = vld [vmem:[#allocation8 + $0x840] sm:$0xff]
    %v1060 = vld [vmem:[#allocation8 + $0x848] sm:$0xff]
    %v1061 = vld [vmem:[#allocation8 + $0x850] sm:$0xff]
    %v1062 = vld [vmem:[#allocation8 + $0x858] sm:$0xff]
    %v1063 = vld [vmem:[#allocation8 + $0x860] sm:$0xff]
    %v1064 = vld [vmem:[#allocation8 + $0x868] sm:$0xff]
    %v1065 = vld [vmem:[#allocation8 + $0x870] sm:$0xff]
    %v1066 = vld [vmem:[#allocation8 + $0x878] sm:$0xff]
    %v1067 = vld [vmem:[#allocation8 + $0x880] sm:$0xff]
    %v1068 = vld [vmem:[#allocation8 + $0x888] sm:$0xff]
    %v1069 = vld [vmem:[#allocation8 + $0x890] sm:$0xff]
    %v1070 = vld [vmem:[#allocation8 + $0x898] sm:$0xff]
    %v1071 = vld [vmem:[#allocation8 + $0x8a0] sm:$0xff]
    %v1072 = vld [vmem:[#allocation8 + $0x8a8] sm:$0xff]
    %v1073 = vld [vmem:[#allocation8 + $0x8b0] sm:$0xff]
    %v1074 = vld [vmem:[#allocation8 + $0x8b8] sm:$0xff]
    %v1075 = vld [vmem:[#allocation8 + $0x8c0] sm:$0xff]
    %v1076 = vld [vmem:[#allocation8 + $0x8c8] sm:$0xff]
    %v1077 = vld [vmem:[#allocation8 + $0x8d0] sm:$0xff]
    %v1078 = vld [vmem:[#allocation8 + $0x8d8] sm:$0xff]
    %v1079 = vld [vmem:[#allocation8 + $0x8e0] sm:$0xff]
    %v1080 = vld [vmem:[#allocation8 + $0x8e8] sm:$0xff]
    %v1081 = vld [vmem:[#allocation8 + $0x8f0] sm:$0xff]
    %v1082 = vld [vmem:[#allocation8 + $0x8f8] sm:$0xff]
    %v1083 = vld [vmem:[#allocation8 + $0x900] sm:$0xff]
    %v1084 = vld [vmem:[#allocation8 + $0x908] sm:$0xff]
    %v1085 = vld [vmem:[#allocation8 + $0x910] sm:$0xff]
    %v1086 = vld [vmem:[#allocation8 + $0x918] sm:$0xff]
    %v1087 = vld [vmem:[#allocation8 + $0x920] sm:$0xff]
    %v1088 = vld [vmem:[#allocation8 + $0x928] sm:$0xff]
    %v1089 = vld [vmem:[#allocation8 + $0x930] sm:$0xff]
    %v1090 = vld [vmem:[#allocation8 + $0x938] sm:$0xff]
    %v1091 = vld [vmem:[#allocation8 + $0x940] sm:$0xff]
    %v1092 = vld [vmem:[#allocation8 + $0x948] sm:$0xff]
    %v1093 = vld [vmem:[#allocation8 + $0x950] sm:$0xff]
    %v1094 = vld [vmem:[#allocation8 + $0x958] sm:$0xff]
    %v1095 = vld [vmem:[#allocation8 + $0x960] sm:$0xff]
    %v1096 = vld [vmem:[#allocation8 + $0x968] sm:$0xff]
    %v1097 = vld [vmem:[#allocation8 + $0x970] sm:$0xff]
    %v1098 = vld [vmem:[#allocation8 + $0x978] sm:$0xff]
    %v1099 = vld [vmem:[#allocation8 + $0x980] sm:$0xff]
    %v1100 = vld [vmem:[#allocation8 + $0x988] sm:$0xff]
    %v1101 = vld [vmem:[#allocation8 + $0x990] sm:$0xff]
    %v1102 = vld [vmem:[#allocation8 + $0x998] sm:$0xff]
    %v1103 = vld [vmem:[#allocation8 + $0x9a0] sm:$0xff]
    %v1104 = vld [vmem:[#allocation8 + $0x9a8] sm:$0xff]
    %v1105 = vld [vmem:[#allocation8 + $0x9b0] sm:$0xff]
    %v1106 = vld [vmem:[#allocation8 + $0x9b8] sm:$0xff]
    %v1107 = vld [vmem:[#allocation8 + $0x9c0] sm:$0xff]
    %v1108 = vld [vmem:[#allocation8 + $0x9c8] sm:$0xff]
    %v1109 = vld [vmem:[#allocation8 + $0x9d0] sm:$0xff]
    %v1110 = vld [vmem:[#allocation8 + $0x9d8] sm:$0xff]
    %v1111 = vld [vmem:[#allocation8 + $0x9e0] sm:$0xff]
    %v1112 = vld [vmem:[#allocation8 + $0x9e8] sm:$0xff]
    %v1113 = vld [vmem:[#allocation8 + $0x9f0] sm:$0xff]
    %v1114 = vld [vmem:[#allocation8 + $0x9f8] sm:$0xff]
    %v1115 = vld [vmem:[#allocation8 + $0xa00] sm:$0xff]
    %v1116 = vld [vmem:[#allocation8 + $0xa08] sm:$0xff]
    %v1117 = vld [vmem:[#allocation8 + $0xa10] sm:$0xff]
    %v1118 = vld [vmem:[#allocation8 + $0xa18] sm:$0xff]
    %v1119 = vld [vmem:[#allocation8 + $0xa20] sm:$0xff]
    %v1120 = vld [vmem:[#allocation8 + $0xa28] sm:$0xff]
    %v1121 = vld [vmem:[#allocation8 + $0xa30] sm:$0xff]
    %v1122 = vld [vmem:[#allocation8 + $0xa38] sm:$0xff]
    %v1123 = vld [vmem:[#allocation8 + $0xa40] sm:$0xff]
    %v1124 = vld [vmem:[#allocation8 + $0xa48] sm:$0xff]
    %v1125 = vld [vmem:[#allocation8 + $0xa50] sm:$0xff]
    %v1126 = vld [vmem:[#allocation8 + $0xa58] sm:$0xff]
    %v1127 = vld [vmem:[#allocation8 + $0xa60] sm:$0xff]
    %v1128 = vld [vmem:[#allocation8 + $0xa68] sm:$0xff]
    %v1129 = vld [vmem:[#allocation8 + $0xa70] sm:$0xff]
    %v1130 = vld [vmem:[#allocation8 + $0xa78] sm:$0xff]
    %v1131 = vld [vmem:[#allocation8 + $0xa80] sm:$0xff]
    %v1132 = vld [vmem:[#allocation8 + $0xa88] sm:$0xff]
    %v1133 = vld [vmem:[#allocation8 + $0xa90] sm:$0xff]
    %v1134 = vld [vmem:[#allocation8 + $0xa98] sm:$0xff]
    %v1135 = vld [vmem:[#allocation8 + $0xaa0] sm:$0xff]
    %v1136 = vld [vmem:[#allocation8 + $0xaa8] sm:$0xff]
    %v1137 = vld [vmem:[#allocation8 + $0xab0] sm:$0xff]
    %v1138 = vld [vmem:[#allocation8 + $0xab8] sm:$0xff]
    %v1139 = vld [vmem:[#allocation8 + $0xac0] sm:$0xff]
    %v1140 = vld [vmem:[#allocation8 + $0xac8] sm:$0xff]
    %v1141 = vld [vmem:[#allocation8 + $0xad0] sm:$0xff]
    %v1142 = vld [vmem:[#allocation8 + $0xad8] sm:$0xff]
    %v1143 = vld [vmem:[#allocation8 + $0xae0] sm:$0xff]
    %v1144 = vld [vmem:[#allocation8 + $0xae8] sm:$0xff]
    %v1145 = vld [vmem:[#allocation8 + $0xaf0] sm:$0xff]
    %v1146 = vld [vmem:[#allocation8 + $0xaf8] sm:$0xff]
    %v1147 = vld [vmem:[#allocation8 + $0xb00] sm:$0xff]
    %v1148 = vld [vmem:[#allocation8 + $0xb08] sm:$0xff]
    %v1149 = vld [vmem:[#allocation8 + $0xb10] sm:$0xff]
    %v1150 = vld [vmem:[#allocation8 + $0xb18] sm:$0xff]
    %v1151 = vld [vmem:[#allocation8 + $0xb20] sm:$0xff]
    %v1152 = vld [vmem:[#allocation8 + $0xb28] sm:$0xff]
    %v1153 = vld [vmem:[#allocation8 + $0xb30] sm:$0xff]
    %v1154 = vld [vmem:[#allocation8 + $0xb38] sm:$0xff]
    %v1155 = vld [vmem:[#allocation8 + $0xb40] sm:$0xff]
    %v1156 = vld [vmem:[#allocation8 + $0xb48] sm:$0xff]
    %v1157 = vld [vmem:[#allocation8 + $0xb50] sm:$0xff]
    %v1158 = vld [vmem:[#allocation8 + $0xb58] sm:$0xff]
    %v1159 = vld [vmem:[#allocation8 + $0xb60] sm:$0xff]
    %v1160 = vld [vmem:[#allocation8 + $0xb68] sm:$0xff]
    %v1161 = vld [vmem:[#allocation8 + $0xb70] sm:$0xff]
    %v1162 = vld [vmem:[#allocation8 + $0xb78] sm:$0xff]
    %v1163 = vld [vmem:[#allocation8 + $0xb80] sm:$0xff]
    %v1164 = vld [vmem:[#allocation8 + $0xb88] sm:$0xff]
    %v1165 = vld [vmem:[#allocation8 + $0xb90] sm:$0xff]
    %v1166 = vld [vmem:[#allocation8 + $0xb98] sm:$0xff]
    %v1167 = vld [vmem:[#allocation8 + $0xba0] sm:$0xff]
    %v1168 = vld [vmem:[#allocation8 + $0xba8] sm:$0xff]
    %v1169 = vld [vmem:[#allocation8 + $0xbb0] sm:$0xff]
    %v1170 = vld [vmem:[#allocation8 + $0xbb8] sm:$0xff]
    %v1171 = vld [vmem:[#allocation8 + $0xbc0] sm:$0xff]
    %v1172 = vld [vmem:[#allocation8 + $0xbc8] sm:$0xff]
    %v1173 = vld [vmem:[#allocation8 + $0xbd0] sm:$0xff]
    %v1174 = vld [vmem:[#allocation8 + $0xbd8] sm:$0xff]
    %v1175 = vld [vmem:[#allocation8 + $0xbe0] sm:$0xff]
    %v1176 = vld [vmem:[#allocation8 + $0xbe8] sm:$0xff]
    %v1177 = vld [vmem:[#allocation8 + $0xbf0] sm:$0xff]
    %v1178 = vld [vmem:[#allocation8 + $0xbf8] sm:$0xff]
    %v1179 = vld [vmem:[#allocation8 + $0xc00] sm:$0xff]
    %v1180 = vld [vmem:[#allocation8 + $0xc08] sm:$0xff]
    %v1181 = vld [vmem:[#allocation8 + $0xc10] sm:$0xff]
    %v1182 = vld [vmem:[#allocation8 + $0xc18] sm:$0xff]
    %v1183 = vld [vmem:[#allocation8 + $0xc20] sm:$0xff]
    %v1184 = vld [vmem:[#allocation8 + $0xc28] sm:$0xff]
    %v1185 = vld [vmem:[#allocation8 + $0xc30] sm:$0xff]
    %v1186 = vld [vmem:[#allocation8 + $0xc38] sm:$0xff]
    %v1187 = vld [vmem:[#allocation8 + $0xc40] sm:$0xff]
    %v1188 = vld [vmem:[#allocation8 + $0xc48] sm:$0xff]
    %v1189 = vld [vmem:[#allocation8 + $0xc50] sm:$0xff]
    %v1190 = vld [vmem:[#allocation8 + $0xc58] sm:$0xff]
    %v1191 = vld [vmem:[#allocation8 + $0xc60] sm:$0xff]
    %v1192 = vld [vmem:[#allocation8 + $0xc68] sm:$0xff]
    %v1193 = vld [vmem:[#allocation8 + $0xc70] sm:$0xff]
    %v1194 = vld [vmem:[#allocation8 + $0xc78] sm:$0xff]
    %v1195 = vld [vmem:[#allocation8 + $0xc80] sm:$0xff]
    %v1196 = vld [vmem:[#allocation8 + $0xc88] sm:$0xff]
    %v1197 = vld [vmem:[#allocation8 + $0xc90] sm:$0xff]
    %v1198 = vld [vmem:[#allocation8 + $0xc98] sm:$0xff]
    %v1199 = vld [vmem:[#allocation8 + $0xca0] sm:$0xff]
    %v1200 = vld [vmem:[#allocation8 + $0xca8] sm:$0xff]
    %v1201 = vld [vmem:[#allocation8 + $0xcb0] sm:$0xff]
    %v1202 = vld [vmem:[#allocation8 + $0xcb8] sm:$0xff]
    %v1203 = vld [vmem:[#allocation8 + $0xcc0] sm:$0xff]
    %v1204 = vld [vmem:[#allocation8 + $0xcc8] sm:$0xff]
    %v1205 = vld [vmem:[#allocation8 + $0xcd0] sm:$0xff]
    %v1206 = vld [vmem:[#allocation8 + $0xcd8] sm:$0xff]
    %v1207 = vld [vmem:[#allocation8 + $0xce0] sm:$0xff]
    %v1208 = vld [vmem:[#allocation8 + $0xce8] sm:$0xff]
    %v1209 = vld [vmem:[#allocation8 + $0xcf0] sm:$0xff]
    %v1210 = vld [vmem:[#allocation8 + $0xcf8] sm:$0xff]
    %v1211 = vld [vmem:[#allocation8 + $0xd00] sm:$0xff]
    %v1212 = vld [vmem:[#allocation8 + $0xd08] sm:$0xff]
    %v1213 = vld [vmem:[#allocation8 + $0xd10] sm:$0xff]
    %v1214 = vld [vmem:[#allocation8 + $0xd18] sm:$0xff]
    %v1215 = vld [vmem:[#allocation8 + $0xd20] sm:$0xff]
    %v1216 = vld [vmem:[#allocation8 + $0xd28] sm:$0xff]
    %v1217 = vld [vmem:[#allocation8 + $0xd30] sm:$0xff]
    %v1218 = vld [vmem:[#allocation8 + $0xd38] sm:$0xff]
    %v1219 = vld [vmem:[#allocation8 + $0xd40] sm:$0xff]
    %v1220 = vld [vmem:[#allocation8 + $0xd48] sm:$0xff]
    %v1221 = vld [vmem:[#allocation8 + $0xd50] sm:$0xff]
    %v1222 = vld [vmem:[#allocation8 + $0xd58] sm:$0xff]
    %v1223 = vld [vmem:[#allocation8 + $0xd60] sm:$0xff]
    %v1224 = vld [vmem:[#allocation8 + $0xd68] sm:$0xff]
    %v1225 = vld [vmem:[#allocation8 + $0xd70] sm:$0xff]
    %v1226 = vld [vmem:[#allocation8 + $0xd78] sm:$0xff]
    %v1227 = vld [vmem:[#allocation8 + $0xd80] sm:$0xff]
    %v1228 = vld [vmem:[#allocation8 + $0xd88] sm:$0xff]
    %v1229 = vld [vmem:[#allocation8 + $0xd90] sm:$0xff]
    %v1230 = vld [vmem:[#allocation8 + $0xd98] sm:$0xff]
    %v1231 = vld [vmem:[#allocation8 + $0xda0] sm:$0xff]
    %v1232 = vld [vmem:[#allocation8 + $0xda8] sm:$0xff]
    %v1233 = vld [vmem:[#allocation8 + $0xdb0] sm:$0xff]
    %v1234 = vld [vmem:[#allocation8 + $0xdb8] sm:$0xff]
    %v1235 = vld [vmem:[#allocation8 + $0xdc0] sm:$0xff]
    %v1236 = vld [vmem:[#allocation8 + $0xdc8] sm:$0xff]
    %v1237 = vld [vmem:[#allocation8 + $0xdd0] sm:$0xff]
    %v1238 = vld [vmem:[#allocation8 + $0xdd8] sm:$0xff]
    %v1239 = vld [vmem:[#allocation8 + $0xde0] sm:$0xff]
    %v1240 = vld [vmem:[#allocation8 + $0xde8] sm:$0xff]
    %v1241 = vld [vmem:[#allocation8 + $0xdf0] sm:$0xff]
    %v1242 = vld [vmem:[#allocation8 + $0xdf8] sm:$0xff]
    %v1243 = vld [vmem:[#allocation8 + $0xe00] sm:$0xff]
    %v1244 = vld [vmem:[#allocation8 + $0xe08] sm:$0xff]
    %v1245 = vld [vmem:[#allocation8 + $0xe10] sm:$0xff]
    %v1246 = vld [vmem:[#allocation8 + $0xe18] sm:$0xff]
    %v1247 = vld [vmem:[#allocation8 + $0xe20] sm:$0xff]
    %v1248 = vld [vmem:[#allocation8 + $0xe28] sm:$0xff]
    %v1249 = vld [vmem:[#allocation8 + $0xe30] sm:$0xff]
    %v1250 = vld [vmem:[#allocation8 + $0xe38] sm:$0xff]
    %v1251 = vld [vmem:[#allocation8 + $0xe40] sm:$0xff]
    %v1252 = vld [vmem:[#allocation8 + $0xe48] sm:$0xff]
    %v1253 = vld [vmem:[#allocation8 + $0xe50] sm:$0xff]
    %v1254 = vld [vmem:[#allocation8 + $0xe58] sm:$0xff]
    %v1255 = vld [vmem:[#allocation8 + $0xe60] sm:$0xff]
    %v1256 = vld [vmem:[#allocation8 + $0xe68] sm:$0xff]
    %v1257 = vld [vmem:[#allocation8 + $0xe70] sm:$0xff]
    %v1258 = vld [vmem:[#allocation8 + $0xe78] sm:$0xff]
    %v1259 = vld [vmem:[#allocation8 + $0xe80] sm:$0xff]
    %v1260 = vld [vmem:[#allocation8 + $0xe88] sm:$0xff]
    %v1261 = vld [vmem:[#allocation8 + $0xe90] sm:$0xff]
    %v1262 = vld [vmem:[#allocation8 + $0xe98] sm:$0xff]
    %v1263 = vld [vmem:[#allocation8 + $0xea0] sm:$0xff]
    %v1264 = vld [vmem:[#allocation8 + $0xea8] sm:$0xff]
    %v1265 = vld [vmem:[#allocation8 + $0xeb0] sm:$0xff]
    %v1266 = vld [vmem:[#allocation8 + $0xeb8] sm:$0xff]
    %v1267 = vld [vmem:[#allocation8 + $0xec0] sm:$0xff]
    %v1268 = vld [vmem:[#allocation8 + $0xec8] sm:$0xff]
    %v1269 = vld [vmem:[#allocation8 + $0xed0] sm:$0xff]
    %v1270 = vld [vmem:[#allocation8 + $0xed8] sm:$0xff]
    %v1271 = vld [vmem:[#allocation8 + $0xee0] sm:$0xff]
    %v1272 = vld [vmem:[#allocation8 + $0xee8] sm:$0xff]
    %v1273 = vld [vmem:[#allocation8 + $0xef0] sm:$0xff]
    %v1274 = vld [vmem:[#allocation8 + $0xef8] sm:$0xff]
    %v1275 = vld [vmem:[#allocation8 + $0xf00] sm:$0xff]
    %v1276 = vld [vmem:[#allocation8 + $0xf08] sm:$0xff]
    %v1277 = vld [vmem:[#allocation8 + $0xf10] sm:$0xff]
    %v1278 = vld [vmem:[#allocation8 + $0xf18] sm:$0xff]
    %v1279 = vld [vmem:[#allocation8 + $0xf20] sm:$0xff]
    %v1280 = vld [vmem:[#allocation8 + $0xf28] sm:$0xff]
    %v1281 = vld [vmem:[#allocation8 + $0xf30] sm:$0xff]
    %v1282 = vld [vmem:[#allocation8 + $0xf38] sm:$0xff]
    %v1283 = vld [vmem:[#allocation8 + $0xf40] sm:$0xff]
    %v1284 = vld [vmem:[#allocation8 + $0xf48] sm:$0xff]
    %v1285 = vld [vmem:[#allocation8 + $0xf50] sm:$0xff]
    %v1286 = vld [vmem:[#allocation8 + $0xf58] sm:$0xff]
    %v1287 = vld [vmem:[#allocation8 + $0xf60] sm:$0xff]
    %v1288 = vld [vmem:[#allocation8 + $0xf68] sm:$0xff]
    %v1289 = vld [vmem:[#allocation8 + $0xf70] sm:$0xff]
    %v1290 = vld [vmem:[#allocation8 + $0xf78] sm:$0xff]
    %v1291 = vld [vmem:[#allocation8 + $0xf80] sm:$0xff]
    %v1292 = vld [vmem:[#allocation8 + $0xf88] sm:$0xff]
    %v1293 = vld [vmem:[#allocation8 + $0xf90] sm:$0xff]
    %v1294 = vld [vmem:[#allocation8 + $0xf98] sm:$0xff]
    %v1295 = vld [vmem:[#allocation8 + $0xfa0] sm:$0xff]
    %v1296 = vld [vmem:[#allocation8 + $0xfa8] sm:$0xff]
    %v1297 = vld [vmem:[#allocation8 + $0xfb0] sm:$0xff]
    %v1298 = vld [vmem:[#allocation8 + $0xfb8] sm:$0xff]
    %v1299 = vld [vmem:[#allocation8 + $0xfc0] sm:$0xff]
    %v1300 = vld [vmem:[#allocation8 + $0xfc8] sm:$0xff]
    %v1301 = vld [vmem:[#allocation8 + $0xfd0] sm:$0xff]
    %v1302 = vld [vmem:[#allocation8 + $0xfd8] sm:$0xff]
    %v1303 = vld [vmem:[#allocation8 + $0xfe0] sm:$0xff]
    %v1304 = vld [vmem:[#allocation8 + $0xfe8] sm:$0xff]
    %v1305 = vld [vmem:[#allocation8 + $0xff0] sm:$0xff]
    %v1306 = vld [vmem:[#allocation8 + $0xff8] sm:$0xff]
    %v1307 = vld [vmem:[#allocation8 + $0x1000] sm:$0xff]
    %v1308 = vld [vmem:[#allocation8 + $0x1008] sm:$0xff]
    %v1309 = vld [vmem:[#allocation8 + $0x1010] sm:$0xff]
    %v1310 = vld [vmem:[#allocation8 + $0x1018] sm:$0xff]
    %v1311 = vld [vmem:[#allocation8 + $0x1020] sm:$0xff]
    %v1312 = vld [vmem:[#allocation8 + $0x1028] sm:$0xff]
    %v1313 = vld [vmem:[#allocation8 + $0x1030] sm:$0xff]
    %v1314 = vld [vmem:[#allocation8 + $0x1038] sm:$0xff]
    %v1315 = vld [vmem:[#allocation8 + $0x1040] sm:$0xff]
    %v1316 = vld [vmem:[#allocation8 + $0x1048] sm:$0xff]
    %v1317 = vld [vmem:[#allocation8 + $0x1050] sm:$0xff]
    %v1318 = vld [vmem:[#allocation8 + $0x1058] sm:$0xff]
    %v1319 = vld [vmem:[#allocation8 + $0x1060] sm:$0xff]
    %v1320 = vld [vmem:[#allocation8 + $0x1068] sm:$0xff]
    %v1321 = vld [vmem:[#allocation8 + $0x1070] sm:$0xff]
    %v1322 = vld [vmem:[#allocation8 + $0x1078] sm:$0xff]
    %v1323 = vld [vmem:[#allocation8 + $0x1080] sm:$0xff]
    %v1324 = vld [vmem:[#allocation8 + $0x1088] sm:$0xff]
    %v1325 = vld [vmem:[#allocation8 + $0x1090] sm:$0xff]
    %v1326 = vld [vmem:[#allocation8 + $0x1098] sm:$0xff]
    %v1327 = vld [vmem:[#allocation8 + $0x10a0] sm:$0xff]
    %v1328 = vld [vmem:[#allocation8 + $0x10a8] sm:$0xff]
    %v1329 = vld [vmem:[#allocation8 + $0x10b0] sm:$0xff]
    %v1330 = vld [vmem:[#allocation8 + $0x10b8] sm:$0xff]
    %v1331 = vld [vmem:[#allocation8 + $0x10c0] sm:$0xff]
    %v1332 = vld [vmem:[#allocation8 + $0x10c8] sm:$0xff]
    %v1333 = vld [vmem:[#allocation8 + $0x10d0] sm:$0xff]
    %v1334 = vld [vmem:[#allocation8 + $0x10d8] sm:$0xff]
    %v1335 = vld [vmem:[#allocation8 + $0x10e0] sm:$0xff]
    %v1336 = vld [vmem:[#allocation8 + $0x10e8] sm:$0xff]
    %v1337 = vld [vmem:[#allocation8 + $0x10f0] sm:$0xff]
    %v1338 = vld [vmem:[#allocation8 + $0x10f8] sm:$0xff]
    %v1339 = vld [vmem:[#allocation8 + $0x1100] sm:$0xff]
    %v1340 = vld [vmem:[#allocation8 + $0x1108] sm:$0xff]
    %v1341 = vld [vmem:[#allocation8 + $0x1110] sm:$0xff]
    %v1342 = vld [vmem:[#allocation8 + $0x1118] sm:$0xff]
    %v1343 = vld [vmem:[#allocation8 + $0x1120] sm:$0xff]
    %v1344 = vld [vmem:[#allocation8 + $0x1128] sm:$0xff]
    %v1345 = vld [vmem:[#allocation8 + $0x1130] sm:$0xff]
    %v1346 = vld [vmem:[#allocation8 + $0x1138] sm:$0xff]
    %v1347 = vld [vmem:[#allocation8 + $0x1140] sm:$0xff]
    %v1348 = vld [vmem:[#allocation8 + $0x1148] sm:$0xff]
    %v1349 = vld [vmem:[#allocation8 + $0x1150] sm:$0xff]
    %v1350 = vld [vmem:[#allocation8 + $0x1158] sm:$0xff]
    %v1351 = vld [vmem:[#allocation8 + $0x1160] sm:$0xff]
    %v1352 = vld [vmem:[#allocation8 + $0x1168] sm:$0xff]
    %v1353 = vld [vmem:[#allocation8 + $0x1170] sm:$0xff]
    %v1354 = vld [vmem:[#allocation8 + $0x1178] sm:$0xff]
    %v1355 = vld [vmem:[#allocation8 + $0x1180] sm:$0xff]
    %v1356 = vld [vmem:[#allocation8 + $0x1188] sm:$0xff]
    %v1357 = vld [vmem:[#allocation8 + $0x1190] sm:$0xff]
    %v1358 = vld [vmem:[#allocation8 + $0x1198] sm:$0xff]
    %v1359 = vld [vmem:[#allocation8 + $0x11a0] sm:$0xff]
    %v1360 = vld [vmem:[#allocation8 + $0x11a8] sm:$0xff]
    %v1361 = vld [vmem:[#allocation8 + $0x11b0] sm:$0xff]
    %v1362 = vld [vmem:[#allocation8 + $0x11b8] sm:$0xff]
    %v1363 = vld [vmem:[#allocation8 + $0x11c0] sm:$0xff]
    %v1364 = vld [vmem:[#allocation8 + $0x11c8] sm:$0xff]
    %v1365 = vld [vmem:[#allocation8 + $0x11d0] sm:$0xff]
    %v1366 = vld [vmem:[#allocation8 + $0x11d8] sm:$0xff]
    %v1367 = vld [vmem:[#allocation8 + $0x11e0] sm:$0xff]
    %v1368 = vld [vmem:[#allocation8 + $0x11e8] sm:$0xff]
    %v1369 = vld [vmem:[#allocation8 + $0x11f0] sm:$0xff]
    %v1370 = vld [vmem:[#allocation8 + $0x11f8] sm:$0xff]
    %v1371 = vld [vmem:[#allocation8 + $0x1200] sm:$0xff]
    %v1372 = vld [vmem:[#allocation8 + $0x1208] sm:$0xff]
    %v1373 = vld [vmem:[#allocation8 + $0x1210] sm:$0xff]
    %v1374 = vld [vmem:[#allocation8 + $0x1218] sm:$0xff]
    %v1375 = vld [vmem:[#allocation8 + $0x1220] sm:$0xff]
    %v1376 = vld [vmem:[#allocation8 + $0x1228] sm:$0xff]
    %v1377 = vld [vmem:[#allocation8 + $0x1230] sm:$0xff]
    %v1378 = vld [vmem:[#allocation8 + $0x1238] sm:$0xff]
    %v1379 = vld [vmem:[#allocation8 + $0x1240] sm:$0xff]
    %v1380 = vld [vmem:[#allocation8 + $0x1248] sm:$0xff]
    %v1381 = vld [vmem:[#allocation8 + $0x1250] sm:$0xff]
    %v1382 = vld [vmem:[#allocation8 + $0x1258] sm:$0xff]
    %v1383 = vld [vmem:[#allocation8 + $0x1260] sm:$0xff]
    %v1384 = vld [vmem:[#allocation8 + $0x1268] sm:$0xff]
    %v1385 = vld [vmem:[#allocation8 + $0x1270] sm:$0xff]
    %v1386 = vld [vmem:[#allocation8 + $0x1278] sm:$0xff]
    %v1387 = vld [vmem:[#allocation8 + $0x1280] sm:$0xff]
    %v1388 = vld [vmem:[#allocation8 + $0x1288] sm:$0xff]
    %v1389 = vld [vmem:[#allocation8 + $0x1290] sm:$0xff]
    %v1390 = vld [vmem:[#allocation8 + $0x1298] sm:$0xff]
    %v1391 = vld [vmem:[#allocation8 + $0x12a0] sm:$0xff]
    %v1392 = vld [vmem:[#allocation8 + $0x12a8] sm:$0xff]
    %v1393 = vld [vmem:[#allocation8 + $0x12b0] sm:$0xff]
    %v1394 = vld [vmem:[#allocation8 + $0x12b8] sm:$0xff]
    %v1395 = vld [vmem:[#allocation8 + $0x12c0] sm:$0xff]
    %v1396 = vld [vmem:[#allocation8 + $0x12c8] sm:$0xff]
    %v1397 = vld [vmem:[#allocation8 + $0x12d0] sm:$0xff]
    %v1398 = vld [vmem:[#allocation8 + $0x12d8] sm:$0xff]
    %v1399 = vld [vmem:[#allocation8 + $0x12e0] sm:$0xff]
    %v1400 = vld [vmem:[#allocation8 + $0x12e8] sm:$0xff]
    %v1401 = vld [vmem:[#allocation8 + $0x12f0] sm:$0xff]
    %v1402 = vld [vmem:[#allocation8 + $0x12f8] sm:$0xff]
    %v1403 = vld [vmem:[#allocation8 + $0x1300] sm:$0xff]
    %v1404 = vld [vmem:[#allocation8 + $0x1308] sm:$0xff]
    %v1405 = vld [vmem:[#allocation8 + $0x1310] sm:$0xff]
    %v1406 = vld [vmem:[#allocation8 + $0x1318] sm:$0xff]
    %v1407 = vld [vmem:[#allocation8 + $0x1320] sm:$0xff]
    %v1408 = vld [vmem:[#allocation8 + $0x1328] sm:$0xff]
    %v1409 = vld [vmem:[#allocation8 + $0x1330] sm:$0xff]
    %v1410 = vld [vmem:[#allocation8 + $0x1338] sm:$0xff]
    %v1411 = vld [vmem:[#allocation8 + $0x1340] sm:$0xff]
    %v1412 = vld [vmem:[#allocation8 + $0x1348] sm:$0xff]
    %v1413 = vld [vmem:[#allocation8 + $0x1350] sm:$0xff]
    %v1414 = vld [vmem:[#allocation8 + $0x1358] sm:$0xff]
    %v1415 = vld [vmem:[#allocation8 + $0x1360] sm:$0xff]
    %v1416 = vld [vmem:[#allocation8 + $0x1368] sm:$0xff]
    %v1417 = vld [vmem:[#allocation8 + $0x1370] sm:$0xff]
    %v1418 = vld [vmem:[#allocation8 + $0x1378] sm:$0xff]
    %v1419 = vld [vmem:[#allocation8 + $0x1380] sm:$0xff]
    %v1420 = vld [vmem:[#allocation8 + $0x1388] sm:$0xff]
    %v1421 = vld [vmem:[#allocation8 + $0x1390] sm:$0xff]
    %v1422 = vld [vmem:[#allocation8 + $0x1398] sm:$0xff]
    %v1423 = vld [vmem:[#allocation8 + $0x13a0] sm:$0xff]
    %v1424 = vld [vmem:[#allocation8 + $0x13a8] sm:$0xff]
    %v1425 = vld [vmem:[#allocation8 + $0x13b0] sm:$0xff]
    %v1426 = vld [vmem:[#allocation8 + $0x13b8] sm:$0xff]
    %v1427 = vld [vmem:[#allocation8 + $0x13c0] sm:$0xff]
    %v1428 = vld [vmem:[#allocation8 + $0x13c8] sm:$0xff]
    %v1429 = vld [vmem:[#allocation8 + $0x13d0] sm:$0xff]
    %v1430 = vld [vmem:[#allocation8 + $0x13d8] sm:$0xff]
    %v1431 = vld [vmem:[#allocation8 + $0x13e0] sm:$0xff]
    %v1432 = vld [vmem:[#allocation8 + $0x13e8] sm:$0xff]
    %v1433 = vld [vmem:[#allocation8 + $0x13f0] sm:$0xff]
    %v1434 = vld [vmem:[#allocation8 + $0x13f8] sm:$0xff]
    %v1435 = vld [vmem:[#allocation8 + $0x1400] sm:$0xff]
    %v1436 = vld [vmem:[#allocation8 + $0x1408] sm:$0xff]
    %v1437 = vld [vmem:[#allocation8 + $0x1410] sm:$0xff]
    %v1438 = vld [vmem:[#allocation8 + $0x1418] sm:$0xff]
    %v1439 = vld [vmem:[#allocation8 + $0x1420] sm:$0xff]
    %v1440 = vld [vmem:[#allocation8 + $0x1428] sm:$0xff]
    %v1441 = vld [vmem:[#allocation8 + $0x1430] sm:$0xff]
    %v1442 = vld [vmem:[#allocation8 + $0x1438] sm:$0xff]
    %v1443 = vld [vmem:[#allocation8 + $0x1440] sm:$0xff]
    %v1444 = vld [vmem:[#allocation8 + $0x1448] sm:$0xff]
    %v1445 = vld [vmem:[#allocation8 + $0x1450] sm:$0xff]
    %v1446 = vld [vmem:[#allocation8 + $0x1458] sm:$0xff]
    %v1447 = vld [vmem:[#allocation8 + $0x1460] sm:$0xff]
    %v1448 = vld [vmem:[#allocation8 + $0x1468] sm:$0xff]
    %v1449 = vld [vmem:[#allocation8 + $0x1470] sm:$0xff]
    %v1450 = vld [vmem:[#allocation8 + $0x1478] sm:$0xff]
    %v1451 = vld [vmem:[#allocation8 + $0x1480] sm:$0xff]
    %v1452 = vld [vmem:[#allocation8 + $0x1488] sm:$0xff]
    %v1453 = vld [vmem:[#allocation8 + $0x1490] sm:$0xff]
    %v1454 = vld [vmem:[#allocation8 + $0x1498] sm:$0xff]
    %v1455 = vld [vmem:[#allocation8 + $0x14a0] sm:$0xff]
    %v1456 = vld [vmem:[#allocation8 + $0x14a8] sm:$0xff]
    %v1457 = vld [vmem:[#allocation8 + $0x14b0] sm:$0xff]
    %v1458 = vld [vmem:[#allocation8 + $0x14b8] sm:$0xff]
    %v1459 = vld [vmem:[#allocation8 + $0x14c0] sm:$0xff]
    %v1460 = vld [vmem:[#allocation8 + $0x14c8] sm:$0xff]
    %v1461 = vld [vmem:[#allocation8 + $0x14d0] sm:$0xff]
    %v1462 = vld [vmem:[#allocation8 + $0x14d8] sm:$0xff]
    %v1463 = vld [vmem:[#allocation8 + $0x14e0] sm:$0xff]
    %v1464 = vld [vmem:[#allocation8 + $0x14e8] sm:$0xff]
    %v1465 = vld [vmem:[#allocation8 + $0x14f0] sm:$0xff]
    %v1466 = vld [vmem:[#allocation8 + $0x14f8] sm:$0xff]
    %v1467 = vld [vmem:[#allocation8 + $0x1500] sm:$0xff]
    %v1468 = vld [vmem:[#allocation8 + $0x1508] sm:$0xff]
    %v1469 = vld [vmem:[#allocation8 + $0x1510] sm:$0xff]
    %v1470 = vld [vmem:[#allocation8 + $0x1518] sm:$0xff]
    %v1471 = vld [vmem:[#allocation8 + $0x1520] sm:$0xff]
    %v1472 = vld [vmem:[#allocation8 + $0x1528] sm:$0xff]
    %v1473 = vld [vmem:[#allocation8 + $0x1530] sm:$0xff]
    %v1474 = vld [vmem:[#allocation8 + $0x1538] sm:$0xff]
    %v1475 = vld [vmem:[#allocation8 + $0x1540] sm:$0xff]
    %v1476 = vld [vmem:[#allocation8 + $0x1548] sm:$0xff]
    %v1477 = vld [vmem:[#allocation8 + $0x1550] sm:$0xff]
    %v1478 = vld [vmem:[#allocation8 + $0x1558] sm:$0xff]
    %v1479 = vld [vmem:[#allocation8 + $0x1560] sm:$0xff]
    %v1480 = vld [vmem:[#allocation8 + $0x1568] sm:$0xff]
    %v1481 = vld [vmem:[#allocation8 + $0x1570] sm:$0xff]
    %v1482 = vld [vmem:[#allocation8 + $0x1578] sm:$0xff]
    %v1483 = vld [vmem:[#allocation8 + $0x1580] sm:$0xff]
    %v1484 = vld [vmem:[#allocation8 + $0x1588] sm:$0xff]
    %v1485 = vld [vmem:[#allocation8 + $0x1590] sm:$0xff]
    %v1486 = vld [vmem:[#allocation8 + $0x1598] sm:$0xff]
    %v1487 = vld [vmem:[#allocation8 + $0x15a0] sm:$0xff]
    %v1488 = vld [vmem:[#allocation8 + $0x15a8] sm:$0xff]
    %v1489 = vld [vmem:[#allocation8 + $0x15b0] sm:$0xff]
    %v1490 = vld [vmem:[#allocation8 + $0x15b8] sm:$0xff]
    %v1491 = vld [vmem:[#allocation8 + $0x15c0] sm:$0xff]
    %v1492 = vld [vmem:[#allocation8 + $0x15c8] sm:$0xff]
    %v1493 = vld [vmem:[#allocation8 + $0x15d0] sm:$0xff]
    %v1494 = vld [vmem:[#allocation8 + $0x15d8] sm:$0xff]
    %v1495 = vld [vmem:[#allocation8 + $0x15e0] sm:$0xff]
    %v1496 = vld [vmem:[#allocation8 + $0x15e8] sm:$0xff]
    %v1497 = vld [vmem:[#allocation8 + $0x15f0] sm:$0xff]
    %v1498 = vld [vmem:[#allocation8 + $0x15f8] sm:$0xff]
    %v1499 = vld [vmem:[#allocation8 + $0x1600] sm:$0xff]
    %v1500 = vld [vmem:[#allocation8 + $0x1608] sm:$0xff]
    %v1501 = vld [vmem:[#allocation8 + $0x1610] sm:$0xff]
    %v1502 = vld [vmem:[#allocation8 + $0x1618] sm:$0xff]
    %v1503 = vld [vmem:[#allocation8 + $0x1620] sm:$0xff]
    %v1504 = vld [vmem:[#allocation8 + $0x1628] sm:$0xff]
    %v1505 = vld [vmem:[#allocation8 + $0x1630] sm:$0xff]
    %v1506 = vld [vmem:[#allocation8 + $0x1638] sm:$0xff]
    %v1507 = vld [vmem:[#allocation8 + $0x1640] sm:$0xff]
    %v1508 = vld [vmem:[#allocation8 + $0x1648] sm:$0xff]
    %v1509 = vld [vmem:[#allocation8 + $0x1650] sm:$0xff]
    %v1510 = vld [vmem:[#allocation8 + $0x1658] sm:$0xff]
    %v1511 = vld [vmem:[#allocation8 + $0x1660] sm:$0xff]
    %v1512 = vld [vmem:[#allocation8 + $0x1668] sm:$0xff]
    %v1513 = vld [vmem:[#allocation8 + $0x1670] sm:$0xff]
    %v1514 = vld [vmem:[#allocation8 + $0x1678] sm:$0xff]
    %v1515 = vld [vmem:[#allocation8 + $0x1680] sm:$0xff]
    %v1516 = vld [vmem:[#allocation8 + $0x1688] sm:$0xff]
    %v1517 = vld [vmem:[#allocation8 + $0x1690] sm:$0xff]
    %v1518 = vld [vmem:[#allocation8 + $0x1698] sm:$0xff]
    %v1519 = vld [vmem:[#allocation8 + $0x16a0] sm:$0xff]
    %v1520 = vld [vmem:[#allocation8 + $0x16a8] sm:$0xff]
    %v1521 = vld [vmem:[#allocation8 + $0x16b0] sm:$0xff]
    %v1522 = vld [vmem:[#allocation8 + $0x16b8] sm:$0xff]
    %v1523 = vld [vmem:[#allocation8 + $0x16c0] sm:$0xff]
    %v1524 = vld [vmem:[#allocation8 + $0x16c8] sm:$0xff]
    %v1525 = vld [vmem:[#allocation8 + $0x16d0] sm:$0xff]
    %v1526 = vld [vmem:[#allocation8 + $0x16d8] sm:$0xff]
    %v1527 = vld [vmem:[#allocation8 + $0x16e0] sm:$0xff]
    %v1528 = vld [vmem:[#allocation8 + $0x16e8] sm:$0xff]
    %v1529 = vld [vmem:[#allocation8 + $0x16f0] sm:$0xff]
    %v1530 = vld [vmem:[#allocation8 + $0x16f8] sm:$0xff]
    %v1531 = vld [vmem:[#allocation8 + $0x1700] sm:$0xff]
    %v1532 = vld [vmem:[#allocation8 + $0x1708] sm:$0xff]
    %v1533 = vld [vmem:[#allocation8 + $0x1710] sm:$0xff]
    %v1534 = vld [vmem:[#allocation8 + $0x1718] sm:$0xff]
    %v1535 = vld [vmem:[#allocation8 + $0x1720] sm:$0xff]
    %v1536 = vld [vmem:[#allocation8 + $0x1728] sm:$0xff]
    %v1537 = vld [vmem:[#allocation8 + $0x1730] sm:$0xff]
    %v1538 = vld [vmem:[#allocation8 + $0x1738] sm:$0xff]
    %v1539 = vld [vmem:[#allocation8 + $0x1740] sm:$0xff]
    %v1540 = vld [vmem:[#allocation8 + $0x1748] sm:$0xff]
    %v1541 = vld [vmem:[#allocation8 + $0x1750] sm:$0xff]
    %v1542 = vld [vmem:[#allocation8 + $0x1758] sm:$0xff]
    %v1543 = vld [vmem:[#allocation8 + $0x1760] sm:$0xff]
    %v1544 = vld [vmem:[#allocation8 + $0x1768] sm:$0xff]
    %v1545 = vld [vmem:[#allocation8 + $0x1770] sm:$0xff]
    %v1546 = vld [vmem:[#allocation8 + $0x1778] sm:$0xff]
    %v1547 = vld [vmem:[#allocation8 + $0x1780] sm:$0xff]
    %v1548 = vld [vmem:[#allocation8 + $0x1788] sm:$0xff]
    %v1549 = vld [vmem:[#allocation8 + $0x1790] sm:$0xff]
    %v1550 = vld [vmem:[#allocation8 + $0x1798] sm:$0xff]
    %v1551 = vld [vmem:[#allocation8 + $0x17a0] sm:$0xff]
    %v1552 = vld [vmem:[#allocation8 + $0x17a8] sm:$0xff]
    %v1553 = vld [vmem:[#allocation8 + $0x17b0] sm:$0xff]
    %v1554 = vld [vmem:[#allocation8 + $0x17b8] sm:$0xff]
    %v1555 = vld [vmem:[#allocation8 + $0x17c0] sm:$0xff]
    %v1556 = vld [vmem:[#allocation8 + $0x17c8] sm:$0xff]
    %v1557 = vld [vmem:[#allocation8 + $0x17d0] sm:$0xff]
    %v1558 = vld [vmem:[#allocation8 + $0x17d8] sm:$0xff]
    %v1559 = vld [vmem:[#allocation8 + $0x17e0] sm:$0xff]
    %v1560 = vld [vmem:[#allocation8 + $0x17e8] sm:$0xff]
    %v1561 = vld [vmem:[#allocation8 + $0x17f0] sm:$0xff]
    %v1562 = vld [vmem:[#allocation8 + $0x17f8] sm:$0xff]
    %v1563 = vld [vmem:[#allocation8 + $0x1800] sm:$0xff]
    %v1564 = vld [vmem:[#allocation8 + $0x1808] sm:$0xff]
    %v1565 = vld [vmem:[#allocation8 + $0x1810] sm:$0xff]
    %v1566 = vld [vmem:[#allocation8 + $0x1818] sm:$0xff]
    %v1567 = vld [vmem:[#allocation8 + $0x1820] sm:$0xff]
    %v1568 = vld [vmem:[#allocation8 + $0x1828] sm:$0xff]
    %v1569 = vld [vmem:[#allocation8 + $0x1830] sm:$0xff]
    %v1570 = vld [vmem:[#allocation8 + $0x1838] sm:$0xff]
    %v1571 = vld [vmem:[#allocation8 + $0x1840] sm:$0xff]
    %v1572 = vld [vmem:[#allocation8 + $0x1848] sm:$0xff]
    %v1573 = vld [vmem:[#allocation8 + $0x1850] sm:$0xff]
    %v1574 = vld [vmem:[#allocation8 + $0x1858] sm:$0xff]
    %v1575 = vld [vmem:[#allocation8 + $0x1860] sm:$0xff]
    %v1576 = vld [vmem:[#allocation8 + $0x1868] sm:$0xff]
    %v1577 = vld [vmem:[#allocation8 + $0x1870] sm:$0xff]
    %v1578 = vld [vmem:[#allocation8 + $0x1878] sm:$0xff]
    %v1579 = vld [vmem:[#allocation8 + $0x1880] sm:$0xff]
    %v1580 = vld [vmem:[#allocation8 + $0x1888] sm:$0xff]
    %v1581 = vld [vmem:[#allocation8 + $0x1890] sm:$0xff]
    %v1582 = vld [vmem:[#allocation8 + $0x1898] sm:$0xff]
    %v1583 = vld [vmem:[#allocation8 + $0x18a0] sm:$0xff]
    %v1584 = vld [vmem:[#allocation8 + $0x18a8] sm:$0xff]
    %v1585 = vld [vmem:[#allocation8 + $0x18b0] sm:$0xff]
    %v1586 = vld [vmem:[#allocation8 + $0x18b8] sm:$0xff]
    %v1587 = vld [vmem:[#allocation8 + $0x18c0] sm:$0xff]
    %v1588 = vld [vmem:[#allocation8 + $0x18c8] sm:$0xff]
    %v1589 = vld [vmem:[#allocation8 + $0x18d0] sm:$0xff]
    %v1590 = vld [vmem:[#allocation8 + $0x18d8] sm:$0xff]
    %v1591 = vld [vmem:[#allocation8 + $0x18e0] sm:$0xff]
    %v1592 = vld [vmem:[#allocation8 + $0x18e8] sm:$0xff]
    %v1593 = vld [vmem:[#allocation8 + $0x18f0] sm:$0xff]
    %v1594 = vld [vmem:[#allocation8 + $0x18f8] sm:$0xff]
    %v1595 = vld [vmem:[#allocation8 + $0x1900] sm:$0xff]
    %v1596 = vld [vmem:[#allocation8 + $0x1908] sm:$0xff]
    %v1597 = vld [vmem:[#allocation8 + $0x1910] sm:$0xff]
    %v1598 = vld [vmem:[#allocation8 + $0x1918] sm:$0xff]
    %v1599 = vld [vmem:[#allocation8 + $0x1920] sm:$0xff]
    %v1600 = vld [vmem:[#allocation8 + $0x1928] sm:$0xff]
    %v1601 = vld [vmem:[#allocation8 + $0x1930] sm:$0xff]
    %v1602 = vld [vmem:[#allocation8 + $0x1938] sm:$0xff]
    %v1603 = vld [vmem:[#allocation8 + $0x1940] sm:$0xff]
    %v1604 = vld [vmem:[#allocation8 + $0x1948] sm:$0xff]
    %v1605 = vld [vmem:[#allocation8 + $0x1950] sm:$0xff]
    %v1606 = vld [vmem:[#allocation8 + $0x1958] sm:$0xff]
    %v1607 = vld [vmem:[#allocation8 + $0x1960] sm:$0xff]
    %v1608 = vld [vmem:[#allocation8 + $0x1968] sm:$0xff]
    %v1609 = vld [vmem:[#allocation8 + $0x1970] sm:$0xff]
    %v1610 = vld [vmem:[#allocation8 + $0x1978] sm:$0xff]
    %v1611 = vld [vmem:[#allocation8 + $0x1980] sm:$0xff]
    %v1612 = vld [vmem:[#allocation8 + $0x1988] sm:$0xff]
    %v1613 = vld [vmem:[#allocation8 + $0x1990] sm:$0xff]
    %v1614 = vld [vmem:[#allocation8 + $0x1998] sm:$0xff]
    %v1615 = vld [vmem:[#allocation8 + $0x19a0] sm:$0xff]
    %v1616 = vld [vmem:[#allocation8 + $0x19a8] sm:$0xff]
    %v1617 = vld [vmem:[#allocation8 + $0x19b0] sm:$0xff]
    %v1618 = vld [vmem:[#allocation8 + $0x19b8] sm:$0xff]
    %v1619 = vld [vmem:[#allocation8 + $0x19c0] sm:$0xff]
    %v1620 = vld [vmem:[#allocation8 + $0x19c8] sm:$0xff]
    %v1621 = vld [vmem:[#allocation8 + $0x19d0] sm:$0xff]
    %v1622 = vld [vmem:[#allocation8 + $0x19d8] sm:$0xff]
    %v1623 = vld [vmem:[#allocation8 + $0x19e0] sm:$0xff]
    %v1624 = vld [vmem:[#allocation8 + $0x19e8] sm:$0xff]
    %v1625 = vld [vmem:[#allocation8 + $0x19f0] sm:$0xff]
    %v1626 = vld [vmem:[#allocation8 + $0x19f8] sm:$0xff]
    %v1627 = vld [vmem:[#allocation8 + $0x1a00] sm:$0xff]
    %v1628 = vld [vmem:[#allocation8 + $0x1a08] sm:$0xff]
    %v1629 = vld [vmem:[#allocation8 + $0x1a10] sm:$0xff]
    %v1630 = vld [vmem:[#allocation8 + $0x1a18] sm:$0xff]
    %v1631 = vld [vmem:[#allocation8 + $0x1a20] sm:$0xff]
    %v1632 = vld [vmem:[#allocation8 + $0x1a28] sm:$0xff]
    %v1633 = vld [vmem:[#allocation8 + $0x1a30] sm:$0xff]
    %v1634 = vld [vmem:[#allocation8 + $0x1a38] sm:$0xff]
    %v1635 = vld [vmem:[#allocation8 + $0x1a40] sm:$0xff]
    %v1636 = vld [vmem:[#allocation8 + $0x1a48] sm:$0xff]
    %v1637 = vld [vmem:[#allocation8 + $0x1a50] sm:$0xff]
    %v1638 = vld [vmem:[#allocation8 + $0x1a58] sm:$0xff]
    %v1639 = vld [vmem:[#allocation8 + $0x1a60] sm:$0xff]
    %v1640 = vld [vmem:[#allocation8 + $0x1a68] sm:$0xff]
    %v1641 = vld [vmem:[#allocation8 + $0x1a70] sm:$0xff]
    %v1642 = vld [vmem:[#allocation8 + $0x1a78] sm:$0xff]
    %v1643 = vld [vmem:[#allocation8 + $0x1a80] sm:$0xff]
    %v1644 = vld [vmem:[#allocation8 + $0x1a88] sm:$0xff]
    %v1645 = vld [vmem:[#allocation8 + $0x1a90] sm:$0xff]
    %v1646 = vld [vmem:[#allocation8 + $0x1a98] sm:$0xff]
    %v1647 = vld [vmem:[#allocation8 + $0x1aa0] sm:$0xff]
    %v1648 = vld [vmem:[#allocation8 + $0x1aa8] sm:$0xff]
    %v1649 = vld [vmem:[#allocation8 + $0x1ab0] sm:$0xff]
    %v1650 = vld [vmem:[#allocation8 + $0x1ab8] sm:$0xff]
    %v1651 = vld [vmem:[#allocation8 + $0x1ac0] sm:$0xff]
    %v1652 = vld [vmem:[#allocation8 + $0x1ac8] sm:$0xff]
    %v1653 = vld [vmem:[#allocation8 + $0x1ad0] sm:$0xff]
    %v1654 = vld [vmem:[#allocation8 + $0x1ad8] sm:$0xff]
    %v1655 = vld [vmem:[#allocation8 + $0x1ae0] sm:$0xff]
    %v1656 = vld [vmem:[#allocation8 + $0x1ae8] sm:$0xff]
    %v1657 = vld [vmem:[#allocation8 + $0x1af0] sm:$0xff]
    %v1658 = vld [vmem:[#allocation8 + $0x1af8] sm:$0xff]
    %v1659 = vld [vmem:[#allocation8 + $0x1b00] sm:$0xff]
    %v1660 = vld [vmem:[#allocation8 + $0x1b08] sm:$0xff]
    %v1661 = vld [vmem:[#allocation8 + $0x1b10] sm:$0xff]
    %v1662 = vld [vmem:[#allocation8 + $0x1b18] sm:$0xff]
    %v1663 = vld [vmem:[#allocation8 + $0x1b20] sm:$0xff]
    %v1664 = vld [vmem:[#allocation8 + $0x1b28] sm:$0xff]
    %v1665 = vld [vmem:[#allocation8 + $0x1b30] sm:$0xff]
    %v1666 = vld [vmem:[#allocation8 + $0x1b38] sm:$0xff]
    %v1667 = vld [vmem:[#allocation8 + $0x1b40] sm:$0xff]
    %v1668 = vld [vmem:[#allocation8 + $0x1b48] sm:$0xff]
    %v1669 = vld [vmem:[#allocation8 + $0x1b50] sm:$0xff]
    %v1670 = vld [vmem:[#allocation8 + $0x1b58] sm:$0xff]
    %v1671 = vld [vmem:[#allocation8 + $0x1b60] sm:$0xff]
    %v1672 = vld [vmem:[#allocation8 + $0x1b68] sm:$0xff]
    %v1673 = vld [vmem:[#allocation8 + $0x1b70] sm:$0xff]
    %v1674 = vld [vmem:[#allocation8 + $0x1b78] sm:$0xff]
    %v1675 = vld [vmem:[#allocation8 + $0x1b80] sm:$0xff]
    %v1676 = vld [vmem:[#allocation8 + $0x1b88] sm:$0xff]
    %v1677 = vld [vmem:[#allocation8 + $0x1b90] sm:$0xff]
    %v1678 = vld [vmem:[#allocation8 + $0x1b98] sm:$0xff]
    %v1679 = vld [vmem:[#allocation8 + $0x1ba0] sm:$0xff]
    %v1680 = vld [vmem:[#allocation8 + $0x1ba8] sm:$0xff]
    %v1681 = vld [vmem:[#allocation8 + $0x1bb0] sm:$0xff]
    %v1682 = vld [vmem:[#allocation8 + $0x1bb8] sm:$0xff]
    %v1683 = vld [vmem:[#allocation8 + $0x1bc0] sm:$0xff]
    %v1684 = vld [vmem:[#allocation8 + $0x1bc8] sm:$0xff]
    %v1685 = vld [vmem:[#allocation8 + $0x1bd0] sm:$0xff]
    %v1686 = vld [vmem:[#allocation8 + $0x1bd8] sm:$0xff]
    %v1687 = vld [vmem:[#allocation8 + $0x1be0] sm:$0xff]
    %v1688 = vld [vmem:[#allocation8 + $0x1be8] sm:$0xff]
    %v1689 = vld [vmem:[#allocation8 + $0x1bf0] sm:$0xff]
    %v1690 = vld [vmem:[#allocation8 + $0x1bf8] sm:$0xff]
    %v1691 = vld [vmem:[#allocation8 + $0x1c00] sm:$0xff]
    %v1692 = vld [vmem:[#allocation8 + $0x1c08] sm:$0xff]
    %v1693 = vld [vmem:[#allocation8 + $0x1c10] sm:$0xff]
    %v1694 = vld [vmem:[#allocation8 + $0x1c18] sm:$0xff]
    %v1695 = vld [vmem:[#allocation8 + $0x1c20] sm:$0xff]
    %v1696 = vld [vmem:[#allocation8 + $0x1c28] sm:$0xff]
    %v1697 = vld [vmem:[#allocation8 + $0x1c30] sm:$0xff]
    %v1698 = vld [vmem:[#allocation8 + $0x1c38] sm:$0xff]
    %v1699 = vld [vmem:[#allocation8 + $0x1c40] sm:$0xff]
    %v1700 = vld [vmem:[#allocation8 + $0x1c48] sm:$0xff]
    %v1701 = vld [vmem:[#allocation8 + $0x1c50] sm:$0xff]
    %v1702 = vld [vmem:[#allocation8 + $0x1c58] sm:$0xff]
    %v1703 = vld [vmem:[#allocation8 + $0x1c60] sm:$0xff]
    %v1704 = vld [vmem:[#allocation8 + $0x1c68] sm:$0xff]
    %v1705 = vld [vmem:[#allocation8 + $0x1c70] sm:$0xff]
    %v1706 = vld [vmem:[#allocation8 + $0x1c78] sm:$0xff]
    %v1707 = vld [vmem:[#allocation8 + $0x1c80] sm:$0xff]
    %v1708 = vld [vmem:[#allocation8 + $0x1c88] sm:$0xff]
    %v1709 = vld [vmem:[#allocation8 + $0x1c90] sm:$0xff]
    %v1710 = vld [vmem:[#allocation8 + $0x1c98] sm:$0xff]
    %v1711 = vld [vmem:[#allocation8 + $0x1ca0] sm:$0xff]
    %v1712 = vld [vmem:[#allocation8 + $0x1ca8] sm:$0xff]
    %v1713 = vld [vmem:[#allocation8 + $0x1cb0] sm:$0xff]
    %v1714 = vld [vmem:[#allocation8 + $0x1cb8] sm:$0xff]
    %v1715 = vld [vmem:[#allocation8 + $0x1cc0] sm:$0xff]
    %v1716 = vld [vmem:[#allocation8 + $0x1cc8] sm:$0xff]
    %v1717 = vld [vmem:[#allocation8 + $0x1cd0] sm:$0xff]
    %v1718 = vld [vmem:[#allocation8 + $0x1cd8] sm:$0xff]
    %v1719 = vld [vmem:[#allocation8 + $0x1ce0] sm:$0xff]
    %v1720 = vld [vmem:[#allocation8 + $0x1ce8] sm:$0xff]
    %v1721 = vld [vmem:[#allocation8 + $0x1cf0] sm:$0xff]
    %v1722 = vld [vmem:[#allocation8 + $0x1cf8] sm:$0xff]
    %v1723 = vld [vmem:[#allocation8 + $0x1d00] sm:$0xff]
    %v1724 = vld [vmem:[#allocation8 + $0x1d08] sm:$0xff]
    %v1725 = vld [vmem:[#allocation8 + $0x1d10] sm:$0xff]
    %v1726 = vld [vmem:[#allocation8 + $0x1d18] sm:$0xff]
    %v1727 = vld [vmem:[#allocation8 + $0x1d20] sm:$0xff]
    %v1728 = vld [vmem:[#allocation8 + $0x1d28] sm:$0xff]
    %v1729 = vld [vmem:[#allocation8 + $0x1d30] sm:$0xff]
    %v1730 = vld [vmem:[#allocation8 + $0x1d38] sm:$0xff]
    %v1731 = vld [vmem:[#allocation8 + $0x1d40] sm:$0xff]
    %v1732 = vld [vmem:[#allocation8 + $0x1d48] sm:$0xff]
    %v1733 = vld [vmem:[#allocation8 + $0x1d50] sm:$0xff]
    %v1734 = vld [vmem:[#allocation8 + $0x1d58] sm:$0xff]
    %v1735 = vld [vmem:[#allocation8 + $0x1d60] sm:$0xff]
    %v1736 = vld [vmem:[#allocation8 + $0x1d68] sm:$0xff]
    %v1737 = vld [vmem:[#allocation8 + $0x1d70] sm:$0xff]
    %v1738 = vld [vmem:[#allocation8 + $0x1d78] sm:$0xff]
    %v1739 = vld [vmem:[#allocation8 + $0x1d80] sm:$0xff]
    %v1740 = vld [vmem:[#allocation8 + $0x1d88] sm:$0xff]
    %v1741 = vld [vmem:[#allocation8 + $0x1d90] sm:$0xff]
    %v1742 = vld [vmem:[#allocation8 + $0x1d98] sm:$0xff]
    %v1743 = vld [vmem:[#allocation8 + $0x1da0] sm:$0xff]
    %v1744 = vld [vmem:[#allocation8 + $0x1da8] sm:$0xff]
    %v1745 = vld [vmem:[#allocation8 + $0x1db0] sm:$0xff]
    %v1746 = vld [vmem:[#allocation8 + $0x1db8] sm:$0xff]
    %v1747 = vld [vmem:[#allocation8 + $0x1dc0] sm:$0xff]
    %v1748 = vld [vmem:[#allocation8 + $0x1dc8] sm:$0xff]
    %v1749 = vld [vmem:[#allocation8 + $0x1dd0] sm:$0xff]
    %v1750 = vld [vmem:[#allocation8 + $0x1dd8] sm:$0xff]
    %v1751 = vld [vmem:[#allocation8 + $0x1de0] sm:$0xff]
    %v1752 = vld [vmem:[#allocation8 + $0x1de8] sm:$0xff]
    %v1753 = vld [vmem:[#allocation8 + $0x1df0] sm:$0xff]
    %v1754 = vld [vmem:[#allocation8 + $0x1df8] sm:$0xff]
    %v1755 = vld [vmem:[#allocation8 + $0x1e00] sm:$0xff]
    %v1756 = vld [vmem:[#allocation8 + $0x1e08] sm:$0xff]
    %v1757 = vld [vmem:[#allocation8 + $0x1e10] sm:$0xff]
    %v1758 = vld [vmem:[#allocation8 + $0x1e18] sm:$0xff]
    %v1759 = vld [vmem:[#allocation8 + $0x1e20] sm:$0xff]
    %v1760 = vld [vmem:[#allocation8 + $0x1e28] sm:$0xff]
    %v1761 = vld [vmem:[#allocation8 + $0x1e30] sm:$0xff]
    %v1762 = vld [vmem:[#allocation8 + $0x1e38] sm:$0xff]
    %v1763 = vld [vmem:[#allocation8 + $0x1e40] sm:$0xff]
    %v1764 = vld [vmem:[#allocation8 + $0x1e48] sm:$0xff]
    %v1765 = vld [vmem:[#allocation8 + $0x1e50] sm:$0xff]
    %v1766 = vld [vmem:[#allocation8 + $0x1e58] sm:$0xff]
    %v1767 = vld [vmem:[#allocation8 + $0x1e60] sm:$0xff]
    %v1768 = vld [vmem:[#allocation8 + $0x1e68] sm:$0xff]
    %v1769 = vld [vmem:[#allocation8 + $0x1e70] sm:$0xff]
    %v1770 = vld [vmem:[#allocation8 + $0x1e78] sm:$0xff]
    %v1771 = vld [vmem:[#allocation8 + $0x1e80] sm:$0xff]
    %v1772 = vld [vmem:[#allocation8 + $0x1e88] sm:$0xff]
    %v1773 = vld [vmem:[#allocation8 + $0x1e90] sm:$0xff]
    %v1774 = vld [vmem:[#allocation8 + $0x1e98] sm:$0xff]
    %v1775 = vld [vmem:[#allocation8 + $0x1ea0] sm:$0xff]
    %v1776 = vld [vmem:[#allocation8 + $0x1ea8] sm:$0xff]
    %v1777 = vld [vmem:[#allocation8 + $0x1eb0] sm:$0xff]
    %v1778 = vld [vmem:[#allocation8 + $0x1eb8] sm:$0xff]
    %v1779 = vld [vmem:[#allocation8 + $0x1ec0] sm:$0xff]
    %v1780 = vld [vmem:[#allocation8 + $0x1ec8] sm:$0xff]
    %v1781 = vld [vmem:[#allocation8 + $0x1ed0] sm:$0xff]
    %v1782 = vld [vmem:[#allocation8 + $0x1ed8] sm:$0xff]
    %v1783 = vld [vmem:[#allocation8 + $0x1ee0] sm:$0xff]
    %v1784 = vld [vmem:[#allocation8 + $0x1ee8] sm:$0xff]
    %v1785 = vld [vmem:[#allocation8 + $0x1ef0] sm:$0xff]
    %v1786 = vld [vmem:[#allocation8 + $0x1ef8] sm:$0xff]
    %v1787 = vld [vmem:[#allocation8 + $0x1f00] sm:$0xff]
    %v1788 = vld [vmem:[#allocation8 + $0x1f08] sm:$0xff]
    %v1789 = vld [vmem:[#allocation8 + $0x1f10] sm:$0xff]
    %v1790 = vld [vmem:[#allocation8 + $0x1f18] sm:$0xff]
    %v1791 = vld [vmem:[#allocation8 + $0x1f20] sm:$0xff]
    %v1792 = vld [vmem:[#allocation8 + $0x1f28] sm:$0xff]
    %v1793 = vld [vmem:[#allocation8 + $0x1f30] sm:$0xff]
    %v1794 = vld [vmem:[#allocation8 + $0x1f38] sm:$0xff]
    %v1795 = vld [vmem:[#allocation8 + $0x1f40] sm:$0xff]
    %v1796 = vld [vmem:[#allocation8 + $0x1f48] sm:$0xff]
    %v1797 = vld [vmem:[#allocation8 + $0x1f50] sm:$0xff]
    %v1798 = vld [vmem:[#allocation8 + $0x1f58] sm:$0xff]
    %v1799 = vld [vmem:[#allocation8 + $0x1f60] sm:$0xff]
    %v1800 = vld [vmem:[#allocation8 + $0x1f68] sm:$0xff]
    %v1801 = vld [vmem:[#allocation8 + $0x1f70] sm:$0xff]
    %v1802 = vld [vmem:[#allocation8 + $0x1f78] sm:$0xff]
    %v1803 = vld [vmem:[#allocation8 + $0x1f80] sm:$0xff]
    %v1804 = vld [vmem:[#allocation8 + $0x1f88] sm:$0xff]
    %v1805 = vld [vmem:[#allocation8 + $0x1f90] sm:$0xff]
    %v1806 = vld [vmem:[#allocation8 + $0x1f98] sm:$0xff]
    %v1807 = vld [vmem:[#allocation8 + $0x1fa0] sm:$0xff]
    %v1808 = vld [vmem:[#allocation8 + $0x1fa8] sm:$0xff]
    %v1809 = vld [vmem:[#allocation8 + $0x1fb0] sm:$0xff]
    %v1810 = vld [vmem:[#allocation8 + $0x1fb8] sm:$0xff]
    %v1811 = vld [vmem:[#allocation8 + $0x1fc0] sm:$0xff]
    %v1812 = vld [vmem:[#allocation8 + $0x1fc8] sm:$0xff]
    %v1813 = vld [vmem:[#allocation8 + $0x1fd0] sm:$0xff]
    %v1814 = vld [vmem:[#allocation8 + $0x1fd8] sm:$0xff]
    %v1815 = vld [vmem:[#allocation8 + $0x1fe0] sm:$0xff]
    %v1816 = vld [vmem:[#allocation8 + $0x1fe8] sm:$0xff]
    %v1817 = vld [vmem:[#allocation8 + $0x1ff0] sm:$0xff]
    %v1818 = vld [vmem:[#allocation8 + $0x1ff8] sm:$0xff]
    %v1819 = vld [vmem:[#allocation10] sm:$0xff]
    %v1821 = vlaneseq
    %v1822 = vshrl.u32 %v1821, 7
    %v1823 = vsub.s32 0, %v1822
    %v1824 = vrot.slane %v1819, %v1823
    %v1825 = vlaneseq
    %v1826 = vshrl.u32 %v1825, 7
    %v1827 = vsub.s32 1, %v1826
    %v1828 = vrot.slane %v1819, %v1827
    %v1829 = vlaneseq
    %v1830 = vshrl.u32 %v1829, 7
    %v1831 = vsub.s32 2, %v1830
    %v1832 = vrot.slane %v1819, %v1831
    %v1833 = vlaneseq
    %v1834 = vshrl.u32 %v1833, 7
    %v1835 = vsub.s32 3, %v1834
    %v1836 = vrot.slane %v1819, %v1835
    %v1837 = vlaneseq
    %v1838 = vshrl.u32 %v1837, 7
    %v1839 = vsub.s32 4, %v1838
    %v1840 = vrot.slane %v1819, %v1839
    %v1841 = vlaneseq
    %v1842 = vshrl.u32 %v1841, 7
    %v1843 = vsub.s32 5, %v1842
    %v1844 = vrot.slane %v1819, %v1843
    %v1845 = vlaneseq
    %v1846 = vshrl.u32 %v1845, 7
    %v1847 = vsub.s32 6, %v1846
    %v1848 = vrot.slane %v1819, %v1847
    %v1849 = vlaneseq
    %v1850 = vshrl.u32 %v1849, 7
    %v1851 = vsub.s32 7, %v1850
    %v1852 = vrot.slane %v1819, %v1851
    %v2885 = vunpack.c.l.b16 %v795
    %v2886 = vunpack.c.h.b16 %v795
    %v2887 = vunpack.c.l.b16 %v796
    %v2888 = vunpack.c.h.b16 %v796
    %v2889 = vunpack.c.l.b16 %v797
    %v2890 = vunpack.c.h.b16 %v797
    %v2891 = vunpack.c.l.b16 %v798
    %v2892 = vunpack.c.h.b16 %v798
    %v2893 = vunpack.c.l.b16 %v799
    %v2894 = vunpack.c.h.b16 %v799
    %v2895 = vunpack.c.l.b16 %v800
    %v2896 = vunpack.c.h.b16 %v800
    %v2897 = vunpack.c.l.b16 %v801
    %v2898 = vunpack.c.h.b16 %v801
    %v2899 = vunpack.c.l.b16 %v802
    %v2900 = vunpack.c.h.b16 %v802
    %v2901 = vunpack.c.l.b16 %v803
    %v2902 = vunpack.c.h.b16 %v803
    %v2903 = vunpack.c.l.b16 %v804
    %v2904 = vunpack.c.h.b16 %v804
    %v2905 = vunpack.c.l.b16 %v805
    %v2906 = vunpack.c.h.b16 %v805
    %v2907 = vunpack.c.l.b16 %v806
    %v2908 = vunpack.c.h.b16 %v806
    %v2909 = vunpack.c.l.b16 %v807
    %v2910 = vunpack.c.h.b16 %v807
    %v2911 = vunpack.c.l.b16 %v808
    %v2912 = vunpack.c.h.b16 %v808
    %v2913 = vunpack.c.l.b16 %v809
    %v2914 = vunpack.c.h.b16 %v809
    %v2915 = vunpack.c.l.b16 %v810
    %v2916 = vunpack.c.h.b16 %v810
    %v2917 = vunpack.c.l.b16 %v811
    %v2918 = vunpack.c.h.b16 %v811
    %v2919 = vunpack.c.l.b16 %v812
    %v2920 = vunpack.c.h.b16 %v812
    %v2921 = vunpack.c.l.b16 %v813
    %v2922 = vunpack.c.h.b16 %v813
    %v2923 = vunpack.c.l.b16 %v814
    %v2924 = vunpack.c.h.b16 %v814
    %v2925 = vunpack.c.l.b16 %v815
    %v2926 = vunpack.c.h.b16 %v815
    %v2927 = vunpack.c.l.b16 %v816
    %v2928 = vunpack.c.h.b16 %v816
    %v2929 = vunpack.c.l.b16 %v817
    %v2930 = vunpack.c.h.b16 %v817
    %v2931 = vunpack.c.l.b16 %v818
    %v2932 = vunpack.c.h.b16 %v818
    %v2933 = vunpack.c.l.b16 %v819
    %v2934 = vunpack.c.h.b16 %v819
    %v2935 = vunpack.c.l.b16 %v820
    %v2936 = vunpack.c.h.b16 %v820
    %v2937 = vunpack.c.l.b16 %v821
    %v2938 = vunpack.c.h.b16 %v821
    %v2939 = vunpack.c.l.b16 %v822
    %v2940 = vunpack.c.h.b16 %v822
    %v2941 = vunpack.c.l.b16 %v823
    %v2942 = vunpack.c.h.b16 %v823
    %v2943 = vunpack.c.l.b16 %v824
    %v2944 = vunpack.c.h.b16 %v824
    %v2945 = vunpack.c.l.b16 %v825
    %v2946 = vunpack.c.h.b16 %v825
    %v2947 = vunpack.c.l.b16 %v826
    %v2948 = vunpack.c.h.b16 %v826
    %v2949 = vunpack.c.l.b16 %v827
    %v2950 = vunpack.c.h.b16 %v827
    %v2951 = vunpack.c.l.b16 %v828
    %v2952 = vunpack.c.h.b16 %v828
    %v2953 = vunpack.c.l.b16 %v829
    %v2954 = vunpack.c.h.b16 %v829
    %v2955 = vunpack.c.l.b16 %v830
    %v2956 = vunpack.c.h.b16 %v830
    %v2957 = vunpack.c.l.b16 %v831
    %v2958 = vunpack.c.h.b16 %v831
    %v2959 = vunpack.c.l.b16 %v832
    %v2960 = vunpack.c.h.b16 %v832
    %v2961 = vunpack.c.l.b16 %v833
    %v2962 = vunpack.c.h.b16 %v833
    %v2963 = vunpack.c.l.b16 %v834
    %v2964 = vunpack.c.h.b16 %v834
    %v2965 = vunpack.c.l.b16 %v835
    %v2966 = vunpack.c.h.b16 %v835
    %v2967 = vunpack.c.l.b16 %v836
    %v2968 = vunpack.c.h.b16 %v836
    %v2969 = vunpack.c.l.b16 %v837
    %v2970 = vunpack.c.h.b16 %v837
    %v2971 = vunpack.c.l.b16 %v838
    %v2972 = vunpack.c.h.b16 %v838
    %v2973 = vunpack.c.l.b16 %v839
    %v2974 = vunpack.c.h.b16 %v839
    %v2975 = vunpack.c.l.b16 %v840
    %v2976 = vunpack.c.h.b16 %v840
    %v2977 = vunpack.c.l.b16 %v841
    %v2978 = vunpack.c.h.b16 %v841
    %v2979 = vunpack.c.l.b16 %v842
    %v2980 = vunpack.c.h.b16 %v842
    %v2981 = vunpack.c.l.b16 %v843
    %v2982 = vunpack.c.h.b16 %v843
    %v2983 = vunpack.c.l.b16 %v844
    %v2984 = vunpack.c.h.b16 %v844
    %v2985 = vunpack.c.l.b16 %v845
    %v2986 = vunpack.c.h.b16 %v845
    %v2987 = vunpack.c.l.b16 %v846
    %v2988 = vunpack.c.h.b16 %v846
    %v2989 = vunpack.c.l.b16 %v847
    %v2990 = vunpack.c.h.b16 %v847
    %v2991 = vunpack.c.l.b16 %v848
    %v2992 = vunpack.c.h.b16 %v848
    %v2993 = vunpack.c.l.b16 %v849
    %v2994 = vunpack.c.h.b16 %v849
    %v2995 = vunpack.c.l.b16 %v850
    %v2996 = vunpack.c.h.b16 %v850
    %v2997 = vunpack.c.l.b16 %v851
    %v2998 = vunpack.c.h.b16 %v851
    %v2999 = vunpack.c.l.b16 %v852
    %v3000 = vunpack.c.h.b16 %v852
    %v3001 = vunpack.c.l.b16 %v853
    %v3002 = vunpack.c.h.b16 %v853
    %v3003 = vunpack.c.l.b16 %v854
    %v3004 = vunpack.c.h.b16 %v854
    %v3005 = vunpack.c.l.b16 %v855
    %v3006 = vunpack.c.h.b16 %v855
    %v3007 = vunpack.c.l.b16 %v856
    %v3008 = vunpack.c.h.b16 %v856
    %v3009 = vunpack.c.l.b16 %v857
    %v3010 = vunpack.c.h.b16 %v857
    %v3011 = vunpack.c.l.b16 %v858
    %v3012 = vunpack.c.h.b16 %v858
    %v3013 = vunpack.c.l.b16 %v859
    %v3014 = vunpack.c.h.b16 %v859
    %v3015 = vunpack.c.l.b16 %v860
    %v3016 = vunpack.c.h.b16 %v860
    %v3017 = vunpack.c.l.b16 %v861
    %v3018 = vunpack.c.h.b16 %v861
    %v3019 = vunpack.c.l.b16 %v862
    %v3020 = vunpack.c.h.b16 %v862
    %v3021 = vunpack.c.l.b16 %v863
    %v3022 = vunpack.c.h.b16 %v863
    %v3023 = vunpack.c.l.b16 %v864
    %v3024 = vunpack.c.h.b16 %v864
    %v3025 = vunpack.c.l.b16 %v865
    %v3026 = vunpack.c.h.b16 %v865
    %v3027 = vunpack.c.l.b16 %v866
    %v3028 = vunpack.c.h.b16 %v866
    %v3029 = vunpack.c.l.b16 %v867
    %v3030 = vunpack.c.h.b16 %v867
    %v3031 = vunpack.c.l.b16 %v868
    %v3032 = vunpack.c.h.b16 %v868
    %v3033 = vunpack.c.l.b16 %v869
    %v3034 = vunpack.c.h.b16 %v869
    %v3035 = vunpack.c.l.b16 %v870
    %v3036 = vunpack.c.h.b16 %v870
    %v3037 = vunpack.c.l.b16 %v871
    %v3038 = vunpack.c.h.b16 %v871
    %v3039 = vunpack.c.l.b16 %v872
    %v3040 = vunpack.c.h.b16 %v872
    %v3041 = vunpack.c.l.b16 %v873
    %v3042 = vunpack.c.h.b16 %v873
    %v3043 = vunpack.c.l.b16 %v874
    %v3044 = vunpack.c.h.b16 %v874
    %v3045 = vunpack.c.l.b16 %v875
    %v3046 = vunpack.c.h.b16 %v875
    %v3047 = vunpack.c.l.b16 %v876
    %v3048 = vunpack.c.h.b16 %v876
    %v3049 = vunpack.c.l.b16 %v877
    %v3050 = vunpack.c.h.b16 %v877
    %v3051 = vunpack.c.l.b16 %v878
    %v3052 = vunpack.c.h.b16 %v878
    %v3053 = vunpack.c.l.b16 %v879
    %v3054 = vunpack.c.h.b16 %v879
    %v3055 = vunpack.c.l.b16 %v880
    %v3056 = vunpack.c.h.b16 %v880
    %v3057 = vunpack.c.l.b16 %v881
    %v3058 = vunpack.c.h.b16 %v881
    %v3059 = vunpack.c.l.b16 %v882
    %v3060 = vunpack.c.h.b16 %v882
    %v3061 = vunpack.c.l.b16 %v883
    %v3062 = vunpack.c.h.b16 %v883
    %v3063 = vunpack.c.l.b16 %v884
    %v3064 = vunpack.c.h.b16 %v884
    %v3065 = vunpack.c.l.b16 %v885
    %v3066 = vunpack.c.h.b16 %v885
    %v3067 = vunpack.c.l.b16 %v886
    %v3068 = vunpack.c.h.b16 %v886
    %v3069 = vunpack.c.l.b16 %v887
    %v3070 = vunpack.c.h.b16 %v887
    %v3071 = vunpack.c.l.b16 %v888
    %v3072 = vunpack.c.h.b16 %v888
    %v3073 = vunpack.c.l.b16 %v889
    %v3074 = vunpack.c.h.b16 %v889
    %v3075 = vunpack.c.l.b16 %v890
    %v3076 = vunpack.c.h.b16 %v890
    %v3077 = vunpack.c.l.b16 %v891
    %v3078 = vunpack.c.h.b16 %v891
    %v3079 = vunpack.c.l.b16 %v892
    %v3080 = vunpack.c.h.b16 %v892
    %v3081 = vunpack.c.l.b16 %v893
    %v3082 = vunpack.c.h.b16 %v893
    %v3083 = vunpack.c.l.b16 %v894
    %v3084 = vunpack.c.h.b16 %v894
    %v3085 = vunpack.c.l.b16 %v895
    %v3086 = vunpack.c.h.b16 %v895
    %v3087 = vunpack.c.l.b16 %v896
    %v3088 = vunpack.c.h.b16 %v896
    %v3089 = vunpack.c.l.b16 %v897
    %v3090 = vunpack.c.h.b16 %v897
    %v3091 = vunpack.c.l.b16 %v898
    %v3092 = vunpack.c.h.b16 %v898
    %v3093 = vunpack.c.l.b16 %v899
    %v3094 = vunpack.c.h.b16 %v899
    %v3095 = vunpack.c.l.b16 %v900
    %v3096 = vunpack.c.h.b16 %v900
    %v3097 = vunpack.c.l.b16 %v901
    %v3098 = vunpack.c.h.b16 %v901
    %v3099 = vunpack.c.l.b16 %v902
    %v3100 = vunpack.c.h.b16 %v902
    %v3101 = vunpack.c.l.b16 %v903
    %v3102 = vunpack.c.h.b16 %v903
    %v3103 = vunpack.c.l.b16 %v904
    %v3104 = vunpack.c.h.b16 %v904
    %v3105 = vunpack.c.l.b16 %v905
    %v3106 = vunpack.c.h.b16 %v905
    %v3107 = vunpack.c.l.b16 %v906
    %v3108 = vunpack.c.h.b16 %v906
    %v3109 = vunpack.c.l.b16 %v907
    %v3110 = vunpack.c.h.b16 %v907
    %v3111 = vunpack.c.l.b16 %v908
    %v3112 = vunpack.c.h.b16 %v908
    %v3113 = vunpack.c.l.b16 %v909
    %v3114 = vunpack.c.h.b16 %v909
    %v3115 = vunpack.c.l.b16 %v910
    %v3116 = vunpack.c.h.b16 %v910
    %v3117 = vunpack.c.l.b16 %v911
    %v3118 = vunpack.c.h.b16 %v911
    %v3119 = vunpack.c.l.b16 %v912
    %v3120 = vunpack.c.h.b16 %v912
    %v3121 = vunpack.c.l.b16 %v913
    %v3122 = vunpack.c.h.b16 %v913
    %v3123 = vunpack.c.l.b16 %v914
    %v3124 = vunpack.c.h.b16 %v914
    %v3125 = vunpack.c.l.b16 %v915
    %v3126 = vunpack.c.h.b16 %v915
    %v3127 = vunpack.c.l.b16 %v916
    %v3128 = vunpack.c.h.b16 %v916
    %v3129 = vunpack.c.l.b16 %v917
    %v3130 = vunpack.c.h.b16 %v917
    %v3131 = vunpack.c.l.b16 %v918
    %v3132 = vunpack.c.h.b16 %v918
    %v3133 = vunpack.c.l.b16 %v919
    %v3134 = vunpack.c.h.b16 %v919
    %v3135 = vunpack.c.l.b16 %v920
    %v3136 = vunpack.c.h.b16 %v920
    %v3137 = vunpack.c.l.b16 %v921
    %v3138 = vunpack.c.h.b16 %v921
    %v3139 = vunpack.c.l.b16 %v922
    %v3140 = vunpack.c.h.b16 %v922
    %v3141 = vunpack.c.l.b16 %v923
    %v3142 = vunpack.c.h.b16 %v923
    %v3143 = vunpack.c.l.b16 %v924
    %v3144 = vunpack.c.h.b16 %v924
    %v3145 = vunpack.c.l.b16 %v925
    %v3146 = vunpack.c.h.b16 %v925
    %v3147 = vunpack.c.l.b16 %v926
    %v3148 = vunpack.c.h.b16 %v926
    %v3149 = vunpack.c.l.b16 %v927
    %v3150 = vunpack.c.h.b16 %v927
    %v3151 = vunpack.c.l.b16 %v928
    %v3152 = vunpack.c.h.b16 %v928
    %v3153 = vunpack.c.l.b16 %v929
    %v3154 = vunpack.c.h.b16 %v929
    %v3155 = vunpack.c.l.b16 %v930
    %v3156 = vunpack.c.h.b16 %v930
    %v3157 = vunpack.c.l.b16 %v931
    %v3158 = vunpack.c.h.b16 %v931
    %v3159 = vunpack.c.l.b16 %v932
    %v3160 = vunpack.c.h.b16 %v932
    %v3161 = vunpack.c.l.b16 %v933
    %v3162 = vunpack.c.h.b16 %v933
    %v3163 = vunpack.c.l.b16 %v934
    %v3164 = vunpack.c.h.b16 %v934
    %v3165 = vunpack.c.l.b16 %v935
    %v3166 = vunpack.c.h.b16 %v935
    %v3167 = vunpack.c.l.b16 %v936
    %v3168 = vunpack.c.h.b16 %v936
    %v3169 = vunpack.c.l.b16 %v937
    %v3170 = vunpack.c.h.b16 %v937
    %v3171 = vunpack.c.l.b16 %v938
    %v3172 = vunpack.c.h.b16 %v938
    %v3173 = vunpack.c.l.b16 %v939
    %v3174 = vunpack.c.h.b16 %v939
    %v3175 = vunpack.c.l.b16 %v940
    %v3176 = vunpack.c.h.b16 %v940
    %v3177 = vunpack.c.l.b16 %v941
    %v3178 = vunpack.c.h.b16 %v941
    %v3179 = vunpack.c.l.b16 %v942
    %v3180 = vunpack.c.h.b16 %v942
    %v3181 = vunpack.c.l.b16 %v943
    %v3182 = vunpack.c.h.b16 %v943
    %v3183 = vunpack.c.l.b16 %v944
    %v3184 = vunpack.c.h.b16 %v944
    %v3185 = vunpack.c.l.b16 %v945
    %v3186 = vunpack.c.h.b16 %v945
    %v3187 = vunpack.c.l.b16 %v946
    %v3188 = vunpack.c.h.b16 %v946
    %v3189 = vunpack.c.l.b16 %v947
    %v3190 = vunpack.c.h.b16 %v947
    %v3191 = vunpack.c.l.b16 %v948
    %v3192 = vunpack.c.h.b16 %v948
    %v3193 = vunpack.c.l.b16 %v949
    %v3194 = vunpack.c.h.b16 %v949
    %v3195 = vunpack.c.l.b16 %v950
    %v3196 = vunpack.c.h.b16 %v950
    %v3197 = vunpack.c.l.b16 %v951
    %v3198 = vunpack.c.h.b16 %v951
    %v3199 = vunpack.c.l.b16 %v952
    %v3200 = vunpack.c.h.b16 %v952
    %v3201 = vunpack.c.l.b16 %v953
    %v3202 = vunpack.c.h.b16 %v953
    %v3203 = vunpack.c.l.b16 %v954
    %v3204 = vunpack.c.h.b16 %v954
    %v3205 = vunpack.c.l.b16 %v955
    %v3206 = vunpack.c.h.b16 %v955
    %v3207 = vunpack.c.l.b16 %v956
    %v3208 = vunpack.c.h.b16 %v956
    %v3209 = vunpack.c.l.b16 %v957
    %v3210 = vunpack.c.h.b16 %v957
    %v3211 = vunpack.c.l.b16 %v958
    %v3212 = vunpack.c.h.b16 %v958
    %v3213 = vunpack.c.l.b16 %v959
    %v3214 = vunpack.c.h.b16 %v959
    %v3215 = vunpack.c.l.b16 %v960
    %v3216 = vunpack.c.h.b16 %v960
    %v3217 = vunpack.c.l.b16 %v961
    %v3218 = vunpack.c.h.b16 %v961
    %v3219 = vunpack.c.l.b16 %v962
    %v3220 = vunpack.c.h.b16 %v962
    %v3221 = vunpack.c.l.b16 %v963
    %v3222 = vunpack.c.h.b16 %v963
    %v3223 = vunpack.c.l.b16 %v964
    %v3224 = vunpack.c.h.b16 %v964
    %v3225 = vunpack.c.l.b16 %v965
    %v3226 = vunpack.c.h.b16 %v965
    %v3227 = vunpack.c.l.b16 %v966
    %v3228 = vunpack.c.h.b16 %v966
    %v3229 = vunpack.c.l.b16 %v967
    %v3230 = vunpack.c.h.b16 %v967
    %v3231 = vunpack.c.l.b16 %v968
    %v3232 = vunpack.c.h.b16 %v968
    %v3233 = vunpack.c.l.b16 %v969
    %v3234 = vunpack.c.h.b16 %v969
    %v3235 = vunpack.c.l.b16 %v970
    %v3236 = vunpack.c.h.b16 %v970
    %v3237 = vunpack.c.l.b16 %v971
    %v3238 = vunpack.c.h.b16 %v971
    %v3239 = vunpack.c.l.b16 %v972
    %v3240 = vunpack.c.h.b16 %v972
    %v3241 = vunpack.c.l.b16 %v973
    %v3242 = vunpack.c.h.b16 %v973
    %v3243 = vunpack.c.l.b16 %v974
    %v3244 = vunpack.c.h.b16 %v974
    %v3245 = vunpack.c.l.b16 %v975
    %v3246 = vunpack.c.h.b16 %v975
    %v3247 = vunpack.c.l.b16 %v976
    %v3248 = vunpack.c.h.b16 %v976
    %v3249 = vunpack.c.l.b16 %v977
    %v3250 = vunpack.c.h.b16 %v977
    %v3251 = vunpack.c.l.b16 %v978
    %v3252 = vunpack.c.h.b16 %v978
    %v3253 = vunpack.c.l.b16 %v979
    %v3254 = vunpack.c.h.b16 %v979
    %v3255 = vunpack.c.l.b16 %v980
    %v3256 = vunpack.c.h.b16 %v980
    %v3257 = vunpack.c.l.b16 %v981
    %v3258 = vunpack.c.h.b16 %v981
    %v3259 = vunpack.c.l.b16 %v982
    %v3260 = vunpack.c.h.b16 %v982
    %v3261 = vunpack.c.l.b16 %v983
    %v3262 = vunpack.c.h.b16 %v983
    %v3263 = vunpack.c.l.b16 %v984
    %v3264 = vunpack.c.h.b16 %v984
    %v3265 = vunpack.c.l.b16 %v985
    %v3266 = vunpack.c.h.b16 %v985
    %v3267 = vunpack.c.l.b16 %v986
    %v3268 = vunpack.c.h.b16 %v986
    %v3269 = vunpack.c.l.b16 %v987
    %v3270 = vunpack.c.h.b16 %v987
    %v3271 = vunpack.c.l.b16 %v988
    %v3272 = vunpack.c.h.b16 %v988
    %v3273 = vunpack.c.l.b16 %v989
    %v3274 = vunpack.c.h.b16 %v989
    %v3275 = vunpack.c.l.b16 %v990
    %v3276 = vunpack.c.h.b16 %v990
    %v3277 = vunpack.c.l.b16 %v991
    %v3278 = vunpack.c.h.b16 %v991
    %v3279 = vunpack.c.l.b16 %v992
    %v3280 = vunpack.c.h.b16 %v992
    %v3281 = vunpack.c.l.b16 %v993
    %v3282 = vunpack.c.h.b16 %v993
    %v3283 = vunpack.c.l.b16 %v994
    %v3284 = vunpack.c.h.b16 %v994
    %v3285 = vunpack.c.l.b16 %v995
    %v3286 = vunpack.c.h.b16 %v995
    %v3287 = vunpack.c.l.b16 %v996
    %v3288 = vunpack.c.h.b16 %v996
    %v3289 = vunpack.c.l.b16 %v997
    %v3290 = vunpack.c.h.b16 %v997
    %v3291 = vunpack.c.l.b16 %v998
    %v3292 = vunpack.c.h.b16 %v998
    %v3293 = vunpack.c.l.b16 %v999
    %v3294 = vunpack.c.h.b16 %v999
    %v3295 = vunpack.c.l.b16 %v1000
    %v3296 = vunpack.c.h.b16 %v1000
    %v3297 = vunpack.c.l.b16 %v1001
    %v3298 = vunpack.c.h.b16 %v1001
    %v3299 = vunpack.c.l.b16 %v1002
    %v3300 = vunpack.c.h.b16 %v1002
    %v3301 = vunpack.c.l.b16 %v1003
    %v3302 = vunpack.c.h.b16 %v1003
    %v3303 = vunpack.c.l.b16 %v1004
    %v3304 = vunpack.c.h.b16 %v1004
    %v3305 = vunpack.c.l.b16 %v1005
    %v3306 = vunpack.c.h.b16 %v1005
    %v3307 = vunpack.c.l.b16 %v1006
    %v3308 = vunpack.c.h.b16 %v1006
    %v3309 = vunpack.c.l.b16 %v1007
    %v3310 = vunpack.c.h.b16 %v1007
    %v3311 = vunpack.c.l.b16 %v1008
    %v3312 = vunpack.c.h.b16 %v1008
    %v3313 = vunpack.c.l.b16 %v1009
    %v3314 = vunpack.c.h.b16 %v1009
    %v3315 = vunpack.c.l.b16 %v1010
    %v3316 = vunpack.c.h.b16 %v1010
    %v3317 = vunpack.c.l.b16 %v1011
    %v3318 = vunpack.c.h.b16 %v1011
    %v3319 = vunpack.c.l.b16 %v1012
    %v3320 = vunpack.c.h.b16 %v1012
    %v3321 = vunpack.c.l.b16 %v1013
    %v3322 = vunpack.c.h.b16 %v1013
    %v3323 = vunpack.c.l.b16 %v1014
    %v3324 = vunpack.c.h.b16 %v1014
    %v3325 = vunpack.c.l.b16 %v1015
    %v3326 = vunpack.c.h.b16 %v1015
    %v3327 = vunpack.c.l.b16 %v1016
    %v3328 = vunpack.c.h.b16 %v1016
    %v3329 = vunpack.c.l.b16 %v1017
    %v3330 = vunpack.c.h.b16 %v1017
    %v3331 = vunpack.c.l.b16 %v1018
    %v3332 = vunpack.c.h.b16 %v1018
    %v3333 = vunpack.c.l.b16 %v1019
    %v3334 = vunpack.c.h.b16 %v1019
    %v3335 = vunpack.c.l.b16 %v1020
    %v3336 = vunpack.c.h.b16 %v1020
    %v3337 = vunpack.c.l.b16 %v1021
    %v3338 = vunpack.c.h.b16 %v1021
    %v3339 = vunpack.c.l.b16 %v1022
    %v3340 = vunpack.c.h.b16 %v1022
    %v3341 = vunpack.c.l.b16 %v1023
    %v3342 = vunpack.c.h.b16 %v1023
    %v3343 = vunpack.c.l.b16 %v1024
    %v3344 = vunpack.c.h.b16 %v1024
    %v3345 = vunpack.c.l.b16 %v1025
    %v3346 = vunpack.c.h.b16 %v1025
    %v3347 = vunpack.c.l.b16 %v1026
    %v3348 = vunpack.c.h.b16 %v1026
    %v3349 = vunpack.c.l.b16 %v1027
    %v3350 = vunpack.c.h.b16 %v1027
    %v3351 = vunpack.c.l.b16 %v1028
    %v3352 = vunpack.c.h.b16 %v1028
    %v3353 = vunpack.c.l.b16 %v1029
    %v3354 = vunpack.c.h.b16 %v1029
    %v3355 = vunpack.c.l.b16 %v1030
    %v3356 = vunpack.c.h.b16 %v1030
    %v3357 = vunpack.c.l.b16 %v1031
    %v3358 = vunpack.c.h.b16 %v1031
    %v3359 = vunpack.c.l.b16 %v1032
    %v3360 = vunpack.c.h.b16 %v1032
    %v3361 = vunpack.c.l.b16 %v1033
    %v3362 = vunpack.c.h.b16 %v1033
    %v3363 = vunpack.c.l.b16 %v1034
    %v3364 = vunpack.c.h.b16 %v1034
    %v3365 = vunpack.c.l.b16 %v1035
    %v3366 = vunpack.c.h.b16 %v1035
    %v3367 = vunpack.c.l.b16 %v1036
    %v3368 = vunpack.c.h.b16 %v1036
    %v3369 = vunpack.c.l.b16 %v1037
    %v3370 = vunpack.c.h.b16 %v1037
    %v3371 = vunpack.c.l.b16 %v1038
    %v3372 = vunpack.c.h.b16 %v1038
    %v3373 = vunpack.c.l.b16 %v1039
    %v3374 = vunpack.c.h.b16 %v1039
    %v3375 = vunpack.c.l.b16 %v1040
    %v3376 = vunpack.c.h.b16 %v1040
    %v3377 = vunpack.c.l.b16 %v1041
    %v3378 = vunpack.c.h.b16 %v1041
    %v3379 = vunpack.c.l.b16 %v1042
    %v3380 = vunpack.c.h.b16 %v1042
    %v3381 = vunpack.c.l.b16 %v1043
    %v3382 = vunpack.c.h.b16 %v1043
    %v3383 = vunpack.c.l.b16 %v1044
    %v3384 = vunpack.c.h.b16 %v1044
    %v3385 = vunpack.c.l.b16 %v1045
    %v3386 = vunpack.c.h.b16 %v1045
    %v3387 = vunpack.c.l.b16 %v1046
    %v3388 = vunpack.c.h.b16 %v1046
    %v3389 = vunpack.c.l.b16 %v1047
    %v3390 = vunpack.c.h.b16 %v1047
    %v3391 = vunpack.c.l.b16 %v1048
    %v3392 = vunpack.c.h.b16 %v1048
    %v3393 = vunpack.c.l.b16 %v1049
    %v3394 = vunpack.c.h.b16 %v1049
    %v3395 = vunpack.c.l.b16 %v1050
    %v3396 = vunpack.c.h.b16 %v1050
    %v3397 = vunpack.c.l.b16 %v1051
    %v3398 = vunpack.c.h.b16 %v1051
    %v3399 = vunpack.c.l.b16 %v1052
    %v3400 = vunpack.c.h.b16 %v1052
    %v3401 = vunpack.c.l.b16 %v1053
    %v3402 = vunpack.c.h.b16 %v1053
    %v3403 = vunpack.c.l.b16 %v1054
    %v3404 = vunpack.c.h.b16 %v1054
    %v3405 = vunpack.c.l.b16 %v1055
    %v3406 = vunpack.c.h.b16 %v1055
    %v3407 = vunpack.c.l.b16 %v1056
    %v3408 = vunpack.c.h.b16 %v1056
    %v3409 = vunpack.c.l.b16 %v1057
    %v3410 = vunpack.c.h.b16 %v1057
    %v3411 = vunpack.c.l.b16 %v1058
    %v3412 = vunpack.c.h.b16 %v1058
    %v3413 = vunpack.c.l.b16 %v1059
    %v3414 = vunpack.c.h.b16 %v1059
    %v3415 = vunpack.c.l.b16 %v1060
    %v3416 = vunpack.c.h.b16 %v1060
    %v3417 = vunpack.c.l.b16 %v1061
    %v3418 = vunpack.c.h.b16 %v1061
    %v3419 = vunpack.c.l.b16 %v1062
    %v3420 = vunpack.c.h.b16 %v1062
    %v3421 = vunpack.c.l.b16 %v1063
    %v3422 = vunpack.c.h.b16 %v1063
    %v3423 = vunpack.c.l.b16 %v1064
    %v3424 = vunpack.c.h.b16 %v1064
    %v3425 = vunpack.c.l.b16 %v1065
    %v3426 = vunpack.c.h.b16 %v1065
    %v3427 = vunpack.c.l.b16 %v1066
    %v3428 = vunpack.c.h.b16 %v1066
    %v3429 = vunpack.c.l.b16 %v1067
    %v3430 = vunpack.c.h.b16 %v1067
    %v3431 = vunpack.c.l.b16 %v1068
    %v3432 = vunpack.c.h.b16 %v1068
    %v3433 = vunpack.c.l.b16 %v1069
    %v3434 = vunpack.c.h.b16 %v1069
    %v3435 = vunpack.c.l.b16 %v1070
    %v3436 = vunpack.c.h.b16 %v1070
    %v3437 = vunpack.c.l.b16 %v1071
    %v3438 = vunpack.c.h.b16 %v1071
    %v3439 = vunpack.c.l.b16 %v1072
    %v3440 = vunpack.c.h.b16 %v1072
    %v3441 = vunpack.c.l.b16 %v1073
    %v3442 = vunpack.c.h.b16 %v1073
    %v3443 = vunpack.c.l.b16 %v1074
    %v3444 = vunpack.c.h.b16 %v1074
    %v3445 = vunpack.c.l.b16 %v1075
    %v3446 = vunpack.c.h.b16 %v1075
    %v3447 = vunpack.c.l.b16 %v1076
    %v3448 = vunpack.c.h.b16 %v1076
    %v3449 = vunpack.c.l.b16 %v1077
    %v3450 = vunpack.c.h.b16 %v1077
    %v3451 = vunpack.c.l.b16 %v1078
    %v3452 = vunpack.c.h.b16 %v1078
    %v3453 = vunpack.c.l.b16 %v1079
    %v3454 = vunpack.c.h.b16 %v1079
    %v3455 = vunpack.c.l.b16 %v1080
    %v3456 = vunpack.c.h.b16 %v1080
    %v3457 = vunpack.c.l.b16 %v1081
    %v3458 = vunpack.c.h.b16 %v1081
    %v3459 = vunpack.c.l.b16 %v1082
    %v3460 = vunpack.c.h.b16 %v1082
    %v3461 = vunpack.c.l.b16 %v1083
    %v3462 = vunpack.c.h.b16 %v1083
    %v3463 = vunpack.c.l.b16 %v1084
    %v3464 = vunpack.c.h.b16 %v1084
    %v3465 = vunpack.c.l.b16 %v1085
    %v3466 = vunpack.c.h.b16 %v1085
    %v3467 = vunpack.c.l.b16 %v1086
    %v3468 = vunpack.c.h.b16 %v1086
    %v3469 = vunpack.c.l.b16 %v1087
    %v3470 = vunpack.c.h.b16 %v1087
    %v3471 = vunpack.c.l.b16 %v1088
    %v3472 = vunpack.c.h.b16 %v1088
    %v3473 = vunpack.c.l.b16 %v1089
    %v3474 = vunpack.c.h.b16 %v1089
    %v3475 = vunpack.c.l.b16 %v1090
    %v3476 = vunpack.c.h.b16 %v1090
    %v3477 = vunpack.c.l.b16 %v1091
    %v3478 = vunpack.c.h.b16 %v1091
    %v3479 = vunpack.c.l.b16 %v1092
    %v3480 = vunpack.c.h.b16 %v1092
    %v3481 = vunpack.c.l.b16 %v1093
    %v3482 = vunpack.c.h.b16 %v1093
    %v3483 = vunpack.c.l.b16 %v1094
    %v3484 = vunpack.c.h.b16 %v1094
    %v3485 = vunpack.c.l.b16 %v1095
    %v3486 = vunpack.c.h.b16 %v1095
    %v3487 = vunpack.c.l.b16 %v1096
    %v3488 = vunpack.c.h.b16 %v1096
    %v3489 = vunpack.c.l.b16 %v1097
    %v3490 = vunpack.c.h.b16 %v1097
    %v3491 = vunpack.c.l.b16 %v1098
    %v3492 = vunpack.c.h.b16 %v1098
    %v3493 = vunpack.c.l.b16 %v1099
    %v3494 = vunpack.c.h.b16 %v1099
    %v3495 = vunpack.c.l.b16 %v1100
    %v3496 = vunpack.c.h.b16 %v1100
    %v3497 = vunpack.c.l.b16 %v1101
    %v3498 = vunpack.c.h.b16 %v1101
    %v3499 = vunpack.c.l.b16 %v1102
    %v3500 = vunpack.c.h.b16 %v1102
    %v3501 = vunpack.c.l.b16 %v1103
    %v3502 = vunpack.c.h.b16 %v1103
    %v3503 = vunpack.c.l.b16 %v1104
    %v3504 = vunpack.c.h.b16 %v1104
    %v3505 = vunpack.c.l.b16 %v1105
    %v3506 = vunpack.c.h.b16 %v1105
    %v3507 = vunpack.c.l.b16 %v1106
    %v3508 = vunpack.c.h.b16 %v1106
    %v3509 = vunpack.c.l.b16 %v1107
    %v3510 = vunpack.c.h.b16 %v1107
    %v3511 = vunpack.c.l.b16 %v1108
    %v3512 = vunpack.c.h.b16 %v1108
    %v3513 = vunpack.c.l.b16 %v1109
    %v3514 = vunpack.c.h.b16 %v1109
    %v3515 = vunpack.c.l.b16 %v1110
    %v3516 = vunpack.c.h.b16 %v1110
    %v3517 = vunpack.c.l.b16 %v1111
    %v3518 = vunpack.c.h.b16 %v1111
    %v3519 = vunpack.c.l.b16 %v1112
    %v3520 = vunpack.c.h.b16 %v1112
    %v3521 = vunpack.c.l.b16 %v1113
    %v3522 = vunpack.c.h.b16 %v1113
    %v3523 = vunpack.c.l.b16 %v1114
    %v3524 = vunpack.c.h.b16 %v1114
    %v3525 = vunpack.c.l.b16 %v1115
    %v3526 = vunpack.c.h.b16 %v1115
    %v3527 = vunpack.c.l.b16 %v1116
    %v3528 = vunpack.c.h.b16 %v1116
    %v3529 = vunpack.c.l.b16 %v1117
    %v3530 = vunpack.c.h.b16 %v1117
    %v3531 = vunpack.c.l.b16 %v1118
    %v3532 = vunpack.c.h.b16 %v1118
    %v3533 = vunpack.c.l.b16 %v1119
    %v3534 = vunpack.c.h.b16 %v1119
    %v3535 = vunpack.c.l.b16 %v1120
    %v3536 = vunpack.c.h.b16 %v1120
    %v3537 = vunpack.c.l.b16 %v1121
    %v3538 = vunpack.c.h.b16 %v1121
    %v3539 = vunpack.c.l.b16 %v1122
    %v3540 = vunpack.c.h.b16 %v1122
    %v3541 = vunpack.c.l.b16 %v1123
    %v3542 = vunpack.c.h.b16 %v1123
    %v3543 = vunpack.c.l.b16 %v1124
    %v3544 = vunpack.c.h.b16 %v1124
    %v3545 = vunpack.c.l.b16 %v1125
    %v3546 = vunpack.c.h.b16 %v1125
    %v3547 = vunpack.c.l.b16 %v1126
    %v3548 = vunpack.c.h.b16 %v1126
    %v3549 = vunpack.c.l.b16 %v1127
    %v3550 = vunpack.c.h.b16 %v1127
    %v3551 = vunpack.c.l.b16 %v1128
    %v3552 = vunpack.c.h.b16 %v1128
    %v3553 = vunpack.c.l.b16 %v1129
    %v3554 = vunpack.c.h.b16 %v1129
    %v3555 = vunpack.c.l.b16 %v1130
    %v3556 = vunpack.c.h.b16 %v1130
    %v3557 = vunpack.c.l.b16 %v1131
    %v3558 = vunpack.c.h.b16 %v1131
    %v3559 = vunpack.c.l.b16 %v1132
    %v3560 = vunpack.c.h.b16 %v1132
    %v3561 = vunpack.c.l.b16 %v1133
    %v3562 = vunpack.c.h.b16 %v1133
    %v3563 = vunpack.c.l.b16 %v1134
    %v3564 = vunpack.c.h.b16 %v1134
    %v3565 = vunpack.c.l.b16 %v1135
    %v3566 = vunpack.c.h.b16 %v1135
    %v3567 = vunpack.c.l.b16 %v1136
    %v3568 = vunpack.c.h.b16 %v1136
    %v3569 = vunpack.c.l.b16 %v1137
    %v3570 = vunpack.c.h.b16 %v1137
    %v3571 = vunpack.c.l.b16 %v1138
    %v3572 = vunpack.c.h.b16 %v1138
    %v3573 = vunpack.c.l.b16 %v1139
    %v3574 = vunpack.c.h.b16 %v1139
    %v3575 = vunpack.c.l.b16 %v1140
    %v3576 = vunpack.c.h.b16 %v1140
    %v3577 = vunpack.c.l.b16 %v1141
    %v3578 = vunpack.c.h.b16 %v1141
    %v3579 = vunpack.c.l.b16 %v1142
    %v3580 = vunpack.c.h.b16 %v1142
    %v3581 = vunpack.c.l.b16 %v1143
    %v3582 = vunpack.c.h.b16 %v1143
    %v3583 = vunpack.c.l.b16 %v1144
    %v3584 = vunpack.c.h.b16 %v1144
    %v3585 = vunpack.c.l.b16 %v1145
    %v3586 = vunpack.c.h.b16 %v1145
    %v3587 = vunpack.c.l.b16 %v1146
    %v3588 = vunpack.c.h.b16 %v1146
    %v3589 = vunpack.c.l.b16 %v1147
    %v3590 = vunpack.c.h.b16 %v1147
    %v3591 = vunpack.c.l.b16 %v1148
    %v3592 = vunpack.c.h.b16 %v1148
    %v3593 = vunpack.c.l.b16 %v1149
    %v3594 = vunpack.c.h.b16 %v1149
    %v3595 = vunpack.c.l.b16 %v1150
    %v3596 = vunpack.c.h.b16 %v1150
    %v3597 = vunpack.c.l.b16 %v1151
    %v3598 = vunpack.c.h.b16 %v1151
    %v3599 = vunpack.c.l.b16 %v1152
    %v3600 = vunpack.c.h.b16 %v1152
    %v3601 = vunpack.c.l.b16 %v1153
    %v3602 = vunpack.c.h.b16 %v1153
    %v3603 = vunpack.c.l.b16 %v1154
    %v3604 = vunpack.c.h.b16 %v1154
    %v3605 = vunpack.c.l.b16 %v1155
    %v3606 = vunpack.c.h.b16 %v1155
    %v3607 = vunpack.c.l.b16 %v1156
    %v3608 = vunpack.c.h.b16 %v1156
    %v3609 = vunpack.c.l.b16 %v1157
    %v3610 = vunpack.c.h.b16 %v1157
    %v3611 = vunpack.c.l.b16 %v1158
    %v3612 = vunpack.c.h.b16 %v1158
    %v3613 = vunpack.c.l.b16 %v1159
    %v3614 = vunpack.c.h.b16 %v1159
    %v3615 = vunpack.c.l.b16 %v1160
    %v3616 = vunpack.c.h.b16 %v1160
    %v3617 = vunpack.c.l.b16 %v1161
    %v3618 = vunpack.c.h.b16 %v1161
    %v3619 = vunpack.c.l.b16 %v1162
    %v3620 = vunpack.c.h.b16 %v1162
    %v3621 = vunpack.c.l.b16 %v1163
    %v3622 = vunpack.c.h.b16 %v1163
    %v3623 = vunpack.c.l.b16 %v1164
    %v3624 = vunpack.c.h.b16 %v1164
    %v3625 = vunpack.c.l.b16 %v1165
    %v3626 = vunpack.c.h.b16 %v1165
    %v3627 = vunpack.c.l.b16 %v1166
    %v3628 = vunpack.c.h.b16 %v1166
    %v3629 = vunpack.c.l.b16 %v1167
    %v3630 = vunpack.c.h.b16 %v1167
    %v3631 = vunpack.c.l.b16 %v1168
    %v3632 = vunpack.c.h.b16 %v1168
    %v3633 = vunpack.c.l.b16 %v1169
    %v3634 = vunpack.c.h.b16 %v1169
    %v3635 = vunpack.c.l.b16 %v1170
    %v3636 = vunpack.c.h.b16 %v1170
    %v3637 = vunpack.c.l.b16 %v1171
    %v3638 = vunpack.c.h.b16 %v1171
    %v3639 = vunpack.c.l.b16 %v1172
    %v3640 = vunpack.c.h.b16 %v1172
    %v3641 = vunpack.c.l.b16 %v1173
    %v3642 = vunpack.c.h.b16 %v1173
    %v3643 = vunpack.c.l.b16 %v1174
    %v3644 = vunpack.c.h.b16 %v1174
    %v3645 = vunpack.c.l.b16 %v1175
    %v3646 = vunpack.c.h.b16 %v1175
    %v3647 = vunpack.c.l.b16 %v1176
    %v3648 = vunpack.c.h.b16 %v1176
    %v3649 = vunpack.c.l.b16 %v1177
    %v3650 = vunpack.c.h.b16 %v1177
    %v3651 = vunpack.c.l.b16 %v1178
    %v3652 = vunpack.c.h.b16 %v1178
    %v3653 = vunpack.c.l.b16 %v1179
    %v3654 = vunpack.c.h.b16 %v1179
    %v3655 = vunpack.c.l.b16 %v1180
    %v3656 = vunpack.c.h.b16 %v1180
    %v3657 = vunpack.c.l.b16 %v1181
    %v3658 = vunpack.c.h.b16 %v1181
    %v3659 = vunpack.c.l.b16 %v1182
    %v3660 = vunpack.c.h.b16 %v1182
    %v3661 = vunpack.c.l.b16 %v1183
    %v3662 = vunpack.c.h.b16 %v1183
    %v3663 = vunpack.c.l.b16 %v1184
    %v3664 = vunpack.c.h.b16 %v1184
    %v3665 = vunpack.c.l.b16 %v1185
    %v3666 = vunpack.c.h.b16 %v1185
    %v3667 = vunpack.c.l.b16 %v1186
    %v3668 = vunpack.c.h.b16 %v1186
    %v3669 = vunpack.c.l.b16 %v1187
    %v3670 = vunpack.c.h.b16 %v1187
    %v3671 = vunpack.c.l.b16 %v1188
    %v3672 = vunpack.c.h.b16 %v1188
    %v3673 = vunpack.c.l.b16 %v1189
    %v3674 = vunpack.c.h.b16 %v1189
    %v3675 = vunpack.c.l.b16 %v1190
    %v3676 = vunpack.c.h.b16 %v1190
    %v3677 = vunpack.c.l.b16 %v1191
    %v3678 = vunpack.c.h.b16 %v1191
    %v3679 = vunpack.c.l.b16 %v1192
    %v3680 = vunpack.c.h.b16 %v1192
    %v3681 = vunpack.c.l.b16 %v1193
    %v3682 = vunpack.c.h.b16 %v1193
    %v3683 = vunpack.c.l.b16 %v1194
    %v3684 = vunpack.c.h.b16 %v1194
    %v3685 = vunpack.c.l.b16 %v1195
    %v3686 = vunpack.c.h.b16 %v1195
    %v3687 = vunpack.c.l.b16 %v1196
    %v3688 = vunpack.c.h.b16 %v1196
    %v3689 = vunpack.c.l.b16 %v1197
    %v3690 = vunpack.c.h.b16 %v1197
    %v3691 = vunpack.c.l.b16 %v1198
    %v3692 = vunpack.c.h.b16 %v1198
    %v3693 = vunpack.c.l.b16 %v1199
    %v3694 = vunpack.c.h.b16 %v1199
    %v3695 = vunpack.c.l.b16 %v1200
    %v3696 = vunpack.c.h.b16 %v1200
    %v3697 = vunpack.c.l.b16 %v1201
    %v3698 = vunpack.c.h.b16 %v1201
    %v3699 = vunpack.c.l.b16 %v1202
    %v3700 = vunpack.c.h.b16 %v1202
    %v3701 = vunpack.c.l.b16 %v1203
    %v3702 = vunpack.c.h.b16 %v1203
    %v3703 = vunpack.c.l.b16 %v1204
    %v3704 = vunpack.c.h.b16 %v1204
    %v3705 = vunpack.c.l.b16 %v1205
    %v3706 = vunpack.c.h.b16 %v1205
    %v3707 = vunpack.c.l.b16 %v1206
    %v3708 = vunpack.c.h.b16 %v1206
    %v3709 = vunpack.c.l.b16 %v1207
    %v3710 = vunpack.c.h.b16 %v1207
    %v3711 = vunpack.c.l.b16 %v1208
    %v3712 = vunpack.c.h.b16 %v1208
    %v3713 = vunpack.c.l.b16 %v1209
    %v3714 = vunpack.c.h.b16 %v1209
    %v3715 = vunpack.c.l.b16 %v1210
    %v3716 = vunpack.c.h.b16 %v1210
    %v3717 = vunpack.c.l.b16 %v1211
    %v3718 = vunpack.c.h.b16 %v1211
    %v3719 = vunpack.c.l.b16 %v1212
    %v3720 = vunpack.c.h.b16 %v1212
    %v3721 = vunpack.c.l.b16 %v1213
    %v3722 = vunpack.c.h.b16 %v1213
    %v3723 = vunpack.c.l.b16 %v1214
    %v3724 = vunpack.c.h.b16 %v1214
    %v3725 = vunpack.c.l.b16 %v1215
    %v3726 = vunpack.c.h.b16 %v1215
    %v3727 = vunpack.c.l.b16 %v1216
    %v3728 = vunpack.c.h.b16 %v1216
    %v3729 = vunpack.c.l.b16 %v1217
    %v3730 = vunpack.c.h.b16 %v1217
    %v3731 = vunpack.c.l.b16 %v1218
    %v3732 = vunpack.c.h.b16 %v1218
    %v3733 = vunpack.c.l.b16 %v1219
    %v3734 = vunpack.c.h.b16 %v1219
    %v3735 = vunpack.c.l.b16 %v1220
    %v3736 = vunpack.c.h.b16 %v1220
    %v3737 = vunpack.c.l.b16 %v1221
    %v3738 = vunpack.c.h.b16 %v1221
    %v3739 = vunpack.c.l.b16 %v1222
    %v3740 = vunpack.c.h.b16 %v1222
    %v3741 = vunpack.c.l.b16 %v1223
    %v3742 = vunpack.c.h.b16 %v1223
    %v3743 = vunpack.c.l.b16 %v1224
    %v3744 = vunpack.c.h.b16 %v1224
    %v3745 = vunpack.c.l.b16 %v1225
    %v3746 = vunpack.c.h.b16 %v1225
    %v3747 = vunpack.c.l.b16 %v1226
    %v3748 = vunpack.c.h.b16 %v1226
    %v3749 = vunpack.c.l.b16 %v1227
    %v3750 = vunpack.c.h.b16 %v1227
    %v3751 = vunpack.c.l.b16 %v1228
    %v3752 = vunpack.c.h.b16 %v1228
    %v3753 = vunpack.c.l.b16 %v1229
    %v3754 = vunpack.c.h.b16 %v1229
    %v3755 = vunpack.c.l.b16 %v1230
    %v3756 = vunpack.c.h.b16 %v1230
    %v3757 = vunpack.c.l.b16 %v1231
    %v3758 = vunpack.c.h.b16 %v1231
    %v3759 = vunpack.c.l.b16 %v1232
    %v3760 = vunpack.c.h.b16 %v1232
    %v3761 = vunpack.c.l.b16 %v1233
    %v3762 = vunpack.c.h.b16 %v1233
    %v3763 = vunpack.c.l.b16 %v1234
    %v3764 = vunpack.c.h.b16 %v1234
    %v3765 = vunpack.c.l.b16 %v1235
    %v3766 = vunpack.c.h.b16 %v1235
    %v3767 = vunpack.c.l.b16 %v1236
    %v3768 = vunpack.c.h.b16 %v1236
    %v3769 = vunpack.c.l.b16 %v1237
    %v3770 = vunpack.c.h.b16 %v1237
    %v3771 = vunpack.c.l.b16 %v1238
    %v3772 = vunpack.c.h.b16 %v1238
    %v3773 = vunpack.c.l.b16 %v1239
    %v3774 = vunpack.c.h.b16 %v1239
    %v3775 = vunpack.c.l.b16 %v1240
    %v3776 = vunpack.c.h.b16 %v1240
    %v3777 = vunpack.c.l.b16 %v1241
    %v3778 = vunpack.c.h.b16 %v1241
    %v3779 = vunpack.c.l.b16 %v1242
    %v3780 = vunpack.c.h.b16 %v1242
    %v3781 = vunpack.c.l.b16 %v1243
    %v3782 = vunpack.c.h.b16 %v1243
    %v3783 = vunpack.c.l.b16 %v1244
    %v3784 = vunpack.c.h.b16 %v1244
    %v3785 = vunpack.c.l.b16 %v1245
    %v3786 = vunpack.c.h.b16 %v1245
    %v3787 = vunpack.c.l.b16 %v1246
    %v3788 = vunpack.c.h.b16 %v1246
    %v3789 = vunpack.c.l.b16 %v1247
    %v3790 = vunpack.c.h.b16 %v1247
    %v3791 = vunpack.c.l.b16 %v1248
    %v3792 = vunpack.c.h.b16 %v1248
    %v3793 = vunpack.c.l.b16 %v1249
    %v3794 = vunpack.c.h.b16 %v1249
    %v3795 = vunpack.c.l.b16 %v1250
    %v3796 = vunpack.c.h.b16 %v1250
    %v3797 = vunpack.c.l.b16 %v1251
    %v3798 = vunpack.c.h.b16 %v1251
    %v3799 = vunpack.c.l.b16 %v1252
    %v3800 = vunpack.c.h.b16 %v1252
    %v3801 = vunpack.c.l.b16 %v1253
    %v3802 = vunpack.c.h.b16 %v1253
    %v3803 = vunpack.c.l.b16 %v1254
    %v3804 = vunpack.c.h.b16 %v1254
    %v3805 = vunpack.c.l.b16 %v1255
    %v3806 = vunpack.c.h.b16 %v1255
    %v3807 = vunpack.c.l.b16 %v1256
    %v3808 = vunpack.c.h.b16 %v1256
    %v3809 = vunpack.c.l.b16 %v1257
    %v3810 = vunpack.c.h.b16 %v1257
    %v3811 = vunpack.c.l.b16 %v1258
    %v3812 = vunpack.c.h.b16 %v1258
    %v3813 = vunpack.c.l.b16 %v1259
    %v3814 = vunpack.c.h.b16 %v1259
    %v3815 = vunpack.c.l.b16 %v1260
    %v3816 = vunpack.c.h.b16 %v1260
    %v3817 = vunpack.c.l.b16 %v1261
    %v3818 = vunpack.c.h.b16 %v1261
    %v3819 = vunpack.c.l.b16 %v1262
    %v3820 = vunpack.c.h.b16 %v1262
    %v3821 = vunpack.c.l.b16 %v1263
    %v3822 = vunpack.c.h.b16 %v1263
    %v3823 = vunpack.c.l.b16 %v1264
    %v3824 = vunpack.c.h.b16 %v1264
    %v3825 = vunpack.c.l.b16 %v1265
    %v3826 = vunpack.c.h.b16 %v1265
    %v3827 = vunpack.c.l.b16 %v1266
    %v3828 = vunpack.c.h.b16 %v1266
    %v3829 = vunpack.c.l.b16 %v1267
    %v3830 = vunpack.c.h.b16 %v1267
    %v3831 = vunpack.c.l.b16 %v1268
    %v3832 = vunpack.c.h.b16 %v1268
    %v3833 = vunpack.c.l.b16 %v1269
    %v3834 = vunpack.c.h.b16 %v1269
    %v3835 = vunpack.c.l.b16 %v1270
    %v3836 = vunpack.c.h.b16 %v1270
    %v3837 = vunpack.c.l.b16 %v1271
    %v3838 = vunpack.c.h.b16 %v1271
    %v3839 = vunpack.c.l.b16 %v1272
    %v3840 = vunpack.c.h.b16 %v1272
    %v3841 = vunpack.c.l.b16 %v1273
    %v3842 = vunpack.c.h.b16 %v1273
    %v3843 = vunpack.c.l.b16 %v1274
    %v3844 = vunpack.c.h.b16 %v1274
    %v3845 = vunpack.c.l.b16 %v1275
    %v3846 = vunpack.c.h.b16 %v1275
    %v3847 = vunpack.c.l.b16 %v1276
    %v3848 = vunpack.c.h.b16 %v1276
    %v3849 = vunpack.c.l.b16 %v1277
    %v3850 = vunpack.c.h.b16 %v1277
    %v3851 = vunpack.c.l.b16 %v1278
    %v3852 = vunpack.c.h.b16 %v1278
    %v3853 = vunpack.c.l.b16 %v1279
    %v3854 = vunpack.c.h.b16 %v1279
    %v3855 = vunpack.c.l.b16 %v1280
    %v3856 = vunpack.c.h.b16 %v1280
    %v3857 = vunpack.c.l.b16 %v1281
    %v3858 = vunpack.c.h.b16 %v1281
    %v3859 = vunpack.c.l.b16 %v1282
    %v3860 = vunpack.c.h.b16 %v1282
    %v3861 = vunpack.c.l.b16 %v1283
    %v3862 = vunpack.c.h.b16 %v1283
    %v3863 = vunpack.c.l.b16 %v1284
    %v3864 = vunpack.c.h.b16 %v1284
    %v3865 = vunpack.c.l.b16 %v1285
    %v3866 = vunpack.c.h.b16 %v1285
    %v3867 = vunpack.c.l.b16 %v1286
    %v3868 = vunpack.c.h.b16 %v1286
    %v3869 = vunpack.c.l.b16 %v1287
    %v3870 = vunpack.c.h.b16 %v1287
    %v3871 = vunpack.c.l.b16 %v1288
    %v3872 = vunpack.c.h.b16 %v1288
    %v3873 = vunpack.c.l.b16 %v1289
    %v3874 = vunpack.c.h.b16 %v1289
    %v3875 = vunpack.c.l.b16 %v1290
    %v3876 = vunpack.c.h.b16 %v1290
    %v3877 = vunpack.c.l.b16 %v1291
    %v3878 = vunpack.c.h.b16 %v1291
    %v3879 = vunpack.c.l.b16 %v1292
    %v3880 = vunpack.c.h.b16 %v1292
    %v3881 = vunpack.c.l.b16 %v1293
    %v3882 = vunpack.c.h.b16 %v1293
    %v3883 = vunpack.c.l.b16 %v1294
    %v3884 = vunpack.c.h.b16 %v1294
    %v3885 = vunpack.c.l.b16 %v1295
    %v3886 = vunpack.c.h.b16 %v1295
    %v3887 = vunpack.c.l.b16 %v1296
    %v3888 = vunpack.c.h.b16 %v1296
    %v3889 = vunpack.c.l.b16 %v1297
    %v3890 = vunpack.c.h.b16 %v1297
    %v3891 = vunpack.c.l.b16 %v1298
    %v3892 = vunpack.c.h.b16 %v1298
    %v3893 = vunpack.c.l.b16 %v1299
    %v3894 = vunpack.c.h.b16 %v1299
    %v3895 = vunpack.c.l.b16 %v1300
    %v3896 = vunpack.c.h.b16 %v1300
    %v3897 = vunpack.c.l.b16 %v1301
    %v3898 = vunpack.c.h.b16 %v1301
    %v3899 = vunpack.c.l.b16 %v1302
    %v3900 = vunpack.c.h.b16 %v1302
    %v3901 = vunpack.c.l.b16 %v1303
    %v3902 = vunpack.c.h.b16 %v1303
    %v3903 = vunpack.c.l.b16 %v1304
    %v3904 = vunpack.c.h.b16 %v1304
    %v3905 = vunpack.c.l.b16 %v1305
    %v3906 = vunpack.c.h.b16 %v1305
    %v3907 = vunpack.c.l.b16 %v1306
    %v3908 = vunpack.c.h.b16 %v1306
    %v3909 = vunpack.c.l.b16 %v1307
    %v3910 = vunpack.c.h.b16 %v1307
    %v3911 = vunpack.c.l.b16 %v1308
    %v3912 = vunpack.c.h.b16 %v1308
    %v3913 = vunpack.c.l.b16 %v1309
    %v3914 = vunpack.c.h.b16 %v1309
    %v3915 = vunpack.c.l.b16 %v1310
    %v3916 = vunpack.c.h.b16 %v1310
    %v3917 = vunpack.c.l.b16 %v1311
    %v3918 = vunpack.c.h.b16 %v1311
    %v3919 = vunpack.c.l.b16 %v1312
    %v3920 = vunpack.c.h.b16 %v1312
    %v3921 = vunpack.c.l.b16 %v1313
    %v3922 = vunpack.c.h.b16 %v1313
    %v3923 = vunpack.c.l.b16 %v1314
    %v3924 = vunpack.c.h.b16 %v1314
    %v3925 = vunpack.c.l.b16 %v1315
    %v3926 = vunpack.c.h.b16 %v1315
    %v3927 = vunpack.c.l.b16 %v1316
    %v3928 = vunpack.c.h.b16 %v1316
    %v3929 = vunpack.c.l.b16 %v1317
    %v3930 = vunpack.c.h.b16 %v1317
    %v3931 = vunpack.c.l.b16 %v1318
    %v3932 = vunpack.c.h.b16 %v1318
    %v3933 = vunpack.c.l.b16 %v1319
    %v3934 = vunpack.c.h.b16 %v1319
    %v3935 = vunpack.c.l.b16 %v1320
    %v3936 = vunpack.c.h.b16 %v1320
    %v3937 = vunpack.c.l.b16 %v1321
    %v3938 = vunpack.c.h.b16 %v1321
    %v3939 = vunpack.c.l.b16 %v1322
    %v3940 = vunpack.c.h.b16 %v1322
    %v3941 = vunpack.c.l.b16 %v1323
    %v3942 = vunpack.c.h.b16 %v1323
    %v3943 = vunpack.c.l.b16 %v1324
    %v3944 = vunpack.c.h.b16 %v1324
    %v3945 = vunpack.c.l.b16 %v1325
    %v3946 = vunpack.c.h.b16 %v1325
    %v3947 = vunpack.c.l.b16 %v1326
    %v3948 = vunpack.c.h.b16 %v1326
    %v3949 = vunpack.c.l.b16 %v1327
    %v3950 = vunpack.c.h.b16 %v1327
    %v3951 = vunpack.c.l.b16 %v1328
    %v3952 = vunpack.c.h.b16 %v1328
    %v3953 = vunpack.c.l.b16 %v1329
    %v3954 = vunpack.c.h.b16 %v1329
    %v3955 = vunpack.c.l.b16 %v1330
    %v3956 = vunpack.c.h.b16 %v1330
    %v3957 = vunpack.c.l.b16 %v1331
    %v3958 = vunpack.c.h.b16 %v1331
    %v3959 = vunpack.c.l.b16 %v1332
    %v3960 = vunpack.c.h.b16 %v1332
    %v3961 = vunpack.c.l.b16 %v1333
    %v3962 = vunpack.c.h.b16 %v1333
    %v3963 = vunpack.c.l.b16 %v1334
    %v3964 = vunpack.c.h.b16 %v1334
    %v3965 = vunpack.c.l.b16 %v1335
    %v3966 = vunpack.c.h.b16 %v1335
    %v3967 = vunpack.c.l.b16 %v1336
    %v3968 = vunpack.c.h.b16 %v1336
    %v3969 = vunpack.c.l.b16 %v1337
    %v3970 = vunpack.c.h.b16 %v1337
    %v3971 = vunpack.c.l.b16 %v1338
    %v3972 = vunpack.c.h.b16 %v1338
    %v3973 = vunpack.c.l.b16 %v1339
    %v3974 = vunpack.c.h.b16 %v1339
    %v3975 = vunpack.c.l.b16 %v1340
    %v3976 = vunpack.c.h.b16 %v1340
    %v3977 = vunpack.c.l.b16 %v1341
    %v3978 = vunpack.c.h.b16 %v1341
    %v3979 = vunpack.c.l.b16 %v1342
    %v3980 = vunpack.c.h.b16 %v1342
    %v3981 = vunpack.c.l.b16 %v1343
    %v3982 = vunpack.c.h.b16 %v1343
    %v3983 = vunpack.c.l.b16 %v1344
    %v3984 = vunpack.c.h.b16 %v1344
    %v3985 = vunpack.c.l.b16 %v1345
    %v3986 = vunpack.c.h.b16 %v1345
    %v3987 = vunpack.c.l.b16 %v1346
    %v3988 = vunpack.c.h.b16 %v1346
    %v3989 = vunpack.c.l.b16 %v1347
    %v3990 = vunpack.c.h.b16 %v1347
    %v3991 = vunpack.c.l.b16 %v1348
    %v3992 = vunpack.c.h.b16 %v1348
    %v3993 = vunpack.c.l.b16 %v1349
    %v3994 = vunpack.c.h.b16 %v1349
    %v3995 = vunpack.c.l.b16 %v1350
    %v3996 = vunpack.c.h.b16 %v1350
    %v3997 = vunpack.c.l.b16 %v1351
    %v3998 = vunpack.c.h.b16 %v1351
    %v3999 = vunpack.c.l.b16 %v1352
    %v4000 = vunpack.c.h.b16 %v1352
    %v4001 = vunpack.c.l.b16 %v1353
    %v4002 = vunpack.c.h.b16 %v1353
    %v4003 = vunpack.c.l.b16 %v1354
    %v4004 = vunpack.c.h.b16 %v1354
    %v4005 = vunpack.c.l.b16 %v1355
    %v4006 = vunpack.c.h.b16 %v1355
    %v4007 = vunpack.c.l.b16 %v1356
    %v4008 = vunpack.c.h.b16 %v1356
    %v4009 = vunpack.c.l.b16 %v1357
    %v4010 = vunpack.c.h.b16 %v1357
    %v4011 = vunpack.c.l.b16 %v1358
    %v4012 = vunpack.c.h.b16 %v1358
    %v4013 = vunpack.c.l.b16 %v1359
    %v4014 = vunpack.c.h.b16 %v1359
    %v4015 = vunpack.c.l.b16 %v1360
    %v4016 = vunpack.c.h.b16 %v1360
    %v4017 = vunpack.c.l.b16 %v1361
    %v4018 = vunpack.c.h.b16 %v1361
    %v4019 = vunpack.c.l.b16 %v1362
    %v4020 = vunpack.c.h.b16 %v1362
    %v4021 = vunpack.c.l.b16 %v1363
    %v4022 = vunpack.c.h.b16 %v1363
    %v4023 = vunpack.c.l.b16 %v1364
    %v4024 = vunpack.c.h.b16 %v1364
    %v4025 = vunpack.c.l.b16 %v1365
    %v4026 = vunpack.c.h.b16 %v1365
    %v4027 = vunpack.c.l.b16 %v1366
    %v4028 = vunpack.c.h.b16 %v1366
    %v4029 = vunpack.c.l.b16 %v1367
    %v4030 = vunpack.c.h.b16 %v1367
    %v4031 = vunpack.c.l.b16 %v1368
    %v4032 = vunpack.c.h.b16 %v1368
    %v4033 = vunpack.c.l.b16 %v1369
    %v4034 = vunpack.c.h.b16 %v1369
    %v4035 = vunpack.c.l.b16 %v1370
    %v4036 = vunpack.c.h.b16 %v1370
    %v4037 = vunpack.c.l.b16 %v1371
    %v4038 = vunpack.c.h.b16 %v1371
    %v4039 = vunpack.c.l.b16 %v1372
    %v4040 = vunpack.c.h.b16 %v1372
    %v4041 = vunpack.c.l.b16 %v1373
    %v4042 = vunpack.c.h.b16 %v1373
    %v4043 = vunpack.c.l.b16 %v1374
    %v4044 = vunpack.c.h.b16 %v1374
    %v4045 = vunpack.c.l.b16 %v1375
    %v4046 = vunpack.c.h.b16 %v1375
    %v4047 = vunpack.c.l.b16 %v1376
    %v4048 = vunpack.c.h.b16 %v1376
    %v4049 = vunpack.c.l.b16 %v1377
    %v4050 = vunpack.c.h.b16 %v1377
    %v4051 = vunpack.c.l.b16 %v1378
    %v4052 = vunpack.c.h.b16 %v1378
    %v4053 = vunpack.c.l.b16 %v1379
    %v4054 = vunpack.c.h.b16 %v1379
    %v4055 = vunpack.c.l.b16 %v1380
    %v4056 = vunpack.c.h.b16 %v1380
    %v4057 = vunpack.c.l.b16 %v1381
    %v4058 = vunpack.c.h.b16 %v1381
    %v4059 = vunpack.c.l.b16 %v1382
    %v4060 = vunpack.c.h.b16 %v1382
    %v4061 = vunpack.c.l.b16 %v1383
    %v4062 = vunpack.c.h.b16 %v1383
    %v4063 = vunpack.c.l.b16 %v1384
    %v4064 = vunpack.c.h.b16 %v1384
    %v4065 = vunpack.c.l.b16 %v1385
    %v4066 = vunpack.c.h.b16 %v1385
    %v4067 = vunpack.c.l.b16 %v1386
    %v4068 = vunpack.c.h.b16 %v1386
    %v4069 = vunpack.c.l.b16 %v1387
    %v4070 = vunpack.c.h.b16 %v1387
    %v4071 = vunpack.c.l.b16 %v1388
    %v4072 = vunpack.c.h.b16 %v1388
    %v4073 = vunpack.c.l.b16 %v1389
    %v4074 = vunpack.c.h.b16 %v1389
    %v4075 = vunpack.c.l.b16 %v1390
    %v4076 = vunpack.c.h.b16 %v1390
    %v4077 = vunpack.c.l.b16 %v1391
    %v4078 = vunpack.c.h.b16 %v1391
    %v4079 = vunpack.c.l.b16 %v1392
    %v4080 = vunpack.c.h.b16 %v1392
    %v4081 = vunpack.c.l.b16 %v1393
    %v4082 = vunpack.c.h.b16 %v1393
    %v4083 = vunpack.c.l.b16 %v1394
    %v4084 = vunpack.c.h.b16 %v1394
    %v4085 = vunpack.c.l.b16 %v1395
    %v4086 = vunpack.c.h.b16 %v1395
    %v4087 = vunpack.c.l.b16 %v1396
    %v4088 = vunpack.c.h.b16 %v1396
    %v4089 = vunpack.c.l.b16 %v1397
    %v4090 = vunpack.c.h.b16 %v1397
    %v4091 = vunpack.c.l.b16 %v1398
    %v4092 = vunpack.c.h.b16 %v1398
    %v4093 = vunpack.c.l.b16 %v1399
    %v4094 = vunpack.c.h.b16 %v1399
    %v4095 = vunpack.c.l.b16 %v1400
    %v4096 = vunpack.c.h.b16 %v1400
    %v4097 = vunpack.c.l.b16 %v1401
    %v4098 = vunpack.c.h.b16 %v1401
    %v4099 = vunpack.c.l.b16 %v1402
    %v4100 = vunpack.c.h.b16 %v1402
    %v4101 = vunpack.c.l.b16 %v1403
    %v4102 = vunpack.c.h.b16 %v1403
    %v4103 = vunpack.c.l.b16 %v1404
    %v4104 = vunpack.c.h.b16 %v1404
    %v4105 = vunpack.c.l.b16 %v1405
    %v4106 = vunpack.c.h.b16 %v1405
    %v4107 = vunpack.c.l.b16 %v1406
    %v4108 = vunpack.c.h.b16 %v1406
    %v4109 = vunpack.c.l.b16 %v1407
    %v4110 = vunpack.c.h.b16 %v1407
    %v4111 = vunpack.c.l.b16 %v1408
    %v4112 = vunpack.c.h.b16 %v1408
    %v4113 = vunpack.c.l.b16 %v1409
    %v4114 = vunpack.c.h.b16 %v1409
    %v4115 = vunpack.c.l.b16 %v1410
    %v4116 = vunpack.c.h.b16 %v1410
    %v4117 = vunpack.c.l.b16 %v1411
    %v4118 = vunpack.c.h.b16 %v1411
    %v4119 = vunpack.c.l.b16 %v1412
    %v4120 = vunpack.c.h.b16 %v1412
    %v4121 = vunpack.c.l.b16 %v1413
    %v4122 = vunpack.c.h.b16 %v1413
    %v4123 = vunpack.c.l.b16 %v1414
    %v4124 = vunpack.c.h.b16 %v1414
    %v4125 = vunpack.c.l.b16 %v1415
    %v4126 = vunpack.c.h.b16 %v1415
    %v4127 = vunpack.c.l.b16 %v1416
    %v4128 = vunpack.c.h.b16 %v1416
    %v4129 = vunpack.c.l.b16 %v1417
    %v4130 = vunpack.c.h.b16 %v1417
    %v4131 = vunpack.c.l.b16 %v1418
    %v4132 = vunpack.c.h.b16 %v1418
    %v4133 = vunpack.c.l.b16 %v1419
    %v4134 = vunpack.c.h.b16 %v1419
    %v4135 = vunpack.c.l.b16 %v1420
    %v4136 = vunpack.c.h.b16 %v1420
    %v4137 = vunpack.c.l.b16 %v1421
    %v4138 = vunpack.c.h.b16 %v1421
    %v4139 = vunpack.c.l.b16 %v1422
    %v4140 = vunpack.c.h.b16 %v1422
    %v4141 = vunpack.c.l.b16 %v1423
    %v4142 = vunpack.c.h.b16 %v1423
    %v4143 = vunpack.c.l.b16 %v1424
    %v4144 = vunpack.c.h.b16 %v1424
    %v4145 = vunpack.c.l.b16 %v1425
    %v4146 = vunpack.c.h.b16 %v1425
    %v4147 = vunpack.c.l.b16 %v1426
    %v4148 = vunpack.c.h.b16 %v1426
    %v4149 = vunpack.c.l.b16 %v1427
    %v4150 = vunpack.c.h.b16 %v1427
    %v4151 = vunpack.c.l.b16 %v1428
    %v4152 = vunpack.c.h.b16 %v1428
    %v4153 = vunpack.c.l.b16 %v1429
    %v4154 = vunpack.c.h.b16 %v1429
    %v4155 = vunpack.c.l.b16 %v1430
    %v4156 = vunpack.c.h.b16 %v1430
    %v4157 = vunpack.c.l.b16 %v1431
    %v4158 = vunpack.c.h.b16 %v1431
    %v4159 = vunpack.c.l.b16 %v1432
    %v4160 = vunpack.c.h.b16 %v1432
    %v4161 = vunpack.c.l.b16 %v1433
    %v4162 = vunpack.c.h.b16 %v1433
    %v4163 = vunpack.c.l.b16 %v1434
    %v4164 = vunpack.c.h.b16 %v1434
    %v4165 = vunpack.c.l.b16 %v1435
    %v4166 = vunpack.c.h.b16 %v1435
    %v4167 = vunpack.c.l.b16 %v1436
    %v4168 = vunpack.c.h.b16 %v1436
    %v4169 = vunpack.c.l.b16 %v1437
    %v4170 = vunpack.c.h.b16 %v1437
    %v4171 = vunpack.c.l.b16 %v1438
    %v4172 = vunpack.c.h.b16 %v1438
    %v4173 = vunpack.c.l.b16 %v1439
    %v4174 = vunpack.c.h.b16 %v1439
    %v4175 = vunpack.c.l.b16 %v1440
    %v4176 = vunpack.c.h.b16 %v1440
    %v4177 = vunpack.c.l.b16 %v1441
    %v4178 = vunpack.c.h.b16 %v1441
    %v4179 = vunpack.c.l.b16 %v1442
    %v4180 = vunpack.c.h.b16 %v1442
    %v4181 = vunpack.c.l.b16 %v1443
    %v4182 = vunpack.c.h.b16 %v1443
    %v4183 = vunpack.c.l.b16 %v1444
    %v4184 = vunpack.c.h.b16 %v1444
    %v4185 = vunpack.c.l.b16 %v1445
    %v4186 = vunpack.c.h.b16 %v1445
    %v4187 = vunpack.c.l.b16 %v1446
    %v4188 = vunpack.c.h.b16 %v1446
    %v4189 = vunpack.c.l.b16 %v1447
    %v4190 = vunpack.c.h.b16 %v1447
    %v4191 = vunpack.c.l.b16 %v1448
    %v4192 = vunpack.c.h.b16 %v1448
    %v4193 = vunpack.c.l.b16 %v1449
    %v4194 = vunpack.c.h.b16 %v1449
    %v4195 = vunpack.c.l.b16 %v1450
    %v4196 = vunpack.c.h.b16 %v1450
    %v4197 = vunpack.c.l.b16 %v1451
    %v4198 = vunpack.c.h.b16 %v1451
    %v4199 = vunpack.c.l.b16 %v1452
    %v4200 = vunpack.c.h.b16 %v1452
    %v4201 = vunpack.c.l.b16 %v1453
    %v4202 = vunpack.c.h.b16 %v1453
    %v4203 = vunpack.c.l.b16 %v1454
    %v4204 = vunpack.c.h.b16 %v1454
    %v4205 = vunpack.c.l.b16 %v1455
    %v4206 = vunpack.c.h.b16 %v1455
    %v4207 = vunpack.c.l.b16 %v1456
    %v4208 = vunpack.c.h.b16 %v1456
    %v4209 = vunpack.c.l.b16 %v1457
    %v4210 = vunpack.c.h.b16 %v1457
    %v4211 = vunpack.c.l.b16 %v1458
    %v4212 = vunpack.c.h.b16 %v1458
    %v4213 = vunpack.c.l.b16 %v1459
    %v4214 = vunpack.c.h.b16 %v1459
    %v4215 = vunpack.c.l.b16 %v1460
    %v4216 = vunpack.c.h.b16 %v1460
    %v4217 = vunpack.c.l.b16 %v1461
    %v4218 = vunpack.c.h.b16 %v1461
    %v4219 = vunpack.c.l.b16 %v1462
    %v4220 = vunpack.c.h.b16 %v1462
    %v4221 = vunpack.c.l.b16 %v1463
    %v4222 = vunpack.c.h.b16 %v1463
    %v4223 = vunpack.c.l.b16 %v1464
    %v4224 = vunpack.c.h.b16 %v1464
    %v4225 = vunpack.c.l.b16 %v1465
    %v4226 = vunpack.c.h.b16 %v1465
    %v4227 = vunpack.c.l.b16 %v1466
    %v4228 = vunpack.c.h.b16 %v1466
    %v4229 = vunpack.c.l.b16 %v1467
    %v4230 = vunpack.c.h.b16 %v1467
    %v4231 = vunpack.c.l.b16 %v1468
    %v4232 = vunpack.c.h.b16 %v1468
    %v4233 = vunpack.c.l.b16 %v1469
    %v4234 = vunpack.c.h.b16 %v1469
    %v4235 = vunpack.c.l.b16 %v1470
    %v4236 = vunpack.c.h.b16 %v1470
    %v4237 = vunpack.c.l.b16 %v1471
    %v4238 = vunpack.c.h.b16 %v1471
    %v4239 = vunpack.c.l.b16 %v1472
    %v4240 = vunpack.c.h.b16 %v1472
    %v4241 = vunpack.c.l.b16 %v1473
    %v4242 = vunpack.c.h.b16 %v1473
    %v4243 = vunpack.c.l.b16 %v1474
    %v4244 = vunpack.c.h.b16 %v1474
    %v4245 = vunpack.c.l.b16 %v1475
    %v4246 = vunpack.c.h.b16 %v1475
    %v4247 = vunpack.c.l.b16 %v1476
    %v4248 = vunpack.c.h.b16 %v1476
    %v4249 = vunpack.c.l.b16 %v1477
    %v4250 = vunpack.c.h.b16 %v1477
    %v4251 = vunpack.c.l.b16 %v1478
    %v4252 = vunpack.c.h.b16 %v1478
    %v4253 = vunpack.c.l.b16 %v1479
    %v4254 = vunpack.c.h.b16 %v1479
    %v4255 = vunpack.c.l.b16 %v1480
    %v4256 = vunpack.c.h.b16 %v1480
    %v4257 = vunpack.c.l.b16 %v1481
    %v4258 = vunpack.c.h.b16 %v1481
    %v4259 = vunpack.c.l.b16 %v1482
    %v4260 = vunpack.c.h.b16 %v1482
    %v4261 = vunpack.c.l.b16 %v1483
    %v4262 = vunpack.c.h.b16 %v1483
    %v4263 = vunpack.c.l.b16 %v1484
    %v4264 = vunpack.c.h.b16 %v1484
    %v4265 = vunpack.c.l.b16 %v1485
    %v4266 = vunpack.c.h.b16 %v1485
    %v4267 = vunpack.c.l.b16 %v1486
    %v4268 = vunpack.c.h.b16 %v1486
    %v4269 = vunpack.c.l.b16 %v1487
    %v4270 = vunpack.c.h.b16 %v1487
    %v4271 = vunpack.c.l.b16 %v1488
    %v4272 = vunpack.c.h.b16 %v1488
    %v4273 = vunpack.c.l.b16 %v1489
    %v4274 = vunpack.c.h.b16 %v1489
    %v4275 = vunpack.c.l.b16 %v1490
    %v4276 = vunpack.c.h.b16 %v1490
    %v4277 = vunpack.c.l.b16 %v1491
    %v4278 = vunpack.c.h.b16 %v1491
    %v4279 = vunpack.c.l.b16 %v1492
    %v4280 = vunpack.c.h.b16 %v1492
    %v4281 = vunpack.c.l.b16 %v1493
    %v4282 = vunpack.c.h.b16 %v1493
    %v4283 = vunpack.c.l.b16 %v1494
    %v4284 = vunpack.c.h.b16 %v1494
    %v4285 = vunpack.c.l.b16 %v1495
    %v4286 = vunpack.c.h.b16 %v1495
    %v4287 = vunpack.c.l.b16 %v1496
    %v4288 = vunpack.c.h.b16 %v1496
    %v4289 = vunpack.c.l.b16 %v1497
    %v4290 = vunpack.c.h.b16 %v1497
    %v4291 = vunpack.c.l.b16 %v1498
    %v4292 = vunpack.c.h.b16 %v1498
    %v4293 = vunpack.c.l.b16 %v1499
    %v4294 = vunpack.c.h.b16 %v1499
    %v4295 = vunpack.c.l.b16 %v1500
    %v4296 = vunpack.c.h.b16 %v1500
    %v4297 = vunpack.c.l.b16 %v1501
    %v4298 = vunpack.c.h.b16 %v1501
    %v4299 = vunpack.c.l.b16 %v1502
    %v4300 = vunpack.c.h.b16 %v1502
    %v4301 = vunpack.c.l.b16 %v1503
    %v4302 = vunpack.c.h.b16 %v1503
    %v4303 = vunpack.c.l.b16 %v1504
    %v4304 = vunpack.c.h.b16 %v1504
    %v4305 = vunpack.c.l.b16 %v1505
    %v4306 = vunpack.c.h.b16 %v1505
    %v4307 = vunpack.c.l.b16 %v1506
    %v4308 = vunpack.c.h.b16 %v1506
    %v4309 = vunpack.c.l.b16 %v1507
    %v4310 = vunpack.c.h.b16 %v1507
    %v4311 = vunpack.c.l.b16 %v1508
    %v4312 = vunpack.c.h.b16 %v1508
    %v4313 = vunpack.c.l.b16 %v1509
    %v4314 = vunpack.c.h.b16 %v1509
    %v4315 = vunpack.c.l.b16 %v1510
    %v4316 = vunpack.c.h.b16 %v1510
    %v4317 = vunpack.c.l.b16 %v1511
    %v4318 = vunpack.c.h.b16 %v1511
    %v4319 = vunpack.c.l.b16 %v1512
    %v4320 = vunpack.c.h.b16 %v1512
    %v4321 = vunpack.c.l.b16 %v1513
    %v4322 = vunpack.c.h.b16 %v1513
    %v4323 = vunpack.c.l.b16 %v1514
    %v4324 = vunpack.c.h.b16 %v1514
    %v4325 = vunpack.c.l.b16 %v1515
    %v4326 = vunpack.c.h.b16 %v1515
    %v4327 = vunpack.c.l.b16 %v1516
    %v4328 = vunpack.c.h.b16 %v1516
    %v4329 = vunpack.c.l.b16 %v1517
    %v4330 = vunpack.c.h.b16 %v1517
    %v4331 = vunpack.c.l.b16 %v1518
    %v4332 = vunpack.c.h.b16 %v1518
    %v4333 = vunpack.c.l.b16 %v1519
    %v4334 = vunpack.c.h.b16 %v1519
    %v4335 = vunpack.c.l.b16 %v1520
    %v4336 = vunpack.c.h.b16 %v1520
    %v4337 = vunpack.c.l.b16 %v1521
    %v4338 = vunpack.c.h.b16 %v1521
    %v4339 = vunpack.c.l.b16 %v1522
    %v4340 = vunpack.c.h.b16 %v1522
    %v4341 = vunpack.c.l.b16 %v1523
    %v4342 = vunpack.c.h.b16 %v1523
    %v4343 = vunpack.c.l.b16 %v1524
    %v4344 = vunpack.c.h.b16 %v1524
    %v4345 = vunpack.c.l.b16 %v1525
    %v4346 = vunpack.c.h.b16 %v1525
    %v4347 = vunpack.c.l.b16 %v1526
    %v4348 = vunpack.c.h.b16 %v1526
    %v4349 = vunpack.c.l.b16 %v1527
    %v4350 = vunpack.c.h.b16 %v1527
    %v4351 = vunpack.c.l.b16 %v1528
    %v4352 = vunpack.c.h.b16 %v1528
    %v4353 = vunpack.c.l.b16 %v1529
    %v4354 = vunpack.c.h.b16 %v1529
    %v4355 = vunpack.c.l.b16 %v1530
    %v4356 = vunpack.c.h.b16 %v1530
    %v4357 = vunpack.c.l.b16 %v1531
    %v4358 = vunpack.c.h.b16 %v1531
    %v4359 = vunpack.c.l.b16 %v1532
    %v4360 = vunpack.c.h.b16 %v1532
    %v4361 = vunpack.c.l.b16 %v1533
    %v4362 = vunpack.c.h.b16 %v1533
    %v4363 = vunpack.c.l.b16 %v1534
    %v4364 = vunpack.c.h.b16 %v1534
    %v4365 = vunpack.c.l.b16 %v1535
    %v4366 = vunpack.c.h.b16 %v1535
    %v4367 = vunpack.c.l.b16 %v1536
    %v4368 = vunpack.c.h.b16 %v1536
    %v4369 = vunpack.c.l.b16 %v1537
    %v4370 = vunpack.c.h.b16 %v1537
    %v4371 = vunpack.c.l.b16 %v1538
    %v4372 = vunpack.c.h.b16 %v1538
    %v4373 = vunpack.c.l.b16 %v1539
    %v4374 = vunpack.c.h.b16 %v1539
    %v4375 = vunpack.c.l.b16 %v1540
    %v4376 = vunpack.c.h.b16 %v1540
    %v4377 = vunpack.c.l.b16 %v1541
    %v4378 = vunpack.c.h.b16 %v1541
    %v4379 = vunpack.c.l.b16 %v1542
    %v4380 = vunpack.c.h.b16 %v1542
    %v4381 = vunpack.c.l.b16 %v1543
    %v4382 = vunpack.c.h.b16 %v1543
    %v4383 = vunpack.c.l.b16 %v1544
    %v4384 = vunpack.c.h.b16 %v1544
    %v4385 = vunpack.c.l.b16 %v1545
    %v4386 = vunpack.c.h.b16 %v1545
    %v4387 = vunpack.c.l.b16 %v1546
    %v4388 = vunpack.c.h.b16 %v1546
    %v4389 = vunpack.c.l.b16 %v1547
    %v4390 = vunpack.c.h.b16 %v1547
    %v4391 = vunpack.c.l.b16 %v1548
    %v4392 = vunpack.c.h.b16 %v1548
    %v4393 = vunpack.c.l.b16 %v1549
    %v4394 = vunpack.c.h.b16 %v1549
    %v4395 = vunpack.c.l.b16 %v1550
    %v4396 = vunpack.c.h.b16 %v1550
    %v4397 = vunpack.c.l.b16 %v1551
    %v4398 = vunpack.c.h.b16 %v1551
    %v4399 = vunpack.c.l.b16 %v1552
    %v4400 = vunpack.c.h.b16 %v1552
    %v4401 = vunpack.c.l.b16 %v1553
    %v4402 = vunpack.c.h.b16 %v1553
    %v4403 = vunpack.c.l.b16 %v1554
    %v4404 = vunpack.c.h.b16 %v1554
    %v4405 = vunpack.c.l.b16 %v1555
    %v4406 = vunpack.c.h.b16 %v1555
    %v4407 = vunpack.c.l.b16 %v1556
    %v4408 = vunpack.c.h.b16 %v1556
    %v4409 = vunpack.c.l.b16 %v1557
    %v4410 = vunpack.c.h.b16 %v1557
    %v4411 = vunpack.c.l.b16 %v1558
    %v4412 = vunpack.c.h.b16 %v1558
    %v4413 = vunpack.c.l.b16 %v1559
    %v4414 = vunpack.c.h.b16 %v1559
    %v4415 = vunpack.c.l.b16 %v1560
    %v4416 = vunpack.c.h.b16 %v1560
    %v4417 = vunpack.c.l.b16 %v1561
    %v4418 = vunpack.c.h.b16 %v1561
    %v4419 = vunpack.c.l.b16 %v1562
    %v4420 = vunpack.c.h.b16 %v1562
    %v4421 = vunpack.c.l.b16 %v1563
    %v4422 = vunpack.c.h.b16 %v1563
    %v4423 = vunpack.c.l.b16 %v1564
    %v4424 = vunpack.c.h.b16 %v1564
    %v4425 = vunpack.c.l.b16 %v1565
    %v4426 = vunpack.c.h.b16 %v1565
    %v4427 = vunpack.c.l.b16 %v1566
    %v4428 = vunpack.c.h.b16 %v1566
    %v4429 = vunpack.c.l.b16 %v1567
    %v4430 = vunpack.c.h.b16 %v1567
    %v4431 = vunpack.c.l.b16 %v1568
    %v4432 = vunpack.c.h.b16 %v1568
    %v4433 = vunpack.c.l.b16 %v1569
    %v4434 = vunpack.c.h.b16 %v1569
    %v4435 = vunpack.c.l.b16 %v1570
    %v4436 = vunpack.c.h.b16 %v1570
    %v4437 = vunpack.c.l.b16 %v1571
    %v4438 = vunpack.c.h.b16 %v1571
    %v4439 = vunpack.c.l.b16 %v1572
    %v4440 = vunpack.c.h.b16 %v1572
    %v4441 = vunpack.c.l.b16 %v1573
    %v4442 = vunpack.c.h.b16 %v1573
    %v4443 = vunpack.c.l.b16 %v1574
    %v4444 = vunpack.c.h.b16 %v1574
    %v4445 = vunpack.c.l.b16 %v1575
    %v4446 = vunpack.c.h.b16 %v1575
    %v4447 = vunpack.c.l.b16 %v1576
    %v4448 = vunpack.c.h.b16 %v1576
    %v4449 = vunpack.c.l.b16 %v1577
    %v4450 = vunpack.c.h.b16 %v1577
    %v4451 = vunpack.c.l.b16 %v1578
    %v4452 = vunpack.c.h.b16 %v1578
    %v4453 = vunpack.c.l.b16 %v1579
    %v4454 = vunpack.c.h.b16 %v1579
    %v4455 = vunpack.c.l.b16 %v1580
    %v4456 = vunpack.c.h.b16 %v1580
    %v4457 = vunpack.c.l.b16 %v1581
    %v4458 = vunpack.c.h.b16 %v1581
    %v4459 = vunpack.c.l.b16 %v1582
    %v4460 = vunpack.c.h.b16 %v1582
    %v4461 = vunpack.c.l.b16 %v1583
    %v4462 = vunpack.c.h.b16 %v1583
    %v4463 = vunpack.c.l.b16 %v1584
    %v4464 = vunpack.c.h.b16 %v1584
    %v4465 = vunpack.c.l.b16 %v1585
    %v4466 = vunpack.c.h.b16 %v1585
    %v4467 = vunpack.c.l.b16 %v1586
    %v4468 = vunpack.c.h.b16 %v1586
    %v4469 = vunpack.c.l.b16 %v1587
    %v4470 = vunpack.c.h.b16 %v1587
    %v4471 = vunpack.c.l.b16 %v1588
    %v4472 = vunpack.c.h.b16 %v1588
    %v4473 = vunpack.c.l.b16 %v1589
    %v4474 = vunpack.c.h.b16 %v1589
    %v4475 = vunpack.c.l.b16 %v1590
    %v4476 = vunpack.c.h.b16 %v1590
    %v4477 = vunpack.c.l.b16 %v1591
    %v4478 = vunpack.c.h.b16 %v1591
    %v4479 = vunpack.c.l.b16 %v1592
    %v4480 = vunpack.c.h.b16 %v1592
    %v4481 = vunpack.c.l.b16 %v1593
    %v4482 = vunpack.c.h.b16 %v1593
    %v4483 = vunpack.c.l.b16 %v1594
    %v4484 = vunpack.c.h.b16 %v1594
    %v4485 = vunpack.c.l.b16 %v1595
    %v4486 = vunpack.c.h.b16 %v1595
    %v4487 = vunpack.c.l.b16 %v1596
    %v4488 = vunpack.c.h.b16 %v1596
    %v4489 = vunpack.c.l.b16 %v1597
    %v4490 = vunpack.c.h.b16 %v1597
    %v4491 = vunpack.c.l.b16 %v1598
    %v4492 = vunpack.c.h.b16 %v1598
    %v4493 = vunpack.c.l.b16 %v1599
    %v4494 = vunpack.c.h.b16 %v1599
    %v4495 = vunpack.c.l.b16 %v1600
    %v4496 = vunpack.c.h.b16 %v1600
    %v4497 = vunpack.c.l.b16 %v1601
    %v4498 = vunpack.c.h.b16 %v1601
    %v4499 = vunpack.c.l.b16 %v1602
    %v4500 = vunpack.c.h.b16 %v1602
    %v4501 = vunpack.c.l.b16 %v1603
    %v4502 = vunpack.c.h.b16 %v1603
    %v4503 = vunpack.c.l.b16 %v1604
    %v4504 = vunpack.c.h.b16 %v1604
    %v4505 = vunpack.c.l.b16 %v1605
    %v4506 = vunpack.c.h.b16 %v1605
    %v4507 = vunpack.c.l.b16 %v1606
    %v4508 = vunpack.c.h.b16 %v1606
    %v4509 = vunpack.c.l.b16 %v1607
    %v4510 = vunpack.c.h.b16 %v1607
    %v4511 = vunpack.c.l.b16 %v1608
    %v4512 = vunpack.c.h.b16 %v1608
    %v4513 = vunpack.c.l.b16 %v1609
    %v4514 = vunpack.c.h.b16 %v1609
    %v4515 = vunpack.c.l.b16 %v1610
    %v4516 = vunpack.c.h.b16 %v1610
    %v4517 = vunpack.c.l.b16 %v1611
    %v4518 = vunpack.c.h.b16 %v1611
    %v4519 = vunpack.c.l.b16 %v1612
    %v4520 = vunpack.c.h.b16 %v1612
    %v4521 = vunpack.c.l.b16 %v1613
    %v4522 = vunpack.c.h.b16 %v1613
    %v4523 = vunpack.c.l.b16 %v1614
    %v4524 = vunpack.c.h.b16 %v1614
    %v4525 = vunpack.c.l.b16 %v1615
    %v4526 = vunpack.c.h.b16 %v1615
    %v4527 = vunpack.c.l.b16 %v1616
    %v4528 = vunpack.c.h.b16 %v1616
    %v4529 = vunpack.c.l.b16 %v1617
    %v4530 = vunpack.c.h.b16 %v1617
    %v4531 = vunpack.c.l.b16 %v1618
    %v4532 = vunpack.c.h.b16 %v1618
    %v4533 = vunpack.c.l.b16 %v1619
    %v4534 = vunpack.c.h.b16 %v1619
    %v4535 = vunpack.c.l.b16 %v1620
    %v4536 = vunpack.c.h.b16 %v1620
    %v4537 = vunpack.c.l.b16 %v1621
    %v4538 = vunpack.c.h.b16 %v1621
    %v4539 = vunpack.c.l.b16 %v1622
    %v4540 = vunpack.c.h.b16 %v1622
    %v4541 = vunpack.c.l.b16 %v1623
    %v4542 = vunpack.c.h.b16 %v1623
    %v4543 = vunpack.c.l.b16 %v1624
    %v4544 = vunpack.c.h.b16 %v1624
    %v4545 = vunpack.c.l.b16 %v1625
    %v4546 = vunpack.c.h.b16 %v1625
    %v4547 = vunpack.c.l.b16 %v1626
    %v4548 = vunpack.c.h.b16 %v1626
    %v4549 = vunpack.c.l.b16 %v1627
    %v4550 = vunpack.c.h.b16 %v1627
    %v4551 = vunpack.c.l.b16 %v1628
    %v4552 = vunpack.c.h.b16 %v1628
    %v4553 = vunpack.c.l.b16 %v1629
    %v4554 = vunpack.c.h.b16 %v1629
    %v4555 = vunpack.c.l.b16 %v1630
    %v4556 = vunpack.c.h.b16 %v1630
    %v4557 = vunpack.c.l.b16 %v1631
    %v4558 = vunpack.c.h.b16 %v1631
    %v4559 = vunpack.c.l.b16 %v1632
    %v4560 = vunpack.c.h.b16 %v1632
    %v4561 = vunpack.c.l.b16 %v1633
    %v4562 = vunpack.c.h.b16 %v1633
    %v4563 = vunpack.c.l.b16 %v1634
    %v4564 = vunpack.c.h.b16 %v1634
    %v4565 = vunpack.c.l.b16 %v1635
    %v4566 = vunpack.c.h.b16 %v1635
    %v4567 = vunpack.c.l.b16 %v1636
    %v4568 = vunpack.c.h.b16 %v1636
    %v4569 = vunpack.c.l.b16 %v1637
    %v4570 = vunpack.c.h.b16 %v1637
    %v4571 = vunpack.c.l.b16 %v1638
    %v4572 = vunpack.c.h.b16 %v1638
    %v4573 = vunpack.c.l.b16 %v1639
    %v4574 = vunpack.c.h.b16 %v1639
    %v4575 = vunpack.c.l.b16 %v1640
    %v4576 = vunpack.c.h.b16 %v1640
    %v4577 = vunpack.c.l.b16 %v1641
    %v4578 = vunpack.c.h.b16 %v1641
    %v4579 = vunpack.c.l.b16 %v1642
    %v4580 = vunpack.c.h.b16 %v1642
    %v4581 = vunpack.c.l.b16 %v1643
    %v4582 = vunpack.c.h.b16 %v1643
    %v4583 = vunpack.c.l.b16 %v1644
    %v4584 = vunpack.c.h.b16 %v1644
    %v4585 = vunpack.c.l.b16 %v1645
    %v4586 = vunpack.c.h.b16 %v1645
    %v4587 = vunpack.c.l.b16 %v1646
    %v4588 = vunpack.c.h.b16 %v1646
    %v4589 = vunpack.c.l.b16 %v1647
    %v4590 = vunpack.c.h.b16 %v1647
    %v4591 = vunpack.c.l.b16 %v1648
    %v4592 = vunpack.c.h.b16 %v1648
    %v4593 = vunpack.c.l.b16 %v1649
    %v4594 = vunpack.c.h.b16 %v1649
    %v4595 = vunpack.c.l.b16 %v1650
    %v4596 = vunpack.c.h.b16 %v1650
    %v4597 = vunpack.c.l.b16 %v1651
    %v4598 = vunpack.c.h.b16 %v1651
    %v4599 = vunpack.c.l.b16 %v1652
    %v4600 = vunpack.c.h.b16 %v1652
    %v4601 = vunpack.c.l.b16 %v1653
    %v4602 = vunpack.c.h.b16 %v1653
    %v4603 = vunpack.c.l.b16 %v1654
    %v4604 = vunpack.c.h.b16 %v1654
    %v4605 = vunpack.c.l.b16 %v1655
    %v4606 = vunpack.c.h.b16 %v1655
    %v4607 = vunpack.c.l.b16 %v1656
    %v4608 = vunpack.c.h.b16 %v1656
    %v4609 = vunpack.c.l.b16 %v1657
    %v4610 = vunpack.c.h.b16 %v1657
    %v4611 = vunpack.c.l.b16 %v1658
    %v4612 = vunpack.c.h.b16 %v1658
    %v4613 = vunpack.c.l.b16 %v1659
    %v4614 = vunpack.c.h.b16 %v1659
    %v4615 = vunpack.c.l.b16 %v1660
    %v4616 = vunpack.c.h.b16 %v1660
    %v4617 = vunpack.c.l.b16 %v1661
    %v4618 = vunpack.c.h.b16 %v1661
    %v4619 = vunpack.c.l.b16 %v1662
    %v4620 = vunpack.c.h.b16 %v1662
    %v4621 = vunpack.c.l.b16 %v1663
    %v4622 = vunpack.c.h.b16 %v1663
    %v4623 = vunpack.c.l.b16 %v1664
    %v4624 = vunpack.c.h.b16 %v1664
    %v4625 = vunpack.c.l.b16 %v1665
    %v4626 = vunpack.c.h.b16 %v1665
    %v4627 = vunpack.c.l.b16 %v1666
    %v4628 = vunpack.c.h.b16 %v1666
    %v4629 = vunpack.c.l.b16 %v1667
    %v4630 = vunpack.c.h.b16 %v1667
    %v4631 = vunpack.c.l.b16 %v1668
    %v4632 = vunpack.c.h.b16 %v1668
    %v4633 = vunpack.c.l.b16 %v1669
    %v4634 = vunpack.c.h.b16 %v1669
    %v4635 = vunpack.c.l.b16 %v1670
    %v4636 = vunpack.c.h.b16 %v1670
    %v4637 = vunpack.c.l.b16 %v1671
    %v4638 = vunpack.c.h.b16 %v1671
    %v4639 = vunpack.c.l.b16 %v1672
    %v4640 = vunpack.c.h.b16 %v1672
    %v4641 = vunpack.c.l.b16 %v1673
    %v4642 = vunpack.c.h.b16 %v1673
    %v4643 = vunpack.c.l.b16 %v1674
    %v4644 = vunpack.c.h.b16 %v1674
    %v4645 = vunpack.c.l.b16 %v1675
    %v4646 = vunpack.c.h.b16 %v1675
    %v4647 = vunpack.c.l.b16 %v1676
    %v4648 = vunpack.c.h.b16 %v1676
    %v4649 = vunpack.c.l.b16 %v1677
    %v4650 = vunpack.c.h.b16 %v1677
    %v4651 = vunpack.c.l.b16 %v1678
    %v4652 = vunpack.c.h.b16 %v1678
    %v4653 = vunpack.c.l.b16 %v1679
    %v4654 = vunpack.c.h.b16 %v1679
    %v4655 = vunpack.c.l.b16 %v1680
    %v4656 = vunpack.c.h.b16 %v1680
    %v4657 = vunpack.c.l.b16 %v1681
    %v4658 = vunpack.c.h.b16 %v1681
    %v4659 = vunpack.c.l.b16 %v1682
    %v4660 = vunpack.c.h.b16 %v1682
    %v4661 = vunpack.c.l.b16 %v1683
    %v4662 = vunpack.c.h.b16 %v1683
    %v4663 = vunpack.c.l.b16 %v1684
    %v4664 = vunpack.c.h.b16 %v1684
    %v4665 = vunpack.c.l.b16 %v1685
    %v4666 = vunpack.c.h.b16 %v1685
    %v4667 = vunpack.c.l.b16 %v1686
    %v4668 = vunpack.c.h.b16 %v1686
    %v4669 = vunpack.c.l.b16 %v1687
    %v4670 = vunpack.c.h.b16 %v1687
    %v4671 = vunpack.c.l.b16 %v1688
    %v4672 = vunpack.c.h.b16 %v1688
    %v4673 = vunpack.c.l.b16 %v1689
    %v4674 = vunpack.c.h.b16 %v1689
    %v4675 = vunpack.c.l.b16 %v1690
    %v4676 = vunpack.c.h.b16 %v1690
    %v4677 = vunpack.c.l.b16 %v1691
    %v4678 = vunpack.c.h.b16 %v1691
    %v4679 = vunpack.c.l.b16 %v1692
    %v4680 = vunpack.c.h.b16 %v1692
    %v4681 = vunpack.c.l.b16 %v1693
    %v4682 = vunpack.c.h.b16 %v1693
    %v4683 = vunpack.c.l.b16 %v1694
    %v4684 = vunpack.c.h.b16 %v1694
    %v4685 = vunpack.c.l.b16 %v1695
    %v4686 = vunpack.c.h.b16 %v1695
    %v4687 = vunpack.c.l.b16 %v1696
    %v4688 = vunpack.c.h.b16 %v1696
    %v4689 = vunpack.c.l.b16 %v1697
    %v4690 = vunpack.c.h.b16 %v1697
    %v4691 = vunpack.c.l.b16 %v1698
    %v4692 = vunpack.c.h.b16 %v1698
    %v4693 = vunpack.c.l.b16 %v1699
    %v4694 = vunpack.c.h.b16 %v1699
    %v4695 = vunpack.c.l.b16 %v1700
    %v4696 = vunpack.c.h.b16 %v1700
    %v4697 = vunpack.c.l.b16 %v1701
    %v4698 = vunpack.c.h.b16 %v1701
    %v4699 = vunpack.c.l.b16 %v1702
    %v4700 = vunpack.c.h.b16 %v1702
    %v4701 = vunpack.c.l.b16 %v1703
    %v4702 = vunpack.c.h.b16 %v1703
    %v4703 = vunpack.c.l.b16 %v1704
    %v4704 = vunpack.c.h.b16 %v1704
    %v4705 = vunpack.c.l.b16 %v1705
    %v4706 = vunpack.c.h.b16 %v1705
    %v4707 = vunpack.c.l.b16 %v1706
    %v4708 = vunpack.c.h.b16 %v1706
    %v4709 = vunpack.c.l.b16 %v1707
    %v4710 = vunpack.c.h.b16 %v1707
    %v4711 = vunpack.c.l.b16 %v1708
    %v4712 = vunpack.c.h.b16 %v1708
    %v4713 = vunpack.c.l.b16 %v1709
    %v4714 = vunpack.c.h.b16 %v1709
    %v4715 = vunpack.c.l.b16 %v1710
    %v4716 = vunpack.c.h.b16 %v1710
    %v4717 = vunpack.c.l.b16 %v1711
    %v4718 = vunpack.c.h.b16 %v1711
    %v4719 = vunpack.c.l.b16 %v1712
    %v4720 = vunpack.c.h.b16 %v1712
    %v4721 = vunpack.c.l.b16 %v1713
    %v4722 = vunpack.c.h.b16 %v1713
    %v4723 = vunpack.c.l.b16 %v1714
    %v4724 = vunpack.c.h.b16 %v1714
    %v4725 = vunpack.c.l.b16 %v1715
    %v4726 = vunpack.c.h.b16 %v1715
    %v4727 = vunpack.c.l.b16 %v1716
    %v4728 = vunpack.c.h.b16 %v1716
    %v4729 = vunpack.c.l.b16 %v1717
    %v4730 = vunpack.c.h.b16 %v1717
    %v4731 = vunpack.c.l.b16 %v1718
    %v4732 = vunpack.c.h.b16 %v1718
    %v4733 = vunpack.c.l.b16 %v1719
    %v4734 = vunpack.c.h.b16 %v1719
    %v4735 = vunpack.c.l.b16 %v1720
    %v4736 = vunpack.c.h.b16 %v1720
    %v4737 = vunpack.c.l.b16 %v1721
    %v4738 = vunpack.c.h.b16 %v1721
    %v4739 = vunpack.c.l.b16 %v1722
    %v4740 = vunpack.c.h.b16 %v1722
    %v4741 = vunpack.c.l.b16 %v1723
    %v4742 = vunpack.c.h.b16 %v1723
    %v4743 = vunpack.c.l.b16 %v1724
    %v4744 = vunpack.c.h.b16 %v1724
    %v4745 = vunpack.c.l.b16 %v1725
    %v4746 = vunpack.c.h.b16 %v1725
    %v4747 = vunpack.c.l.b16 %v1726
    %v4748 = vunpack.c.h.b16 %v1726
    %v4749 = vunpack.c.l.b16 %v1727
    %v4750 = vunpack.c.h.b16 %v1727
    %v4751 = vunpack.c.l.b16 %v1728
    %v4752 = vunpack.c.h.b16 %v1728
    %v4753 = vunpack.c.l.b16 %v1729
    %v4754 = vunpack.c.h.b16 %v1729
    %v4755 = vunpack.c.l.b16 %v1730
    %v4756 = vunpack.c.h.b16 %v1730
    %v4757 = vunpack.c.l.b16 %v1731
    %v4758 = vunpack.c.h.b16 %v1731
    %v4759 = vunpack.c.l.b16 %v1732
    %v4760 = vunpack.c.h.b16 %v1732
    %v4761 = vunpack.c.l.b16 %v1733
    %v4762 = vunpack.c.h.b16 %v1733
    %v4763 = vunpack.c.l.b16 %v1734
    %v4764 = vunpack.c.h.b16 %v1734
    %v4765 = vunpack.c.l.b16 %v1735
    %v4766 = vunpack.c.h.b16 %v1735
    %v4767 = vunpack.c.l.b16 %v1736
    %v4768 = vunpack.c.h.b16 %v1736
    %v4769 = vunpack.c.l.b16 %v1737
    %v4770 = vunpack.c.h.b16 %v1737
    %v4771 = vunpack.c.l.b16 %v1738
    %v4772 = vunpack.c.h.b16 %v1738
    %v4773 = vunpack.c.l.b16 %v1739
    %v4774 = vunpack.c.h.b16 %v1739
    %v4775 = vunpack.c.l.b16 %v1740
    %v4776 = vunpack.c.h.b16 %v1740
    %v4777 = vunpack.c.l.b16 %v1741
    %v4778 = vunpack.c.h.b16 %v1741
    %v4779 = vunpack.c.l.b16 %v1742
    %v4780 = vunpack.c.h.b16 %v1742
    %v4781 = vunpack.c.l.b16 %v1743
    %v4782 = vunpack.c.h.b16 %v1743
    %v4783 = vunpack.c.l.b16 %v1744
    %v4784 = vunpack.c.h.b16 %v1744
    %v4785 = vunpack.c.l.b16 %v1745
    %v4786 = vunpack.c.h.b16 %v1745
    %v4787 = vunpack.c.l.b16 %v1746
    %v4788 = vunpack.c.h.b16 %v1746
    %v4789 = vunpack.c.l.b16 %v1747
    %v4790 = vunpack.c.h.b16 %v1747
    %v4791 = vunpack.c.l.b16 %v1748
    %v4792 = vunpack.c.h.b16 %v1748
    %v4793 = vunpack.c.l.b16 %v1749
    %v4794 = vunpack.c.h.b16 %v1749
    %v4795 = vunpack.c.l.b16 %v1750
    %v4796 = vunpack.c.h.b16 %v1750
    %v4797 = vunpack.c.l.b16 %v1751
    %v4798 = vunpack.c.h.b16 %v1751
    %v4799 = vunpack.c.l.b16 %v1752
    %v4800 = vunpack.c.h.b16 %v1752
    %v4801 = vunpack.c.l.b16 %v1753
    %v4802 = vunpack.c.h.b16 %v1753
    %v4803 = vunpack.c.l.b16 %v1754
    %v4804 = vunpack.c.h.b16 %v1754
    %v4805 = vunpack.c.l.b16 %v1755
    %v4806 = vunpack.c.h.b16 %v1755
    %v4807 = vunpack.c.l.b16 %v1756
    %v4808 = vunpack.c.h.b16 %v1756
    %v4809 = vunpack.c.l.b16 %v1757
    %v4810 = vunpack.c.h.b16 %v1757
    %v4811 = vunpack.c.l.b16 %v1758
    %v4812 = vunpack.c.h.b16 %v1758
    %v4813 = vunpack.c.l.b16 %v1759
    %v4814 = vunpack.c.h.b16 %v1759
    %v4815 = vunpack.c.l.b16 %v1760
    %v4816 = vunpack.c.h.b16 %v1760
    %v4817 = vunpack.c.l.b16 %v1761
    %v4818 = vunpack.c.h.b16 %v1761
    %v4819 = vunpack.c.l.b16 %v1762
    %v4820 = vunpack.c.h.b16 %v1762
    %v4821 = vunpack.c.l.b16 %v1763
    %v4822 = vunpack.c.h.b16 %v1763
    %v4823 = vunpack.c.l.b16 %v1764
    %v4824 = vunpack.c.h.b16 %v1764
    %v4825 = vunpack.c.l.b16 %v1765
    %v4826 = vunpack.c.h.b16 %v1765
    %v4827 = vunpack.c.l.b16 %v1766
    %v4828 = vunpack.c.h.b16 %v1766
    %v4829 = vunpack.c.l.b16 %v1767
    %v4830 = vunpack.c.h.b16 %v1767
    %v4831 = vunpack.c.l.b16 %v1768
    %v4832 = vunpack.c.h.b16 %v1768
    %v4833 = vunpack.c.l.b16 %v1769
    %v4834 = vunpack.c.h.b16 %v1769
    %v4835 = vunpack.c.l.b16 %v1770
    %v4836 = vunpack.c.h.b16 %v1770
    %v4837 = vunpack.c.l.b16 %v1771
    %v4838 = vunpack.c.h.b16 %v1771
    %v4839 = vunpack.c.l.b16 %v1772
    %v4840 = vunpack.c.h.b16 %v1772
    %v4841 = vunpack.c.l.b16 %v1773
    %v4842 = vunpack.c.h.b16 %v1773
    %v4843 = vunpack.c.l.b16 %v1774
    %v4844 = vunpack.c.h.b16 %v1774
    %v4845 = vunpack.c.l.b16 %v1775
    %v4846 = vunpack.c.h.b16 %v1775
    %v4847 = vunpack.c.l.b16 %v1776
    %v4848 = vunpack.c.h.b16 %v1776
    %v4849 = vunpack.c.l.b16 %v1777
    %v4850 = vunpack.c.h.b16 %v1777
    %v4851 = vunpack.c.l.b16 %v1778
    %v4852 = vunpack.c.h.b16 %v1778
    %v4853 = vunpack.c.l.b16 %v1779
    %v4854 = vunpack.c.h.b16 %v1779
    %v4855 = vunpack.c.l.b16 %v1780
    %v4856 = vunpack.c.h.b16 %v1780
    %v4857 = vunpack.c.l.b16 %v1781
    %v4858 = vunpack.c.h.b16 %v1781
    %v4859 = vunpack.c.l.b16 %v1782
    %v4860 = vunpack.c.h.b16 %v1782
    %v4861 = vunpack.c.l.b16 %v1783
    %v4862 = vunpack.c.h.b16 %v1783
    %v4863 = vunpack.c.l.b16 %v1784
    %v4864 = vunpack.c.h.b16 %v1784
    %v4865 = vunpack.c.l.b16 %v1785
    %v4866 = vunpack.c.h.b16 %v1785
    %v4867 = vunpack.c.l.b16 %v1786
    %v4868 = vunpack.c.h.b16 %v1786
    %v4869 = vunpack.c.l.b16 %v1787
    %v4870 = vunpack.c.h.b16 %v1787
    %v4871 = vunpack.c.l.b16 %v1788
    %v4872 = vunpack.c.h.b16 %v1788
    %v4873 = vunpack.c.l.b16 %v1789
    %v4874 = vunpack.c.h.b16 %v1789
    %v4875 = vunpack.c.l.b16 %v1790
    %v4876 = vunpack.c.h.b16 %v1790
    %v4877 = vunpack.c.l.b16 %v1791
    %v4878 = vunpack.c.h.b16 %v1791
    %v4879 = vunpack.c.l.b16 %v1792
    %v4880 = vunpack.c.h.b16 %v1792
    %v4881 = vunpack.c.l.b16 %v1793
    %v4882 = vunpack.c.h.b16 %v1793
    %v4883 = vunpack.c.l.b16 %v1794
    %v4884 = vunpack.c.h.b16 %v1794
    %v4885 = vunpack.c.l.b16 %v1795
    %v4886 = vunpack.c.h.b16 %v1795
    %v4887 = vunpack.c.l.b16 %v1796
    %v4888 = vunpack.c.h.b16 %v1796
    %v4889 = vunpack.c.l.b16 %v1797
    %v4890 = vunpack.c.h.b16 %v1797
    %v4891 = vunpack.c.l.b16 %v1798
    %v4892 = vunpack.c.h.b16 %v1798
    %v4893 = vunpack.c.l.b16 %v1799
    %v4894 = vunpack.c.h.b16 %v1799
    %v4895 = vunpack.c.l.b16 %v1800
    %v4896 = vunpack.c.h.b16 %v1800
    %v4897 = vunpack.c.l.b16 %v1801
    %v4898 = vunpack.c.h.b16 %v1801
    %v4899 = vunpack.c.l.b16 %v1802
    %v4900 = vunpack.c.h.b16 %v1802
    %v4901 = vunpack.c.l.b16 %v1803
    %v4902 = vunpack.c.h.b16 %v1803
    %v4903 = vunpack.c.l.b16 %v1804
    %v4904 = vunpack.c.h.b16 %v1804
    %v4905 = vunpack.c.l.b16 %v1805
    %v4906 = vunpack.c.h.b16 %v1805
    %v4907 = vunpack.c.l.b16 %v1806
    %v4908 = vunpack.c.h.b16 %v1806
    %v4909 = vunpack.c.l.b16 %v1807
    %v4910 = vunpack.c.h.b16 %v1807
    %v4911 = vunpack.c.l.b16 %v1808
    %v4912 = vunpack.c.h.b16 %v1808
    %v4913 = vunpack.c.l.b16 %v1809
    %v4914 = vunpack.c.h.b16 %v1809
    %v4915 = vunpack.c.l.b16 %v1810
    %v4916 = vunpack.c.h.b16 %v1810
    %v4917 = vunpack.c.l.b16 %v1811
    %v4918 = vunpack.c.h.b16 %v1811
    %v4919 = vunpack.c.l.b16 %v1812
    %v4920 = vunpack.c.h.b16 %v1812
    %v4921 = vunpack.c.l.b16 %v1813
    %v4922 = vunpack.c.h.b16 %v1813
    %v4923 = vunpack.c.l.b16 %v1814
    %v4924 = vunpack.c.h.b16 %v1814
    %v4925 = vunpack.c.l.b16 %v1815
    %v4926 = vunpack.c.h.b16 %v1815
    %v4927 = vunpack.c.l.b16 %v1816
    %v4928 = vunpack.c.h.b16 %v1816
    %v4929 = vunpack.c.l.b16 %v1817
    %v4930 = vunpack.c.h.b16 %v1817
    %v4931 = vunpack.c.l.b16 %v1818
    %v4932 = vunpack.c.h.b16 %v1818
    %v4933 = vpack.c.b16 %v2893, %v2885
    %v4934 = vpack.c.b16 %v2894, %v2886
    %v4935 = vpack.c.b16 %v2895, %v2887
    %v4936 = vpack.c.b16 %v2896, %v2888
    %v4937 = vpack.c.b16 %v2897, %v2889
    %v4938 = vpack.c.b16 %v2898, %v2890
    %v4939 = vpack.c.b16 %v2899, %v2891
    %v4940 = vpack.c.b16 %v2900, %v2892
    %v4941 = vpack.c.b16 %v2909, %v2901
    %v4942 = vpack.c.b16 %v2910, %v2902
    %v4943 = vpack.c.b16 %v2911, %v2903
    %v4944 = vpack.c.b16 %v2912, %v2904
    %v4945 = vpack.c.b16 %v2913, %v2905
    %v4946 = vpack.c.b16 %v2914, %v2906
    %v4947 = vpack.c.b16 %v2915, %v2907
    %v4948 = vpack.c.b16 %v2916, %v2908
    %v4949 = vpack.c.b16 %v2925, %v2917
    %v4950 = vpack.c.b16 %v2926, %v2918
    %v4951 = vpack.c.b16 %v2927, %v2919
    %v4952 = vpack.c.b16 %v2928, %v2920
    %v4953 = vpack.c.b16 %v2929, %v2921
    %v4954 = vpack.c.b16 %v2930, %v2922
    %v4955 = vpack.c.b16 %v2931, %v2923
    %v4956 = vpack.c.b16 %v2932, %v2924
    %v4957 = vpack.c.b16 %v2941, %v2933
    %v4958 = vpack.c.b16 %v2942, %v2934
    %v4959 = vpack.c.b16 %v2943, %v2935
    %v4960 = vpack.c.b16 %v2944, %v2936
    %v4961 = vpack.c.b16 %v2945, %v2937
    %v4962 = vpack.c.b16 %v2946, %v2938
    %v4963 = vpack.c.b16 %v2947, %v2939
    %v4964 = vpack.c.b16 %v2948, %v2940
    %v4965 = vpack.c.b16 %v2957, %v2949
    %v4966 = vpack.c.b16 %v2958, %v2950
    %v4967 = vpack.c.b16 %v2959, %v2951
    %v4968 = vpack.c.b16 %v2960, %v2952
    %v4969 = vpack.c.b16 %v2961, %v2953
    %v4970 = vpack.c.b16 %v2962, %v2954
    %v4971 = vpack.c.b16 %v2963, %v2955
    %v4972 = vpack.c.b16 %v2964, %v2956
    %v4973 = vpack.c.b16 %v2973, %v2965
    %v4974 = vpack.c.b16 %v2974, %v2966
    %v4975 = vpack.c.b16 %v2975, %v2967
    %v4976 = vpack.c.b16 %v2976, %v2968
    %v4977 = vpack.c.b16 %v2977, %v2969
    %v4978 = vpack.c.b16 %v2978, %v2970
    %v4979 = vpack.c.b16 %v2979, %v2971
    %v4980 = vpack.c.b16 %v2980, %v2972
    %v4981 = vpack.c.b16 %v2989, %v2981
    %v4982 = vpack.c.b16 %v2990, %v2982
    %v4983 = vpack.c.b16 %v2991, %v2983
    %v4984 = vpack.c.b16 %v2992, %v2984
    %v4985 = vpack.c.b16 %v2993, %v2985
    %v4986 = vpack.c.b16 %v2994, %v2986
    %v4987 = vpack.c.b16 %v2995, %v2987
    %v4988 = vpack.c.b16 %v2996, %v2988
    %v4989 = vpack.c.b16 %v3005, %v2997
    %v4990 = vpack.c.b16 %v3006, %v2998
    %v4991 = vpack.c.b16 %v3007, %v2999
    %v4992 = vpack.c.b16 %v3008, %v3000
    %v4993 = vpack.c.b16 %v3009, %v3001
    %v4994 = vpack.c.b16 %v3010, %v3002
    %v4995 = vpack.c.b16 %v3011, %v3003
    %v4996 = vpack.c.b16 %v3012, %v3004
    %v4997 = vpack.c.b16 %v3021, %v3013
    %v4998 = vpack.c.b16 %v3022, %v3014
    %v4999 = vpack.c.b16 %v3023, %v3015
    %v5000 = vpack.c.b16 %v3024, %v3016
    %v5001 = vpack.c.b16 %v3025, %v3017
    %v5002 = vpack.c.b16 %v3026, %v3018
    %v5003 = vpack.c.b16 %v3027, %v3019
    %v5004 = vpack.c.b16 %v3028, %v3020
    %v5005 = vpack.c.b16 %v3037, %v3029
    %v5006 = vpack.c.b16 %v3038, %v3030
    %v5007 = vpack.c.b16 %v3039, %v3031
    %v5008 = vpack.c.b16 %v3040, %v3032
    %v5009 = vpack.c.b16 %v3041, %v3033
    %v5010 = vpack.c.b16 %v3042, %v3034
    %v5011 = vpack.c.b16 %v3043, %v3035
    %v5012 = vpack.c.b16 %v3044, %v3036
    %v5013 = vpack.c.b16 %v3053, %v3045
    %v5014 = vpack.c.b16 %v3054, %v3046
    %v5015 = vpack.c.b16 %v3055, %v3047
    %v5016 = vpack.c.b16 %v3056, %v3048
    %v5017 = vpack.c.b16 %v3057, %v3049
    %v5018 = vpack.c.b16 %v3058, %v3050
    %v5019 = vpack.c.b16 %v3059, %v3051
    %v5020 = vpack.c.b16 %v3060, %v3052
    %v5021 = vpack.c.b16 %v3069, %v3061
    %v5022 = vpack.c.b16 %v3070, %v3062
    %v5023 = vpack.c.b16 %v3071, %v3063
    %v5024 = vpack.c.b16 %v3072, %v3064
    %v5025 = vpack.c.b16 %v3073, %v3065
    %v5026 = vpack.c.b16 %v3074, %v3066
    %v5027 = vpack.c.b16 %v3075, %v3067
    %v5028 = vpack.c.b16 %v3076, %v3068
    %v5029 = vpack.c.b16 %v3085, %v3077
    %v5030 = vpack.c.b16 %v3086, %v3078
    %v5031 = vpack.c.b16 %v3087, %v3079
    %v5032 = vpack.c.b16 %v3088, %v3080
    %v5033 = vpack.c.b16 %v3089, %v3081
    %v5034 = vpack.c.b16 %v3090, %v3082
    %v5035 = vpack.c.b16 %v3091, %v3083
    %v5036 = vpack.c.b16 %v3092, %v3084
    %v5037 = vpack.c.b16 %v3101, %v3093
    %v5038 = vpack.c.b16 %v3102, %v3094
    %v5039 = vpack.c.b16 %v3103, %v3095
    %v5040 = vpack.c.b16 %v3104, %v3096
    %v5041 = vpack.c.b16 %v3105, %v3097
    %v5042 = vpack.c.b16 %v3106, %v3098
    %v5043 = vpack.c.b16 %v3107, %v3099
    %v5044 = vpack.c.b16 %v3108, %v3100
    %v5045 = vpack.c.b16 %v3117, %v3109
    %v5046 = vpack.c.b16 %v3118, %v3110
    %v5047 = vpack.c.b16 %v3119, %v3111
    %v5048 = vpack.c.b16 %v3120, %v3112
    %v5049 = vpack.c.b16 %v3121, %v3113
    %v5050 = vpack.c.b16 %v3122, %v3114
    %v5051 = vpack.c.b16 %v3123, %v3115
    %v5052 = vpack.c.b16 %v3124, %v3116
    %v5053 = vpack.c.b16 %v3133, %v3125
    %v5054 = vpack.c.b16 %v3134, %v3126
    %v5055 = vpack.c.b16 %v3135, %v3127
    %v5056 = vpack.c.b16 %v3136, %v3128
    %v5057 = vpack.c.b16 %v3137, %v3129
    %v5058 = vpack.c.b16 %v3138, %v3130
    %v5059 = vpack.c.b16 %v3139, %v3131
    %v5060 = vpack.c.b16 %v3140, %v3132
    %v5061 = vpack.c.b16 %v3149, %v3141
    %v5062 = vpack.c.b16 %v3150, %v3142
    %v5063 = vpack.c.b16 %v3151, %v3143
    %v5064 = vpack.c.b16 %v3152, %v3144
    %v5065 = vpack.c.b16 %v3153, %v3145
    %v5066 = vpack.c.b16 %v3154, %v3146
    %v5067 = vpack.c.b16 %v3155, %v3147
    %v5068 = vpack.c.b16 %v3156, %v3148
    %v5069 = vpack.c.b16 %v3165, %v3157
    %v5070 = vpack.c.b16 %v3166, %v3158
    %v5071 = vpack.c.b16 %v3167, %v3159
    %v5072 = vpack.c.b16 %v3168, %v3160
    %v5073 = vpack.c.b16 %v3169, %v3161
    %v5074 = vpack.c.b16 %v3170, %v3162
    %v5075 = vpack.c.b16 %v3171, %v3163
    %v5076 = vpack.c.b16 %v3172, %v3164
    %v5077 = vpack.c.b16 %v3181, %v3173
    %v5078 = vpack.c.b16 %v3182, %v3174
    %v5079 = vpack.c.b16 %v3183, %v3175
    %v5080 = vpack.c.b16 %v3184, %v3176
    %v5081 = vpack.c.b16 %v3185, %v3177
    %v5082 = vpack.c.b16 %v3186, %v3178
    %v5083 = vpack.c.b16 %v3187, %v3179
    %v5084 = vpack.c.b16 %v3188, %v3180
    %v5085 = vpack.c.b16 %v3197, %v3189
    %v5086 = vpack.c.b16 %v3198, %v3190
    %v5087 = vpack.c.b16 %v3199, %v3191
    %v5088 = vpack.c.b16 %v3200, %v3192
    %v5089 = vpack.c.b16 %v3201, %v3193
    %v5090 = vpack.c.b16 %v3202, %v3194
    %v5091 = vpack.c.b16 %v3203, %v3195
    %v5092 = vpack.c.b16 %v3204, %v3196
    %v5093 = vpack.c.b16 %v3213, %v3205
    %v5094 = vpack.c.b16 %v3214, %v3206
    %v5095 = vpack.c.b16 %v3215, %v3207
    %v5096 = vpack.c.b16 %v3216, %v3208
    %v5097 = vpack.c.b16 %v3217, %v3209
    %v5098 = vpack.c.b16 %v3218, %v3210
    %v5099 = vpack.c.b16 %v3219, %v3211
    %v5100 = vpack.c.b16 %v3220, %v3212
    %v5101 = vpack.c.b16 %v3229, %v3221
    %v5102 = vpack.c.b16 %v3230, %v3222
    %v5103 = vpack.c.b16 %v3231, %v3223
    %v5104 = vpack.c.b16 %v3232, %v3224
    %v5105 = vpack.c.b16 %v3233, %v3225
    %v5106 = vpack.c.b16 %v3234, %v3226
    %v5107 = vpack.c.b16 %v3235, %v3227
    %v5108 = vpack.c.b16 %v3236, %v3228
    %v5109 = vpack.c.b16 %v3245, %v3237
    %v5110 = vpack.c.b16 %v3246, %v3238
    %v5111 = vpack.c.b16 %v3247, %v3239
    %v5112 = vpack.c.b16 %v3248, %v3240
    %v5113 = vpack.c.b16 %v3249, %v3241
    %v5114 = vpack.c.b16 %v3250, %v3242
    %v5115 = vpack.c.b16 %v3251, %v3243
    %v5116 = vpack.c.b16 %v3252, %v3244
    %v5117 = vpack.c.b16 %v3261, %v3253
    %v5118 = vpack.c.b16 %v3262, %v3254
    %v5119 = vpack.c.b16 %v3263, %v3255
    %v5120 = vpack.c.b16 %v3264, %v3256
    %v5121 = vpack.c.b16 %v3265, %v3257
    %v5122 = vpack.c.b16 %v3266, %v3258
    %v5123 = vpack.c.b16 %v3267, %v3259
    %v5124 = vpack.c.b16 %v3268, %v3260
    %v5125 = vpack.c.b16 %v3277, %v3269
    %v5126 = vpack.c.b16 %v3278, %v3270
    %v5127 = vpack.c.b16 %v3279, %v3271
    %v5128 = vpack.c.b16 %v3280, %v3272
    %v5129 = vpack.c.b16 %v3281, %v3273
    %v5130 = vpack.c.b16 %v3282, %v3274
    %v5131 = vpack.c.b16 %v3283, %v3275
    %v5132 = vpack.c.b16 %v3284, %v3276
    %v5133 = vpack.c.b16 %v3293, %v3285
    %v5134 = vpack.c.b16 %v3294, %v3286
    %v5135 = vpack.c.b16 %v3295, %v3287
    %v5136 = vpack.c.b16 %v3296, %v3288
    %v5137 = vpack.c.b16 %v3297, %v3289
    %v5138 = vpack.c.b16 %v3298, %v3290
    %v5139 = vpack.c.b16 %v3299, %v3291
    %v5140 = vpack.c.b16 %v3300, %v3292
    %v5141 = vpack.c.b16 %v3309, %v3301
    %v5142 = vpack.c.b16 %v3310, %v3302
    %v5143 = vpack.c.b16 %v3311, %v3303
    %v5144 = vpack.c.b16 %v3312, %v3304
    %v5145 = vpack.c.b16 %v3313, %v3305
    %v5146 = vpack.c.b16 %v3314, %v3306
    %v5147 = vpack.c.b16 %v3315, %v3307
    %v5148 = vpack.c.b16 %v3316, %v3308
    %v5149 = vpack.c.b16 %v3325, %v3317
    %v5150 = vpack.c.b16 %v3326, %v3318
    %v5151 = vpack.c.b16 %v3327, %v3319
    %v5152 = vpack.c.b16 %v3328, %v3320
    %v5153 = vpack.c.b16 %v3329, %v3321
    %v5154 = vpack.c.b16 %v3330, %v3322
    %v5155 = vpack.c.b16 %v3331, %v3323
    %v5156 = vpack.c.b16 %v3332, %v3324
    %v5157 = vpack.c.b16 %v3341, %v3333
    %v5158 = vpack.c.b16 %v3342, %v3334
    %v5159 = vpack.c.b16 %v3343, %v3335
    %v5160 = vpack.c.b16 %v3344, %v3336
    %v5161 = vpack.c.b16 %v3345, %v3337
    %v5162 = vpack.c.b16 %v3346, %v3338
    %v5163 = vpack.c.b16 %v3347, %v3339
    %v5164 = vpack.c.b16 %v3348, %v3340
    %v5165 = vpack.c.b16 %v3357, %v3349
    %v5166 = vpack.c.b16 %v3358, %v3350
    %v5167 = vpack.c.b16 %v3359, %v3351
    %v5168 = vpack.c.b16 %v3360, %v3352
    %v5169 = vpack.c.b16 %v3361, %v3353
    %v5170 = vpack.c.b16 %v3362, %v3354
    %v5171 = vpack.c.b16 %v3363, %v3355
    %v5172 = vpack.c.b16 %v3364, %v3356
    %v5173 = vpack.c.b16 %v3373, %v3365
    %v5174 = vpack.c.b16 %v3374, %v3366
    %v5175 = vpack.c.b16 %v3375, %v3367
    %v5176 = vpack.c.b16 %v3376, %v3368
    %v5177 = vpack.c.b16 %v3377, %v3369
    %v5178 = vpack.c.b16 %v3378, %v3370
    %v5179 = vpack.c.b16 %v3379, %v3371
    %v5180 = vpack.c.b16 %v3380, %v3372
    %v5181 = vpack.c.b16 %v3389, %v3381
    %v5182 = vpack.c.b16 %v3390, %v3382
    %v5183 = vpack.c.b16 %v3391, %v3383
    %v5184 = vpack.c.b16 %v3392, %v3384
    %v5185 = vpack.c.b16 %v3393, %v3385
    %v5186 = vpack.c.b16 %v3394, %v3386
    %v5187 = vpack.c.b16 %v3395, %v3387
    %v5188 = vpack.c.b16 %v3396, %v3388
    %v5189 = vpack.c.b16 %v3405, %v3397
    %v5190 = vpack.c.b16 %v3406, %v3398
    %v5191 = vpack.c.b16 %v3407, %v3399
    %v5192 = vpack.c.b16 %v3408, %v3400
    %v5193 = vpack.c.b16 %v3409, %v3401
    %v5194 = vpack.c.b16 %v3410, %v3402
    %v5195 = vpack.c.b16 %v3411, %v3403
    %v5196 = vpack.c.b16 %v3412, %v3404
    %v5197 = vpack.c.b16 %v3421, %v3413
    %v5198 = vpack.c.b16 %v3422, %v3414
    %v5199 = vpack.c.b16 %v3423, %v3415
    %v5200 = vpack.c.b16 %v3424, %v3416
    %v5201 = vpack.c.b16 %v3425, %v3417
    %v5202 = vpack.c.b16 %v3426, %v3418
    %v5203 = vpack.c.b16 %v3427, %v3419
    %v5204 = vpack.c.b16 %v3428, %v3420
    %v5205 = vpack.c.b16 %v3437, %v3429
    %v5206 = vpack.c.b16 %v3438, %v3430
    %v5207 = vpack.c.b16 %v3439, %v3431
    %v5208 = vpack.c.b16 %v3440, %v3432
    %v5209 = vpack.c.b16 %v3441, %v3433
    %v5210 = vpack.c.b16 %v3442, %v3434
    %v5211 = vpack.c.b16 %v3443, %v3435
    %v5212 = vpack.c.b16 %v3444, %v3436
    %v5213 = vpack.c.b16 %v3453, %v3445
    %v5214 = vpack.c.b16 %v3454, %v3446
    %v5215 = vpack.c.b16 %v3455, %v3447
    %v5216 = vpack.c.b16 %v3456, %v3448
    %v5217 = vpack.c.b16 %v3457, %v3449
    %v5218 = vpack.c.b16 %v3458, %v3450
    %v5219 = vpack.c.b16 %v3459, %v3451
    %v5220 = vpack.c.b16 %v3460, %v3452
    %v5221 = vpack.c.b16 %v3469, %v3461
    %v5222 = vpack.c.b16 %v3470, %v3462
    %v5223 = vpack.c.b16 %v3471, %v3463
    %v5224 = vpack.c.b16 %v3472, %v3464
    %v5225 = vpack.c.b16 %v3473, %v3465
    %v5226 = vpack.c.b16 %v3474, %v3466
    %v5227 = vpack.c.b16 %v3475, %v3467
    %v5228 = vpack.c.b16 %v3476, %v3468
    %v5229 = vpack.c.b16 %v3485, %v3477
    %v5230 = vpack.c.b16 %v3486, %v3478
    %v5231 = vpack.c.b16 %v3487, %v3479
    %v5232 = vpack.c.b16 %v3488, %v3480
    %v5233 = vpack.c.b16 %v3489, %v3481
    %v5234 = vpack.c.b16 %v3490, %v3482
    %v5235 = vpack.c.b16 %v3491, %v3483
    %v5236 = vpack.c.b16 %v3492, %v3484
    %v5237 = vpack.c.b16 %v3501, %v3493
    %v5238 = vpack.c.b16 %v3502, %v3494
    %v5239 = vpack.c.b16 %v3503, %v3495
    %v5240 = vpack.c.b16 %v3504, %v3496
    %v5241 = vpack.c.b16 %v3505, %v3497
    %v5242 = vpack.c.b16 %v3506, %v3498
    %v5243 = vpack.c.b16 %v3507, %v3499
    %v5244 = vpack.c.b16 %v3508, %v3500
    %v5245 = vpack.c.b16 %v3517, %v3509
    %v5246 = vpack.c.b16 %v3518, %v3510
    %v5247 = vpack.c.b16 %v3519, %v3511
    %v5248 = vpack.c.b16 %v3520, %v3512
    %v5249 = vpack.c.b16 %v3521, %v3513
    %v5250 = vpack.c.b16 %v3522, %v3514
    %v5251 = vpack.c.b16 %v3523, %v3515
    %v5252 = vpack.c.b16 %v3524, %v3516
    %v5253 = vpack.c.b16 %v3533, %v3525
    %v5254 = vpack.c.b16 %v3534, %v3526
    %v5255 = vpack.c.b16 %v3535, %v3527
    %v5256 = vpack.c.b16 %v3536, %v3528
    %v5257 = vpack.c.b16 %v3537, %v3529
    %v5258 = vpack.c.b16 %v3538, %v3530
    %v5259 = vpack.c.b16 %v3539, %v3531
    %v5260 = vpack.c.b16 %v3540, %v3532
    %v5261 = vpack.c.b16 %v3549, %v3541
    %v5262 = vpack.c.b16 %v3550, %v3542
    %v5263 = vpack.c.b16 %v3551, %v3543
    %v5264 = vpack.c.b16 %v3552, %v3544
    %v5265 = vpack.c.b16 %v3553, %v3545
    %v5266 = vpack.c.b16 %v3554, %v3546
    %v5267 = vpack.c.b16 %v3555, %v3547
    %v5268 = vpack.c.b16 %v3556, %v3548
    %v5269 = vpack.c.b16 %v3565, %v3557
    %v5270 = vpack.c.b16 %v3566, %v3558
    %v5271 = vpack.c.b16 %v3567, %v3559
    %v5272 = vpack.c.b16 %v3568, %v3560
    %v5273 = vpack.c.b16 %v3569, %v3561
    %v5274 = vpack.c.b16 %v3570, %v3562
    %v5275 = vpack.c.b16 %v3571, %v3563
    %v5276 = vpack.c.b16 %v3572, %v3564
    %v5277 = vpack.c.b16 %v3581, %v3573
    %v5278 = vpack.c.b16 %v3582, %v3574
    %v5279 = vpack.c.b16 %v3583, %v3575
    %v5280 = vpack.c.b16 %v3584, %v3576
    %v5281 = vpack.c.b16 %v3585, %v3577
    %v5282 = vpack.c.b16 %v3586, %v3578
    %v5283 = vpack.c.b16 %v3587, %v3579
    %v5284 = vpack.c.b16 %v3588, %v3580
    %v5285 = vpack.c.b16 %v3597, %v3589
    %v5286 = vpack.c.b16 %v3598, %v3590
    %v5287 = vpack.c.b16 %v3599, %v3591
    %v5288 = vpack.c.b16 %v3600, %v3592
    %v5289 = vpack.c.b16 %v3601, %v3593
    %v5290 = vpack.c.b16 %v3602, %v3594
    %v5291 = vpack.c.b16 %v3603, %v3595
    %v5292 = vpack.c.b16 %v3604, %v3596
    %v5293 = vpack.c.b16 %v3613, %v3605
    %v5294 = vpack.c.b16 %v3614, %v3606
    %v5295 = vpack.c.b16 %v3615, %v3607
    %v5296 = vpack.c.b16 %v3616, %v3608
    %v5297 = vpack.c.b16 %v3617, %v3609
    %v5298 = vpack.c.b16 %v3618, %v3610
    %v5299 = vpack.c.b16 %v3619, %v3611
    %v5300 = vpack.c.b16 %v3620, %v3612
    %v5301 = vpack.c.b16 %v3629, %v3621
    %v5302 = vpack.c.b16 %v3630, %v3622
    %v5303 = vpack.c.b16 %v3631, %v3623
    %v5304 = vpack.c.b16 %v3632, %v3624
    %v5305 = vpack.c.b16 %v3633, %v3625
    %v5306 = vpack.c.b16 %v3634, %v3626
    %v5307 = vpack.c.b16 %v3635, %v3627
    %v5308 = vpack.c.b16 %v3636, %v3628
    %v5309 = vpack.c.b16 %v3645, %v3637
    %v5310 = vpack.c.b16 %v3646, %v3638
    %v5311 = vpack.c.b16 %v3647, %v3639
    %v5312 = vpack.c.b16 %v3648, %v3640
    %v5313 = vpack.c.b16 %v3649, %v3641
    %v5314 = vpack.c.b16 %v3650, %v3642
    %v5315 = vpack.c.b16 %v3651, %v3643
    %v5316 = vpack.c.b16 %v3652, %v3644
    %v5317 = vpack.c.b16 %v3661, %v3653
    %v5318 = vpack.c.b16 %v3662, %v3654
    %v5319 = vpack.c.b16 %v3663, %v3655
    %v5320 = vpack.c.b16 %v3664, %v3656
    %v5321 = vpack.c.b16 %v3665, %v3657
    %v5322 = vpack.c.b16 %v3666, %v3658
    %v5323 = vpack.c.b16 %v3667, %v3659
    %v5324 = vpack.c.b16 %v3668, %v3660
    %v5325 = vpack.c.b16 %v3677, %v3669
    %v5326 = vpack.c.b16 %v3678, %v3670
    %v5327 = vpack.c.b16 %v3679, %v3671
    %v5328 = vpack.c.b16 %v3680, %v3672
    %v5329 = vpack.c.b16 %v3681, %v3673
    %v5330 = vpack.c.b16 %v3682, %v3674
    %v5331 = vpack.c.b16 %v3683, %v3675
    %v5332 = vpack.c.b16 %v3684, %v3676
    %v5333 = vpack.c.b16 %v3693, %v3685
    %v5334 = vpack.c.b16 %v3694, %v3686
    %v5335 = vpack.c.b16 %v3695, %v3687
    %v5336 = vpack.c.b16 %v3696, %v3688
    %v5337 = vpack.c.b16 %v3697, %v3689
    %v5338 = vpack.c.b16 %v3698, %v3690
    %v5339 = vpack.c.b16 %v3699, %v3691
    %v5340 = vpack.c.b16 %v3700, %v3692
    %v5341 = vpack.c.b16 %v3709, %v3701
    %v5342 = vpack.c.b16 %v3710, %v3702
    %v5343 = vpack.c.b16 %v3711, %v3703
    %v5344 = vpack.c.b16 %v3712, %v3704
    %v5345 = vpack.c.b16 %v3713, %v3705
    %v5346 = vpack.c.b16 %v3714, %v3706
    %v5347 = vpack.c.b16 %v3715, %v3707
    %v5348 = vpack.c.b16 %v3716, %v3708
    %v5349 = vpack.c.b16 %v3725, %v3717
    %v5350 = vpack.c.b16 %v3726, %v3718
    %v5351 = vpack.c.b16 %v3727, %v3719
    %v5352 = vpack.c.b16 %v3728, %v3720
    %v5353 = vpack.c.b16 %v3729, %v3721
    %v5354 = vpack.c.b16 %v3730, %v3722
    %v5355 = vpack.c.b16 %v3731, %v3723
    %v5356 = vpack.c.b16 %v3732, %v3724
    %v5357 = vpack.c.b16 %v3741, %v3733
    %v5358 = vpack.c.b16 %v3742, %v3734
    %v5359 = vpack.c.b16 %v3743, %v3735
    %v5360 = vpack.c.b16 %v3744, %v3736
    %v5361 = vpack.c.b16 %v3745, %v3737
    %v5362 = vpack.c.b16 %v3746, %v3738
    %v5363 = vpack.c.b16 %v3747, %v3739
    %v5364 = vpack.c.b16 %v3748, %v3740
    %v5365 = vpack.c.b16 %v3757, %v3749
    %v5366 = vpack.c.b16 %v3758, %v3750
    %v5367 = vpack.c.b16 %v3759, %v3751
    %v5368 = vpack.c.b16 %v3760, %v3752
    %v5369 = vpack.c.b16 %v3761, %v3753
    %v5370 = vpack.c.b16 %v3762, %v3754
    %v5371 = vpack.c.b16 %v3763, %v3755
    %v5372 = vpack.c.b16 %v3764, %v3756
    %v5373 = vpack.c.b16 %v3773, %v3765
    %v5374 = vpack.c.b16 %v3774, %v3766
    %v5375 = vpack.c.b16 %v3775, %v3767
    %v5376 = vpack.c.b16 %v3776, %v3768
    %v5377 = vpack.c.b16 %v3777, %v3769
    %v5378 = vpack.c.b16 %v3778, %v3770
    %v5379 = vpack.c.b16 %v3779, %v3771
    %v5380 = vpack.c.b16 %v3780, %v3772
    %v5381 = vpack.c.b16 %v3789, %v3781
    %v5382 = vpack.c.b16 %v3790, %v3782
    %v5383 = vpack.c.b16 %v3791, %v3783
    %v5384 = vpack.c.b16 %v3792, %v3784
    %v5385 = vpack.c.b16 %v3793, %v3785
    %v5386 = vpack.c.b16 %v3794, %v3786
    %v5387 = vpack.c.b16 %v3795, %v3787
    %v5388 = vpack.c.b16 %v3796, %v3788
    %v5389 = vpack.c.b16 %v3805, %v3797
    %v5390 = vpack.c.b16 %v3806, %v3798
    %v5391 = vpack.c.b16 %v3807, %v3799
    %v5392 = vpack.c.b16 %v3808, %v3800
    %v5393 = vpack.c.b16 %v3809, %v3801
    %v5394 = vpack.c.b16 %v3810, %v3802
    %v5395 = vpack.c.b16 %v3811, %v3803
    %v5396 = vpack.c.b16 %v3812, %v3804
    %v5397 = vpack.c.b16 %v3821, %v3813
    %v5398 = vpack.c.b16 %v3822, %v3814
    %v5399 = vpack.c.b16 %v3823, %v3815
    %v5400 = vpack.c.b16 %v3824, %v3816
    %v5401 = vpack.c.b16 %v3825, %v3817
    %v5402 = vpack.c.b16 %v3826, %v3818
    %v5403 = vpack.c.b16 %v3827, %v3819
    %v5404 = vpack.c.b16 %v3828, %v3820
    %v5405 = vpack.c.b16 %v3837, %v3829
    %v5406 = vpack.c.b16 %v3838, %v3830
    %v5407 = vpack.c.b16 %v3839, %v3831
    %v5408 = vpack.c.b16 %v3840, %v3832
    %v5409 = vpack.c.b16 %v3841, %v3833
    %v5410 = vpack.c.b16 %v3842, %v3834
    %v5411 = vpack.c.b16 %v3843, %v3835
    %v5412 = vpack.c.b16 %v3844, %v3836
    %v5413 = vpack.c.b16 %v3853, %v3845
    %v5414 = vpack.c.b16 %v3854, %v3846
    %v5415 = vpack.c.b16 %v3855, %v3847
    %v5416 = vpack.c.b16 %v3856, %v3848
    %v5417 = vpack.c.b16 %v3857, %v3849
    %v5418 = vpack.c.b16 %v3858, %v3850
    %v5419 = vpack.c.b16 %v3859, %v3851
    %v5420 = vpack.c.b16 %v3860, %v3852
    %v5421 = vpack.c.b16 %v3869, %v3861
    %v5422 = vpack.c.b16 %v3870, %v3862
    %v5423 = vpack.c.b16 %v3871, %v3863
    %v5424 = vpack.c.b16 %v3872, %v3864
    %v5425 = vpack.c.b16 %v3873, %v3865
    %v5426 = vpack.c.b16 %v3874, %v3866
    %v5427 = vpack.c.b16 %v3875, %v3867
    %v5428 = vpack.c.b16 %v3876, %v3868
    %v5429 = vpack.c.b16 %v3885, %v3877
    %v5430 = vpack.c.b16 %v3886, %v3878
    %v5431 = vpack.c.b16 %v3887, %v3879
    %v5432 = vpack.c.b16 %v3888, %v3880
    %v5433 = vpack.c.b16 %v3889, %v3881
    %v5434 = vpack.c.b16 %v3890, %v3882
    %v5435 = vpack.c.b16 %v3891, %v3883
    %v5436 = vpack.c.b16 %v3892, %v3884
    %v5437 = vpack.c.b16 %v3901, %v3893
    %v5438 = vpack.c.b16 %v3902, %v3894
    %v5439 = vpack.c.b16 %v3903, %v3895
    %v5440 = vpack.c.b16 %v3904, %v3896
    %v5441 = vpack.c.b16 %v3905, %v3897
    %v5442 = vpack.c.b16 %v3906, %v3898
    %v5443 = vpack.c.b16 %v3907, %v3899
    %v5444 = vpack.c.b16 %v3908, %v3900
    %v5445 = vpack.c.b16 %v3917, %v3909
    %v5446 = vpack.c.b16 %v3918, %v3910
    %v5447 = vpack.c.b16 %v3919, %v3911
    %v5448 = vpack.c.b16 %v3920, %v3912
    %v5449 = vpack.c.b16 %v3921, %v3913
    %v5450 = vpack.c.b16 %v3922, %v3914
    %v5451 = vpack.c.b16 %v3923, %v3915
    %v5452 = vpack.c.b16 %v3924, %v3916
    %v5453 = vpack.c.b16 %v3933, %v3925
    %v5454 = vpack.c.b16 %v3934, %v3926
    %v5455 = vpack.c.b16 %v3935, %v3927
    %v5456 = vpack.c.b16 %v3936, %v3928
    %v5457 = vpack.c.b16 %v3937, %v3929
    %v5458 = vpack.c.b16 %v3938, %v3930
    %v5459 = vpack.c.b16 %v3939, %v3931
    %v5460 = vpack.c.b16 %v3940, %v3932
    %v5461 = vpack.c.b16 %v3949, %v3941
    %v5462 = vpack.c.b16 %v3950, %v3942
    %v5463 = vpack.c.b16 %v3951, %v3943
    %v5464 = vpack.c.b16 %v3952, %v3944
    %v5465 = vpack.c.b16 %v3953, %v3945
    %v5466 = vpack.c.b16 %v3954, %v3946
    %v5467 = vpack.c.b16 %v3955, %v3947
    %v5468 = vpack.c.b16 %v3956, %v3948
    %v5469 = vpack.c.b16 %v3965, %v3957
    %v5470 = vpack.c.b16 %v3966, %v3958
    %v5471 = vpack.c.b16 %v3967, %v3959
    %v5472 = vpack.c.b16 %v3968, %v3960
    %v5473 = vpack.c.b16 %v3969, %v3961
    %v5474 = vpack.c.b16 %v3970, %v3962
    %v5475 = vpack.c.b16 %v3971, %v3963
    %v5476 = vpack.c.b16 %v3972, %v3964
    %v5477 = vpack.c.b16 %v3981, %v3973
    %v5478 = vpack.c.b16 %v3982, %v3974
    %v5479 = vpack.c.b16 %v3983, %v3975
    %v5480 = vpack.c.b16 %v3984, %v3976
    %v5481 = vpack.c.b16 %v3985, %v3977
    %v5482 = vpack.c.b16 %v3986, %v3978
    %v5483 = vpack.c.b16 %v3987, %v3979
    %v5484 = vpack.c.b16 %v3988, %v3980
    %v5485 = vpack.c.b16 %v3997, %v3989
    %v5486 = vpack.c.b16 %v3998, %v3990
    %v5487 = vpack.c.b16 %v3999, %v3991
    %v5488 = vpack.c.b16 %v4000, %v3992
    %v5489 = vpack.c.b16 %v4001, %v3993
    %v5490 = vpack.c.b16 %v4002, %v3994
    %v5491 = vpack.c.b16 %v4003, %v3995
    %v5492 = vpack.c.b16 %v4004, %v3996
    %v5493 = vpack.c.b16 %v4013, %v4005
    %v5494 = vpack.c.b16 %v4014, %v4006
    %v5495 = vpack.c.b16 %v4015, %v4007
    %v5496 = vpack.c.b16 %v4016, %v4008
    %v5497 = vpack.c.b16 %v4017, %v4009
    %v5498 = vpack.c.b16 %v4018, %v4010
    %v5499 = vpack.c.b16 %v4019, %v4011
    %v5500 = vpack.c.b16 %v4020, %v4012
    %v5501 = vpack.c.b16 %v4029, %v4021
    %v5502 = vpack.c.b16 %v4030, %v4022
    %v5503 = vpack.c.b16 %v4031, %v4023
    %v5504 = vpack.c.b16 %v4032, %v4024
    %v5505 = vpack.c.b16 %v4033, %v4025
    %v5506 = vpack.c.b16 %v4034, %v4026
    %v5507 = vpack.c.b16 %v4035, %v4027
    %v5508 = vpack.c.b16 %v4036, %v4028
    %v5509 = vpack.c.b16 %v4045, %v4037
    %v5510 = vpack.c.b16 %v4046, %v4038
    %v5511 = vpack.c.b16 %v4047, %v4039
    %v5512 = vpack.c.b16 %v4048, %v4040
    %v5513 = vpack.c.b16 %v4049, %v4041
    %v5514 = vpack.c.b16 %v4050, %v4042
    %v5515 = vpack.c.b16 %v4051, %v4043
    %v5516 = vpack.c.b16 %v4052, %v4044
    %v5517 = vpack.c.b16 %v4061, %v4053
    %v5518 = vpack.c.b16 %v4062, %v4054
    %v5519 = vpack.c.b16 %v4063, %v4055
    %v5520 = vpack.c.b16 %v4064, %v4056
    %v5521 = vpack.c.b16 %v4065, %v4057
    %v5522 = vpack.c.b16 %v4066, %v4058
    %v5523 = vpack.c.b16 %v4067, %v4059
    %v5524 = vpack.c.b16 %v4068, %v4060
    %v5525 = vpack.c.b16 %v4077, %v4069
    %v5526 = vpack.c.b16 %v4078, %v4070
    %v5527 = vpack.c.b16 %v4079, %v4071
    %v5528 = vpack.c.b16 %v4080, %v4072
    %v5529 = vpack.c.b16 %v4081, %v4073
    %v5530 = vpack.c.b16 %v4082, %v4074
    %v5531 = vpack.c.b16 %v4083, %v4075
    %v5532 = vpack.c.b16 %v4084, %v4076
    %v5533 = vpack.c.b16 %v4093, %v4085
    %v5534 = vpack.c.b16 %v4094, %v4086
    %v5535 = vpack.c.b16 %v4095, %v4087
    %v5536 = vpack.c.b16 %v4096, %v4088
    %v5537 = vpack.c.b16 %v4097, %v4089
    %v5538 = vpack.c.b16 %v4098, %v4090
    %v5539 = vpack.c.b16 %v4099, %v4091
    %v5540 = vpack.c.b16 %v4100, %v4092
    %v5541 = vpack.c.b16 %v4109, %v4101
    %v5542 = vpack.c.b16 %v4110, %v4102
    %v5543 = vpack.c.b16 %v4111, %v4103
    %v5544 = vpack.c.b16 %v4112, %v4104
    %v5545 = vpack.c.b16 %v4113, %v4105
    %v5546 = vpack.c.b16 %v4114, %v4106
    %v5547 = vpack.c.b16 %v4115, %v4107
    %v5548 = vpack.c.b16 %v4116, %v4108
    %v5549 = vpack.c.b16 %v4125, %v4117
    %v5550 = vpack.c.b16 %v4126, %v4118
    %v5551 = vpack.c.b16 %v4127, %v4119
    %v5552 = vpack.c.b16 %v4128, %v4120
    %v5553 = vpack.c.b16 %v4129, %v4121
    %v5554 = vpack.c.b16 %v4130, %v4122
    %v5555 = vpack.c.b16 %v4131, %v4123
    %v5556 = vpack.c.b16 %v4132, %v4124
    %v5557 = vpack.c.b16 %v4141, %v4133
    %v5558 = vpack.c.b16 %v4142, %v4134
    %v5559 = vpack.c.b16 %v4143, %v4135
    %v5560 = vpack.c.b16 %v4144, %v4136
    %v5561 = vpack.c.b16 %v4145, %v4137
    %v5562 = vpack.c.b16 %v4146, %v4138
    %v5563 = vpack.c.b16 %v4147, %v4139
    %v5564 = vpack.c.b16 %v4148, %v4140
    %v5565 = vpack.c.b16 %v4157, %v4149
    %v5566 = vpack.c.b16 %v4158, %v4150
    %v5567 = vpack.c.b16 %v4159, %v4151
    %v5568 = vpack.c.b16 %v4160, %v4152
    %v5569 = vpack.c.b16 %v4161, %v4153
    %v5570 = vpack.c.b16 %v4162, %v4154
    %v5571 = vpack.c.b16 %v4163, %v4155
    %v5572 = vpack.c.b16 %v4164, %v4156
    %v5573 = vpack.c.b16 %v4173, %v4165
    %v5574 = vpack.c.b16 %v4174, %v4166
    %v5575 = vpack.c.b16 %v4175, %v4167
    %v5576 = vpack.c.b16 %v4176, %v4168
    %v5577 = vpack.c.b16 %v4177, %v4169
    %v5578 = vpack.c.b16 %v4178, %v4170
    %v5579 = vpack.c.b16 %v4179, %v4171
    %v5580 = vpack.c.b16 %v4180, %v4172
    %v5581 = vpack.c.b16 %v4189, %v4181
    %v5582 = vpack.c.b16 %v4190, %v4182
    %v5583 = vpack.c.b16 %v4191, %v4183
    %v5584 = vpack.c.b16 %v4192, %v4184
    %v5585 = vpack.c.b16 %v4193, %v4185
    %v5586 = vpack.c.b16 %v4194, %v4186
    %v5587 = vpack.c.b16 %v4195, %v4187
    %v5588 = vpack.c.b16 %v4196, %v4188
    %v5589 = vpack.c.b16 %v4205, %v4197
    %v5590 = vpack.c.b16 %v4206, %v4198
    %v5591 = vpack.c.b16 %v4207, %v4199
    %v5592 = vpack.c.b16 %v4208, %v4200
    %v5593 = vpack.c.b16 %v4209, %v4201
    %v5594 = vpack.c.b16 %v4210, %v4202
    %v5595 = vpack.c.b16 %v4211, %v4203
    %v5596 = vpack.c.b16 %v4212, %v4204
    %v5597 = vpack.c.b16 %v4221, %v4213
    %v5598 = vpack.c.b16 %v4222, %v4214
    %v5599 = vpack.c.b16 %v4223, %v4215
    %v5600 = vpack.c.b16 %v4224, %v4216
    %v5601 = vpack.c.b16 %v4225, %v4217
    %v5602 = vpack.c.b16 %v4226, %v4218
    %v5603 = vpack.c.b16 %v4227, %v4219
    %v5604 = vpack.c.b16 %v4228, %v4220
    %v5605 = vpack.c.b16 %v4237, %v4229
    %v5606 = vpack.c.b16 %v4238, %v4230
    %v5607 = vpack.c.b16 %v4239, %v4231
    %v5608 = vpack.c.b16 %v4240, %v4232
    %v5609 = vpack.c.b16 %v4241, %v4233
    %v5610 = vpack.c.b16 %v4242, %v4234
    %v5611 = vpack.c.b16 %v4243, %v4235
    %v5612 = vpack.c.b16 %v4244, %v4236
    %v5613 = vpack.c.b16 %v4253, %v4245
    %v5614 = vpack.c.b16 %v4254, %v4246
    %v5615 = vpack.c.b16 %v4255, %v4247
    %v5616 = vpack.c.b16 %v4256, %v4248
    %v5617 = vpack.c.b16 %v4257, %v4249
    %v5618 = vpack.c.b16 %v4258, %v4250
    %v5619 = vpack.c.b16 %v4259, %v4251
    %v5620 = vpack.c.b16 %v4260, %v4252
    %v5621 = vpack.c.b16 %v4269, %v4261
    %v5622 = vpack.c.b16 %v4270, %v4262
    %v5623 = vpack.c.b16 %v4271, %v4263
    %v5624 = vpack.c.b16 %v4272, %v4264
    %v5625 = vpack.c.b16 %v4273, %v4265
    %v5626 = vpack.c.b16 %v4274, %v4266
    %v5627 = vpack.c.b16 %v4275, %v4267
    %v5628 = vpack.c.b16 %v4276, %v4268
    %v5629 = vpack.c.b16 %v4285, %v4277
    %v5630 = vpack.c.b16 %v4286, %v4278
    %v5631 = vpack.c.b16 %v4287, %v4279
    %v5632 = vpack.c.b16 %v4288, %v4280
    %v5633 = vpack.c.b16 %v4289, %v4281
    %v5634 = vpack.c.b16 %v4290, %v4282
    %v5635 = vpack.c.b16 %v4291, %v4283
    %v5636 = vpack.c.b16 %v4292, %v4284
    %v5637 = vpack.c.b16 %v4301, %v4293
    %v5638 = vpack.c.b16 %v4302, %v4294
    %v5639 = vpack.c.b16 %v4303, %v4295
    %v5640 = vpack.c.b16 %v4304, %v4296
    %v5641 = vpack.c.b16 %v4305, %v4297
    %v5642 = vpack.c.b16 %v4306, %v4298
    %v5643 = vpack.c.b16 %v4307, %v4299
    %v5644 = vpack.c.b16 %v4308, %v4300
    %v5645 = vpack.c.b16 %v4317, %v4309
    %v5646 = vpack.c.b16 %v4318, %v4310
    %v5647 = vpack.c.b16 %v4319, %v4311
    %v5648 = vpack.c.b16 %v4320, %v4312
    %v5649 = vpack.c.b16 %v4321, %v4313
    %v5650 = vpack.c.b16 %v4322, %v4314
    %v5651 = vpack.c.b16 %v4323, %v4315
    %v5652 = vpack.c.b16 %v4324, %v4316
    %v5653 = vpack.c.b16 %v4333, %v4325
    %v5654 = vpack.c.b16 %v4334, %v4326
    %v5655 = vpack.c.b16 %v4335, %v4327
    %v5656 = vpack.c.b16 %v4336, %v4328
    %v5657 = vpack.c.b16 %v4337, %v4329
    %v5658 = vpack.c.b16 %v4338, %v4330
    %v5659 = vpack.c.b16 %v4339, %v4331
    %v5660 = vpack.c.b16 %v4340, %v4332
    %v5661 = vpack.c.b16 %v4349, %v4341
    %v5662 = vpack.c.b16 %v4350, %v4342
    %v5663 = vpack.c.b16 %v4351, %v4343
    %v5664 = vpack.c.b16 %v4352, %v4344
    %v5665 = vpack.c.b16 %v4353, %v4345
    %v5666 = vpack.c.b16 %v4354, %v4346
    %v5667 = vpack.c.b16 %v4355, %v4347
    %v5668 = vpack.c.b16 %v4356, %v4348
    %v5669 = vpack.c.b16 %v4365, %v4357
    %v5670 = vpack.c.b16 %v4366, %v4358
    %v5671 = vpack.c.b16 %v4367, %v4359
    %v5672 = vpack.c.b16 %v4368, %v4360
    %v5673 = vpack.c.b16 %v4369, %v4361
    %v5674 = vpack.c.b16 %v4370, %v4362
    %v5675 = vpack.c.b16 %v4371, %v4363
    %v5676 = vpack.c.b16 %v4372, %v4364
    %v5677 = vpack.c.b16 %v4381, %v4373
    %v5678 = vpack.c.b16 %v4382, %v4374
    %v5679 = vpack.c.b16 %v4383, %v4375
    %v5680 = vpack.c.b16 %v4384, %v4376
    %v5681 = vpack.c.b16 %v4385, %v4377
    %v5682 = vpack.c.b16 %v4386, %v4378
    %v5683 = vpack.c.b16 %v4387, %v4379
    %v5684 = vpack.c.b16 %v4388, %v4380
    %v5685 = vpack.c.b16 %v4397, %v4389
    %v5686 = vpack.c.b16 %v4398, %v4390
    %v5687 = vpack.c.b16 %v4399, %v4391
    %v5688 = vpack.c.b16 %v4400, %v4392
    %v5689 = vpack.c.b16 %v4401, %v4393
    %v5690 = vpack.c.b16 %v4402, %v4394
    %v5691 = vpack.c.b16 %v4403, %v4395
    %v5692 = vpack.c.b16 %v4404, %v4396
    %v5693 = vpack.c.b16 %v4413, %v4405
    %v5694 = vpack.c.b16 %v4414, %v4406
    %v5695 = vpack.c.b16 %v4415, %v4407
    %v5696 = vpack.c.b16 %v4416, %v4408
    %v5697 = vpack.c.b16 %v4417, %v4409
    %v5698 = vpack.c.b16 %v4418, %v4410
    %v5699 = vpack.c.b16 %v4419, %v4411
    %v5700 = vpack.c.b16 %v4420, %v4412
    %v5701 = vpack.c.b16 %v4429, %v4421
    %v5702 = vpack.c.b16 %v4430, %v4422
    %v5703 = vpack.c.b16 %v4431, %v4423
    %v5704 = vpack.c.b16 %v4432, %v4424
    %v5705 = vpack.c.b16 %v4433, %v4425
    %v5706 = vpack.c.b16 %v4434, %v4426
    %v5707 = vpack.c.b16 %v4435, %v4427
    %v5708 = vpack.c.b16 %v4436, %v4428
    %v5709 = vpack.c.b16 %v4445, %v4437
    %v5710 = vpack.c.b16 %v4446, %v4438
    %v5711 = vpack.c.b16 %v4447, %v4439
    %v5712 = vpack.c.b16 %v4448, %v4440
    %v5713 = vpack.c.b16 %v4449, %v4441
    %v5714 = vpack.c.b16 %v4450, %v4442
    %v5715 = vpack.c.b16 %v4451, %v4443
    %v5716 = vpack.c.b16 %v4452, %v4444
    %v5717 = vpack.c.b16 %v4461, %v4453
    %v5718 = vpack.c.b16 %v4462, %v4454
    %v5719 = vpack.c.b16 %v4463, %v4455
    %v5720 = vpack.c.b16 %v4464, %v4456
    %v5721 = vpack.c.b16 %v4465, %v4457
    %v5722 = vpack.c.b16 %v4466, %v4458
    %v5723 = vpack.c.b16 %v4467, %v4459
    %v5724 = vpack.c.b16 %v4468, %v4460
    %v5725 = vpack.c.b16 %v4477, %v4469
    %v5726 = vpack.c.b16 %v4478, %v4470
    %v5727 = vpack.c.b16 %v4479, %v4471
    %v5728 = vpack.c.b16 %v4480, %v4472
    %v5729 = vpack.c.b16 %v4481, %v4473
    %v5730 = vpack.c.b16 %v4482, %v4474
    %v5731 = vpack.c.b16 %v4483, %v4475
    %v5732 = vpack.c.b16 %v4484, %v4476
    %v5733 = vpack.c.b16 %v4493, %v4485
    %v5734 = vpack.c.b16 %v4494, %v4486
    %v5735 = vpack.c.b16 %v4495, %v4487
    %v5736 = vpack.c.b16 %v4496, %v4488
    %v5737 = vpack.c.b16 %v4497, %v4489
    %v5738 = vpack.c.b16 %v4498, %v4490
    %v5739 = vpack.c.b16 %v4499, %v4491
    %v5740 = vpack.c.b16 %v4500, %v4492
    %v5741 = vpack.c.b16 %v4509, %v4501
    %v5742 = vpack.c.b16 %v4510, %v4502
    %v5743 = vpack.c.b16 %v4511, %v4503
    %v5744 = vpack.c.b16 %v4512, %v4504
    %v5745 = vpack.c.b16 %v4513, %v4505
    %v5746 = vpack.c.b16 %v4514, %v4506
    %v5747 = vpack.c.b16 %v4515, %v4507
    %v5748 = vpack.c.b16 %v4516, %v4508
    %v5749 = vpack.c.b16 %v4525, %v4517
    %v5750 = vpack.c.b16 %v4526, %v4518
    %v5751 = vpack.c.b16 %v4527, %v4519
    %v5752 = vpack.c.b16 %v4528, %v4520
    %v5753 = vpack.c.b16 %v4529, %v4521
    %v5754 = vpack.c.b16 %v4530, %v4522
    %v5755 = vpack.c.b16 %v4531, %v4523
    %v5756 = vpack.c.b16 %v4532, %v4524
    %v5757 = vpack.c.b16 %v4541, %v4533
    %v5758 = vpack.c.b16 %v4542, %v4534
    %v5759 = vpack.c.b16 %v4543, %v4535
    %v5760 = vpack.c.b16 %v4544, %v4536
    %v5761 = vpack.c.b16 %v4545, %v4537
    %v5762 = vpack.c.b16 %v4546, %v4538
    %v5763 = vpack.c.b16 %v4547, %v4539
    %v5764 = vpack.c.b16 %v4548, %v4540
    %v5765 = vpack.c.b16 %v4557, %v4549
    %v5766 = vpack.c.b16 %v4558, %v4550
    %v5767 = vpack.c.b16 %v4559, %v4551
    %v5768 = vpack.c.b16 %v4560, %v4552
    %v5769 = vpack.c.b16 %v4561, %v4553
    %v5770 = vpack.c.b16 %v4562, %v4554
    %v5771 = vpack.c.b16 %v4563, %v4555
    %v5772 = vpack.c.b16 %v4564, %v4556
    %v5773 = vpack.c.b16 %v4573, %v4565
    %v5774 = vpack.c.b16 %v4574, %v4566
    %v5775 = vpack.c.b16 %v4575, %v4567
    %v5776 = vpack.c.b16 %v4576, %v4568
    %v5777 = vpack.c.b16 %v4577, %v4569
    %v5778 = vpack.c.b16 %v4578, %v4570
    %v5779 = vpack.c.b16 %v4579, %v4571
    %v5780 = vpack.c.b16 %v4580, %v4572
    %v5781 = vpack.c.b16 %v4589, %v4581
    %v5782 = vpack.c.b16 %v4590, %v4582
    %v5783 = vpack.c.b16 %v4591, %v4583
    %v5784 = vpack.c.b16 %v4592, %v4584
    %v5785 = vpack.c.b16 %v4593, %v4585
    %v5786 = vpack.c.b16 %v4594, %v4586
    %v5787 = vpack.c.b16 %v4595, %v4587
    %v5788 = vpack.c.b16 %v4596, %v4588
    %v5789 = vpack.c.b16 %v4605, %v4597
    %v5790 = vpack.c.b16 %v4606, %v4598
    %v5791 = vpack.c.b16 %v4607, %v4599
    %v5792 = vpack.c.b16 %v4608, %v4600
    %v5793 = vpack.c.b16 %v4609, %v4601
    %v5794 = vpack.c.b16 %v4610, %v4602
    %v5795 = vpack.c.b16 %v4611, %v4603
    %v5796 = vpack.c.b16 %v4612, %v4604
    %v5797 = vpack.c.b16 %v4621, %v4613
    %v5798 = vpack.c.b16 %v4622, %v4614
    %v5799 = vpack.c.b16 %v4623, %v4615
    %v5800 = vpack.c.b16 %v4624, %v4616
    %v5801 = vpack.c.b16 %v4625, %v4617
    %v5802 = vpack.c.b16 %v4626, %v4618
    %v5803 = vpack.c.b16 %v4627, %v4619
    %v5804 = vpack.c.b16 %v4628, %v4620
    %v5805 = vpack.c.b16 %v4637, %v4629
    %v5806 = vpack.c.b16 %v4638, %v4630
    %v5807 = vpack.c.b16 %v4639, %v4631
    %v5808 = vpack.c.b16 %v4640, %v4632
    %v5809 = vpack.c.b16 %v4641, %v4633
    %v5810 = vpack.c.b16 %v4642, %v4634
    %v5811 = vpack.c.b16 %v4643, %v4635
    %v5812 = vpack.c.b16 %v4644, %v4636
    %v5813 = vpack.c.b16 %v4653, %v4645
    %v5814 = vpack.c.b16 %v4654, %v4646
    %v5815 = vpack.c.b16 %v4655, %v4647
    %v5816 = vpack.c.b16 %v4656, %v4648
    %v5817 = vpack.c.b16 %v4657, %v4649
    %v5818 = vpack.c.b16 %v4658, %v4650
    %v5819 = vpack.c.b16 %v4659, %v4651
    %v5820 = vpack.c.b16 %v4660, %v4652
    %v5821 = vpack.c.b16 %v4669, %v4661
    %v5822 = vpack.c.b16 %v4670, %v4662
    %v5823 = vpack.c.b16 %v4671, %v4663
    %v5824 = vpack.c.b16 %v4672, %v4664
    %v5825 = vpack.c.b16 %v4673, %v4665
    %v5826 = vpack.c.b16 %v4674, %v4666
    %v5827 = vpack.c.b16 %v4675, %v4667
    %v5828 = vpack.c.b16 %v4676, %v4668
    %v5829 = vpack.c.b16 %v4685, %v4677
    %v5830 = vpack.c.b16 %v4686, %v4678
    %v5831 = vpack.c.b16 %v4687, %v4679
    %v5832 = vpack.c.b16 %v4688, %v4680
    %v5833 = vpack.c.b16 %v4689, %v4681
    %v5834 = vpack.c.b16 %v4690, %v4682
    %v5835 = vpack.c.b16 %v4691, %v4683
    %v5836 = vpack.c.b16 %v4692, %v4684
    %v5837 = vpack.c.b16 %v4701, %v4693
    %v5838 = vpack.c.b16 %v4702, %v4694
    %v5839 = vpack.c.b16 %v4703, %v4695
    %v5840 = vpack.c.b16 %v4704, %v4696
    %v5841 = vpack.c.b16 %v4705, %v4697
    %v5842 = vpack.c.b16 %v4706, %v4698
    %v5843 = vpack.c.b16 %v4707, %v4699
    %v5844 = vpack.c.b16 %v4708, %v4700
    %v5845 = vpack.c.b16 %v4717, %v4709
    %v5846 = vpack.c.b16 %v4718, %v4710
    %v5847 = vpack.c.b16 %v4719, %v4711
    %v5848 = vpack.c.b16 %v4720, %v4712
    %v5849 = vpack.c.b16 %v4721, %v4713
    %v5850 = vpack.c.b16 %v4722, %v4714
    %v5851 = vpack.c.b16 %v4723, %v4715
    %v5852 = vpack.c.b16 %v4724, %v4716
    %v5853 = vpack.c.b16 %v4733, %v4725
    %v5854 = vpack.c.b16 %v4734, %v4726
    %v5855 = vpack.c.b16 %v4735, %v4727
    %v5856 = vpack.c.b16 %v4736, %v4728
    %v5857 = vpack.c.b16 %v4737, %v4729
    %v5858 = vpack.c.b16 %v4738, %v4730
    %v5859 = vpack.c.b16 %v4739, %v4731
    %v5860 = vpack.c.b16 %v4740, %v4732
    %v5861 = vpack.c.b16 %v4749, %v4741
    %v5862 = vpack.c.b16 %v4750, %v4742
    %v5863 = vpack.c.b16 %v4751, %v4743
    %v5864 = vpack.c.b16 %v4752, %v4744
    %v5865 = vpack.c.b16 %v4753, %v4745
    %v5866 = vpack.c.b16 %v4754, %v4746
    %v5867 = vpack.c.b16 %v4755, %v4747
    %v5868 = vpack.c.b16 %v4756, %v4748
    %v5869 = vpack.c.b16 %v4765, %v4757
    %v5870 = vpack.c.b16 %v4766, %v4758
    %v5871 = vpack.c.b16 %v4767, %v4759
    %v5872 = vpack.c.b16 %v4768, %v4760
    %v5873 = vpack.c.b16 %v4769, %v4761
    %v5874 = vpack.c.b16 %v4770, %v4762
    %v5875 = vpack.c.b16 %v4771, %v4763
    %v5876 = vpack.c.b16 %v4772, %v4764
    %v5877 = vpack.c.b16 %v4781, %v4773
    %v5878 = vpack.c.b16 %v4782, %v4774
    %v5879 = vpack.c.b16 %v4783, %v4775
    %v5880 = vpack.c.b16 %v4784, %v4776
    %v5881 = vpack.c.b16 %v4785, %v4777
    %v5882 = vpack.c.b16 %v4786, %v4778
    %v5883 = vpack.c.b16 %v4787, %v4779
    %v5884 = vpack.c.b16 %v4788, %v4780
    %v5885 = vpack.c.b16 %v4797, %v4789
    %v5886 = vpack.c.b16 %v4798, %v4790
    %v5887 = vpack.c.b16 %v4799, %v4791
    %v5888 = vpack.c.b16 %v4800, %v4792
    %v5889 = vpack.c.b16 %v4801, %v4793
    %v5890 = vpack.c.b16 %v4802, %v4794
    %v5891 = vpack.c.b16 %v4803, %v4795
    %v5892 = vpack.c.b16 %v4804, %v4796
    %v5893 = vpack.c.b16 %v4813, %v4805
    %v5894 = vpack.c.b16 %v4814, %v4806
    %v5895 = vpack.c.b16 %v4815, %v4807
    %v5896 = vpack.c.b16 %v4816, %v4808
    %v5897 = vpack.c.b16 %v4817, %v4809
    %v5898 = vpack.c.b16 %v4818, %v4810
    %v5899 = vpack.c.b16 %v4819, %v4811
    %v5900 = vpack.c.b16 %v4820, %v4812
    %v5901 = vpack.c.b16 %v4829, %v4821
    %v5902 = vpack.c.b16 %v4830, %v4822
    %v5903 = vpack.c.b16 %v4831, %v4823
    %v5904 = vpack.c.b16 %v4832, %v4824
    %v5905 = vpack.c.b16 %v4833, %v4825
    %v5906 = vpack.c.b16 %v4834, %v4826
    %v5907 = vpack.c.b16 %v4835, %v4827
    %v5908 = vpack.c.b16 %v4836, %v4828
    %v5909 = vpack.c.b16 %v4845, %v4837
    %v5910 = vpack.c.b16 %v4846, %v4838
    %v5911 = vpack.c.b16 %v4847, %v4839
    %v5912 = vpack.c.b16 %v4848, %v4840
    %v5913 = vpack.c.b16 %v4849, %v4841
    %v5914 = vpack.c.b16 %v4850, %v4842
    %v5915 = vpack.c.b16 %v4851, %v4843
    %v5916 = vpack.c.b16 %v4852, %v4844
    %v5917 = vpack.c.b16 %v4861, %v4853
    %v5918 = vpack.c.b16 %v4862, %v4854
    %v5919 = vpack.c.b16 %v4863, %v4855
    %v5920 = vpack.c.b16 %v4864, %v4856
    %v5921 = vpack.c.b16 %v4865, %v4857
    %v5922 = vpack.c.b16 %v4866, %v4858
    %v5923 = vpack.c.b16 %v4867, %v4859
    %v5924 = vpack.c.b16 %v4868, %v4860
    %v5925 = vpack.c.b16 %v4877, %v4869
    %v5926 = vpack.c.b16 %v4878, %v4870
    %v5927 = vpack.c.b16 %v4879, %v4871
    %v5928 = vpack.c.b16 %v4880, %v4872
    %v5929 = vpack.c.b16 %v4881, %v4873
    %v5930 = vpack.c.b16 %v4882, %v4874
    %v5931 = vpack.c.b16 %v4883, %v4875
    %v5932 = vpack.c.b16 %v4884, %v4876
    %v5933 = vpack.c.b16 %v4893, %v4885
    %v5934 = vpack.c.b16 %v4894, %v4886
    %v5935 = vpack.c.b16 %v4895, %v4887
    %v5936 = vpack.c.b16 %v4896, %v4888
    %v5937 = vpack.c.b16 %v4897, %v4889
    %v5938 = vpack.c.b16 %v4898, %v4890
    %v5939 = vpack.c.b16 %v4899, %v4891
    %v5940 = vpack.c.b16 %v4900, %v4892
    %v5941 = vpack.c.b16 %v4909, %v4901
    %v5942 = vpack.c.b16 %v4910, %v4902
    %v5943 = vpack.c.b16 %v4911, %v4903
    %v5944 = vpack.c.b16 %v4912, %v4904
    %v5945 = vpack.c.b16 %v4913, %v4905
    %v5946 = vpack.c.b16 %v4914, %v4906
    %v5947 = vpack.c.b16 %v4915, %v4907
    %v5948 = vpack.c.b16 %v4916, %v4908
    %v5949 = vpack.c.b16 %v4925, %v4917
    %v5950 = vpack.c.b16 %v4926, %v4918
    %v5951 = vpack.c.b16 %v4927, %v4919
    %v5952 = vpack.c.b16 %v4928, %v4920
    %v5953 = vpack.c.b16 %v4929, %v4921
    %v5954 = vpack.c.b16 %v4930, %v4922
    %v5955 = vpack.c.b16 %v4931, %v4923
    %v5956 = vpack.c.b16 %v4932, %v4924
    %6981 = vmatprep.subr.bf16.mxu0 %v4934
    %6982 = vmatpush1.bf16.msra.mxu0 %v4933
    %6983 = vmatprep.subr.bf16.mxu0 %v4942
    %6984 = vmatpush1.bf16.msra.mxu0 %v4941
    %6985 = vmatprep.subr.bf16.mxu0 %v4950
    %6986 = vmatpush1.bf16.msra.mxu0 %v4949
    %6987 = vmatprep.subr.bf16.mxu0 %v4958
    %6988 = vmatpush1.bf16.msra.mxu0 %v4957
    %6989 = vmatprep.subr.bf16.mxu0 %v4966
    %6990 = vmatpush1.bf16.msra.mxu0 %v4965
    %6991 = vmatprep.subr.bf16.mxu0 %v4974
    %6992 = vmatpush1.bf16.msra.mxu0 %v4973
    %6993 = vmatprep.subr.bf16.mxu0 %v4982
    %6994 = vmatpush1.bf16.msra.mxu0 %v4981
    %6995 = vmatprep.subr.bf16.mxu0 %v4990
    %6996 = vmatpush1.bf16.msra.mxu0 %v4989
    %6997 = vmatprep.subr.bf16.mxu0 %v4998
    %6998 = vmatpush1.bf16.msra.mxu0 %v4997
    %6999 = vmatprep.subr.bf16.mxu0 %v5006
    %7000 = vmatpush1.bf16.msra.mxu0 %v5005
    %7001 = vmatprep.subr.bf16.mxu0 %v5014
    %7002 = vmatpush1.bf16.msra.mxu0 %v5013
    %7003 = vmatprep.subr.bf16.mxu0 %v5022
    %7004 = vmatpush1.bf16.msra.mxu0 %v5021
    %7005 = vmatprep.subr.bf16.mxu0 %v5030
    %7006 = vmatpush1.bf16.msra.mxu0 %v5029
    %7007 = vmatprep.subr.bf16.mxu0 %v5038
    %7008 = vmatpush1.bf16.msra.mxu0 %v5037
    %7009 = vmatprep.subr.bf16.mxu0 %v5046
    %7010 = vmatpush1.bf16.msra.mxu0 %v5045
    %7011 = vmatprep.subr.bf16.mxu0 %v5054
    %7012 = vmatpush1.bf16.msra.mxu0 %v5053
    %7013 = vmatprep.mubr.bf16.mxu0 %v780
    %7014 = vmatmul.mubr.bf16.gmra.mrb[0].mxu0 %v779
    %v7015 = vpop.f32.mrb[0].mxu0
    %v7016 = vadd.f32 %v1824, %v7015
    %v7017 = vpop.f32.mrb[0].mxu0
    %v7018 = vadd.f32 %v1828, %v7017
    %v7019 = vpop.f32.mrb[0].mxu0
    %v7020 = vadd.f32 %v1824, %v7019
    %v7021 = vpop.f32.mrb[0].mxu0
    %v7022 = vadd.f32 %v1828, %v7021
    %7023 = vdwg.mxu0
    %7024 = vmatprep.subr.bf16.mxu0 %v5062
    %7025 = vmatpush1.bf16.msra.mxu0 %v5061
    %7026 = vmatprep.subr.bf16.mxu0 %v5070
    %7027 = vmatpush1.bf16.msra.mxu0 %v5069
    %7028 = vmatprep.subr.bf16.mxu0 %v5078
    %7029 = vmatpush1.bf16.msra.mxu0 %v5077
    %7030 = vmatprep.subr.bf16.mxu0 %v5086
    %7031 = vmatpush1.bf16.msra.mxu0 %v5085
    %7032 = vmatprep.subr.bf16.mxu0 %v5094
    %7033 = vmatpush1.bf16.msra.mxu0 %v5093
    %7034 = vmatprep.subr.bf16.mxu0 %v5102
    %7035 = vmatpush1.bf16.msra.mxu0 %v5101
    %7036 = vmatprep.subr.bf16.mxu0 %v5110
    %7037 = vmatpush1.bf16.msra.mxu0 %v5109
    %7038 = vmatprep.subr.bf16.mxu0 %v5118
    %7039 = vmatpush1.bf16.msra.mxu0 %v5117
    %7040 = vmatprep.subr.bf16.mxu0 %v5126
    %7041 = vmatpush1.bf16.msra.mxu0 %v5125
    %7042 = vmatprep.subr.bf16.mxu0 %v5134
    %7043 = vmatpush1.bf16.msra.mxu0 %v5133
    %7044 = vmatprep.subr.bf16.mxu0 %v5142
    %7045 = vmatpush1.bf16.msra.mxu0 %v5141
    %7046 = vmatprep.subr.bf16.mxu0 %v5150
    %7047 = vmatpush1.bf16.msra.mxu0 %v5149
    %7048 = vmatprep.subr.bf16.mxu0 %v5158
    %7049 = vmatpush1.bf16.msra.mxu0 %v5157
    %7050 = vmatprep.subr.bf16.mxu0 %v5166
    %7051 = vmatpush1.bf16.msra.mxu0 %v5165
    %7052 = vmatprep.subr.bf16.mxu0 %v5174
    %7053 = vmatpush1.bf16.msra.mxu0 %v5173
    %7054 = vmatprep.subr.bf16.mxu0 %v5182
    %7055 = vmatpush1.bf16.msra.mxu0 %v5181
    %7056 = vmatprep.mubr.bf16.mxu0 %v782
    %7057 = vmatmul.mubr.bf16.gmra.mrb[0].mxu0 %v781
    %v7058 = vpop.f32.mrb[0].mxu0
    %v7059 = vadd.f32 %v7016, %v7058
    %v7060 = vpop.f32.mrb[0].mxu0
    %v7061 = vadd.f32 %v7018, %v7060
    %v7062 = vpop.f32.mrb[0].mxu0
    %v7063 = vadd.f32 %v7020, %v7062
    %v7064 = vpop.f32.mrb[0].mxu0
    %v7065 = vadd.f32 %v7022, %v7064
    %7066 = vdwg.mxu0
    %7067 = vmatprep.subr.bf16.mxu0 %v5190
    %7068 = vmatpush1.bf16.msra.mxu0 %v5189
    %7069 = vmatprep.subr.bf16.mxu0 %v5198
    %7070 = vmatpush1.bf16.msra.mxu0 %v5197
    %7071 = vmatprep.subr.bf16.mxu0 %v5206
    %7072 = vmatpush1.bf16.msra.mxu0 %v5205
    %7073 = vmatprep.subr.bf16.mxu0 %v5214
    %7074 = vmatpush1.bf16.msra.mxu0 %v5213
    %7075 = vmatprep.subr.bf16.mxu0 %v5222
    %7076 = vmatpush1.bf16.msra.mxu0 %v5221
    %7077 = vmatprep.subr.bf16.mxu0 %v5230
    %7078 = vmatpush1.bf16.msra.mxu0 %v5229
    %7079 = vmatprep.subr.bf16.mxu0 %v5238
    %7080 = vmatpush1.bf16.msra.mxu0 %v5237
    %7081 = vmatprep.subr.bf16.mxu0 %v5246
    %7082 = vmatpush1.bf16.msra.mxu0 %v5245
    %7083 = vmatprep.subr.bf16.mxu0 %v5254
    %7084 = vmatpush1.bf16.msra.mxu0 %v5253
    %7085 = vmatprep.subr.bf16.mxu0 %v5262
    %7086 = vmatpush1.bf16.msra.mxu0 %v5261
    %7087 = vmatprep.subr.bf16.mxu0 %v5270
    %7088 = vmatpush1.bf16.msra.mxu0 %v5269
    %7089 = vmatprep.subr.bf16.mxu0 %v5278
    %7090 = vmatpush1.bf16.msra.mxu0 %v5277
    %7091 = vmatprep.subr.bf16.mxu0 %v5286
    %7092 = vmatpush1.bf16.msra.mxu0 %v5285
    %7093 = vmatprep.subr.bf16.mxu0 %v5294
    %7094 = vmatpush1.bf16.msra.mxu0 %v5293
    %7095 = vmatprep.subr.bf16.mxu0 %v5302
    %7096 = vmatpush1.bf16.msra.mxu0 %v5301
    %7097 = vmatprep.subr.bf16.mxu0 %v5310
    %7098 = vmatpush1.bf16.msra.mxu0 %v5309
    %7099 = vmatprep.mubr.bf16.mxu0 %v784
    %7100 = vmatmul.mubr.bf16.gmra.mrb[0].mxu0 %v783
    %v7101 = vpop.f32.mrb[0].mxu0
    %v7102 = vadd.f32 %v7059, %v7101
    %v7103 = vpop.f32.mrb[0].mxu0
    %v7104 = vadd.f32 %v7061, %v7103
    %v7105 = vpop.f32.mrb[0].mxu0
    %v7106 = vadd.f32 %v7063, %v7105
    %v7107 = vpop.f32.mrb[0].mxu0
    %v7108 = vadd.f32 %v7065, %v7107
    %7109 = vdwg.mxu0
    %7110 = vmatprep.subr.bf16.mxu0 %v5318
    %7111 = vmatpush1.bf16.msra.mxu0 %v5317
    %7112 = vmatprep.subr.bf16.mxu0 %v5326
    %7113 = vmatpush1.bf16.msra.mxu0 %v5325
    %7114 = vmatprep.subr.bf16.mxu0 %v5334
    %7115 = vmatpush1.bf16.msra.mxu0 %v5333
    %7116 = vmatprep.subr.bf16.mxu0 %v5342
    %7117 = vmatpush1.bf16.msra.mxu0 %v5341
    %7118 = vmatprep.subr.bf16.mxu0 %v5350
    %7119 = vmatpush1.bf16.msra.mxu0 %v5349
    %7120 = vmatprep.subr.bf16.mxu0 %v5358
    %7121 = vmatpush1.bf16.msra.mxu0 %v5357
    %7122 = vmatprep.subr.bf16.mxu0 %v5366
    %7123 = vmatpush1.bf16.msra.mxu0 %v5365
    %7124 = vmatprep.subr.bf16.mxu0 %v5374
    %7125 = vmatpush1.bf16.msra.mxu0 %v5373
    %7126 = vmatprep.subr.bf16.mxu0 %v5382
    %7127 = vmatpush1.bf16.msra.mxu0 %v5381
    %7128 = vmatprep.subr.bf16.mxu0 %v5390
    %7129 = vmatpush1.bf16.msra.mxu0 %v5389
    %7130 = vmatprep.subr.bf16.mxu0 %v5398
    %7131 = vmatpush1.bf16.msra.mxu0 %v5397
    %7132 = vmatprep.subr.bf16.mxu0 %v5406
    %7133 = vmatpush1.bf16.msra.mxu0 %v5405
    %7134 = vmatprep.subr.bf16.mxu0 %v5414
    %7135 = vmatpush1.bf16.msra.mxu0 %v5413
    %7136 = vmatprep.subr.bf16.mxu0 %v5422
    %7137 = vmatpush1.bf16.msra.mxu0 %v5421
    %7138 = vmatprep.subr.bf16.mxu0 %v5430
    %7139 = vmatpush1.bf16.msra.mxu0 %v5429
    %7140 = vmatprep.subr.bf16.mxu0 %v5438
    %7141 = vmatpush1.bf16.msra.mxu0 %v5437
    %7142 = vmatprep.mubr.bf16.mxu0 %v786
    %7143 = vmatmul.mubr.bf16.gmra.mrb[0].mxu0 %v785
    %v7144 = vpop.f32.mrb[0].mxu0
    %v7145 = vadd.f32 %v7102, %v7144
    %v7146 = vpop.f32.mrb[0].mxu0
    %v7147 = vadd.f32 %v7104, %v7146
    %v7148 = vpop.f32.mrb[0].mxu0
    %v7149 = vadd.f32 %v7106, %v7148
    %v7150 = vpop.f32.mrb[0].mxu0
    %v7151 = vadd.f32 %v7108, %v7150
    %7152 = vdwg.mxu0
    %7153 = vmatprep.subr.bf16.mxu0 %v5446
    %7154 = vmatpush1.bf16.msra.mxu0 %v5445
    %7155 = vmatprep.subr.bf16.mxu0 %v5454
    %7156 = vmatpush1.bf16.msra.mxu0 %v5453
    %7157 = vmatprep.subr.bf16.mxu0 %v5462
    %7158 = vmatpush1.bf16.msra.mxu0 %v5461
    %7159 = vmatprep.subr.bf16.mxu0 %v5470
    %7160 = vmatpush1.bf16.msra.mxu0 %v5469
    %7161 = vmatprep.subr.bf16.mxu0 %v5478
    %7162 = vmatpush1.bf16.msra.mxu0 %v5477
    %7163 = vmatprep.subr.bf16.mxu0 %v5486
    %7164 = vmatpush1.bf16.msra.mxu0 %v5485
    %7165 = vmatprep.subr.bf16.mxu0 %v5494
    %7166 = vmatpush1.bf16.msra.mxu0 %v5493
    %7167 = vmatprep.subr.bf16.mxu0 %v5502
    %7168 = vmatpush1.bf16.msra.mxu0 %v5501
    %7169 = vmatprep.subr.bf16.mxu0 %v5510
    %7170 = vmatpush1.bf16.msra.mxu0 %v5509
    %7171 = vmatprep.subr.bf16.mxu0 %v5518
    %7172 = vmatpush1.bf16.msra.mxu0 %v5517
    %7173 = vmatprep.subr.bf16.mxu0 %v5526
    %7174 = vmatpush1.bf16.msra.mxu0 %v5525
    %7175 = vmatprep.subr.bf16.mxu0 %v5534
    %7176 = vmatpush1.bf16.msra.mxu0 %v5533
    %7177 = vmatprep.subr.bf16.mxu0 %v5542
    %7178 = vmatpush1.bf16.msra.mxu0 %v5541
    %7179 = vmatprep.subr.bf16.mxu0 %v5550
    %7180 = vmatpush1.bf16.msra.mxu0 %v5549
    %7181 = vmatprep.subr.bf16.mxu0 %v5558
    %7182 = vmatpush1.bf16.msra.mxu0 %v5557
    %7183 = vmatprep.subr.bf16.mxu0 %v5566
    %7184 = vmatpush1.bf16.msra.mxu0 %v5565
    %7185 = vmatprep.mubr.bf16.mxu0 %v788
    %7186 = vmatmul.mubr.bf16.gmra.mrb[0].mxu0 %v787
    %v7187 = vpop.f32.mrb[0].mxu0
    %v7188 = vadd.f32 %v7145, %v7187
    %v7189 = vpop.f32.mrb[0].mxu0
    %v7190 = vadd.f32 %v7147, %v7189
    %v7191 = vpop.f32.mrb[0].mxu0
    %v7192 = vadd.f32 %v7149, %v7191
    %v7193 = vpop.f32.mrb[0].mxu0
    %v7194 = vadd.f32 %v7151, %v7193
    %7195 = vdwg.mxu0
    %7196 = vmatprep.subr.bf16.mxu0 %v5574
    %7197 = vmatpush1.bf16.msra.mxu0 %v5573
    %7198 = vmatprep.subr.bf16.mxu0 %v5582
    %7199 = vmatpush1.bf16.msra.mxu0 %v5581
    %7200 = vmatprep.subr.bf16.mxu0 %v5590
    %7201 = vmatpush1.bf16.msra.mxu0 %v5589
    %7202 = vmatprep.subr.bf16.mxu0 %v5598
    %7203 = vmatpush1.bf16.msra.mxu0 %v5597
    %7204 = vmatprep.subr.bf16.mxu0 %v5606
    %7205 = vmatpush1.bf16.msra.mxu0 %v5605
    %7206 = vmatprep.subr.bf16.mxu0 %v5614
    %7207 = vmatpush1.bf16.msra.mxu0 %v5613
    %7208 = vmatprep.subr.bf16.mxu0 %v5622
    %7209 = vmatpush1.bf16.msra.mxu0 %v5621
    %7210 = vmatprep.subr.bf16.mxu0 %v5630
    %7211 = vmatpush1.bf16.msra.mxu0 %v5629
    %7212 = vmatprep.subr.bf16.mxu0 %v5638
    %7213 = vmatpush1.bf16.msra.mxu0 %v5637
    %7214 = vmatprep.subr.bf16.mxu0 %v5646
    %7215 = vmatpush1.bf16.msra.mxu0 %v5645
    %7216 = vmatprep.subr.bf16.mxu0 %v5654
    %7217 = vmatpush1.bf16.msra.mxu0 %v5653
    %7218 = vmatprep.subr.bf16.mxu0 %v5662
    %7219 = vmatpush1.bf16.msra.mxu0 %v5661
    %7220 = vmatprep.subr.bf16.mxu0 %v5670
    %7221 = vmatpush1.bf16.msra.mxu0 %v5669
    %7222 = vmatprep.subr.bf16.mxu0 %v5678
    %7223 = vmatpush1.bf16.msra.mxu0 %v5677
    %7224 = vmatprep.subr.bf16.mxu0 %v5686
    %7225 = vmatpush1.bf16.msra.mxu0 %v5685
    %7226 = vmatprep.subr.bf16.mxu0 %v5694
    %7227 = vmatpush1.bf16.msra.mxu0 %v5693
    %7228 = vmatprep.mubr.bf16.mxu0 %v790
    %7229 = vmatmul.mubr.bf16.gmra.mrb[0].mxu0 %v789
    %v7230 = vpop.f32.mrb[0].mxu0
    %v7231 = vadd.f32 %v7188, %v7230
    %v7232 = vpop.f32.mrb[0].mxu0
    %v7233 = vadd.f32 %v7190, %v7232
    %v7234 = vpop.f32.mrb[0].mxu0
    %v7235 = vadd.f32 %v7192, %v7234
    %v7236 = vpop.f32.mrb[0].mxu0
    %v7237 = vadd.f32 %v7194, %v7236
    %7238 = vdwg.mxu0
    %7239 = vmatprep.subr.bf16.mxu0 %v5702
    %7240 = vmatpush1.bf16.msra.mxu0 %v5701
    %7241 = vmatprep.subr.bf16.mxu0 %v5710
    %7242 = vmatpush1.bf16.msra.mxu0 %v5709
    %7243 = vmatprep.subr.bf16.mxu0 %v5718
    %7244 = vmatpush1.bf16.msra.mxu0 %v5717
    %7245 = vmatprep.subr.bf16.mxu0 %v5726
    %7246 = vmatpush1.bf16.msra.mxu0 %v5725
    %7247 = vmatprep.subr.bf16.mxu0 %v5734
    %7248 = vmatpush1.bf16.msra.mxu0 %v5733
    %7249 = vmatprep.subr.bf16.mxu0 %v5742
    %7250 = vmatpush1.bf16.msra.mxu0 %v5741
    %7251 = vmatprep.subr.bf16.mxu0 %v5750
    %7252 = vmatpush1.bf16.msra.mxu0 %v5749
    %7253 = vmatprep.subr.bf16.mxu0 %v5758
    %7254 = vmatpush1.bf16.msra.mxu0 %v5757
    %7255 = vmatprep.subr.bf16.mxu0 %v5766
    %7256 = vmatpush1.bf16.msra.mxu0 %v5765
    %7257 = vmatprep.subr.bf16.mxu0 %v5774
    %7258 = vmatpush1.bf16.msra.mxu0 %v5773
    %7259 = vmatprep.subr.bf16.mxu0 %v5782
    %7260 = vmatpush1.bf16.msra.mxu0 %v5781
    %7261 = vmatprep.subr.bf16.mxu0 %v5790
    %7262 = vmatpush1.bf16.msra.mxu0 %v5789
    %7263 = vmatprep.subr.bf16.mxu0 %v5798
    %7264 = vmatpush1.bf16.msra.mxu0 %v5797
    %7265 = vmatprep.subr.bf16.mxu0 %v5806
    %7266 = vmatpush1.bf16.msra.mxu0 %v5805
    %7267 = vmatprep.subr.bf16.mxu0 %v5814
    %7268 = vmatpush1.bf16.msra.mxu0 %v5813
    %7269 = vmatprep.subr.bf16.mxu0 %v5822
    %7270 = vmatpush1.bf16.msra.mxu0 %v5821
    %7271 = vmatprep.mubr.bf16.mxu0 %v792
    %7272 = vmatmul.mubr.bf16.gmra.mrb[0].mxu0 %v791
    %v7273 = vpop.f32.mrb[0].mxu0
    %v7274 = vadd.f32 %v7231, %v7273
    %v7275 = vpop.f32.mrb[0].mxu0
    %v7276 = vadd.f32 %v7233, %v7275
    %v7277 = vpop.f32.mrb[0].mxu0
    %v7278 = vadd.f32 %v7235, %v7277
    %v7279 = vpop.f32.mrb[0].mxu0
    %v7280 = vadd.f32 %v7237, %v7279
    %7281 = vdwg.mxu0
    %7282 = vmatprep.subr.bf16.mxu0 %v5830
    %7283 = vmatpush1.bf16.msra.mxu0 %v5829
    %7284 = vmatprep.subr.bf16.mxu0 %v5838
    %7285 = vmatpush1.bf16.msra.mxu0 %v5837
    %7286 = vmatprep.subr.bf16.mxu0 %v5846
    %7287 = vmatpush1.bf16.msra.mxu0 %v5845
    %7288 = vmatprep.subr.bf16.mxu0 %v5854
    %7289 = vmatpush1.bf16.msra.mxu0 %v5853
    %7290 = vmatprep.subr.bf16.mxu0 %v5862
    %7291 = vmatpush1.bf16.msra.mxu0 %v5861
    %7292 = vmatprep.subr.bf16.mxu0 %v5870
    %7293 = vmatpush1.bf16.msra.mxu0 %v5869
    %7294 = vmatprep.subr.bf16.mxu0 %v5878
    %7295 = vmatpush1.bf16.msra.mxu0 %v5877
    %7296 = vmatprep.subr.bf16.mxu0 %v5886
    %7297 = vmatpush1.bf16.msra.mxu0 %v5885
    %7298 = vmatprep.subr.bf16.mxu0 %v5894
    %7299 = vmatpush1.bf16.msra.mxu0 %v5893
    %7300 = vmatprep.subr.bf16.mxu0 %v5902
    %7301 = vmatpush1.bf16.msra.mxu0 %v5901
    %7302 = vmatprep.subr.bf16.mxu0 %v5910
    %7303 = vmatpush1.bf16.msra.mxu0 %v5909
    %7304 = vmatprep.subr.bf16.mxu0 %v5918
    %7305 = vmatpush1.bf16.msra.mxu0 %v5917
    %7306 = vmatprep.subr.bf16.mxu0 %v5926
    %7307 = vmatpush1.bf16.msra.mxu0 %v5925
    %7308 = vmatprep.subr.bf16.mxu0 %v5934
    %7309 = vmatpush1.bf16.msra.mxu0 %v5933
    %7310 = vmatprep.subr.bf16.mxu0 %v5942
    %7311 = vmatpush1.bf16.msra.mxu0 %v5941
    %7312 = vmatprep.subr.bf16.mxu0 %v5950
    %7313 = vmatpush1.bf16.msra.mxu0 %v5949
    %7314 = vmatprep.mubr.bf16.mxu0 %v794
    %7315 = vmatmul.mubr.bf16.gmra.mrb[0].mxu0 %v793
    %v7316 = vpop.f32.mrb[0].mxu0
    %v7317 = vadd.f32 %v7274, %v7316
    %v7318 = vpop.f32.mrb[0].mxu0
    %v7319 = vadd.f32 %v7276, %v7318
    %v7320 = vpop.f32.mrb[0].mxu0
    %v7321 = vadd.f32 %v7278, %v7320
    %v7322 = vpop.f32.mrb[0].mxu0
    %v7323 = vadd.f32 %v7280, %v7322
    %7324 = vdwg.mxu0
    %7325 = vmatprep.subr.bf16.mxu0 %v4936
    %7326 = vmatpush1.bf16.msra.mxu0 %v4935
    %7327 = vmatprep.subr.bf16.mxu0 %v4944
    %7328 = vmatpush1.bf16.msra.mxu0 %v4943
    %7329 = vmatprep.subr.bf16.mxu0 %v4952
    %7330 = vmatpush1.bf16.msra.mxu0 %v4951
    %7331 = vmatprep.subr.bf16.mxu0 %v4960
    %7332 = vmatpush1.bf16.msra.mxu0 %v4959
    %7333 = vmatprep.subr.bf16.mxu0 %v4968
    %7334 = vmatpush1.bf16.msra.mxu0 %v4967
    %7335 = vmatprep.subr.bf16.mxu0 %v4976
    %7336 = vmatpush1.bf16.msra.mxu0 %v4975
    %7337 = vmatprep.subr.bf16.mxu0 %v4984
    %7338 = vmatpush1.bf16.msra.mxu0 %v4983
    %7339 = vmatprep.subr.bf16.mxu0 %v4992
    %7340 = vmatpush1.bf16.msra.mxu0 %v4991
    %7341 = vmatprep.subr.bf16.mxu0 %v5000
    %7342 = vmatpush1.bf16.msra.mxu0 %v4999
    %7343 = vmatprep.subr.bf16.mxu0 %v5008
    %7344 = vmatpush1.bf16.msra.mxu0 %v5007
    %7345 = vmatprep.subr.bf16.mxu0 %v5016
    %7346 = vmatpush1.bf16.msra.mxu0 %v5015
    %7347 = vmatprep.subr.bf16.mxu0 %v5024
    %7348 = vmatpush1.bf16.msra.mxu0 %v5023
    %7349 = vmatprep.subr.bf16.mxu0 %v5032
    %7350 = vmatpush1.bf16.msra.mxu0 %v5031
    %7351 = vmatprep.subr.bf16.mxu0 %v5040
    %7352 = vmatpush1.bf16.msra.mxu0 %v5039
    %7353 = vmatprep.subr.bf16.mxu0 %v5048
    %7354 = vmatpush1.bf16.msra.mxu0 %v5047
    %7355 = vmatprep.subr.bf16.mxu0 %v5056
    %7356 = vmatpush1.bf16.msra.mxu0 %v5055
    %7357 = vmatprep.mubr.bf16.mxu0 %v780
    %7358 = vmatmul.mubr.bf16.gmra.mrb[0].mxu0 %v779
    %v7359 = vpop.f32.mrb[0].mxu0
    %v7360 = vadd.f32 %v1832, %v7359
    %v7361 = vpop.f32.mrb[0].mxu0
    %v7362 = vadd.f32 %v1836, %v7361
    %v7363 = vpop.f32.mrb[0].mxu0
    %v7364 = vadd.f32 %v1832, %v7363
    %v7365 = vpop.f32.mrb[0].mxu0
    %v7366 = vadd.f32 %v1836, %v7365
    %7367 = vdwg.mxu0
    %7368 = vmatprep.subr.bf16.mxu0 %v5064
    %7369 = vmatpush1.bf16.msra.mxu0 %v5063
    %7370 = vmatprep.subr.bf16.mxu0 %v5072
    %7371 = vmatpush1.bf16.msra.mxu0 %v5071
    %7372 = vmatprep.subr.bf16.mxu0 %v5080
    %7373 = vmatpush1.bf16.msra.mxu0 %v5079
    %7374 = vmatprep.subr.bf16.mxu0 %v5088
    %7375 = vmatpush1.bf16.msra.mxu0 %v5087
    %7376 = vmatprep.subr.bf16.mxu0 %v5096
    %7377 = vmatpush1.bf16.msra.mxu0 %v5095
    %7378 = vmatprep.subr.bf16.mxu0 %v5104
    %7379 = vmatpush1.bf16.msra.mxu0 %v5103
    %7380 = vmatprep.subr.bf16.mxu0 %v5112
    %7381 = vmatpush1.bf16.msra.mxu0 %v5111
    %7382 = vmatprep.subr.bf16.mxu0 %v5120
    %7383 = vmatpush1.bf16.msra.mxu0 %v5119
    %7384 = vmatprep.subr.bf16.mxu0 %v5128
    %7385 = vmatpush1.bf16.msra.mxu0 %v5127
    %7386 = vmatprep.subr.bf16.mxu0 %v5136
    %7387 = vmatpush1.bf16.msra.mxu0 %v5135
    %7388 = vmatprep.subr.bf16.mxu0 %v5144
    %7389 = vmatpush1.bf16.msra.mxu0 %v5143
    %7390 = vmatprep.subr.bf16.mxu0 %v5152
    %7391 = vmatpush1.bf16.msra.mxu0 %v5151
    %7392 = vmatprep.subr.bf16.mxu0 %v5160
    %7393 = vmatpush1.bf16.msra.mxu0 %v5159
    %7394 = vmatprep.subr.bf16.mxu0 %v5168
    %7395 = vmatpush1.bf16.msra.mxu0 %v5167
    %7396 = vmatprep.subr.bf16.mxu0 %v5176
    %7397 = vmatpush1.bf16.msra.mxu0 %v5175
    %7398 = vmatprep.subr.bf16.mxu0 %v5184
    %7399 = vmatpush1.bf16.msra.mxu0 %v5183
    %7400 = vmatprep.mubr.bf16.mxu0 %v782
    %7401 = vmatmul.mubr.bf16.gmra.mrb[0].mxu0 %v781
    %v7402 = vpop.f32.mrb[0].mxu0
    %v7403 = vadd.f32 %v7360, %v7402
    %v7404 = vpop.f32.mrb[0].mxu0
    %v7405 = vadd.f32 %v7362, %v7404
    %v7406 = vpop.f32.mrb[0].mxu0
    %v7407 = vadd.f32 %v7364, %v7406
    %v7408 = vpop.f32.mrb[0].mxu0
    %v7409 = vadd.f32 %v7366, %v7408
    %7410 = vdwg.mxu0
    %7411 = vmatprep.subr.bf16.mxu0 %v5192
    %7412 = vmatpush1.bf16.msra.mxu0 %v5191
    %7413 = vmatprep.subr.bf16.mxu0 %v5200
    %7414 = vmatpush1.bf16.msra.mxu0 %v5199
    %7415 = vmatprep.subr.bf16.mxu0 %v5208
    %7416 = vmatpush1.bf16.msra.mxu0 %v5207
    %7417 = vmatprep.subr.bf16.mxu0 %v5216
    %7418 = vmatpush1.bf16.msra.mxu0 %v5215
    %7419 = vmatprep.subr.bf16.mxu0 %v5224
    %7420 = vmatpush1.bf16.msra.mxu0 %v5223
    %7421 = vmatprep.subr.bf16.mxu0 %v5232
    %7422 = vmatpush1.bf16.msra.mxu0 %v5231
    %7423 = vmatprep.subr.bf16.mxu0 %v5240
    %7424 = vmatpush1.bf16.msra.mxu0 %v5239
    %7425 = vmatprep.subr.bf16.mxu0 %v5248
    %7426 = vmatpush1.bf16.msra.mxu0 %v5247
    %7427 = vmatprep.subr.bf16.mxu0 %v5256
    %7428 = vmatpush1.bf16.msra.mxu0 %v5255
    %7429 = vmatprep.subr.bf16.mxu0 %v5264
    %7430 = vmatpush1.bf16.msra.mxu0 %v5263
    %7431 = vmatprep.subr.bf16.mxu0 %v5272
    %7432 = vmatpush1.bf16.msra.mxu0 %v5271
    %7433 = vmatprep.subr.bf16.mxu0 %v5280
    %7434 = vmatpush1.bf16.msra.mxu0 %v5279
    %7435 = vmatprep.subr.bf16.mxu0 %v5288
    %7436 = vmatpush1.bf16.msra.mxu0 %v5287
    %7437 = vmatprep.subr.bf16.mxu0 %v5296
    %7438 = vmatpush1.bf16.msra.mxu0 %v5295
    %7439 = vmatprep.subr.bf16.mxu0 %v5304
    %7440 = vmatpush1.bf16.msra.mxu0 %v5303
    %7441 = vmatprep.subr.bf16.mxu0 %v5312
    %7442 = vmatpush1.bf16.msra.mxu0 %v5311
    %7443 = vmatprep.mubr.bf16.mxu0 %v784
    %7444 = vmatmul.mubr.bf16.gmra.mrb[0].mxu0 %v783
    %v7445 = vpop.f32.mrb[0].mxu0
    %v7446 = vadd.f32 %v7403, %v7445
    %v7447 = vpop.f32.mrb[0].mxu0
    %v7448 = vadd.f32 %v7405, %v7447
    %v7449 = vpop.f32.mrb[0].mxu0
    %v7450 = vadd.f32 %v7407, %v7449
    %v7451 = vpop.f32.mrb[0].mxu0
    %v7452 = vadd.f32 %v7409, %v7451
    %7453 = vdwg.mxu0
    %7454 = vmatprep.subr.bf16.mxu0 %v5320
    %7455 = vmatpush1.bf16.msra.mxu0 %v5319
    %7456 = vmatprep.subr.bf16.mxu0 %v5328
    %7457 = vmatpush1.bf16.msra.mxu0 %v5327
    %7458 = vmatprep.subr.bf16.mxu0 %v5336
    %7459 = vmatpush1.bf16.msra.mxu0 %v5335
    %7460 = vmatprep.subr.bf16.mxu0 %v5344
    %7461 = vmatpush1.bf16.msra.mxu0 %v5343
    %7462 = vmatprep.subr.bf16.mxu0 %v5352
    %7463 = vmatpush1.bf16.msra.mxu0 %v5351
    %7464 = vmatprep.subr.bf16.mxu0 %v5360
    %7465 = vmatpush1.bf16.msra.mxu0 %v5359
    %7466 = vmatprep.subr.bf16.mxu0 %v5368
    %7467 = vmatpush1.bf16.msra.mxu0 %v5367
    %7468 = vmatprep.subr.bf16.mxu0 %v5376
    %7469 = vmatpush1.bf16.msra.mxu0 %v5375
    %7470 = vmatprep.subr.bf16.mxu0 %v5384
    %7471 = vmatpush1.bf16.msra.mxu0 %v5383
    %7472 = vmatprep.subr.bf16.mxu0 %v5392
    %7473 = vmatpush1.bf16.msra.mxu0 %v5391
    %7474 = vmatprep.subr.bf16.mxu0 %v5400
    %7475 = vmatpush1.bf16.msra.mxu0 %v5399
    %7476 = vmatprep.subr.bf16.mxu0 %v5408
    %7477 = vmatpush1.bf16.msra.mxu0 %v5407
    %7478 = vmatprep.subr.bf16.mxu0 %v5416
    %7479 = vmatpush1.bf16.msra.mxu0 %v5415
    %7480 = vmatprep.subr.bf16.mxu0 %v5424
    %7481 = vmatpush1.bf16.msra.mxu0 %v5423
    %7482 = vmatprep.subr.bf16.mxu0 %v5432
    %7483 = vmatpush1.bf16.msra.mxu0 %v5431
    %7484 = vmatprep.subr.bf16.mxu0 %v5440
    %7485 = vmatpush1.bf16.msra.mxu0 %v5439
    %7486 = vmatprep.mubr.bf16.mxu0 %v786
    %7487 = vmatmul.mubr.bf16.gmra.mrb[0].mxu0 %v785
    %v7488 = vpop.f32.mrb[0].mxu0
    %v7489 = vadd.f32 %v7446, %v7488
    %v7490 = vpop.f32.mrb[0].mxu0
    %v7491 = vadd.f32 %v7448, %v7490
    %v7492 = vpop.f32.mrb[0].mxu0
    %v7493 = vadd.f32 %v7450, %v7492
    %v7494 = vpop.f32.mrb[0].mxu0
    %v7495 = vadd.f32 %v7452, %v7494
    %7496 = vdwg.mxu0
    %7497 = vmatprep.subr.bf16.mxu0 %v5448
    %7498 = vmatpush1.bf16.msra.mxu0 %v5447
    %7499 = vmatprep.subr.bf16.mxu0 %v5456
    %7500 = vmatpush1.bf16.msra.mxu0 %v5455
    %7501 = vmatprep.subr.bf16.mxu0 %v5464
    %7502 = vmatpush1.bf16.msra.mxu0 %v5463
    %7503 = vmatprep.subr.bf16.mxu0 %v5472
    %7504 = vmatpush1.bf16.msra.mxu0 %v5471
    %7505 = vmatprep.subr.bf16.mxu0 %v5480
    %7506 = vmatpush1.bf16.msra.mxu0 %v5479
    %7507 = vmatprep.subr.bf16.mxu0 %v5488
    %7508 = vmatpush1.bf16.msra.mxu0 %v5487
    %7509 = vmatprep.subr.bf16.mxu0 %v5496
    %7510 = vmatpush1.bf16.msra.mxu0 %v5495
    %7511 = vmatprep.subr.bf16.mxu0 %v5504
    %7512 = vmatpush1.bf16.msra.mxu0 %v5503
    %7513 = vmatprep.subr.bf16.mxu0 %v5512
    %7514 = vmatpush1.bf16.msra.mxu0 %v5511
    %7515 = vmatprep.subr.bf16.mxu0 %v5520
    %7516 = vmatpush1.bf16.msra.mxu0 %v5519
    %7517 = vmatprep.subr.bf16.mxu0 %v5528
    %7518 = vmatpush1.bf16.msra.mxu0 %v5527
    %7519 = vmatprep.subr.bf16.mxu0 %v5536
    %7520 = vmatpush1.bf16.msra.mxu0 %v5535
    %7521 = vmatprep.subr.bf16.mxu0 %v5544
    %7522 = vmatpush1.bf16.msra.mxu0 %v5543
    %7523 = vmatprep.subr.bf16.mxu0 %v5552
    %7524 = vmatpush1.bf16.msra.mxu0 %v5551
    %7525 = vmatprep.subr.bf16.mxu0 %v5560
    %7526 = vmatpush1.bf16.msra.mxu0 %v5559
    %7527 = vmatprep.subr.bf16.mxu0 %v5568
    %7528 = vmatpush1.bf16.msra.mxu0 %v5567
    %7529 = vmatprep.mubr.bf16.mxu0 %v788
    %7530 = vmatmul.mubr.bf16.gmra.mrb[0].mxu0 %v787
    %v7531 = vpop.f32.mrb[0].mxu0
    %v7532 = vadd.f32 %v7489, %v7531
    %v7533 = vpop.f32.mrb[0].mxu0
    %v7534 = vadd.f32 %v7491, %v7533
    %v7535 = vpop.f32.mrb[0].mxu0
    %v7536 = vadd.f32 %v7493, %v7535
    %v7537 = vpop.f32.mrb[0].mxu0
    %v7538 = vadd.f32 %v7495, %v7537
    %7539 = vdwg.mxu0
    %7540 = vmatprep.subr.bf16.mxu0 %v5576
    %7541 = vmatpush1.bf16.msra.mxu0 %v5575
    %7542 = vmatprep.subr.bf16.mxu0 %v5584
    %7543 = vmatpush1.bf16.msra.mxu0 %v5583
    %7544 = vmatprep.subr.bf16.mxu0 %v5592
    %7545 = vmatpush1.bf16.msra.mxu0 %v5591
    %7546 = vmatprep.subr.bf16.mxu0 %v5600
    %7547 = vmatpush1.bf16.msra.mxu0 %v5599
    %7548 = vmatprep.subr.bf16.mxu0 %v5608
    %7549 = vmatpush1.bf16.msra.mxu0 %v5607
    %7550 = vmatprep.subr.bf16.mxu0 %v5616
    %7551 = vmatpush1.bf16.msra.mxu0 %v5615
    %7552 = vmatprep.subr.bf16.mxu0 %v5624
    %7553 = vmatpush1.bf16.msra.mxu0 %v5623
    %7554 = vmatprep.subr.bf16.mxu0 %v5632
    %7555 = vmatpush1.bf16.msra.mxu0 %v5631
    %7556 = vmatprep.subr.bf16.mxu0 %v5640
    %7557 = vmatpush1.bf16.msra.mxu0 %v5639
    %7558 = vmatprep.subr.bf16.mxu0 %v5648
    %7559 = vmatpush1.bf16.msra.mxu0 %v5647
    %7560 = vmatprep.subr.bf16.mxu0 %v5656
    %7561 = vmatpush1.bf16.msra.mxu0 %v5655
    %7562 = vmatprep.subr.bf16.mxu0 %v5664
    %7563 = vmatpush1.bf16.msra.mxu0 %v5663
    %7564 = vmatprep.subr.bf16.mxu0 %v5672
    %7565 = vmatpush1.bf16.msra.mxu0 %v5671
    %7566 = vmatprep.subr.bf16.mxu0 %v5680
    %7567 = vmatpush1.bf16.msra.mxu0 %v5679
    %7568 = vmatprep.subr.bf16.mxu0 %v5688
    %7569 = vmatpush1.bf16.msra.mxu0 %v5687
    %7570 = vmatprep.subr.bf16.mxu0 %v5696
    %7571 = vmatpush1.bf16.msra.mxu0 %v5695
    %7572 = vmatprep.mubr.bf16.mxu0 %v790
    %7573 = vmatmul.mubr.bf16.gmra.mrb[0].mxu0 %v789
    %v7574 = vpop.f32.mrb[0].mxu0
    %v7575 = vadd.f32 %v7532, %v7574
    %v7576 = vpop.f32.mrb[0].mxu0
    %v7577 = vadd.f32 %v7534, %v7576
    %v7578 = vpop.f32.mrb[0].mxu0
    %v7579 = vadd.f32 %v7536, %v7578
    %v7580 = vpop.f32.mrb[0].mxu0
    %v7581 = vadd.f32 %v7538, %v7580
    %7582 = vdwg.mxu0
    %7583 = vmatprep.subr.bf16.mxu0 %v5704
    %7584 = vmatpush1.bf16.msra.mxu0 %v5703
    %7585 = vmatprep.subr.bf16.mxu0 %v5712
    %7586 = vmatpush1.bf16.msra.mxu0 %v5711
    %7587 = vmatprep.subr.bf16.mxu0 %v5720
    %7588 = vmatpush1.bf16.msra.mxu0 %v5719
    %7589 = vmatprep.subr.bf16.mxu0 %v5728
    %7590 = vmatpush1.bf16.msra.mxu0 %v5727
    %7591 = vmatprep.subr.bf16.mxu0 %v5736
    %7592 = vmatpush1.bf16.msra.mxu0 %v5735
    %7593 = vmatprep.subr.bf16.mxu0 %v5744
    %7594 = vmatpush1.bf16.msra.mxu0 %v5743
    %7595 = vmatprep.subr.bf16.mxu0 %v5752
    %7596 = vmatpush1.bf16.msra.mxu0 %v5751
    %7597 = vmatprep.subr.bf16.mxu0 %v5760
    %7598 = vmatpush1.bf16.msra.mxu0 %v5759
    %7599 = vmatprep.subr.bf16.mxu0 %v5768
    %7600 = vmatpush1.bf16.msra.mxu0 %v5767
    %7601 = vmatprep.subr.bf16.mxu0 %v5776
    %7602 = vmatpush1.bf16.msra.mxu0 %v5775
    %7603 = vmatprep.subr.bf16.mxu0 %v5784
    %7604 = vmatpush1.bf16.msra.mxu0 %v5783
    %7605 = vmatprep.subr.bf16.mxu0 %v5792
    %7606 = vmatpush1.bf16.msra.mxu0 %v5791
    %7607 = vmatprep.subr.bf16.mxu0 %v5800
    %7608 = vmatpush1.bf16.msra.mxu0 %v5799
    %7609 = vmatprep.subr.bf16.mxu0 %v5808
    %7610 = vmatpush1.bf16.msra.mxu0 %v5807
    %7611 = vmatprep.subr.bf16.mxu0 %v5816
    %7612 = vmatpush1.bf16.msra.mxu0 %v5815
    %7613 = vmatprep.subr.bf16.mxu0 %v5824
    %7614 = vmatpush1.bf16.msra.mxu0 %v5823
    %7615 = vmatprep.mubr.bf16.mxu0 %v792
    %7616 = vmatmul.mubr.bf16.gmra.mrb[0].mxu0 %v791
    %v7617 = vpop.f32.mrb[0].mxu0
    %v7618 = vadd.f32 %v7575, %v7617
    %v7619 = vpop.f32.mrb[0].mxu0
    %v7620 = vadd.f32 %v7577, %v7619
    %v7621 = vpop.f32.mrb[0].mxu0
    %v7622 = vadd.f32 %v7579, %v7621
    %v7623 = vpop.f32.mrb[0].mxu0
    %v7624 = vadd.f32 %v7581, %v7623
    %7625 = vdwg.mxu0
    %7626 = vmatprep.subr.bf16.mxu0 %v5832
    %7627 = vmatpush1.bf16.msra.mxu0 %v5831
    %7628 = vmatprep.subr.bf16.mxu0 %v5840
    %7629 = vmatpush1.bf16.msra.mxu0 %v5839
    %7630 = vmatprep.subr.bf16.mxu0 %v5848
    %7631 = vmatpush1.bf16.msra.mxu0 %v5847
    %7632 = vmatprep.subr.bf16.mxu0 %v5856
    %7633 = vmatpush1.bf16.msra.mxu0 %v5855
    %7634 = vmatprep.subr.bf16.mxu0 %v5864
    %7635 = vmatpush1.bf16.msra.mxu0 %v5863
    %7636 = vmatprep.subr.bf16.mxu0 %v5872
    %7637 = vmatpush1.bf16.msra.mxu0 %v5871
    %7638 = vmatprep.subr.bf16.mxu0 %v5880
    %7639 = vmatpush1.bf16.msra.mxu0 %v5879
    %7640 = vmatprep.subr.bf16.mxu0 %v5888
    %7641 = vmatpush1.bf16.msra.mxu0 %v5887
    %7642 = vmatprep.subr.bf16.mxu0 %v5896
    %7643 = vmatpush1.bf16.msra.mxu0 %v5895
    %7644 = vmatprep.subr.bf16.mxu0 %v5904
    %7645 = vmatpush1.bf16.msra.mxu0 %v5903
    %7646 = vmatprep.subr.bf16.mxu0 %v5912
    %7647 = vmatpush1.bf16.msra.mxu0 %v5911
    %7648 = vmatprep.subr.bf16.mxu0 %v5920
    %7649 = vmatpush1.bf16.msra.mxu0 %v5919
    %7650 = vmatprep.subr.bf16.mxu0 %v5928
    %7651 = vmatpush1.bf16.msra.mxu0 %v5927
    %7652 = vmatprep.subr.bf16.mxu0 %v5936
    %7653 = vmatpush1.bf16.msra.mxu0 %v5935
    %7654 = vmatprep.subr.bf16.mxu0 %v5944
    %7655 = vmatpush1.bf16.msra.mxu0 %v5943
    %7656 = vmatprep.subr.bf16.mxu0 %v5952
    %7657 = vmatpush1.bf16.msra.mxu0 %v5951
    %7658 = vmatprep.mubr.bf16.mxu0 %v794
    %7659 = vmatmul.mubr.bf16.gmra.mrb[0].mxu0 %v793
    %v7660 = vpop.f32.mrb[0].mxu0
    %v7661 = vadd.f32 %v7618, %v7660
    %v7662 = vpop.f32.mrb[0].mxu0
    %v7663 = vadd.f32 %v7620, %v7662
    %v7664 = vpop.f32.mrb[0].mxu0
    %v7665 = vadd.f32 %v7622, %v7664
    %v7666 = vpop.f32.mrb[0].mxu0
    %v7667 = vadd.f32 %v7624, %v7666
    %7668 = vdwg.mxu0
    %7669 = vmatprep.subr.bf16.mxu0 %v4938
    %7670 = vmatpush1.bf16.msra.mxu0 %v4937
    %7671 = vmatprep.subr.bf16.mxu0 %v4946
    %7672 = vmatpush1.bf16.msra.mxu0 %v4945
    %7673 = vmatprep.subr.bf16.mxu0 %v4954
    %7674 = vmatpush1.bf16.msra.mxu0 %v4953
    %7675 = vmatprep.subr.bf16.mxu0 %v4962
    %7676 = vmatpush1.bf16.msra.mxu0 %v4961
    %7677 = vmatprep.subr.bf16.mxu0 %v4970
    %7678 = vmatpush1.bf16.msra.mxu0 %v4969
    %7679 = vmatprep.subr.bf16.mxu0 %v4978
    %7680 = vmatpush1.bf16.msra.mxu0 %v4977
    %7681 = vmatprep.subr.bf16.mxu0 %v4986
    %7682 = vmatpush1.bf16.msra.mxu0 %v4985
    %7683 = vmatprep.subr.bf16.mxu0 %v4994
    %7684 = vmatpush1.bf16.msra.mxu0 %v4993
    %7685 = vmatprep.subr.bf16.mxu0 %v5002
    %7686 = vmatpush1.bf16.msra.mxu0 %v5001
    %7687 = vmatprep.subr.bf16.mxu0 %v5010
    %7688 = vmatpush1.bf16.msra.mxu0 %v5009
    %7689 = vmatprep.subr.bf16.mxu0 %v5018
    %7690 = vmatpush1.bf16.msra.mxu0 %v5017
    %7691 = vmatprep.subr.bf16.mxu0 %v5026
    %7692 = vmatpush1.bf16.msra.mxu0 %v5025
    %7693 = vmatprep.subr.bf16.mxu0 %v5034
    %7694 = vmatpush1.bf16.msra.mxu0 %v5033
    %7695 = vmatprep.subr.bf16.mxu0 %v5042
    %7696 = vmatpush1.bf16.msra.mxu0 %v5041
    %7697 = vmatprep.subr.bf16.mxu0 %v5050
    %7698 = vmatpush1.bf16.msra.mxu0 %v5049
    %7699 = vmatprep.subr.bf16.mxu0 %v5058
    %7700 = vmatpush1.bf16.msra.mxu0 %v5057
    %7701 = vmatprep.mubr.bf16.mxu0 %v780
    %7702 = vmatmul.mubr.bf16.gmra.mrb[0].mxu0 %v779
    %v7703 = vpop.f32.mrb[0].mxu0
    %v7704 = vadd.f32 %v1840, %v7703
    %v7705 = vpop.f32.mrb[0].mxu0
    %v7706 = vadd.f32 %v1844, %v7705
    %v7707 = vpop.f32.mrb[0].mxu0
    %v7708 = vadd.f32 %v1840, %v7707
    %v7709 = vpop.f32.mrb[0].mxu0
    %v7710 = vadd.f32 %v1844, %v7709
    %7711 = vdwg.mxu0
    %7712 = vmatprep.subr.bf16.mxu0 %v5066
    %7713 = vmatpush1.bf16.msra.mxu0 %v5065
    %7714 = vmatprep.subr.bf16.mxu0 %v5074
    %7715 = vmatpush1.bf16.msra.mxu0 %v5073
    %7716 = vmatprep.subr.bf16.mxu0 %v5082
    %7717 = vmatpush1.bf16.msra.mxu0 %v5081
    %7718 = vmatprep.subr.bf16.mxu0 %v5090
    %7719 = vmatpush1.bf16.msra.mxu0 %v5089
    %7720 = vmatprep.subr.bf16.mxu0 %v5098
    %7721 = vmatpush1.bf16.msra.mxu0 %v5097
    %7722 = vmatprep.subr.bf16.mxu0 %v5106
    %7723 = vmatpush1.bf16.msra.mxu0 %v5105
    %7724 = vmatprep.subr.bf16.mxu0 %v5114
    %7725 = vmatpush1.bf16.msra.mxu0 %v5113
    %7726 = vmatprep.subr.bf16.mxu0 %v5122
    %7727 = vmatpush1.bf16.msra.mxu0 %v5121
    %7728 = vmatprep.subr.bf16.mxu0 %v5130
    %7729 = vmatpush1.bf16.msra.mxu0 %v5129
    %7730 = vmatprep.subr.bf16.mxu0 %v5138
    %7731 = vmatpush1.bf16.msra.mxu0 %v5137
    %7732 = vmatprep.subr.bf16.mxu0 %v5146
    %7733 = vmatpush1.bf16.msra.mxu0 %v5145
    %7734 = vmatprep.subr.bf16.mxu0 %v5154
    %7735 = vmatpush1.bf16.msra.mxu0 %v5153
    %7736 = vmatprep.subr.bf16.mxu0 %v5162
    %7737 = vmatpush1.bf16.msra.mxu0 %v5161
    %7738 = vmatprep.subr.bf16.mxu0 %v5170
    %7739 = vmatpush1.bf16.msra.mxu0 %v5169
    %7740 = vmatprep.subr.bf16.mxu0 %v5178
    %7741 = vmatpush1.bf16.msra.mxu0 %v5177
    %7742 = vmatprep.subr.bf16.mxu0 %v5186
    %7743 = vmatpush1.bf16.msra.mxu0 %v5185
    %7744 = vmatprep.mubr.bf16.mxu0 %v782
    %7745 = vmatmul.mubr.bf16.gmra.mrb[0].mxu0 %v781
    %v7746 = vpop.f32.mrb[0].mxu0
    %v7747 = vadd.f32 %v7704, %v7746
    %v7748 = vpop.f32.mrb[0].mxu0
    %v7749 = vadd.f32 %v7706, %v7748
    %v7750 = vpop.f32.mrb[0].mxu0
    %v7751 = vadd.f32 %v7708, %v7750
    %v7752 = vpop.f32.mrb[0].mxu0
    %v7753 = vadd.f32 %v7710, %v7752
    %7754 = vdwg.mxu0
    %7755 = vmatprep.subr.bf16.mxu0 %v5194
    %7756 = vmatpush1.bf16.msra.mxu0 %v5193
    %7757 = vmatprep.subr.bf16.mxu0 %v5202
    %7758 = vmatpush1.bf16.msra.mxu0 %v5201
    %7759 = vmatprep.subr.bf16.mxu0 %v5210
    %7760 = vmatpush1.bf16.msra.mxu0 %v5209
    %7761 = vmatprep.subr.bf16.mxu0 %v5218
    %7762 = vmatpush1.bf16.msra.mxu0 %v5217
    %7763 = vmatprep.subr.bf16.mxu0 %v5226
    %7764 = vmatpush1.bf16.msra.mxu0 %v5225
    %7765 = vmatprep.subr.bf16.mxu0 %v5234
    %7766 = vmatpush1.bf16.msra.mxu0 %v5233
    %7767 = vmatprep.subr.bf16.mxu0 %v5242
    %7768 = vmatpush1.bf16.msra.mxu0 %v5241
    %7769 = vmatprep.subr.bf16.mxu0 %v5250
    %7770 = vmatpush1.bf16.msra.mxu0 %v5249
    %7771 = vmatprep.subr.bf16.mxu0 %v5258
    %7772 = vmatpush1.bf16.msra.mxu0 %v5257
    %7773 = vmatprep.subr.bf16.mxu0 %v5266
    %7774 = vmatpush1.bf16.msra.mxu0 %v5265
    %7775 = vmatprep.subr.bf16.mxu0 %v5274
    %7776 = vmatpush1.bf16.msra.mxu0 %v5273
    %7777 = vmatprep.subr.bf16.mxu0 %v5282
    %7778 = vmatpush1.bf16.msra.mxu0 %v5281
    %7779 = vmatprep.subr.bf16.mxu0 %v5290
    %7780 = vmatpush1.bf16.msra.mxu0 %v5289
    %7781 = vmatprep.subr.bf16.mxu0 %v5298
    %7782 = vmatpush1.bf16.msra.mxu0 %v5297
    %7783 = vmatprep.subr.bf16.mxu0 %v5306
    %7784 = vmatpush1.bf16.msra.mxu0 %v5305
    %7785 = vmatprep.subr.bf16.mxu0 %v5314
    %7786 = vmatpush1.bf16.msra.mxu0 %v5313
    %7787 = vmatprep.mubr.bf16.mxu0 %v784
    %7788 = vmatmul.mubr.bf16.gmra.mrb[0].mxu0 %v783
    %v7789 = vpop.f32.mrb[0].mxu0
    %v7790 = vadd.f32 %v7747, %v7789
    %v7791 = vpop.f32.mrb[0].mxu0
    %v7792 = vadd.f32 %v7749, %v7791
    %v7793 = vpop.f32.mrb[0].mxu0
    %v7794 = vadd.f32 %v7751, %v7793
    %v7795 = vpop.f32.mrb[0].mxu0
    %v7796 = vadd.f32 %v7753, %v7795
    %7797 = vdwg.mxu0
    %7798 = vmatprep.subr.bf16.mxu0 %v5322
    %7799 = vmatpush1.bf16.msra.mxu0 %v5321
    %7800 = vmatprep.subr.bf16.mxu0 %v5330
    %7801 = vmatpush1.bf16.msra.mxu0 %v5329
    %7802 = vmatprep.subr.bf16.mxu0 %v5338
    %7803 = vmatpush1.bf16.msra.mxu0 %v5337
    %7804 = vmatprep.subr.bf16.mxu0 %v5346
    %7805 = vmatpush1.bf16.msra.mxu0 %v5345
    %7806 = vmatprep.subr.bf16.mxu0 %v5354
    %7807 = vmatpush1.bf16.msra.mxu0 %v5353
    %7808 = vmatprep.subr.bf16.mxu0 %v5362
    %7809 = vmatpush1.bf16.msra.mxu0 %v5361
    %7810 = vmatprep.subr.bf16.mxu0 %v5370
    %7811 = vmatpush1.bf16.msra.mxu0 %v5369
    %7812 = vmatprep.subr.bf16.mxu0 %v5378
    %7813 = vmatpush1.bf16.msra.mxu0 %v5377
    %7814 = vmatprep.subr.bf16.mxu0 %v5386
    %7815 = vmatpush1.bf16.msra.mxu0 %v5385
    %7816 = vmatprep.subr.bf16.mxu0 %v5394
    %7817 = vmatpush1.bf16.msra.mxu0 %v5393
    %7818 = vmatprep.subr.bf16.mxu0 %v5402
    %7819 = vmatpush1.bf16.msra.mxu0 %v5401
    %7820 = vmatprep.subr.bf16.mxu0 %v5410
    %7821 = vmatpush1.bf16.msra.mxu0 %v5409
    %7822 = vmatprep.subr.bf16.mxu0 %v5418
    %7823 = vmatpush1.bf16.msra.mxu0 %v5417
    %7824 = vmatprep.subr.bf16.mxu0 %v5426
    %7825 = vmatpush1.bf16.msra.mxu0 %v5425
    %7826 = vmatprep.subr.bf16.mxu0 %v5434
    %7827 = vmatpush1.bf16.msra.mxu0 %v5433
    %7828 = vmatprep.subr.bf16.mxu0 %v5442
    %7829 = vmatpush1.bf16.msra.mxu0 %v5441
    %7830 = vmatprep.mubr.bf16.mxu0 %v786
    %7831 = vmatmul.mubr.bf16.gmra.mrb[0].mxu0 %v785
    %v7832 = vpop.f32.mrb[0].mxu0
    %v7833 = vadd.f32 %v7790, %v7832
    %v7834 = vpop.f32.mrb[0].mxu0
    %v7835 = vadd.f32 %v7792, %v7834
    %v7836 = vpop.f32.mrb[0].mxu0
    %v7837 = vadd.f32 %v7794, %v7836
    %v7838 = vpop.f32.mrb[0].mxu0
    %v7839 = vadd.f32 %v7796, %v7838
    %7840 = vdwg.mxu0
    %7841 = vmatprep.subr.bf16.mxu0 %v5450
    %7842 = vmatpush1.bf16.msra.mxu0 %v5449
    %7843 = vmatprep.subr.bf16.mxu0 %v5458
    %7844 = vmatpush1.bf16.msra.mxu0 %v5457
    %7845 = vmatprep.subr.bf16.mxu0 %v5466
    %7846 = vmatpush1.bf16.msra.mxu0 %v5465
    %7847 = vmatprep.subr.bf16.mxu0 %v5474
    %7848 = vmatpush1.bf16.msra.mxu0 %v5473
    %7849 = vmatprep.subr.bf16.mxu0 %v5482
    %7850 = vmatpush1.bf16.msra.mxu0 %v5481
    %7851 = vmatprep.subr.bf16.mxu0 %v5490
    %7852 = vmatpush1.bf16.msra.mxu0 %v5489
    %7853 = vmatprep.subr.bf16.mxu0 %v5498
    %7854 = vmatpush1.bf16.msra.mxu0 %v5497
    %7855 = vmatprep.subr.bf16.mxu0 %v5506
    %7856 = vmatpush1.bf16.msra.mxu0 %v5505
    %7857 = vmatprep.subr.bf16.mxu0 %v5514
    %7858 = vmatpush1.bf16.msra.mxu0 %v5513
    %7859 = vmatprep.subr.bf16.mxu0 %v5522
    %7860 = vmatpush1.bf16.msra.mxu0 %v5521
    %7861 = vmatprep.subr.bf16.mxu0 %v5530
    %7862 = vmatpush1.bf16.msra.mxu0 %v5529
    %7863 = vmatprep.subr.bf16.mxu0 %v5538
    %7864 = vmatpush1.bf16.msra.mxu0 %v5537
    %7865 = vmatprep.subr.bf16.mxu0 %v5546
    %7866 = vmatpush1.bf16.msra.mxu0 %v5545
    %7867 = vmatprep.subr.bf16.mxu0 %v5554
    %7868 = vmatpush1.bf16.msra.mxu0 %v5553
    %7869 = vmatprep.subr.bf16.mxu0 %v5562
    %7870 = vmatpush1.bf16.msra.mxu0 %v5561
    %7871 = vmatprep.subr.bf16.mxu0 %v5570
    %7872 = vmatpush1.bf16.msra.mxu0 %v5569
    %7873 = vmatprep.mubr.bf16.mxu0 %v788
    %7874 = vmatmul.mubr.bf16.gmra.mrb[0].mxu0 %v787
    %v7875 = vpop.f32.mrb[0].mxu0
    %v7876 = vadd.f32 %v7833, %v7875
    %v7877 = vpop.f32.mrb[0].mxu0
    %v7878 = vadd.f32 %v7835, %v7877
    %v7879 = vpop.f32.mrb[0].mxu0
    %v7880 = vadd.f32 %v7837, %v7879
    %v7881 = vpop.f32.mrb[0].mxu0
    %v7882 = vadd.f32 %v7839, %v7881
    %7883 = vdwg.mxu0
    %7884 = vmatprep.subr.bf16.mxu0 %v5578
    %7885 = vmatpush1.bf16.msra.mxu0 %v5577
    %7886 = vmatprep.subr.bf16.mxu0 %v5586
    %7887 = vmatpush1.bf16.msra.mxu0 %v5585
    %7888 = vmatprep.subr.bf16.mxu0 %v5594
    %7889 = vmatpush1.bf16.msra.mxu0 %v5593
    %7890 = vmatprep.subr.bf16.mxu0 %v5602
    %7891 = vmatpush1.bf16.msra.mxu0 %v5601
    %7892 = vmatprep.subr.bf16.mxu0 %v5610
    %7893 = vmatpush1.bf16.msra.mxu0 %v5609
    %7894 = vmatprep.subr.bf16.mxu0 %v5618
    %7895 = vmatpush1.bf16.msra.mxu0 %v5617
    %7896 = vmatprep.subr.bf16.mxu0 %v5626
    %7897 = vmatpush1.bf16.msra.mxu0 %v5625
    %7898 = vmatprep.subr.bf16.mxu0 %v5634
    %7899 = vmatpush1.bf16.msra.mxu0 %v5633
    %7900 = vmatprep.subr.bf16.mxu0 %v5642
    %7901 = vmatpush1.bf16.msra.mxu0 %v5641
    %7902 = vmatprep.subr.bf16.mxu0 %v5650
    %7903 = vmatpush1.bf16.msra.mxu0 %v5649
    %7904 = vmatprep.subr.bf16.mxu0 %v5658
    %7905 = vmatpush1.bf16.msra.mxu0 %v5657
    %7906 = vmatprep.subr.bf16.mxu0 %v5666
    %7907 = vmatpush1.bf16.msra.mxu0 %v5665
    %7908 = vmatprep.subr.bf16.mxu0 %v5674
    %7909 = vmatpush1.bf16.msra.mxu0 %v5673
    %7910 = vmatprep.subr.bf16.mxu0 %v5682
    %7911 = vmatpush1.bf16.msra.mxu0 %v5681
    %7912 = vmatprep.subr.bf16.mxu0 %v5690
    %7913 = vmatpush1.bf16.msra.mxu0 %v5689
    %7914 = vmatprep.subr.bf16.mxu0 %v5698
    %7915 = vmatpush1.bf16.msra.mxu0 %v5697
    %7916 = vmatprep.mubr.bf16.mxu0 %v790
    %7917 = vmatmul.mubr.bf16.gmra.mrb[0].mxu0 %v789
    %v7918 = vpop.f32.mrb[0].mxu0
    %v7919 = vadd.f32 %v7876, %v7918
    %v7920 = vpop.f32.mrb[0].mxu0
    %v7921 = vadd.f32 %v7878, %v7920
    %v7922 = vpop.f32.mrb[0].mxu0
    %v7923 = vadd.f32 %v7880, %v7922
    %v7924 = vpop.f32.mrb[0].mxu0
    %v7925 = vadd.f32 %v7882, %v7924
    %7926 = vdwg.mxu0
    %7927 = vmatprep.subr.bf16.mxu0 %v5706
    %7928 = vmatpush1.bf16.msra.mxu0 %v5705
    %7929 = vmatprep.subr.bf16.mxu0 %v5714
    %7930 = vmatpush1.bf16.msra.mxu0 %v5713
    %7931 = vmatprep.subr.bf16.mxu0 %v5722
    %7932 = vmatpush1.bf16.msra.mxu0 %v5721
    %7933 = vmatprep.subr.bf16.mxu0 %v5730
    %7934 = vmatpush1.bf16.msra.mxu0 %v5729
    %7935 = vmatprep.subr.bf16.mxu0 %v5738
    %7936 = vmatpush1.bf16.msra.mxu0 %v5737
    %7937 = vmatprep.subr.bf16.mxu0 %v5746
    %7938 = vmatpush1.bf16.msra.mxu0 %v5745
    %7939 = vmatprep.subr.bf16.mxu0 %v5754
    %7940 = vmatpush1.bf16.msra.mxu0 %v5753
    %7941 = vmatprep.subr.bf16.mxu0 %v5762
    %7942 = vmatpush1.bf16.msra.mxu0 %v5761
    %7943 = vmatprep.subr.bf16.mxu0 %v5770
    %7944 = vmatpush1.bf16.msra.mxu0 %v5769
    %7945 = vmatprep.subr.bf16.mxu0 %v5778
    %7946 = vmatpush1.bf16.msra.mxu0 %v5777
    %7947 = vmatprep.subr.bf16.mxu0 %v5786
    %7948 = vmatpush1.bf16.msra.mxu0 %v5785
    %7949 = vmatprep.subr.bf16.mxu0 %v5794
    %7950 = vmatpush1.bf16.msra.mxu0 %v5793
    %7951 = vmatprep.subr.bf16.mxu0 %v5802
    %7952 = vmatpush1.bf16.msra.mxu0 %v5801
    %7953 = vmatprep.subr.bf16.mxu0 %v5810
    %7954 = vmatpush1.bf16.msra.mxu0 %v5809
    %7955 = vmatprep.subr.bf16.mxu0 %v5818
    %7956 = vmatpush1.bf16.msra.mxu0 %v5817
    %7957 = vmatprep.subr.bf16.mxu0 %v5826
    %7958 = vmatpush1.bf16.msra.mxu0 %v5825
    %7959 = vmatprep.mubr.bf16.mxu0 %v792
    %7960 = vmatmul.mubr.bf16.gmra.mrb[0].mxu0 %v791
    %v7961 = vpop.f32.mrb[0].mxu0
    %v7962 = vadd.f32 %v7919, %v7961
    %v7963 = vpop.f32.mrb[0].mxu0
    %v7964 = vadd.f32 %v7921, %v7963
    %v7965 = vpop.f32.mrb[0].mxu0
    %v7966 = vadd.f32 %v7923, %v7965
    %v7967 = vpop.f32.mrb[0].mxu0
    %v7968 = vadd.f32 %v7925, %v7967
    %7969 = vdwg.mxu0
    %7970 = vmatprep.subr.bf16.mxu0 %v5834
    %7971 = vmatpush1.bf16.msra.mxu0 %v5833
    %7972 = vmatprep.subr.bf16.mxu0 %v5842
    %7973 = vmatpush1.bf16.msra.mxu0 %v5841
    %7974 = vmatprep.subr.bf16.mxu0 %v5850
    %7975 = vmatpush1.bf16.msra.mxu0 %v5849
    %7976 = vmatprep.subr.bf16.mxu0 %v5858
    %7977 = vmatpush1.bf16.msra.mxu0 %v5857
    %7978 = vmatprep.subr.bf16.mxu0 %v5866
    %7979 = vmatpush1.bf16.msra.mxu0 %v5865
    %7980 = vmatprep.subr.bf16.mxu0 %v5874
    %7981 = vmatpush1.bf16.msra.mxu0 %v5873
    %7982 = vmatprep.subr.bf16.mxu0 %v5882
    %7983 = vmatpush1.bf16.msra.mxu0 %v5881
    %7984 = vmatprep.subr.bf16.mxu0 %v5890
    %7985 = vmatpush1.bf16.msra.mxu0 %v5889
    %7986 = vmatprep.subr.bf16.mxu0 %v5898
    %7987 = vmatpush1.bf16.msra.mxu0 %v5897
    %7988 = vmatprep.subr.bf16.mxu0 %v5906
    %7989 = vmatpush1.bf16.msra.mxu0 %v5905
    %7990 = vmatprep.subr.bf16.mxu0 %v5914
    %7991 = vmatpush1.bf16.msra.mxu0 %v5913
    %7992 = vmatprep.subr.bf16.mxu0 %v5922
    %7993 = vmatpush1.bf16.msra.mxu0 %v5921
    %7994 = vmatprep.subr.bf16.mxu0 %v5930
    %7995 = vmatpush1.bf16.msra.mxu0 %v5929
    %7996 = vmatprep.subr.bf16.mxu0 %v5938
    %7997 = vmatpush1.bf16.msra.mxu0 %v5937
    %7998 = vmatprep.subr.bf16.mxu0 %v5946
    %7999 = vmatpush1.bf16.msra.mxu0 %v5945
    %8000 = vmatprep.subr.bf16.mxu0 %v5954
    %8001 = vmatpush1.bf16.msra.mxu0 %v5953
    %8002 = vmatprep.mubr.bf16.mxu0 %v794
    %8003 = vmatmul.mubr.bf16.gmra.mrb[0].mxu0 %v793
    %v8004 = vpop.f32.mrb[0].mxu0
    %v8005 = vadd.f32 %v7962, %v8004
    %v8006 = vpop.f32.mrb[0].mxu0
    %v8007 = vadd.f32 %v7964, %v8006
    %v8008 = vpop.f32.mrb[0].mxu0
    %v8009 = vadd.f32 %v7966, %v8008
    %v8010 = vpop.f32.mrb[0].mxu0
    %v8011 = vadd.f32 %v7968, %v8010
    %8012 = vdwg.mxu0
    %8013 = vmatprep.subr.bf16.mxu0 %v4940
    %8014 = vmatpush1.bf16.msra.mxu0 %v4939
    %8015 = vmatprep.subr.bf16.mxu0 %v4948
    %8016 = vmatpush1.bf16.msra.mxu0 %v4947
    %8017 = vmatprep.subr.bf16.mxu0 %v4956
    %8018 = vmatpush1.bf16.msra.mxu0 %v4955
    %8019 = vmatprep.subr.bf16.mxu0 %v4964
    %8020 = vmatpush1.bf16.msra.mxu0 %v4963
    %8021 = vmatprep.subr.bf16.mxu0 %v4972
    %8022 = vmatpush1.bf16.msra.mxu0 %v4971
    %8023 = vmatprep.subr.bf16.mxu0 %v4980
    %8024 = vmatpush1.bf16.msra.mxu0 %v4979
    %8025 = vmatprep.subr.bf16.mxu0 %v4988
    %8026 = vmatpush1.bf16.msra.mxu0 %v4987
    %8027 = vmatprep.subr.bf16.mxu0 %v4996
    %8028 = vmatpush1.bf16.msra.mxu0 %v4995
    %8029 = vmatprep.subr.bf16.mxu0 %v5004
    %8030 = vmatpush1.bf16.msra.mxu0 %v5003
    %8031 = vmatprep.subr.bf16.mxu0 %v5012
    %8032 = vmatpush1.bf16.msra.mxu0 %v5011
    %8033 = vmatprep.subr.bf16.mxu0 %v5020
    %8034 = vmatpush1.bf16.msra.mxu0 %v5019
    %8035 = vmatprep.subr.bf16.mxu0 %v5028
    %8036 = vmatpush1.bf16.msra.mxu0 %v5027
    %8037 = vmatprep.subr.bf16.mxu0 %v5036
    %8038 = vmatpush1.bf16.msra.mxu0 %v5035
    %8039 = vmatprep.subr.bf16.mxu0 %v5044
    %8040 = vmatpush1.bf16.msra.mxu0 %v5043
    %8041 = vmatprep.subr.bf16.mxu0 %v5052
    %8042 = vmatpush1.bf16.msra.mxu0 %v5051
    %8043 = vmatprep.subr.bf16.mxu0 %v5060
    %8044 = vmatpush1.bf16.msra.mxu0 %v5059
    %8045 = vmatprep.mubr.bf16.mxu0 %v780
    %8046 = vmatmul.mubr.bf16.gmra.mrb[0].mxu0 %v779
    %v8047 = vpop.f32.mrb[0].mxu0
    %v8048 = vadd.f32 %v1848, %v8047
    %v8049 = vpop.f32.mrb[0].mxu0
    %v8050 = vadd.f32 %v1852, %v8049
    %v8051 = vpop.f32.mrb[0].mxu0
    %v8052 = vadd.f32 %v1848, %v8051
    %v8053 = vpop.f32.mrb[0].mxu0
    %v8054 = vadd.f32 %v1852, %v8053
    %8055 = vdwg.mxu0
    %8056 = vmatprep.subr.bf16.mxu0 %v5068
    %8057 = vmatpush1.bf16.msra.mxu0 %v5067
    %8058 = vmatprep.subr.bf16.mxu0 %v5076
    %8059 = vmatpush1.bf16.msra.mxu0 %v5075
    %8060 = vmatprep.subr.bf16.mxu0 %v5084
    %8061 = vmatpush1.bf16.msra.mxu0 %v5083
    %8062 = vmatprep.subr.bf16.mxu0 %v5092
    %8063 = vmatpush1.bf16.msra.mxu0 %v5091
    %8064 = vmatprep.subr.bf16.mxu0 %v5100
    %8065 = vmatpush1.bf16.msra.mxu0 %v5099
    %8066 = vmatprep.subr.bf16.mxu0 %v5108
    %8067 = vmatpush1.bf16.msra.mxu0 %v5107
    %8068 = vmatprep.subr.bf16.mxu0 %v5116
    %8069 = vmatpush1.bf16.msra.mxu0 %v5115
    %8070 = vmatprep.subr.bf16.mxu0 %v5124
    %8071 = vmatpush1.bf16.msra.mxu0 %v5123
    %8072 = vmatprep.subr.bf16.mxu0 %v5132
    %8073 = vmatpush1.bf16.msra.mxu0 %v5131
    %8074 = vmatprep.subr.bf16.mxu0 %v5140
    %8075 = vmatpush1.bf16.msra.mxu0 %v5139
    %8076 = vmatprep.subr.bf16.mxu0 %v5148
    %8077 = vmatpush1.bf16.msra.mxu0 %v5147
    %8078 = vmatprep.subr.bf16.mxu0 %v5156
    %8079 = vmatpush1.bf16.msra.mxu0 %v5155
    %8080 = vmatprep.subr.bf16.mxu0 %v5164
    %8081 = vmatpush1.bf16.msra.mxu0 %v5163
    %8082 = vmatprep.subr.bf16.mxu0 %v5172
    %8083 = vmatpush1.bf16.msra.mxu0 %v5171
    %8084 = vmatprep.subr.bf16.mxu0 %v5180
    %8085 = vmatpush1.bf16.msra.mxu0 %v5179
    %8086 = vmatprep.subr.bf16.mxu0 %v5188
    %8087 = vmatpush1.bf16.msra.mxu0 %v5187
    %8088 = vmatprep.mubr.bf16.mxu0 %v782
    %8089 = vmatmul.mubr.bf16.gmra.mrb[0].mxu0 %v781
    %v8090 = vpop.f32.mrb[0].mxu0
    %v8091 = vadd.f32 %v8048, %v8090
    %v8092 = vpop.f32.mrb[0].mxu0
    %v8093 = vadd.f32 %v8050, %v8092
    %v8094 = vpop.f32.mrb[0].mxu0
    %v8095 = vadd.f32 %v8052, %v8094
    %v8096 = vpop.f32.mrb[0].mxu0
    %v8097 = vadd.f32 %v8054, %v8096
    %8098 = vdwg.mxu0
    %8099 = vmatprep.subr.bf16.mxu0 %v5196
    %8100 = vmatpush1.bf16.msra.mxu0 %v5195
    %8101 = vmatprep.subr.bf16.mxu0 %v5204
    %8102 = vmatpush1.bf16.msra.mxu0 %v5203
    %8103 = vmatprep.subr.bf16.mxu0 %v5212
    %8104 = vmatpush1.bf16.msra.mxu0 %v5211
    %8105 = vmatprep.subr.bf16.mxu0 %v5220
    %8106 = vmatpush1.bf16.msra.mxu0 %v5219
    %8107 = vmatprep.subr.bf16.mxu0 %v5228
    %8108 = vmatpush1.bf16.msra.mxu0 %v5227
    %8109 = vmatprep.subr.bf16.mxu0 %v5236
    %8110 = vmatpush1.bf16.msra.mxu0 %v5235
    %8111 = vmatprep.subr.bf16.mxu0 %v5244
    %8112 = vmatpush1.bf16.msra.mxu0 %v5243
    %8113 = vmatprep.subr.bf16.mxu0 %v5252
    %8114 = vmatpush1.bf16.msra.mxu0 %v5251
    %8115 = vmatprep.subr.bf16.mxu0 %v5260
    %8116 = vmatpush1.bf16.msra.mxu0 %v5259
    %8117 = vmatprep.subr.bf16.mxu0 %v5268
    %8118 = vmatpush1.bf16.msra.mxu0 %v5267
    %8119 = vmatprep.subr.bf16.mxu0 %v5276
    %8120 = vmatpush1.bf16.msra.mxu0 %v5275
    %8121 = vmatprep.subr.bf16.mxu0 %v5284
    %8122 = vmatpush1.bf16.msra.mxu0 %v5283
    %8123 = vmatprep.subr.bf16.mxu0 %v5292
    %8124 = vmatpush1.bf16.msra.mxu0 %v5291
    %8125 = vmatprep.subr.bf16.mxu0 %v5300
    %8126 = vmatpush1.bf16.msra.mxu0 %v5299
    %8127 = vmatprep.subr.bf16.mxu0 %v5308
    %8128 = vmatpush1.bf16.msra.mxu0 %v5307
    %8129 = vmatprep.subr.bf16.mxu0 %v5316
    %8130 = vmatpush1.bf16.msra.mxu0 %v5315
    %8131 = vmatprep.mubr.bf16.mxu0 %v784
    %8132 = vmatmul.mubr.bf16.gmra.mrb[0].mxu0 %v783
    %v8133 = vpop.f32.mrb[0].mxu0
    %v8134 = vadd.f32 %v8091, %v8133
    %v8135 = vpop.f32.mrb[0].mxu0
    %v8136 = vadd.f32 %v8093, %v8135
    %v8137 = vpop.f32.mrb[0].mxu0
    %v8138 = vadd.f32 %v8095, %v8137
    %v8139 = vpop.f32.mrb[0].mxu0
    %v8140 = vadd.f32 %v8097, %v8139
    %8141 = vdwg.mxu0
    %8142 = vmatprep.subr.bf16.mxu0 %v5324
    %8143 = vmatpush1.bf16.msra.mxu0 %v5323
    %8144 = vmatprep.subr.bf16.mxu0 %v5332
    %8145 = vmatpush1.bf16.msra.mxu0 %v5331
    %8146 = vmatprep.subr.bf16.mxu0 %v5340
    %8147 = vmatpush1.bf16.msra.mxu0 %v5339
    %8148 = vmatprep.subr.bf16.mxu0 %v5348
    %8149 = vmatpush1.bf16.msra.mxu0 %v5347
    %8150 = vmatprep.subr.bf16.mxu0 %v5356
    %8151 = vmatpush1.bf16.msra.mxu0 %v5355
    %8152 = vmatprep.subr.bf16.mxu0 %v5364
    %8153 = vmatpush1.bf16.msra.mxu0 %v5363
    %8154 = vmatprep.subr.bf16.mxu0 %v5372
    %8155 = vmatpush1.bf16.msra.mxu0 %v5371
    %8156 = vmatprep.subr.bf16.mxu0 %v5380
    %8157 = vmatpush1.bf16.msra.mxu0 %v5379
    %8158 = vmatprep.subr.bf16.mxu0 %v5388
    %8159 = vmatpush1.bf16.msra.mxu0 %v5387
    %8160 = vmatprep.subr.bf16.mxu0 %v5396
    %8161 = vmatpush1.bf16.msra.mxu0 %v5395
    %8162 = vmatprep.subr.bf16.mxu0 %v5404
    %8163 = vmatpush1.bf16.msra.mxu0 %v5403
    %8164 = vmatprep.subr.bf16.mxu0 %v5412
    %8165 = vmatpush1.bf16.msra.mxu0 %v5411
    %8166 = vmatprep.subr.bf16.mxu0 %v5420
    %8167 = vmatpush1.bf16.msra.mxu0 %v5419
    %8168 = vmatprep.subr.bf16.mxu0 %v5428
    %8169 = vmatpush1.bf16.msra.mxu0 %v5427
    %8170 = vmatprep.subr.bf16.mxu0 %v5436
    %8171 = vmatpush1.bf16.msra.mxu0 %v5435
    %8172 = vmatprep.subr.bf16.mxu0 %v5444
    %8173 = vmatpush1.bf16.msra.mxu0 %v5443
    %8174 = vmatprep.mubr.bf16.mxu0 %v786
    %8175 = vmatmul.mubr.bf16.gmra.mrb[0].mxu0 %v785
    %v8176 = vpop.f32.mrb[0].mxu0
    %v8177 = vadd.f32 %v8134, %v8176
    %v8178 = vpop.f32.mrb[0].mxu0
    %v8179 = vadd.f32 %v8136, %v8178
    %v8180 = vpop.f32.mrb[0].mxu0
    %v8181 = vadd.f32 %v8138, %v8180
    %v8182 = vpop.f32.mrb[0].mxu0
    %v8183 = vadd.f32 %v8140, %v8182
    %8184 = vdwg.mxu0
    %8185 = vmatprep.subr.bf16.mxu0 %v5452
    %8186 = vmatpush1.bf16.msra.mxu0 %v5451
    %8187 = vmatprep.subr.bf16.mxu0 %v5460
    %8188 = vmatpush1.bf16.msra.mxu0 %v5459
    %8189 = vmatprep.subr.bf16.mxu0 %v5468
    %8190 = vmatpush1.bf16.msra.mxu0 %v5467
    %8191 = vmatprep.subr.bf16.mxu0 %v5476
    %8192 = vmatpush1.bf16.msra.mxu0 %v5475
    %8193 = vmatprep.subr.bf16.mxu0 %v5484
    %8194 = vmatpush1.bf16.msra.mxu0 %v5483
    %8195 = vmatprep.subr.bf16.mxu0 %v5492
    %8196 = vmatpush1.bf16.msra.mxu0 %v5491
    %8197 = vmatprep.subr.bf16.mxu0 %v5500
    %8198 = vmatpush1.bf16.msra.mxu0 %v5499
    %8199 = vmatprep.subr.bf16.mxu0 %v5508
    %8200 = vmatpush1.bf16.msra.mxu0 %v5507
    %8201 = vmatprep.subr.bf16.mxu0 %v5516
    %8202 = vmatpush1.bf16.msra.mxu0 %v5515
    %8203 = vmatprep.subr.bf16.mxu0 %v5524
    %8204 = vmatpush1.bf16.msra.mxu0 %v5523
    %8205 = vmatprep.subr.bf16.mxu0 %v5532
    %8206 = vmatpush1.bf16.msra.mxu0 %v5531
    %8207 = vmatprep.subr.bf16.mxu0 %v5540
    %8208 = vmatpush1.bf16.msra.mxu0 %v5539
    %8209 = vmatprep.subr.bf16.mxu0 %v5548
    %8210 = vmatpush1.bf16.msra.mxu0 %v5547
    %8211 = vmatprep.subr.bf16.mxu0 %v5556
    %8212 = vmatpush1.bf16.msra.mxu0 %v5555
    %8213 = vmatprep.subr.bf16.mxu0 %v5564
    %8214 = vmatpush1.bf16.msra.mxu0 %v5563
    %8215 = vmatprep.subr.bf16.mxu0 %v5572
    %8216 = vmatpush1.bf16.msra.mxu0 %v5571
    %8217 = vmatprep.mubr.bf16.mxu0 %v788
    %8218 = vmatmul.mubr.bf16.gmra.mrb[0].mxu0 %v787
    %v8219 = vpop.f32.mrb[0].mxu0
    %v8220 = vadd.f32 %v8177, %v8219
    %v8221 = vpop.f32.mrb[0].mxu0
    %v8222 = vadd.f32 %v8179, %v8221
    %v8223 = vpop.f32.mrb[0].mxu0
    %v8224 = vadd.f32 %v8181, %v8223
    %v8225 = vpop.f32.mrb[0].mxu0
    %v8226 = vadd.f32 %v8183, %v8225
    %8227 = vdwg.mxu0
    %8228 = vmatprep.subr.bf16.mxu0 %v5580
    %8229 = vmatpush1.bf16.msra.mxu0 %v5579
    %8230 = vmatprep.subr.bf16.mxu0 %v5588
    %8231 = vmatpush1.bf16.msra.mxu0 %v5587
    %8232 = vmatprep.subr.bf16.mxu0 %v5596
    %8233 = vmatpush1.bf16.msra.mxu0 %v5595
    %8234 = vmatprep.subr.bf16.mxu0 %v5604
    %8235 = vmatpush1.bf16.msra.mxu0 %v5603
    %8236 = vmatprep.subr.bf16.mxu0 %v5612
    %8237 = vmatpush1.bf16.msra.mxu0 %v5611
    %8238 = vmatprep.subr.bf16.mxu0 %v5620
    %8239 = vmatpush1.bf16.msra.mxu0 %v5619
    %8240 = vmatprep.subr.bf16.mxu0 %v5628
    %8241 = vmatpush1.bf16.msra.mxu0 %v5627
    %8242 = vmatprep.subr.bf16.mxu0 %v5636
    %8243 = vmatpush1.bf16.msra.mxu0 %v5635
    %8244 = vmatprep.subr.bf16.mxu0 %v5644
    %8245 = vmatpush1.bf16.msra.mxu0 %v5643
    %8246 = vmatprep.subr.bf16.mxu0 %v5652
    %8247 = vmatpush1.bf16.msra.mxu0 %v5651
    %8248 = vmatprep.subr.bf16.mxu0 %v5660
    %8249 = vmatpush1.bf16.msra.mxu0 %v5659
    %8250 = vmatprep.subr.bf16.mxu0 %v5668
    %8251 = vmatpush1.bf16.msra.mxu0 %v5667
    %8252 = vmatprep.subr.bf16.mxu0 %v5676
    %8253 = vmatpush1.bf16.msra.mxu0 %v5675
    %8254 = vmatprep.subr.bf16.mxu0 %v5684
    %8255 = vmatpush1.bf16.msra.mxu0 %v5683
    %8256 = vmatprep.subr.bf16.mxu0 %v5692
    %8257 = vmatpush1.bf16.msra.mxu0 %v5691
    %8258 = vmatprep.subr.bf16.mxu0 %v5700
    %8259 = vmatpush1.bf16.msra.mxu0 %v5699
    %8260 = vmatprep.mubr.bf16.mxu0 %v790
    %8261 = vmatmul.mubr.bf16.gmra.mrb[0].mxu0 %v789
    %v8262 = vpop.f32.mrb[0].mxu0
    %v8263 = vadd.f32 %v8220, %v8262
    %v8264 = vpop.f32.mrb[0].mxu0
    %v8265 = vadd.f32 %v8222, %v8264
    %v8266 = vpop.f32.mrb[0].mxu0
    %v8267 = vadd.f32 %v8224, %v8266
    %v8268 = vpop.f32.mrb[0].mxu0
    %v8269 = vadd.f32 %v8226, %v8268
    %8270 = vdwg.mxu0
    %8271 = vmatprep.subr.bf16.mxu0 %v5708
    %8272 = vmatpush1.bf16.msra.mxu0 %v5707
    %8273 = vmatprep.subr.bf16.mxu0 %v5716
    %8274 = vmatpush1.bf16.msra.mxu0 %v5715
    %8275 = vmatprep.subr.bf16.mxu0 %v5724
    %8276 = vmatpush1.bf16.msra.mxu0 %v5723
    %8277 = vmatprep.subr.bf16.mxu0 %v5732
    %8278 = vmatpush1.bf16.msra.mxu0 %v5731
    %8279 = vmatprep.subr.bf16.mxu0 %v5740
    %8280 = vmatpush1.bf16.msra.mxu0 %v5739
    %8281 = vmatprep.subr.bf16.mxu0 %v5748
    %8282 = vmatpush1.bf16.msra.mxu0 %v5747
    %8283 = vmatprep.subr.bf16.mxu0 %v5756
    %8284 = vmatpush1.bf16.msra.mxu0 %v5755
    %8285 = vmatprep.subr.bf16.mxu0 %v5764
    %8286 = vmatpush1.bf16.msra.mxu0 %v5763
    %8287 = vmatprep.subr.bf16.mxu0 %v5772
    %8288 = vmatpush1.bf16.msra.mxu0 %v5771
    %8289 = vmatprep.subr.bf16.mxu0 %v5780
    %8290 = vmatpush1.bf16.msra.mxu0 %v5779
    %8291 = vmatprep.subr.bf16.mxu0 %v5788
    %8292 = vmatpush1.bf16.msra.mxu0 %v5787
    %8293 = vmatprep.subr.bf16.mxu0 %v5796
    %8294 = vmatpush1.bf16.msra.mxu0 %v5795
    %8295 = vmatprep.subr.bf16.mxu0 %v5804
    %8296 = vmatpush1.bf16.msra.mxu0 %v5803
    %8297 = vmatprep.subr.bf16.mxu0 %v5812
    %8298 = vmatpush1.bf16.msra.mxu0 %v5811
    %8299 = vmatprep.subr.bf16.mxu0 %v5820
    %8300 = vmatpush1.bf16.msra.mxu0 %v5819
    %8301 = vmatprep.subr.bf16.mxu0 %v5828
    %8302 = vmatpush1.bf16.msra.mxu0 %v5827
    %8303 = vmatprep.mubr.bf16.mxu0 %v792
    %8304 = vmatmul.mubr.bf16.gmra.mrb[0].mxu0 %v791
    %v8305 = vpop.f32.mrb[0].mxu0
    %v8306 = vadd.f32 %v8263, %v8305
    %v8307 = vpop.f32.mrb[0].mxu0
    %v8308 = vadd.f32 %v8265, %v8307
    %v8309 = vpop.f32.mrb[0].mxu0
    %v8310 = vadd.f32 %v8267, %v8309
    %v8311 = vpop.f32.mrb[0].mxu0
    %v8312 = vadd.f32 %v8269, %v8311
    %8313 = vdwg.mxu0
    %8314 = vmatprep.subr.bf16.mxu0 %v5836
    %8315 = vmatpush1.bf16.msra.mxu0 %v5835
    %8316 = vmatprep.subr.bf16.mxu0 %v5844
    %8317 = vmatpush1.bf16.msra.mxu0 %v5843
    %8318 = vmatprep.subr.bf16.mxu0 %v5852
    %8319 = vmatpush1.bf16.msra.mxu0 %v5851
    %8320 = vmatprep.subr.bf16.mxu0 %v5860
    %8321 = vmatpush1.bf16.msra.mxu0 %v5859
    %8322 = vmatprep.subr.bf16.mxu0 %v5868
    %8323 = vmatpush1.bf16.msra.mxu0 %v5867
    %8324 = vmatprep.subr.bf16.mxu0 %v5876
    %8325 = vmatpush1.bf16.msra.mxu0 %v5875
    %8326 = vmatprep.subr.bf16.mxu0 %v5884
    %8327 = vmatpush1.bf16.msra.mxu0 %v5883
    %8328 = vmatprep.subr.bf16.mxu0 %v5892
    %8329 = vmatpush1.bf16.msra.mxu0 %v5891
    %8330 = vmatprep.subr.bf16.mxu0 %v5900
    %8331 = vmatpush1.bf16.msra.mxu0 %v5899
    %8332 = vmatprep.subr.bf16.mxu0 %v5908
    %8333 = vmatpush1.bf16.msra.mxu0 %v5907
    %8334 = vmatprep.subr.bf16.mxu0 %v5916
    %8335 = vmatpush1.bf16.msra.mxu0 %v5915
    %8336 = vmatprep.subr.bf16.mxu0 %v5924
    %8337 = vmatpush1.bf16.msra.mxu0 %v5923
    %8338 = vmatprep.subr.bf16.mxu0 %v5932
    %8339 = vmatpush1.bf16.msra.mxu0 %v5931
    %8340 = vmatprep.subr.bf16.mxu0 %v5940
    %8341 = vmatpush1.bf16.msra.mxu0 %v5939
    %8342 = vmatprep.subr.bf16.mxu0 %v5948
    %8343 = vmatpush1.bf16.msra.mxu0 %v5947
    %8344 = vmatprep.subr.bf16.mxu0 %v5956
    %8345 = vmatpush1.bf16.msra.mxu0 %v5955
    %8346 = vmatprep.mubr.bf16.mxu0 %v794
    %8347 = vmatmul.mubr.bf16.gmra.mrb[0].mxu0 %v793
    %v8348 = vpop.f32.mrb[0].mxu0
    %v8349 = vadd.f32 %v8306, %v8348
    %v8350 = vpop.f32.mrb[0].mxu0
    %v8351 = vadd.f32 %v8308, %v8350
    %v8352 = vpop.f32.mrb[0].mxu0
    %v8353 = vadd.f32 %v8310, %v8352
    %v8354 = vpop.f32.mrb[0].mxu0
    %v8355 = vadd.f32 %v8312, %v8354
    %8356 = vdwg.mxu0
    %v8357 = vmax.f32 %v7317, 0.0
    %v8358 = vmax.f32 %v7319, 0.0
    %v8359 = vmax.f32 %v7661, 0.0
    %v8360 = vmax.f32 %v7663, 0.0
    %v8361 = vmax.f32 %v8005, 0.0
    %v8362 = vmax.f32 %v8007, 0.0
    %v8363 = vmax.f32 %v8349, 0.0
    %v8364 = vmax.f32 %v8351, 0.0
    %v8365 = vmax.f32 %v7321, 0.0
    %v8366 = vmax.f32 %v7323, 0.0
    %v8367 = vmax.f32 %v7665, 0.0
    %v8368 = vmax.f32 %v7667, 0.0
    %v8369 = vmax.f32 %v8009, 0.0
    %v8370 = vmax.f32 %v8011, 0.0
    %v8371 = vmax.f32 %v8353, 0.0
    %v8372 = vmax.f32 %v8355, 0.0
    %v8373 = vpack.c.bf16 %v8365, %v8357
    %v8374 = vpack.c.bf16 %v8366, %v8358
    %v8375 = vpack.c.bf16 %v8367, %v8359
    %v8376 = vpack.c.bf16 %v8368, %v8360
    %v8377 = vpack.c.bf16 %v8369, %v8361
    %v8378 = vpack.c.bf16 %v8370, %v8362
    %v8379 = vpack.c.bf16 %v8371, %v8363
    %v8380 = vpack.c.bf16 %v8372, %v8364
    %v8381 = vld [vmem:[#allocation11] sm:$0xf]
    %v8382 = vld [vmem:[#allocation11 + $0x4] sm:$0xf]
    %v8383 = vld [vmem:[#allocation11 + $0x8] sm:$0xf]
    %v8384 = vld [vmem:[#allocation11 + $0xc] sm:$0xf]
    %v8385 = vld [vmem:[#allocation11 + $0x10] sm:$0xf]
    %v8386 = vld [vmem:[#allocation11 + $0x14] sm:$0xf]
    %v8387 = vld [vmem:[#allocation11 + $0x18] sm:$0xf]
    %v8388 = vld [vmem:[#allocation11 + $0x1c] sm:$0xf]
    %v8389 = vld [vmem:[#allocation11 + $0x20] sm:$0xf]
    %v8390 = vld [vmem:[#allocation11 + $0x24] sm:$0xf]
    %v8391 = vld [vmem:[#allocation11 + $0x28] sm:$0xf]
    %v8392 = vld [vmem:[#allocation11 + $0x2c] sm:$0xf]
    %v8393 = vld [vmem:[#allocation11 + $0x30] sm:$0xf]
    %v8394 = vld [vmem:[#allocation11 + $0x34] sm:$0xf]
    %v8395 = vld [vmem:[#allocation11 + $0x38] sm:$0xf]
    %v8396 = vld [vmem:[#allocation11 + $0x3c] sm:$0xf]
    %v8397 = vld [vmem:[#allocation11 + $0x40] sm:$0xf]
    %v8398 = vld [vmem:[#allocation11 + $0x44] sm:$0xf]
    %v8399 = vld [vmem:[#allocation11 + $0x48] sm:$0xf]
    %v8400 = vld [vmem:[#allocation11 + $0x4c] sm:$0xf]
    %v8401 = vld [vmem:[#allocation11 + $0x50] sm:$0xf]
    %v8402 = vld [vmem:[#allocation11 + $0x54] sm:$0xf]
    %v8403 = vld [vmem:[#allocation11 + $0x58] sm:$0xf]
    %v8404 = vld [vmem:[#allocation11 + $0x5c] sm:$0xf]
    %v8405 = vld [vmem:[#allocation11 + $0x60] sm:$0xf]
    %v8406 = vld [vmem:[#allocation11 + $0x64] sm:$0xf]
    %v8407 = vld [vmem:[#allocation11 + $0x68] sm:$0xf]
    %v8408 = vld [vmem:[#allocation11 + $0x6c] sm:$0xf]
    %v8409 = vld [vmem:[#allocation11 + $0x70] sm:$0xf]
    %v8410 = vld [vmem:[#allocation11 + $0x74] sm:$0xf]
    %v8411 = vld [vmem:[#allocation11 + $0x78] sm:$0xf]
    %v8412 = vld [vmem:[#allocation11 + $0x7c] sm:$0xf]
    %v8413 = vld [vmem:[#allocation11 + $0x80] sm:$0xf]
    %v8414 = vld [vmem:[#allocation11 + $0x84] sm:$0xf]
    %v8415 = vld [vmem:[#allocation11 + $0x88] sm:$0xf]
    %v8416 = vld [vmem:[#allocation11 + $0x8c] sm:$0xf]
    %v8417 = vld [vmem:[#allocation11 + $0x90] sm:$0xf]
    %v8418 = vld [vmem:[#allocation11 + $0x94] sm:$0xf]
    %v8419 = vld [vmem:[#allocation11 + $0x98] sm:$0xf]
    %v8420 = vld [vmem:[#allocation11 + $0x9c] sm:$0xf]
    %v8421 = vld [vmem:[#allocation11 + $0xa0] sm:$0xf]
    %v8422 = vld [vmem:[#allocation11 + $0xa4] sm:$0xf]
    %v8423 = vld [vmem:[#allocation11 + $0xa8] sm:$0xf]
    %v8424 = vld [vmem:[#allocation11 + $0xac] sm:$0xf]
    %v8425 = vld [vmem:[#allocation11 + $0xb0] sm:$0xf]
    %v8426 = vld [vmem:[#allocation11 + $0xb4] sm:$0xf]
    %v8427 = vld [vmem:[#allocation11 + $0xb8] sm:$0xf]
    %v8428 = vld [vmem:[#allocation11 + $0xbc] sm:$0xf]
    %v8429 = vld [vmem:[#allocation11 + $0xc0] sm:$0xf]
    %v8430 = vld [vmem:[#allocation11 + $0xc4] sm:$0xf]
    %v8431 = vld [vmem:[#allocation11 + $0xc8] sm:$0xf]
    %v8432 = vld [vmem:[#allocation11 + $0xcc] sm:$0xf]
    %v8433 = vld [vmem:[#allocation11 + $0xd0] sm:$0xf]
    %v8434 = vld [vmem:[#allocation11 + $0xd4] sm:$0xf]
    %v8435 = vld [vmem:[#allocation11 + $0xd8] sm:$0xf]
    %v8436 = vld [vmem:[#allocation11 + $0xdc] sm:$0xf]
    %v8437 = vld [vmem:[#allocation11 + $0xe0] sm:$0xf]
    %v8438 = vld [vmem:[#allocation11 + $0xe4] sm:$0xf]
    %v8439 = vld [vmem:[#allocation11 + $0xe8] sm:$0xf]
    %v8440 = vld [vmem:[#allocation11 + $0xec] sm:$0xf]
    %v8441 = vld [vmem:[#allocation11 + $0xf0] sm:$0xf]
    %v8442 = vld [vmem:[#allocation11 + $0xf4] sm:$0xf]
    %v8443 = vld [vmem:[#allocation11 + $0xf8] sm:$0xf]
    %v8444 = vld [vmem:[#allocation11 + $0xfc] sm:$0xf]
    %v8445 = vld [vmem:[#allocation11 + $0x100] sm:$0xf]
    %v8446 = vld [vmem:[#allocation11 + $0x104] sm:$0xf]
    %v8447 = vld [vmem:[#allocation11 + $0x108] sm:$0xf]
    %v8448 = vld [vmem:[#allocation11 + $0x10c] sm:$0xf]
    %v8449 = vld [vmem:[#allocation11 + $0x110] sm:$0xf]
    %v8450 = vld [vmem:[#allocation11 + $0x114] sm:$0xf]
    %v8451 = vld [vmem:[#allocation11 + $0x118] sm:$0xf]
    %v8452 = vld [vmem:[#allocation11 + $0x11c] sm:$0xf]
    %v8453 = vld [vmem:[#allocation11 + $0x120] sm:$0xf]
    %v8454 = vld [vmem:[#allocation11 + $0x124] sm:$0xf]
    %v8455 = vld [vmem:[#allocation11 + $0x128] sm:$0xf]
    %v8456 = vld [vmem:[#allocation11 + $0x12c] sm:$0xf]
    %v8457 = vld [vmem:[#allocation11 + $0x130] sm:$0xf]
    %v8458 = vld [vmem:[#allocation11 + $0x134] sm:$0xf]
    %v8459 = vld [vmem:[#allocation11 + $0x138] sm:$0xf]
    %v8460 = vld [vmem:[#allocation11 + $0x13c] sm:$0xf]
    %v8461 = vld [vmem:[#allocation11 + $0x140] sm:$0xf]
    %v8462 = vld [vmem:[#allocation11 + $0x144] sm:$0xf]
    %v8463 = vld [vmem:[#allocation11 + $0x148] sm:$0xf]
    %v8464 = vld [vmem:[#allocation11 + $0x14c] sm:$0xf]
    %v8465 = vld [vmem:[#allocation11 + $0x150] sm:$0xf]
    %v8466 = vld [vmem:[#allocation11 + $0x154] sm:$0xf]
    %v8467 = vld [vmem:[#allocation11 + $0x158] sm:$0xf]
    %v8468 = vld [vmem:[#allocation11 + $0x15c] sm:$0xf]
    %v8469 = vld [vmem:[#allocation11 + $0x160] sm:$0xf]
    %v8470 = vld [vmem:[#allocation11 + $0x164] sm:$0xf]
    %v8471 = vld [vmem:[#allocation11 + $0x168] sm:$0xf]
    %v8472 = vld [vmem:[#allocation11 + $0x16c] sm:$0xf]
    %v8473 = vld [vmem:[#allocation11 + $0x170] sm:$0xf]
    %v8474 = vld [vmem:[#allocation11 + $0x174] sm:$0xf]
    %v8475 = vld [vmem:[#allocation11 + $0x178] sm:$0xf]
    %v8476 = vld [vmem:[#allocation11 + $0x17c] sm:$0xf]
    %v8477 = vld [vmem:[#allocation11 + $0x180] sm:$0xf]
    %v8478 = vld [vmem:[#allocation11 + $0x184] sm:$0xf]
    %v8479 = vld [vmem:[#allocation11 + $0x188] sm:$0xf]
    %v8480 = vld [vmem:[#allocation11 + $0x18c] sm:$0xf]
    %v8481 = vld [vmem:[#allocation11 + $0x190] sm:$0xf]
    %v8482 = vld [vmem:[#allocation11 + $0x194] sm:$0xf]
    %v8483 = vld [vmem:[#allocation11 + $0x198] sm:$0xf]
    %v8484 = vld [vmem:[#allocation11 + $0x19c] sm:$0xf]
    %v8485 = vld [vmem:[#allocation11 + $0x1a0] sm:$0xf]
    %v8486 = vld [vmem:[#allocation11 + $0x1a4] sm:$0xf]
    %v8487 = vld [vmem:[#allocation11 + $0x1a8] sm:$0xf]
    %v8488 = vld [vmem:[#allocation11 + $0x1ac] sm:$0xf]
    %v8489 = vld [vmem:[#allocation11 + $0x1b0] sm:$0xf]
    %v8490 = vld [vmem:[#allocation11 + $0x1b4] sm:$0xf]
    %v8491 = vld [vmem:[#allocation11 + $0x1b8] sm:$0xf]
    %v8492 = vld [vmem:[#allocation11 + $0x1bc] sm:$0xf]
    %v8493 = vld [vmem:[#allocation11 + $0x1c0] sm:$0xf]
    %v8494 = vld [vmem:[#allocation11 + $0x1c4] sm:$0xf]
    %v8495 = vld [vmem:[#allocation11 + $0x1c8] sm:$0xf]
    %v8496 = vld [vmem:[#allocation11 + $0x1cc] sm:$0xf]
    %v8497 = vld [vmem:[#allocation11 + $0x1d0] sm:$0xf]
    %v8498 = vld [vmem:[#allocation11 + $0x1d4] sm:$0xf]
    %v8499 = vld [vmem:[#allocation11 + $0x1d8] sm:$0xf]
    %v8500 = vld [vmem:[#allocation11 + $0x1dc] sm:$0xf]
    %v8501 = vld [vmem:[#allocation11 + $0x1e0] sm:$0xf]
    %v8502 = vld [vmem:[#allocation11 + $0x1e4] sm:$0xf]
    %v8503 = vld [vmem:[#allocation11 + $0x1e8] sm:$0xf]
    %v8504 = vld [vmem:[#allocation11 + $0x1ec] sm:$0xf]
    %v8505 = vld [vmem:[#allocation11 + $0x1f0] sm:$0xf]
    %v8506 = vld [vmem:[#allocation11 + $0x1f4] sm:$0xf]
    %v8507 = vld [vmem:[#allocation11 + $0x1f8] sm:$0xf]
    %v8508 = vld [vmem:[#allocation11 + $0x1fc] sm:$0xf]
    %v8509 = vld [vmem:[#allocation13] sm:$0x1]
    %v8511 = vlaneseq
    %v8512 = vshrl.u32 %v8511, 7
    %v8513 = vsub.s32 0, %v8512
    %v8514 = vrot.slane %v8509, %v8513
    %v8644 = vunpack.c.l.b16 %v8381
    %v8645 = vunpack.c.l.b16 %v8382
    %v8646 = vunpack.c.l.b16 %v8383
    %v8647 = vunpack.c.l.b16 %v8384
    %v8648 = vunpack.c.l.b16 %v8385
    %v8649 = vunpack.c.l.b16 %v8386
    %v8650 = vunpack.c.l.b16 %v8387
    %v8651 = vunpack.c.l.b16 %v8388
    %v8652 = vunpack.c.l.b16 %v8389
    %v8653 = vunpack.c.l.b16 %v8390
    %v8654 = vunpack.c.l.b16 %v8391
    %v8655 = vunpack.c.l.b16 %v8392
    %v8656 = vunpack.c.l.b16 %v8393
    %v8657 = vunpack.c.l.b16 %v8394
    %v8658 = vunpack.c.l.b16 %v8395
    %v8659 = vunpack.c.l.b16 %v8396
    %v8660 = vunpack.c.l.b16 %v8397
    %v8661 = vunpack.c.l.b16 %v8398
    %v8662 = vunpack.c.l.b16 %v8399
    %v8663 = vunpack.c.l.b16 %v8400
    %v8664 = vunpack.c.l.b16 %v8401
    %v8665 = vunpack.c.l.b16 %v8402
    %v8666 = vunpack.c.l.b16 %v8403
    %v8667 = vunpack.c.l.b16 %v8404
    %v8668 = vunpack.c.l.b16 %v8405
    %v8669 = vunpack.c.l.b16 %v8406
    %v8670 = vunpack.c.l.b16 %v8407
    %v8671 = vunpack.c.l.b16 %v8408
    %v8672 = vunpack.c.l.b16 %v8409
    %v8673 = vunpack.c.l.b16 %v8410
    %v8674 = vunpack.c.l.b16 %v8411
    %v8675 = vunpack.c.l.b16 %v8412
    %v8676 = vunpack.c.l.b16 %v8413
    %v8677 = vunpack.c.l.b16 %v8414
    %v8678 = vunpack.c.l.b16 %v8415
    %v8679 = vunpack.c.l.b16 %v8416
    %v8680 = vunpack.c.l.b16 %v8417
    %v8681 = vunpack.c.l.b16 %v8418
    %v8682 = vunpack.c.l.b16 %v8419
    %v8683 = vunpack.c.l.b16 %v8420
    %v8684 = vunpack.c.l.b16 %v8421
    %v8685 = vunpack.c.l.b16 %v8422
    %v8686 = vunpack.c.l.b16 %v8423
    %v8687 = vunpack.c.l.b16 %v8424
    %v8688 = vunpack.c.l.b16 %v8425
    %v8689 = vunpack.c.l.b16 %v8426
    %v8690 = vunpack.c.l.b16 %v8427
    %v8691 = vunpack.c.l.b16 %v8428
    %v8692 = vunpack.c.l.b16 %v8429
    %v8693 = vunpack.c.l.b16 %v8430
    %v8694 = vunpack.c.l.b16 %v8431
    %v8695 = vunpack.c.l.b16 %v8432
    %v8696 = vunpack.c.l.b16 %v8433
    %v8697 = vunpack.c.l.b16 %v8434
    %v8698 = vunpack.c.l.b16 %v8435
    %v8699 = vunpack.c.l.b16 %v8436
    %v8700 = vunpack.c.l.b16 %v8437
    %v8701 = vunpack.c.l.b16 %v8438
    %v8702 = vunpack.c.l.b16 %v8439
    %v8703 = vunpack.c.l.b16 %v8440
    %v8704 = vunpack.c.l.b16 %v8441
    %v8705 = vunpack.c.l.b16 %v8442
    %v8706 = vunpack.c.l.b16 %v8443
    %v8707 = vunpack.c.l.b16 %v8444
    %v8708 = vunpack.c.l.b16 %v8445
    %v8709 = vunpack.c.l.b16 %v8446
    %v8710 = vunpack.c.l.b16 %v8447
    %v8711 = vunpack.c.l.b16 %v8448
    %v8712 = vunpack.c.l.b16 %v8449
    %v8713 = vunpack.c.l.b16 %v8450
    %v8714 = vunpack.c.l.b16 %v8451
    %v8715 = vunpack.c.l.b16 %v8452
    %v8716 = vunpack.c.l.b16 %v8453
    %v8717 = vunpack.c.l.b16 %v8454
    %v8718 = vunpack.c.l.b16 %v8455
    %v8719 = vunpack.c.l.b16 %v8456
    %v8720 = vunpack.c.l.b16 %v8457
    %v8721 = vunpack.c.l.b16 %v8458
    %v8722 = vunpack.c.l.b16 %v8459
    %v8723 = vunpack.c.l.b16 %v8460
    %v8724 = vunpack.c.l.b16 %v8461
    %v8725 = vunpack.c.l.b16 %v8462
    %v8726 = vunpack.c.l.b16 %v8463
    %v8727 = vunpack.c.l.b16 %v8464
    %v8728 = vunpack.c.l.b16 %v8465
    %v8729 = vunpack.c.l.b16 %v8466
    %v8730 = vunpack.c.l.b16 %v8467
    %v8731 = vunpack.c.l.b16 %v8468
    %v8732 = vunpack.c.l.b16 %v8469
    %v8733 = vunpack.c.l.b16 %v8470
    %v8734 = vunpack.c.l.b16 %v8471
    %v8735 = vunpack.c.l.b16 %v8472
    %v8736 = vunpack.c.l.b16 %v8473
    %v8737 = vunpack.c.l.b16 %v8474
    %v8738 = vunpack.c.l.b16 %v8475
    %v8739 = vunpack.c.l.b16 %v8476
    %v8740 = vunpack.c.l.b16 %v8477
    %v8741 = vunpack.c.l.b16 %v8478
    %v8742 = vunpack.c.l.b16 %v8479
    %v8743 = vunpack.c.l.b16 %v8480
    %v8744 = vunpack.c.l.b16 %v8481
    %v8745 = vunpack.c.l.b16 %v8482
    %v8746 = vunpack.c.l.b16 %v8483
    %v8747 = vunpack.c.l.b16 %v8484
    %v8748 = vunpack.c.l.b16 %v8485
    %v8749 = vunpack.c.l.b16 %v8486
    %v8750 = vunpack.c.l.b16 %v8487
    %v8751 = vunpack.c.l.b16 %v8488
    %v8752 = vunpack.c.l.b16 %v8489
    %v8753 = vunpack.c.l.b16 %v8490
    %v8754 = vunpack.c.l.b16 %v8491
    %v8755 = vunpack.c.l.b16 %v8492
    %v8756 = vunpack.c.l.b16 %v8493
    %v8757 = vunpack.c.l.b16 %v8494
    %v8758 = vunpack.c.l.b16 %v8495
    %v8759 = vunpack.c.l.b16 %v8496
    %v8760 = vunpack.c.l.b16 %v8497
    %v8761 = vunpack.c.l.b16 %v8498
    %v8762 = vunpack.c.l.b16 %v8499
    %v8763 = vunpack.c.l.b16 %v8500
    %v8764 = vunpack.c.l.b16 %v8501
    %v8765 = vunpack.c.l.b16 %v8502
    %v8766 = vunpack.c.l.b16 %v8503
    %v8767 = vunpack.c.l.b16 %v8504
    %v8768 = vunpack.c.l.b16 %v8505
    %v8769 = vunpack.c.l.b16 %v8506
    %v8770 = vunpack.c.l.b16 %v8507
    %v8771 = vunpack.c.l.b16 %v8508
    %v8772 = vpack.c.b16 %v8645, %v8644
    %v8773 = vpack.c.b16 %v8647, %v8646
    %v8774 = vpack.c.b16 %v8649, %v8648
    %v8775 = vpack.c.b16 %v8651, %v8650
    %v8776 = vpack.c.b16 %v8653, %v8652
    %v8777 = vpack.c.b16 %v8655, %v8654
    %v8778 = vpack.c.b16 %v8657, %v8656
    %v8779 = vpack.c.b16 %v8659, %v8658
    %v8780 = vpack.c.b16 %v8661, %v8660
    %v8781 = vpack.c.b16 %v8663, %v8662
    %v8782 = vpack.c.b16 %v8665, %v8664
    %v8783 = vpack.c.b16 %v8667, %v8666
    %v8784 = vpack.c.b16 %v8669, %v8668
    %v8785 = vpack.c.b16 %v8671, %v8670
    %v8786 = vpack.c.b16 %v8673, %v8672
    %v8787 = vpack.c.b16 %v8675, %v8674
    %v8788 = vpack.c.b16 %v8677, %v8676
    %v8789 = vpack.c.b16 %v8679, %v8678
    %v8790 = vpack.c.b16 %v8681, %v8680
    %v8791 = vpack.c.b16 %v8683, %v8682
    %v8792 = vpack.c.b16 %v8685, %v8684
    %v8793 = vpack.c.b16 %v8687, %v8686
    %v8794 = vpack.c.b16 %v8689, %v8688
    %v8795 = vpack.c.b16 %v8691, %v8690
    %v8796 = vpack.c.b16 %v8693, %v8692
    %v8797 = vpack.c.b16 %v8695, %v8694
    %v8798 = vpack.c.b16 %v8697, %v8696
    %v8799 = vpack.c.b16 %v8699, %v8698
    %v8800 = vpack.c.b16 %v8701, %v8700
    %v8801 = vpack.c.b16 %v8703, %v8702
    %v8802 = vpack.c.b16 %v8705, %v8704
    %v8803 = vpack.c.b16 %v8707, %v8706
    %v8804 = vpack.c.b16 %v8709, %v8708
    %v8805 = vpack.c.b16 %v8711, %v8710
    %v8806 = vpack.c.b16 %v8713, %v8712
    %v8807 = vpack.c.b16 %v8715, %v8714
    %v8808 = vpack.c.b16 %v8717, %v8716
    %v8809 = vpack.c.b16 %v8719, %v8718
    %v8810 = vpack.c.b16 %v8721, %v8720
    %v8811 = vpack.c.b16 %v8723, %v8722
    %v8812 = vpack.c.b16 %v8725, %v8724
    %v8813 = vpack.c.b16 %v8727, %v8726
    %v8814 = vpack.c.b16 %v8729, %v8728
    %v8815 = vpack.c.b16 %v8731, %v8730
    %v8816 = vpack.c.b16 %v8733, %v8732
    %v8817 = vpack.c.b16 %v8735, %v8734
    %v8818 = vpack.c.b16 %v8737, %v8736
    %v8819 = vpack.c.b16 %v8739, %v8738
    %v8820 = vpack.c.b16 %v8741, %v8740
    %v8821 = vpack.c.b16 %v8743, %v8742
    %v8822 = vpack.c.b16 %v8745, %v8744
    %v8823 = vpack.c.b16 %v8747, %v8746
    %v8824 = vpack.c.b16 %v8749, %v8748
    %v8825 = vpack.c.b16 %v8751, %v8750
    %v8826 = vpack.c.b16 %v8753, %v8752
    %v8827 = vpack.c.b16 %v8755, %v8754
    %v8828 = vpack.c.b16 %v8757, %v8756
    %v8829 = vpack.c.b16 %v8759, %v8758
    %v8830 = vpack.c.b16 %v8761, %v8760
    %v8831 = vpack.c.b16 %v8763, %v8762
    %v8832 = vpack.c.b16 %v8765, %v8764
    %v8833 = vpack.c.b16 %v8767, %v8766
    %v8834 = vpack.c.b16 %v8769, %v8768
    %v8835 = vpack.c.b16 %v8771, %v8770
    %8900 = vmatprep.subr.bf16.mxu0 0
    %8901 = vmatpush1.bf16.msra.mxu0 %v8772
    %8902 = vmatprep.subr.bf16.mxu0 0
    %8903 = vmatpush1.bf16.msra.mxu0 %v8773
    %8904 = vmatprep.subr.bf16.mxu0 0
    %8905 = vmatpush1.bf16.msra.mxu0 %v8774
    %8906 = vmatprep.subr.bf16.mxu0 0
    %8907 = vmatpush1.bf16.msra.mxu0 %v8775
    %8908 = vmatprep.subr.bf16.mxu0 0
    %8909 = vmatpush1.bf16.msra.mxu0 %v8776
    %8910 = vmatprep.subr.bf16.mxu0 0
    %8911 = vmatpush1.bf16.msra.mxu0 %v8777
    %8912 = vmatprep.subr.bf16.mxu0 0
    %8913 = vmatpush1.bf16.msra.mxu0 %v8778
    %8914 = vmatprep.subr.bf16.mxu0 0
    %8915 = vmatpush1.bf16.msra.mxu0 %v8779
    %8916 = vmatprep.subr.bf16.mxu0 0
    %8917 = vmatpush1.bf16.msra.mxu0 %v8780
    %8918 = vmatprep.subr.bf16.mxu0 0
    %8919 = vmatpush1.bf16.msra.mxu0 %v8781
    %8920 = vmatprep.subr.bf16.mxu0 0
    %8921 = vmatpush1.bf16.msra.mxu0 %v8782
    %8922 = vmatprep.subr.bf16.mxu0 0
    %8923 = vmatpush1.bf16.msra.mxu0 %v8783
    %8924 = vmatprep.subr.bf16.mxu0 0
    %8925 = vmatpush1.bf16.msra.mxu0 %v8784
    %8926 = vmatprep.subr.bf16.mxu0 0
    %8927 = vmatpush1.bf16.msra.mxu0 %v8785
    %8928 = vmatprep.subr.bf16.mxu0 0
    %8929 = vmatpush1.bf16.msra.mxu0 %v8786
    %8930 = vmatprep.subr.bf16.mxu0 0
    %8931 = vmatpush1.bf16.msra.mxu0 %v8787
    %8932 = vmatprep.mubr.bf16.mxu0 %v8374
    %8933 = vmatmul.mubr.bf16.gmra.mrb[0].mxu0 %v8373
    %v8934 = vpop.f32.mrb[0].mxu0
    %v8935 = vadd.f32 %v8514, %v8934
    %v8936 = vpop.f32.mrb[0].mxu0
    %v8937 = vpop.f32.mrb[0].mxu0
    %v8938 = vadd.f32 %v8514, %v8937
    %v8939 = vpop.f32.mrb[0].mxu0
    %8940 = vdwg.mxu0
    %8941 = vmatprep.subr.bf16.mxu0 0
    %8942 = vmatpush1.bf16.msra.mxu0 %v8788
    %8943 = vmatprep.subr.bf16.mxu0 0
    %8944 = vmatpush1.bf16.msra.mxu0 %v8789
    %8945 = vmatprep.subr.bf16.mxu0 0
    %8946 = vmatpush1.bf16.msra.mxu0 %v8790
    %8947 = vmatprep.subr.bf16.mxu0 0
    %8948 = vmatpush1.bf16.msra.mxu0 %v8791
    %8949 = vmatprep.subr.bf16.mxu0 0
    %8950 = vmatpush1.bf16.msra.mxu0 %v8792
    %8951 = vmatprep.subr.bf16.mxu0 0
    %8952 = vmatpush1.bf16.msra.mxu0 %v8793
    %8953 = vmatprep.subr.bf16.mxu0 0
    %8954 = vmatpush1.bf16.msra.mxu0 %v8794
    %8955 = vmatprep.subr.bf16.mxu0 0
    %8956 = vmatpush1.bf16.msra.mxu0 %v8795
    %8957 = vmatprep.subr.bf16.mxu0 0
    %8958 = vmatpush1.bf16.msra.mxu0 %v8796
    %8959 = vmatprep.subr.bf16.mxu0 0
    %8960 = vmatpush1.bf16.msra.mxu0 %v8797
    %8961 = vmatprep.subr.bf16.mxu0 0
    %8962 = vmatpush1.bf16.msra.mxu0 %v8798
    %8963 = vmatprep.subr.bf16.mxu0 0
    %8964 = vmatpush1.bf16.msra.mxu0 %v8799
    %8965 = vmatprep.subr.bf16.mxu0 0
    %8966 = vmatpush1.bf16.msra.mxu0 %v8800
    %8967 = vmatprep.subr.bf16.mxu0 0
    %8968 = vmatpush1.bf16.msra.mxu0 %v8801
    %8969 = vmatprep.subr.bf16.mxu0 0
    %8970 = vmatpush1.bf16.msra.mxu0 %v8802
    %8971 = vmatprep.subr.bf16.mxu0 0
    %8972 = vmatpush1.bf16.msra.mxu0 %v8803
    %8973 = vmatprep.mubr.bf16.mxu0 %v8376
    %8974 = vmatmul.mubr.bf16.gmra.mrb[0].mxu0 %v8375
    %v8975 = vpop.f32.mrb[0].mxu0
    %v8976 = vadd.f32 %v8935, %v8975
    %v8977 = vpop.f32.mrb[0].mxu0
    %v8978 = vpop.f32.mrb[0].mxu0
    %v8979 = vadd.f32 %v8938, %v8978
    %v8980 = vpop.f32.mrb[0].mxu0
    %8981 = vdwg.mxu0
    %8982 = vmatprep.subr.bf16.mxu0 0
    %8983 = vmatpush1.bf16.msra.mxu0 %v8804
    %8984 = vmatprep.subr.bf16.mxu0 0
    %8985 = vmatpush1.bf16.msra.mxu0 %v8805
    %8986 = vmatprep.subr.bf16.mxu0 0
    %8987 = vmatpush1.bf16.msra.mxu0 %v8806
    %8988 = vmatprep.subr.bf16.mxu0 0
    %8989 = vmatpush1.bf16.msra.mxu0 %v8807
    %8990 = vmatprep.subr.bf16.mxu0 0
    %8991 = vmatpush1.bf16.msra.mxu0 %v8808
    %8992 = vmatprep.subr.bf16.mxu0 0
    %8993 = vmatpush1.bf16.msra.mxu0 %v8809
    %8994 = vmatprep.subr.bf16.mxu0 0
    %8995 = vmatpush1.bf16.msra.mxu0 %v8810
    %8996 = vmatprep.subr.bf16.mxu0 0
    %8997 = vmatpush1.bf16.msra.mxu0 %v8811
    %8998 = vmatprep.subr.bf16.mxu0 0
    %8999 = vmatpush1.bf16.msra.mxu0 %v8812
    %9000 = vmatprep.subr.bf16.mxu0 0
    %9001 = vmatpush1.bf16.msra.mxu0 %v8813
    %9002 = vmatprep.subr.bf16.mxu0 0
    %9003 = vmatpush1.bf16.msra.mxu0 %v8814
    %9004 = vmatprep.subr.bf16.mxu0 0
    %9005 = vmatpush1.bf16.msra.mxu0 %v8815
    %9006 = vmatprep.subr.bf16.mxu0 0
    %9007 = vmatpush1.bf16.msra.mxu0 %v8816
    %9008 = vmatprep.subr.bf16.mxu0 0
    %9009 = vmatpush1.bf16.msra.mxu0 %v8817
    %9010 = vmatprep.subr.bf16.mxu0 0
    %9011 = vmatpush1.bf16.msra.mxu0 %v8818
    %9012 = vmatprep.subr.bf16.mxu0 0
    %9013 = vmatpush1.bf16.msra.mxu0 %v8819
    %9014 = vmatprep.mubr.bf16.mxu0 %v8378
    %9015 = vmatmul.mubr.bf16.gmra.mrb[0].mxu0 %v8377
    %v9016 = vpop.f32.mrb[0].mxu0
    %v9017 = vadd.f32 %v8976, %v9016
    %v9018 = vpop.f32.mrb[0].mxu0
    %v9019 = vpop.f32.mrb[0].mxu0
    %v9020 = vadd.f32 %v8979, %v9019
    %v9021 = vpop.f32.mrb[0].mxu0
    %9022 = vdwg.mxu0
    %9023 = vmatprep.subr.bf16.mxu0 0
    %9024 = vmatpush1.bf16.msra.mxu0 %v8820
    %9025 = vmatprep.subr.bf16.mxu0 0
    %9026 = vmatpush1.bf16.msra.mxu0 %v8821
    %9027 = vmatprep.subr.bf16.mxu0 0
    %9028 = vmatpush1.bf16.msra.mxu0 %v8822
    %9029 = vmatprep.subr.bf16.mxu0 0
    %9030 = vmatpush1.bf16.msra.mxu0 %v8823
    %9031 = vmatprep.subr.bf16.mxu0 0
    %9032 = vmatpush1.bf16.msra.mxu0 %v8824
    %9033 = vmatprep.subr.bf16.mxu0 0
    %9034 = vmatpush1.bf16.msra.mxu0 %v8825
    %9035 = vmatprep.subr.bf16.mxu0 0
    %9036 = vmatpush1.bf16.msra.mxu0 %v8826
    %9037 = vmatprep.subr.bf16.mxu0 0
    %9038 = vmatpush1.bf16.msra.mxu0 %v8827
    %9039 = vmatprep.subr.bf16.mxu0 0
    %9040 = vmatpush1.bf16.msra.mxu0 %v8828
    %9041 = vmatprep.subr.bf16.mxu0 0
    %9042 = vmatpush1.bf16.msra.mxu0 %v8829
    %9043 = vmatprep.subr.bf16.mxu0 0
    %9044 = vmatpush1.bf16.msra.mxu0 %v8830
    %9045 = vmatprep.subr.bf16.mxu0 0
    %9046 = vmatpush1.bf16.msra.mxu0 %v8831
    %9047 = vmatprep.subr.bf16.mxu0 0
    %9048 = vmatpush1.bf16.msra.mxu0 %v8832
    %9049 = vmatprep.subr.bf16.mxu0 0
    %9050 = vmatpush1.bf16.msra.mxu0 %v8833
    %9051 = vmatprep.subr.bf16.mxu0 0
    %9052 = vmatpush1.bf16.msra.mxu0 %v8834
    %9053 = vmatprep.subr.bf16.mxu0 0
    %9054 = vmatpush1.bf16.msra.mxu0 %v8835
    %9055 = vmatprep.mubr.bf16.mxu0 %v8380
    %9056 = vmatmul.mubr.bf16.gmra.mrb[0].mxu0 %v8379
    %v9057 = vpop.f32.mrb[0].mxu0
    %v9058 = vadd.f32 %v9017, %v9057
    %v9059 = vpop.f32.mrb[0].mxu0
    %v9060 = vpop.f32.mrb[0].mxu0
    %v9061 = vadd.f32 %v9020, %v9060
    %v9062 = vpop.f32.mrb[0].mxu0
    %9063 = vdwg.mxu0
    %v9064 = vld [vmem:[%s1] sm:$0xff]
    %v9065 = vld [vmem:[%s1 + $0x8] sm:$0xff]
    %v9066 = vlaneseq
    %v9067 = vand.u32 %v9066, 127
    %vm9068 = vcmp.lt.s32.totalorder %v9067, 2
    %v9069 = vsel %vm9068, %v9058, -1e+30
    %v9070 = vsel %vm9068, %v9061, -1e+30
    %9071 = vmax.xlane.f32.xlu0 %v9069
    %v9072 = vpop.xlane.xlu0 %9071
    %9073 = vmax.xlane.f32.xlu0 %v9070
    %v9074 = vpop.xlane.xlu0 %9073
    %v9075 = vsub.f32 %v9069, %v9072
    %v9076 = vsub.f32 %v9070, %v9074
    %v9077 = vmul.f32 %v9075, 1.442695
    %v9078 = vpow.pop %v9077
    %v9079 = vmul.f32 %v9076, 1.442695
    %v9080 = vpow.pop %v9079
    %9081 = vadd.xlane.f32.xlu0 %v9078
    %v9082 = vpop.xlane.xlu0 %9081
    %9083 = vadd.xlane.f32.xlu0 %v9080
    %v9084 = vpop.xlane.xlu0 %9083
    %v9085 = vlog2.pop %v9082
    %v9086 = vmul.f32 %v9085, 0.6931472
    %v9087 = vlog2.pop %v9084
    %v9088 = vmul.f32 %v9087, 0.6931472
    %v9089 = vadd.f32 %v9072, %v9086
    %v9090 = vadd.f32 %v9074, %v9088
    %v9091 = vsub.f32 %v9058, %v9089
    %v9092 = vsub.f32 %v9061, %v9090
    %9093 = vset.pattern.permute.xlu0 0
    %9094 = vperm.xlu0 %9093, %v9064
    %v9095 = vpop.permute.xlu0 %9094
    %9096 = vset.pattern.permute.xlu0 0
    %9097 = vperm.xlu0 %9096, %v9065
    %v9098 = vpop.permute.xlu0 %9097
    %vm9099 = vcmp.eq.s32.totalorder %v9067, %v9095
    %vm9100 = vcmp.eq.s32.totalorder %v9067, %v9098
    %v9101 = vsel %vm9099, 1, 0
    %v9102 = vsel %vm9100, 1, 0
    %v9103 = vcvt.s32.f32 %v9101
    %v9104 = vcvt.s32.f32 %v9102
    %v9105 = vmul.f32 %v9103, %v9091
    %v9106 = vmul.f32 %v9104, %v9092
    %9107 = vadd.xlane.f32.xlu0 %v9105
    %v9108 = vpop.xlane.xlu0 %9107
    %9109 = vadd.xlane.f32.xlu0 %v9106
    %v9110 = vpop.xlane.xlu0 %9109
    %v9111 = vsub.f32 0.0, %v9108
    %v9112 = vsub.f32 0.0, %v9110
    %v9113 = vsel %vm9068, %v9091, 0.0
    %v9114 = vsel %vm9068, %v9092, 0.0
    %9115 = vadd.xlane.f32.xlu0 %v9113
    %v9116 = vpop.xlane.xlu0 %9115
    %9117 = vadd.xlane.f32.xlu0 %v9114
    %v9118 = vpop.xlane.xlu0 %9117
    %v9119 = vsub.f32 0.0, %v9116
    %v9120 = vsub.f32 0.0, %v9118
    %v9121 = vrcp.pop 2.0
    %v9122 = vmul.f32 %v9119, %v9121
    %v9123 = vmul.f32 %v9120, %v9121
    %v9124 = vmul.f32 %v9111, 0.9
    %v9125 = vmul.f32 %v9112, 0.9
    %v9126 = vmul.f32 %v9122, 0.1
    %v9127 = vmul.f32 %v9123, 0.1
    %v9128 = vadd.f32 %v9124, %v9126
    %v9129 = vadd.f32 %v9125, %v9127
    %vm9130 = vcmp.ne.s32.totalorder %v9064, 4294967196
    %vm9131 = vcmp.ne.s32.totalorder %v9065, 4294967196
    %v9132 = vsel %vm9130, 1, 0
    %v9133 = vsel %vm9131, 1, 0
    %v9134 = vcvt.s32.f32 %v9132
    %v9135 = vcvt.s32.f32 %v9133
    %v9136 = vmul.f32 %v9128, %v9134
    %v9137 = vmul.f32 %v9129, %v9135
    %vm9138 = vcmp.eq.s32.totalorder %v9067, 2
    %9140 = vset.pattern.permute.xlu0 0
    %9141 = vperm.xlu0 %9140, %v9136
    %v9142 = vpop.permute.xlu0 %9141
    %9145 = vset.pattern.permute.xlu0 0
    %9146 = vperm.xlu0 %9145, %v9137
    %v9147 = vpop.permute.xlu0 %9146
    %v9149 = vsel %vm9138, %v9142, %v9058
    %v9150 = vsel %vm9138, %v9147, %v9061
    %9151 = vst [vmem:[#allocation14] sm:$0xff] %v9149
    %9152 = vst [vmem:[#allocation14 + $0x8] sm:$0xff] %v9150
    // Predicated region
    $region62: #{tpu_custom_call.1} parent=1 // pred_check
      _
    $region63: #{tpu_custom_call.1} parent=1 // pred_check_branch
      %9154 = sbr.rel (0) target = $region65
    $region64: #{tpu_custom_call.1} parent=1 // pred_region
      %s9156 = ssub.s32 256, 256
      %9157 = vsyncadd [#allocation4], %s9156
      %s9158 = sshll.u32 [#allocation14], 4
      %s9159 = int_to_ptr.vmem [resolvable:$true] %s9158
      %9164 = dma.vmem_to_hbm [thread:$0]  %s9159, 256, %s8, [#allocation4], 128, 128, 8
    $region65: #{tpu_custom_call.1} parent=1 // pred_fallthru
      _
    // Predicated region
    $region66: #{tpu_custom_call.1} parent=1 // pred_check
      _
    $region67: #{tpu_custom_call.1} parent=1 // pred_check_branch
      %9166 = sbr.rel (0) target = $region69
    $region68: #{tpu_custom_call.1} parent=1 // pred_region
      %9167 = dma.done [#allocation4], 256
    $region69: #{tpu_custom_call.1} parent=1 // pred_fallthru
      _
    %9168 = vsyncpa [#allocation3], 1
    %9169 = vsyncpa [#allocation6], 1
    %9170 = vsyncpa [#allocation9], 1
    %9171 = vsyncpa [#allocation12], 1
    %9172 = vsyncpa [#allocation4], 1

</llo_original>
